<compile_context>
chip_gen: v7x
topology: tpu7x:2x2x1
jax: 0.10.0
libtpu: 0.0.40
codegen_flags: <defaults>
</compile_context>

<pallas_src>
import functools
import math

import jax
import jax.numpy as jnp
from jax.experimental import pallas as pl
from jax.experimental.pallas import tpu as pltpu

FFN_DIM = 2048
NEG_INF = -1e9   # additive mask value (numerically safe stand-in for -inf)
LN_EPS = 1e-5    # PyTorch LayerNorm default


def _round_up(x, m):
    return (x + m - 1) // m * m


# ----------------------------- in-kernel helpers -----------------------------

def _layernorm(z, g, b):
    """LayerNorm over last dim; g/b are (1, D) and broadcast."""
    mu = jnp.mean(z, axis=-1, keepdims=True)
    var = jnp.mean((z - mu) * (z - mu), axis=-1, keepdims=True)
    return (z - mu) * jax.lax.rsqrt(var + LN_EPS) * g + b


def _mha(q, k, v, wo, bo, bias, *, B, Lq, Lk, H, Dh):
    """Multi-head scaled-dot-product attention + output projection.

    q: (B*Lq, H*Dh) f32, k/v: (B*Lk, H*Dh) f32 (already projected),
    bias: (B, Lq, Lk) precomputed additive f32 (attn_mask + key padding).
    Batched over B with one 3-D einsum per head; no per-batch Python loop and no
    per-(b, h) lane slicing / double concatenation.  Returns (B*Lq, H*Dh) f32.
    """
    scale = 1.0 / math.sqrt(Dh)
    # Leading-dim splits only (Lq/Lk are padded to multiples of 8 -> tile-aligned).
    q3 = q.reshape(B, Lq, H * Dh)
    k3 = k.reshape(B, Lk, H * Dh)
    v3 = v.reshape(B, Lk, H * Dh)
    heads = []
    for h in range(H):                              # short static unroll over heads
        qh = q3[:, :, h * Dh:(h + 1) * Dh].astype(jnp.bfloat16)
        kh = k3[:, :, h * Dh:(h + 1) * Dh].astype(jnp.bfloat16)
        vh = v3[:, :, h * Dh:(h + 1) * Dh].astype(jnp.bfloat16)
        s = jnp.einsum('bqd,bkd->bqk', qh, kh,
                       preferred_element_type=jnp.float32) * scale + bias
        s = s - jnp.max(s, axis=-1, keepdims=True)
        p = jnp.exp(s)
        p = p * pl.reciprocal(jnp.sum(p, axis=-1, keepdims=True), approx=True)
        heads.append(jnp.einsum('bqk,bkd->bqd', p.astype(jnp.bfloat16), vh,
                                preferred_element_type=jnp.float32))
    ctx = jnp.concatenate(heads, axis=-1).reshape(B * Lq, H * Dh)
    return jnp.dot(ctx.astype(jnp.bfloat16), wo,
                   preferred_element_type=jnp.float32) + bo


# ----------------------------- the fused kernel -----------------------------

def _seq2seq_kernel(
    # activations / biases (batch-sharded blocks)
    src_emb_ref, tgt_emb_ref, enc_w_ref, enc_b_ref, tgt_bias_ref, mem_bias_ref,
    # per-layer stacked weights (whole blocks; leading dim = layer)
    sa_wqkv_ref, sa_bqkv_ref, sa_wo_ref, sa_bo_ref,
    ca_wq_ref, ca_bq_ref, ca_wkv_ref, ca_bkv_ref, ca_wo_ref, ca_bo_ref,
    ln1_g_ref, ln1_b_ref, ln2_g_ref, ln2_b_ref, ln3_g_ref, ln3_b_ref,
    w1_ref, b1_ref, w2_ref, b2_ref,
    # final stage
    dn_g_ref, dn_b_ref, fc_w_ref, fc_b_ref,
    # output
    out_ref,
    *, B, Lt, Ls, E, H, L):
    Dh = E // H

    # ---- text encoder projection; memory cached in bf16 (only used as MXU operand) ----
    mem = (jnp.dot(src_emb_ref[...].astype(jnp.bfloat16), enc_w_ref[...],
                   preferred_element_type=jnp.float32)
           + enc_b_ref[...]).astype(jnp.bfloat16)                 # (B*Ls, E) bf16

    x = tgt_emb_ref[...]                                          # (B*Lt, E) f32
    tgt_bias = tgt_bias_ref[...]                                  # (B, Lt, Lt) f32
    mem_bias = mem_bias_ref[...]                                  # (B, Lt, Ls) f32

    for l in range(L):                                            # static unroll over layers
        # ---- self-attention (fused QKV) + residual + LayerNorm ----
        qkv = (jnp.dot(x.astype(jnp.bfloat16), sa_wqkv_ref[l],
                       preferred_element_type=jnp.float32) + sa_bqkv_ref[l])   # (B*Lt, 3E)
        sa = _mha(qkv[:, :E], qkv[:, E:2 * E], qkv[:, 2 * E:],
                  sa_wo_ref[l], sa_bo_ref[l], tgt_bias,
                  B=B, Lq=Lt, Lk=Lt, H=H, Dh=Dh)
        x = _layernorm(x + sa, ln1_g_ref[l], ln1_b_ref[l])

        # ---- cross-attention (fused KV from bf16 memory) + residual + LayerNorm ----
        q = (jnp.dot(x.astype(jnp.bfloat16), ca_wq_ref[l],
                     preferred_element_type=jnp.float32) + ca_bq_ref[l])       # (B*Lt, E)
        kv = (jnp.dot(mem, ca_wkv_ref[l],
                      preferred_element_type=jnp.float32) + ca_bkv_ref[l])     # (B*Ls, 2E)
        ca = _mha(q, kv[:, :E], kv[:, E:],
                  ca_wo_ref[l], ca_bo_ref[l], mem_bias,
                  B=B, Lq=Lt, Lk=Ls, H=H, Dh=Dh)
        x = _layernorm(x + ca, ln2_g_ref[l], ln2_b_ref[l])

        # ---- feed-forward (linear1 -> relu -> linear2) + residual + LayerNorm ----
        h = jnp.maximum(
            jnp.dot(x.astype(jnp.bfloat16), w1_ref[l],
                    preferred_element_type=jnp.float32) + b1_ref[l], 0.0)      # (B*Lt, F)
        ff = (jnp.dot(h.astype(jnp.bfloat16), w2_ref[l],
                      preferred_element_type=jnp.float32) + b2_ref[l])         # (B*Lt, E)
        x = _layernorm(x + ff, ln3_g_ref[l], ln3_b_ref[l])

    # ---- final decoder LayerNorm + fc_out (lane-dense, padded to 128) ----
    z = _layernorm(x, dn_g_ref[...], dn_b_ref[...])
    out_ref[...] = (jnp.dot(z.astype(jnp.bfloat16), fc_w_ref[...],
                            preferred_element_type=jnp.float32) + fc_b_ref[...])


# ----------------------------- forward wrapper -----------------------------

def seq2seq_forward(params, src, tgt, src_mask, tgt_mask, memory_mask,
                    src_key_padding_mask, tgt_key_padding_mask, memory_key_padding_mask,
                    *, nhead, num_unit_tokens, batch_shards=1):
    # src_mask / src_key_padding_mask are unused by the reference forward
    # (text_encoder is called with src only).
    del src_mask, src_key_padding_mask
    B, Lt = tgt.shape
    Ls = src.shape[1]
    E = params["unit_emb"].shape[1]
    L = params["sa_wqkv"].shape[0]
    Npad = params["fc_w"].shape[1]
    S = batch_shards                       # set to 2 on v7x to use both TensorCores
    assert B % S == 0

    # pad sequence dims to sublane multiples so in-kernel reshapes are tile-aligned
    Ltp = _round_up(Lt, 8)
    Lsp = _round_up(Ls, 8)

    # embedding gathers stay in plain JAX (glue)
    src_emb = jnp.take(params["text_emb"], src, axis=0)                    # (B, Ls, E)
    tgt_emb = jnp.take(params["unit_emb"], tgt, axis=0)                    # (B, Lt, E)
    src_emb = jnp.pad(src_emb, ((0, 0), (0, Lsp - Ls), (0, 0))).reshape(B * Lsp, E)
    tgt_emb = jnp.pad(tgt_emb, ((0, 0), (0, Ltp - Lt), (0, 0))).reshape(B * Ltp, E)

    # combined additive biases, precomputed ONCE (attn mask + key padding); padded key
    # columns are masked with NEG_INF, padded query rows are discarded after the call.
    tgt_kpm = jnp.where(tgt_key_padding_mask, NEG_INF, 0.0).astype(jnp.float32)
    mem_kpm = jnp.where(memory_key_padding_mask, NEG_INF, 0.0).astype(jnp.float32)
    tgt_kpm = jnp.pad(tgt_kpm, ((0, 0), (0, Ltp - Lt)), constant_values=NEG_INF)
    mem_kpm = jnp.pad(mem_kpm, ((0, 0), (0, Lsp - Ls)), constant_values=NEG_INF)
    tmask = jnp.pad(tgt_mask.astype(jnp.float32), ((0, Ltp - Lt), (0, Ltp - Lt)))
    mmask = jnp.pad(memory_mask.astype(jnp.float32), ((0, Ltp - Lt), (0, Lsp - Ls)))
    tgt_bias = tmask[None] + tgt_kpm[:, None, :]                           # (B, Ltp, Ltp)
    mem_bias = mmask[None] + mem_kpm[:, None, :]                           # (B, Ltp, Lsp)

    args = [
        src_emb, tgt_emb, params["enc_w"], params["enc_b"], tgt_bias, mem_bias,
        params["sa_wqkv"], params["sa_bqkv"], params["sa_wo"], params["sa_bo"],
        params["ca_wq"], params["ca_bq"], params["ca_wkv"], params["ca_bkv"],
        params["ca_wo"], params["ca_bo"],
        params["ln1_g"], params["ln1_b"], params["ln2_g"], params["ln2_b"],
        params["ln3_g"], params["ln3_b"],
        params["w1"], params["b1"], params["w2"], params["b2"],
        params["dec_norm_g"], params["dec_norm_b"], params["fc_w"], params["fc_b"],
    ]

    in_specs = []
    for idx, a in enumerate(args):
        if idx in (0, 1):       # (B*Lx, E) activations: shard along batch-major rows
            in_specs.append(pl.BlockSpec((a.shape[0] // S, a.shape[1]),
                                         lambda i: (i, 0)))
        elif idx in (4, 5):     # (B, Lq, Lk) biases: shard along batch
            in_specs.append(pl.BlockSpec((B // S,) + a.shape[1:],
                                         lambda i: (i, 0, 0)))
        else:                   # weights: replicated full blocks (same index every step)
            nd = a.ndim
            in_specs.append(pl.BlockSpec(a.shape, lambda i, nd=nd: (0,) * nd))

    logits_pad = pl.pallas_call(
        functools.partial(_seq2seq_kernel,
                          B=B // S, Lt=Ltp, Ls=Lsp, E=E, H=nhead, L=L),
        out_shape=jax.ShapeDtypeStruct((B * Ltp, Npad), jnp.float32),
        grid=(S,),
        in_specs=in_specs,
        out_specs=pl.BlockSpec((B // S * Ltp, Npad), lambda i: (i, 0)),
        compiler_params=pltpu.CompilerParams(
            dimension_semantics=("parallel",)),     # batch shards are independent
    )(*args)

    logits = logits_pad.reshape(B, Ltp, Npad)[:, :Lt, :num_unit_tokens]
    return logits


# ----------------------------- parameter init -----------------------------

def init_params(key, num_text_tokens, num_unit_tokens, emb_size, num_decoder_layers):
    E, F, L = emb_size, FFN_DIM, num_decoder_layers
    keys = iter(jax.random.split(key, 32))

    def nrm(shape, s=0.05, dtype=jnp.bfloat16):
        return (jax.random.normal(next(keys), shape, dtype=jnp.float32) * s).astype(dtype)

    npad = ((num_unit_tokens + 127) // 128) * 128
    fc_w_raw = jax.random.normal(next(keys), (E, num_unit_tokens), jnp.float32) * 0.05
    fc_w = jnp.pad(fc_w_raw, ((0, 0), (0, npad - num_unit_tokens))).astype(jnp.bfloat16)

    zeros = lambda shape: jnp.zeros(shape, jnp.float32)
    ones = lambda shape: jnp.ones(shape, jnp.float32)

    return {
        "text_emb": nrm((num_text_tokens, E), 1.0, jnp.float32),
        "unit_emb": nrm((num_unit_tokens, E), 1.0, jnp.float32),
        "enc_w": nrm((E, E)), "enc_b": zeros((1, E)),
        # per-layer stacked weights (bf16) / biases & LN params (f32)
        "sa_wqkv": nrm((L, E, 3 * E)), "sa_bqkv": zeros((L, 1, 3 * E)),
        "sa_wo": nrm((L, E, E)), "sa_bo": zeros((L, 1, E)),
        "ca_wq": nrm((L, E, E)), "ca_bq": zeros((L, 1, E)),
        "ca_wkv": nrm((L, E, 2 * E)), "ca_bkv": zeros((L, 1, 2 * E)),
        "ca_wo": nrm((L, E, E)), "ca_bo": zeros((L, 1, E)),
        "ln1_g": ones((L, 1, E)), "ln1_b": zeros((L, 1, E)),
        "ln2_g": ones((L, 1, E)), "ln2_b": zeros((L, 1, E)),
        "ln3_g": ones((L, 1, E)), "ln3_b": zeros((L, 1, E)),
        "w1": nrm((L, E, F)), "b1": zeros((L, 1, F)),
        "w2": nrm((L, F, E)), "b2": zeros((L, 1, E)),
        "dec_norm_g": ones((1, E)), "dec_norm_b": zeros((1, E)),
        "fc_w": fc_w, "fc_b": zeros((1, npad)),
    }


# ----------------------------- main -----------------------------

if __name__ == "__main__":
    num_text_tokens = 50
    num_unit_tokens = 40
    emb_size = 32
    nhead = 4
    num_decoder_layers = 2
    B, Ls, Lt = 2, 12, 8

    key = jax.random.PRNGKey(0)
    kp, ks, kt = jax.random.split(key, 3)
    params = init_params(kp, num_text_tokens, num_unit_tokens, emb_size, num_decoder_layers)

    src = jax.random.randint(ks, (B, Ls), 0, num_text_tokens, dtype=jnp.int32)
    tgt = jax.random.randint(kt, (B, Lt), 0, num_unit_tokens, dtype=jnp.int32)

    # masks (nn.Transformer conventions): float additive attn masks, bool key-padding masks
    src_mask = jnp.zeros((Ls, Ls), jnp.float32)                                    # unused by forward
    causal = jnp.where(jnp.arange(Lt)[None, :] > jnp.arange(Lt)[:, None],
                       NEG_INF, 0.0).astype(jnp.float32)
    tgt_mask = causal                                                              # (Lt, Lt)
    memory_mask = jnp.zeros((Lt, Ls), jnp.float32)                                 # (Lt, Ls)
    src_key_padding_mask = jnp.zeros((B, Ls), dtype=bool)                          # unused by forward
    tgt_key_padding_mask = jnp.arange(Lt)[None, :] >= jnp.array([[Lt], [Lt - 2]])  # pad tail of batch 1
    memory_key_padding_mask = jnp.arange(Ls)[None, :] >= jnp.array([[Ls], [Ls - 3]])

    # batch_shards=1 everywhere; set batch_shards=2 on v7x to split the batch across
    # its two TensorCores (no-op benefit on single-TC v5e/v6e).
    fwd = jax.jit(functools.partial(seq2seq_forward, nhead=nhead,
                                    num_unit_tokens=num_unit_tokens, batch_shards=1))
    out = fwd(params, src, tgt, src_mask, tgt_mask, memory_mask,
              src_key_padding_mask, tgt_key_padding_mask, memory_key_padding_mask)
    out = jax.block_until_ready(out)

    assert out.shape == (B, Lt, num_unit_tokens), out.shape
    assert bool(jnp.all(jnp.isfinite(out)))
    print("KERNEL_OK")
</pallas_src>

<mosaic_0001>
module attributes {stable_mosaic.version = 11 : i64} {
  func.func @_seq2seq_kernel(%arg0: i32, %arg1: memref<32x32xf32, #tpu.memory_space<vmem>>, %arg2: memref<16x32xf32, #tpu.memory_space<vmem>>, %arg3: memref<32x32xbf16, #tpu.memory_space<vmem>>, %arg4: memref<1x32xf32, #tpu.memory_space<vmem>>, %arg5: memref<2x8x8xf32, #tpu.memory_space<vmem>>, %arg6: memref<2x8x16xf32, #tpu.memory_space<vmem>>, %arg7: memref<2x32x96xbf16, #tpu.memory_space<vmem>>, %arg8: memref<2x1x96xf32, #tpu.memory_space<vmem>>, %arg9: memref<2x32x32xbf16, #tpu.memory_space<vmem>>, %arg10: memref<2x1x32xf32, #tpu.memory_space<vmem>>, %arg11: memref<2x32x32xbf16, #tpu.memory_space<vmem>>, %arg12: memref<2x1x32xf32, #tpu.memory_space<vmem>>, %arg13: memref<2x32x64xbf16, #tpu.memory_space<vmem>>, %arg14: memref<2x1x64xf32, #tpu.memory_space<vmem>>, %arg15: memref<2x32x32xbf16, #tpu.memory_space<vmem>>, %arg16: memref<2x1x32xf32, #tpu.memory_space<vmem>>, %arg17: memref<2x1x32xf32, #tpu.memory_space<vmem>>, %arg18: memref<2x1x32xf32, #tpu.memory_space<vmem>>, %arg19: memref<2x1x32xf32, #tpu.memory_space<vmem>>, %arg20: memref<2x1x32xf32, #tpu.memory_space<vmem>>, %arg21: memref<2x1x32xf32, #tpu.memory_space<vmem>>, %arg22: memref<2x1x32xf32, #tpu.memory_space<vmem>>, %arg23: memref<2x32x2048xbf16, #tpu.memory_space<vmem>>, %arg24: memref<2x1x2048xf32, #tpu.memory_space<vmem>>, %arg25: memref<2x2048x32xbf16, #tpu.memory_space<vmem>>, %arg26: memref<2x1x32xf32, #tpu.memory_space<vmem>>, %arg27: memref<1x32xf32, #tpu.memory_space<vmem>>, %arg28: memref<1x32xf32, #tpu.memory_space<vmem>>, %arg29: memref<32x128xbf16, #tpu.memory_space<vmem>>, %arg30: memref<1x128xf32, #tpu.memory_space<vmem>>, %arg31: memref<16x128xf32, #tpu.memory_space<vmem>>) attributes {dimension_semantics = [#tpu.dimension_semantics<parallel>], iteration_bounds = array<i64: 1>, scalar_prefetch = 0 : i64, scratch_operands = 0 : i64, tpu.core_type = #tpu.core_type<tc>, window_params = [{transform_indices = @transform_0, window_bounds = array<i64: 32, 32>}, {transform_indices = @transform_1, window_bounds = array<i64: 16, 32>}, {pipeline_mode = #tpu.pipeline_mode<synchronous>, transform_indices = @transform_2, window_bounds = array<i64: 32, 32>}, {pipeline_mode = #tpu.pipeline_mode<synchronous>, transform_indices = @transform_3, window_bounds = array<i64: 1, 32>}, {transform_indices = @transform_4, window_bounds = array<i64: 2, 8, 8>}, {transform_indices = @transform_5, window_bounds = array<i64: 2, 8, 16>}, {pipeline_mode = #tpu.pipeline_mode<synchronous>, transform_indices = @transform_6, window_bounds = array<i64: 2, 32, 96>}, {pipeline_mode = #tpu.pipeline_mode<synchronous>, transform_indices = @transform_7, window_bounds = array<i64: 2, 1, 96>}, {pipeline_mode = #tpu.pipeline_mode<synchronous>, transform_indices = @transform_8, window_bounds = array<i64: 2, 32, 32>}, {pipeline_mode = #tpu.pipeline_mode<synchronous>, transform_indices = @transform_9, window_bounds = array<i64: 2, 1, 32>}, {pipeline_mode = #tpu.pipeline_mode<synchronous>, transform_indices = @transform_10, window_bounds = array<i64: 2, 32, 32>}, {pipeline_mode = #tpu.pipeline_mode<synchronous>, transform_indices = @transform_11, window_bounds = array<i64: 2, 1, 32>}, {pipeline_mode = #tpu.pipeline_mode<synchronous>, transform_indices = @transform_12, window_bounds = array<i64: 2, 32, 64>}, {pipeline_mode = #tpu.pipeline_mode<synchronous>, transform_indices = @transform_13, window_bounds = array<i64: 2, 1, 64>}, {pipeline_mode = #tpu.pipeline_mode<synchronous>, transform_indices = @transform_14, window_bounds = array<i64: 2, 32, 32>}, {pipeline_mode = #tpu.pipeline_mode<synchronous>, transform_indices = @transform_15, window_bounds = array<i64: 2, 1, 32>}, {pipeline_mode = #tpu.pipeline_mode<synchronous>, transform_indices = @transform_16, window_bounds = array<i64: 2, 1, 32>}, {pipeline_mode = #tpu.pipeline_mode<synchronous>, transform_indices = @transform_17, window_bounds = array<i64: 2, 1, 32>}, {pipeline_mode = #tpu.pipeline_mode<synchronous>, transform_indices = @transform_18, window_bounds = array<i64: 2, 1, 32>}, {pipeline_mode = #tpu.pipeline_mode<synchronous>, transform_indices = @transform_19, window_bounds = array<i64: 2, 1, 32>}, {pipeline_mode = #tpu.pipeline_mode<synchronous>, transform_indices = @transform_20, window_bounds = array<i64: 2, 1, 32>}, {pipeline_mode = #tpu.pipeline_mode<synchronous>, transform_indices = @transform_21, window_bounds = array<i64: 2, 1, 32>}, {pipeline_mode = #tpu.pipeline_mode<synchronous>, transform_indices = @transform_22, window_bounds = array<i64: 2, 32, 2048>}, {pipeline_mode = #tpu.pipeline_mode<synchronous>, transform_indices = @transform_23, window_bounds = array<i64: 2, 1, 2048>}, {pipeline_mode = #tpu.pipeline_mode<synchronous>, transform_indices = @transform_24, window_bounds = array<i64: 2, 2048, 32>}, {pipeline_mode = #tpu.pipeline_mode<synchronous>, transform_indices = @transform_25, window_bounds = array<i64: 2, 1, 32>}, {pipeline_mode = #tpu.pipeline_mode<synchronous>, transform_indices = @transform_26, window_bounds = array<i64: 1, 32>}, {pipeline_mode = #tpu.pipeline_mode<synchronous>, transform_indices = @transform_27, window_bounds = array<i64: 1, 32>}, {pipeline_mode = #tpu.pipeline_mode<synchronous>, transform_indices = @transform_28, window_bounds = array<i64: 32, 128>}, {pipeline_mode = #tpu.pipeline_mode<synchronous>, transform_indices = @transform_29, window_bounds = array<i64: 1, 128>}, {transform_indices = @transform_30, window_bounds = array<i64: 16, 128>}]} {
    %c0 = arith.constant 0 : index
    %c0_0 = arith.constant 0 : index
    %0 = vector.load %arg1[%c0, %c0_0] : memref<32x32xf32, #tpu.memory_space<vmem>>, vector<32x32xf32>
    %1 = arith.truncf %0 : vector<32x32xf32> to vector<32x32xbf16>
    %c0_1 = arith.constant 0 : index
    %c0_2 = arith.constant 0 : index
    %2 = vector.load %arg3[%c0_1, %c0_2] : memref<32x32xbf16, #tpu.memory_space<vmem>>, vector<32x32xbf16>
    %cst = arith.constant dense<0.000000e+00> : vector<32x32xf32>
    %3 = tpu.matmul %1, %2, %cst {dimension_numbers = #tpu.dot_dimension_numbers<[1], [0], [0], [1], [0, 0, 1, 1], [], []>} : vector<32x32xbf16>, vector<32x32xbf16>, vector<32x32xf32> -> vector<32x32xf32>
    %c0_3 = arith.constant 0 : index
    %c0_4 = arith.constant 0 : index
    %4 = vector.load %arg4[%c0_3, %c0_4] : memref<1x32xf32, #tpu.memory_space<vmem>>, vector<1x32xf32>
    %5 = vector.broadcast %4 : vector<1x32xf32> to vector<32x32xf32>
    %6 = arith.addf %3, %5 : vector<32x32xf32>
    %7 = arith.truncf %6 : vector<32x32xf32> to vector<32x32xbf16>
    %c0_5 = arith.constant 0 : index
    %c0_6 = arith.constant 0 : index
    %8 = vector.load %arg2[%c0_5, %c0_6] : memref<16x32xf32, #tpu.memory_space<vmem>>, vector<16x32xf32>
    %c0_7 = arith.constant 0 : index
    %c0_8 = arith.constant 0 : index
    %c0_9 = arith.constant 0 : index
    %9 = vector.load %arg5[%c0_7, %c0_8, %c0_9] : memref<2x8x8xf32, #tpu.memory_space<vmem>>, vector<2x8x8xf32>
    %c0_10 = arith.constant 0 : index
    %c0_11 = arith.constant 0 : index
    %c0_12 = arith.constant 0 : index
    %10 = vector.load %arg6[%c0_10, %c0_11, %c0_12] : memref<2x8x16xf32, #tpu.memory_space<vmem>>, vector<2x8x16xf32>
    %11 = arith.truncf %8 : vector<16x32xf32> to vector<16x32xbf16>
    %c0_13 = arith.constant 0 : index
    %c0_14 = arith.constant 0 : index
    %c0_15 = arith.constant 0 : index
    %12 = vector.load %arg7[%c0_13, %c0_14, %c0_15] : memref<2x32x96xbf16, #tpu.memory_space<vmem>>, vector<1x32x96xbf16>
    %13 = vector.shape_cast %12 : vector<1x32x96xbf16> to vector<32x96xbf16>
    %cst_16 = arith.constant dense<0.000000e+00> : vector<16x96xf32>
    %14 = tpu.matmul %11, %13, %cst_16 {dimension_numbers = #tpu.dot_dimension_numbers<[1], [0], [0], [1], [0, 0, 1, 1], [], []>} : vector<16x32xbf16>, vector<32x96xbf16>, vector<16x96xf32> -> vector<16x96xf32>
    %c0_17 = arith.constant 0 : index
    %c0_18 = arith.constant 0 : index
    %c0_19 = arith.constant 0 : index
    %15 = vector.load %arg8[%c0_17, %c0_18, %c0_19] : memref<2x1x96xf32, #tpu.memory_space<vmem>>, vector<1x1x96xf32>
    %16 = vector.shape_cast %15 : vector<1x1x96xf32> to vector<1x96xf32>
    %17 = vector.broadcast %16 : vector<1x96xf32> to vector<16x96xf32>
    %18 = arith.addf %14, %17 : vector<16x96xf32>
    %19 = vector.extract_strided_slice %18 {offsets = [0, 0], sizes = [16, 32], strides = [1, 1]} : vector<16x96xf32> to vector<16x32xf32>
    %20 = vector.extract_strided_slice %18 {offsets = [0, 32], sizes = [16, 32], strides = [1, 1]} : vector<16x96xf32> to vector<16x32xf32>
    %21 = vector.extract_strided_slice %18 {offsets = [0, 64], sizes = [16, 32], strides = [1, 1]} : vector<16x96xf32> to vector<16x32xf32>
    %c0_20 = arith.constant 0 : index
    %c0_21 = arith.constant 0 : index
    %c0_22 = arith.constant 0 : index
    %22 = vector.load %arg9[%c0_20, %c0_21, %c0_22] : memref<2x32x32xbf16, #tpu.memory_space<vmem>>, vector<1x32x32xbf16>
    %23 = vector.shape_cast %22 : vector<1x32x32xbf16> to vector<32x32xbf16>
    %c0_23 = arith.constant 0 : index
    %c0_24 = arith.constant 0 : index
    %c0_25 = arith.constant 0 : index
    %24 = vector.load %arg10[%c0_23, %c0_24, %c0_25] : memref<2x1x32xf32, #tpu.memory_space<vmem>>, vector<1x1x32xf32>
    %25 = vector.shape_cast %24 : vector<1x1x32xf32> to vector<1x32xf32>
    %26 = vector.shape_cast %19 : vector<16x32xf32> to vector<2x8x32xf32>
    %27 = vector.shape_cast %20 : vector<16x32xf32> to vector<2x8x32xf32>
    %28 = vector.shape_cast %21 : vector<16x32xf32> to vector<2x8x32xf32>
    %29 = vector.extract_strided_slice %26 {offsets = [0, 0, 0], sizes = [2, 8, 8], strides = [1, 1, 1]} : vector<2x8x32xf32> to vector<2x8x8xf32>
    %30 = arith.truncf %29 : vector<2x8x8xf32> to vector<2x8x8xbf16>
    %31 = vector.extract_strided_slice %27 {offsets = [0, 0, 0], sizes = [2, 8, 8], strides = [1, 1, 1]} : vector<2x8x32xf32> to vector<2x8x8xf32>
    %32 = arith.truncf %31 : vector<2x8x8xf32> to vector<2x8x8xbf16>
    %33 = vector.extract_strided_slice %28 {offsets = [0, 0, 0], sizes = [2, 8, 8], strides = [1, 1, 1]} : vector<2x8x32xf32> to vector<2x8x8xf32>
    %34 = arith.truncf %33 : vector<2x8x8xf32> to vector<2x8x8xbf16>
    "tpu.trace_start"() <{level = 10 : i32, message = "bqd,bkd->bqk"}> : () -> ()
    %cst_26 = arith.constant dense<0.000000e+00> : vector<2x8x8xf32>
    %35 = tpu.matmul %30, %32, %cst_26 {dimension_numbers = #tpu.dot_dimension_numbers<[2], [2], [1], [1], [0, 0, 0, 1, 1, 1], [0], [0]>} : vector<2x8x8xbf16>, vector<2x8x8xbf16>, vector<2x8x8xf32> -> vector<2x8x8xf32>
    "tpu.trace_stop"() : () -> ()
    %cst_27 = arith.constant 0.353553385 : f32
    %36 = vector.broadcast %cst_27 : f32 to vector<2x8x8xf32>
    %37 = arith.mulf %35, %36 : vector<2x8x8xf32>
    %38 = arith.addf %37, %9 : vector<2x8x8xf32>
    %cst_28 = arith.constant dense<0xFF800000> : vector<2x8xf32>
    %39 = vector.multi_reduction <maximumf>, %38, %cst_28 [2] : vector<2x8x8xf32> to vector<2x8xf32>
    %40 = vector.shape_cast %39 : vector<2x8xf32> to vector<2x8x1xf32>
    %41 = vector.broadcast %40 : vector<2x8x1xf32> to vector<2x8x8xf32>
    %42 = arith.subf %38, %41 : vector<2x8x8xf32>
    %43 = math.exp %42 : vector<2x8x8xf32>
    %cst_29 = arith.constant dense<0.000000e+00> : vector<2x8xf32>
    %44 = vector.multi_reduction <add>, %43, %cst_29 [2] : vector<2x8x8xf32> to vector<2x8xf32>
    %45 = vector.shape_cast %44 : vector<2x8xf32> to vector<2x8x1xf32>
    %46 = tpu.reciprocal %45 {approx = true} : vector<2x8x1xf32> -> vector<2x8x1xf32>
    %47 = vector.broadcast %46 : vector<2x8x1xf32> to vector<2x8x8xf32>
    %48 = arith.mulf %43, %47 : vector<2x8x8xf32>
    %49 = arith.truncf %48 : vector<2x8x8xf32> to vector<2x8x8xbf16>
    "tpu.trace_start"() <{level = 10 : i32, message = "bqk,bkd->bqd"}> : () -> ()
    %cst_30 = arith.constant dense<0.000000e+00> : vector<2x8x8xf32>
    %50 = tpu.matmul %49, %34, %cst_30 {dimension_numbers = #tpu.dot_dimension_numbers<[2], [1], [1], [2], [0, 0, 0, 1, 1, 2], [0], [0]>} : vector<2x8x8xbf16>, vector<2x8x8xbf16>, vector<2x8x8xf32> -> vector<2x8x8xf32>
    "tpu.trace_stop"() : () -> ()
    %51 = vector.extract_strided_slice %26 {offsets = [0, 0, 8], sizes = [2, 8, 8], strides = [1, 1, 1]} : vector<2x8x32xf32> to vector<2x8x8xf32>
    %52 = arith.truncf %51 : vector<2x8x8xf32> to vector<2x8x8xbf16>
    %53 = vector.extract_strided_slice %27 {offsets = [0, 0, 8], sizes = [2, 8, 8], strides = [1, 1, 1]} : vector<2x8x32xf32> to vector<2x8x8xf32>
    %54 = arith.truncf %53 : vector<2x8x8xf32> to vector<2x8x8xbf16>
    %55 = vector.extract_strided_slice %28 {offsets = [0, 0, 8], sizes = [2, 8, 8], strides = [1, 1, 1]} : vector<2x8x32xf32> to vector<2x8x8xf32>
    %56 = arith.truncf %55 : vector<2x8x8xf32> to vector<2x8x8xbf16>
    "tpu.trace_start"() <{level = 10 : i32, message = "bqd,bkd->bqk"}> : () -> ()
    %cst_31 = arith.constant dense<0.000000e+00> : vector<2x8x8xf32>
    %57 = tpu.matmul %52, %54, %cst_31 {dimension_numbers = #tpu.dot_dimension_numbers<[2], [2], [1], [1], [0, 0, 0, 1, 1, 1], [0], [0]>} : vector<2x8x8xbf16>, vector<2x8x8xbf16>, vector<2x8x8xf32> -> vector<2x8x8xf32>
    "tpu.trace_stop"() : () -> ()
    %cst_32 = arith.constant 0.353553385 : f32
    %58 = vector.broadcast %cst_32 : f32 to vector<2x8x8xf32>
    %59 = arith.mulf %57, %58 : vector<2x8x8xf32>
    %60 = arith.addf %59, %9 : vector<2x8x8xf32>
    %cst_33 = arith.constant dense<0xFF800000> : vector<2x8xf32>
    %61 = vector.multi_reduction <maximumf>, %60, %cst_33 [2] : vector<2x8x8xf32> to vector<2x8xf32>
    %62 = vector.shape_cast %61 : vector<2x8xf32> to vector<2x8x1xf32>
    %63 = vector.broadcast %62 : vector<2x8x1xf32> to vector<2x8x8xf32>
    %64 = arith.subf %60, %63 : vector<2x8x8xf32>
    %65 = math.exp %64 : vector<2x8x8xf32>
    %cst_34 = arith.constant dense<0.000000e+00> : vector<2x8xf32>
    %66 = vector.multi_reduction <add>, %65, %cst_34 [2] : vector<2x8x8xf32> to vector<2x8xf32>
    %67 = vector.shape_cast %66 : vector<2x8xf32> to vector<2x8x1xf32>
    %68 = tpu.reciprocal %67 {approx = true} : vector<2x8x1xf32> -> vector<2x8x1xf32>
    %69 = vector.broadcast %68 : vector<2x8x1xf32> to vector<2x8x8xf32>
    %70 = arith.mulf %65, %69 : vector<2x8x8xf32>
    %71 = arith.truncf %70 : vector<2x8x8xf32> to vector<2x8x8xbf16>
    "tpu.trace_start"() <{level = 10 : i32, message = "bqk,bkd->bqd"}> : () -> ()
    %cst_35 = arith.constant dense<0.000000e+00> : vector<2x8x8xf32>
    %72 = tpu.matmul %71, %56, %cst_35 {dimension_numbers = #tpu.dot_dimension_numbers<[2], [1], [1], [2], [0, 0, 0, 1, 1, 2], [0], [0]>} : vector<2x8x8xbf16>, vector<2x8x8xbf16>, vector<2x8x8xf32> -> vector<2x8x8xf32>
    "tpu.trace_stop"() : () -> ()
    %73 = vector.extract_strided_slice %26 {offsets = [0, 0, 16], sizes = [2, 8, 8], strides = [1, 1, 1]} : vector<2x8x32xf32> to vector<2x8x8xf32>
    %74 = arith.truncf %73 : vector<2x8x8xf32> to vector<2x8x8xbf16>
    %75 = vector.extract_strided_slice %27 {offsets = [0, 0, 16], sizes = [2, 8, 8], strides = [1, 1, 1]} : vector<2x8x32xf32> to vector<2x8x8xf32>
    %76 = arith.truncf %75 : vector<2x8x8xf32> to vector<2x8x8xbf16>
    %77 = vector.extract_strided_slice %28 {offsets = [0, 0, 16], sizes = [2, 8, 8], strides = [1, 1, 1]} : vector<2x8x32xf32> to vector<2x8x8xf32>
    %78 = arith.truncf %77 : vector<2x8x8xf32> to vector<2x8x8xbf16>
    "tpu.trace_start"() <{level = 10 : i32, message = "bqd,bkd->bqk"}> : () -> ()
    %cst_36 = arith.constant dense<0.000000e+00> : vector<2x8x8xf32>
    %79 = tpu.matmul %74, %76, %cst_36 {dimension_numbers = #tpu.dot_dimension_numbers<[2], [2], [1], [1], [0, 0, 0, 1, 1, 1], [0], [0]>} : vector<2x8x8xbf16>, vector<2x8x8xbf16>, vector<2x8x8xf32> -> vector<2x8x8xf32>
    "tpu.trace_stop"() : () -> ()
    %cst_37 = arith.constant 0.353553385 : f32
    %80 = vector.broadcast %cst_37 : f32 to vector<2x8x8xf32>
    %81 = arith.mulf %79, %80 : vector<2x8x8xf32>
    %82 = arith.addf %81, %9 : vector<2x8x8xf32>
    %cst_38 = arith.constant dense<0xFF800000> : vector<2x8xf32>
    %83 = vector.multi_reduction <maximumf>, %82, %cst_38 [2] : vector<2x8x8xf32> to vector<2x8xf32>
    %84 = vector.shape_cast %83 : vector<2x8xf32> to vector<2x8x1xf32>
    %85 = vector.broadcast %84 : vector<2x8x1xf32> to vector<2x8x8xf32>
    %86 = arith.subf %82, %85 : vector<2x8x8xf32>
    %87 = math.exp %86 : vector<2x8x8xf32>
    %cst_39 = arith.constant dense<0.000000e+00> : vector<2x8xf32>
    %88 = vector.multi_reduction <add>, %87, %cst_39 [2] : vector<2x8x8xf32> to vector<2x8xf32>
    %89 = vector.shape_cast %88 : vector<2x8xf32> to vector<2x8x1xf32>
    %90 = tpu.reciprocal %89 {approx = true} : vector<2x8x1xf32> -> vector<2x8x1xf32>
    %91 = vector.broadcast %90 : vector<2x8x1xf32> to vector<2x8x8xf32>
    %92 = arith.mulf %87, %91 : vector<2x8x8xf32>
    %93 = arith.truncf %92 : vector<2x8x8xf32> to vector<2x8x8xbf16>
    "tpu.trace_start"() <{level = 10 : i32, message = "bqk,bkd->bqd"}> : () -> ()
    %cst_40 = arith.constant dense<0.000000e+00> : vector<2x8x8xf32>
    %94 = tpu.matmul %93, %78, %cst_40 {dimension_numbers = #tpu.dot_dimension_numbers<[2], [1], [1], [2], [0, 0, 0, 1, 1, 2], [0], [0]>} : vector<2x8x8xbf16>, vector<2x8x8xbf16>, vector<2x8x8xf32> -> vector<2x8x8xf32>
    "tpu.trace_stop"() : () -> ()
    %95 = vector.extract_strided_slice %26 {offsets = [0, 0, 24], sizes = [2, 8, 8], strides = [1, 1, 1]} : vector<2x8x32xf32> to vector<2x8x8xf32>
    %96 = arith.truncf %95 : vector<2x8x8xf32> to vector<2x8x8xbf16>
    %97 = vector.extract_strided_slice %27 {offsets = [0, 0, 24], sizes = [2, 8, 8], strides = [1, 1, 1]} : vector<2x8x32xf32> to vector<2x8x8xf32>
    %98 = arith.truncf %97 : vector<2x8x8xf32> to vector<2x8x8xbf16>
    %99 = vector.extract_strided_slice %28 {offsets = [0, 0, 24], sizes = [2, 8, 8], strides = [1, 1, 1]} : vector<2x8x32xf32> to vector<2x8x8xf32>
    %100 = arith.truncf %99 : vector<2x8x8xf32> to vector<2x8x8xbf16>
    "tpu.trace_start"() <{level = 10 : i32, message = "bqd,bkd->bqk"}> : () -> ()
    %cst_41 = arith.constant dense<0.000000e+00> : vector<2x8x8xf32>
    %101 = tpu.matmul %96, %98, %cst_41 {dimension_numbers = #tpu.dot_dimension_numbers<[2], [2], [1], [1], [0, 0, 0, 1, 1, 1], [0], [0]>} : vector<2x8x8xbf16>, vector<2x8x8xbf16>, vector<2x8x8xf32> -> vector<2x8x8xf32>
    "tpu.trace_stop"() : () -> ()
    %cst_42 = arith.constant 0.353553385 : f32
    %102 = vector.broadcast %cst_42 : f32 to vector<2x8x8xf32>
    %103 = arith.mulf %101, %102 : vector<2x8x8xf32>
    %104 = arith.addf %103, %9 : vector<2x8x8xf32>
    %cst_43 = arith.constant dense<0xFF800000> : vector<2x8xf32>
    %105 = vector.multi_reduction <maximumf>, %104, %cst_43 [2] : vector<2x8x8xf32> to vector<2x8xf32>
    %106 = vector.shape_cast %105 : vector<2x8xf32> to vector<2x8x1xf32>
    %107 = vector.broadcast %106 : vector<2x8x1xf32> to vector<2x8x8xf32>
    %108 = arith.subf %104, %107 : vector<2x8x8xf32>
    %109 = math.exp %108 : vector<2x8x8xf32>
    %cst_44 = arith.constant dense<0.000000e+00> : vector<2x8xf32>
    %110 = vector.multi_reduction <add>, %109, %cst_44 [2] : vector<2x8x8xf32> to vector<2x8xf32>
    %111 = vector.shape_cast %110 : vector<2x8xf32> to vector<2x8x1xf32>
    %112 = tpu.reciprocal %111 {approx = true} : vector<2x8x1xf32> -> vector<2x8x1xf32>
    %113 = vector.broadcast %112 : vector<2x8x1xf32> to vector<2x8x8xf32>
    %114 = arith.mulf %109, %113 : vector<2x8x8xf32>
    %115 = arith.truncf %114 : vector<2x8x8xf32> to vector<2x8x8xbf16>
    "tpu.trace_start"() <{level = 10 : i32, message = "bqk,bkd->bqd"}> : () -> ()
    %cst_45 = arith.constant dense<0.000000e+00> : vector<2x8x8xf32>
    %116 = tpu.matmul %115, %100, %cst_45 {dimension_numbers = #tpu.dot_dimension_numbers<[2], [1], [1], [2], [0, 0, 0, 1, 1, 2], [0], [0]>} : vector<2x8x8xbf16>, vector<2x8x8xbf16>, vector<2x8x8xf32> -> vector<2x8x8xf32>
    "tpu.trace_stop"() : () -> ()
    %117 = tpu.concatenate %50, %72, %94, %116 in 2 : vector<2x8x8xf32>, vector<2x8x8xf32>, vector<2x8x8xf32>, vector<2x8x8xf32> -> vector<2x8x32xf32>
    %118 = vector.shape_cast %117 : vector<2x8x32xf32> to vector<16x32xf32>
    %119 = arith.truncf %118 : vector<16x32xf32> to vector<16x32xbf16>
    %cst_46 = arith.constant dense<0.000000e+00> : vector<16x32xf32>
    %120 = tpu.matmul %119, %23, %cst_46 {dimension_numbers = #tpu.dot_dimension_numbers<[1], [0], [0], [1], [0, 0, 1, 1], [], []>} : vector<16x32xbf16>, vector<32x32xbf16>, vector<16x32xf32> -> vector<16x32xf32>
    %121 = vector.broadcast %25 : vector<1x32xf32> to vector<16x32xf32>
    %122 = arith.addf %120, %121 : vector<16x32xf32>
    %123 = arith.addf %8, %122 : vector<16x32xf32>
    %c0_47 = arith.constant 0 : index
    %c0_48 = arith.constant 0 : index
    %c0_49 = arith.constant 0 : index
    %124 = vector.load %arg17[%c0_47, %c0_48, %c0_49] : memref<2x1x32xf32, #tpu.memory_space<vmem>>, vector<1x1x32xf32>
    %125 = vector.shape_cast %124 : vector<1x1x32xf32> to vector<1x32xf32>
    %c0_50 = arith.constant 0 : index
    %c0_51 = arith.constant 0 : index
    %c0_52 = arith.constant 0 : index
    %126 = vector.load %arg18[%c0_50, %c0_51, %c0_52] : memref<2x1x32xf32, #tpu.memory_space<vmem>>, vector<1x1x32xf32>
    %127 = vector.shape_cast %126 : vector<1x1x32xf32> to vector<1x32xf32>
    %cst_53 = arith.constant dense<0.000000e+00> : vector<16xf32>
    %128 = vector.multi_reduction <add>, %123, %cst_53 [1] : vector<16x32xf32> to vector<16xf32>
    %129 = vector.shape_cast %128 : vector<16xf32> to vector<16x1xf32>
    %cst_54 = arith.constant 3.200000e+01 : f32
    %130 = vector.broadcast %cst_54 : f32 to vector<16x1xf32>
    %131 = arith.divf %129, %130 : vector<16x1xf32>
    %132 = vector.broadcast %131 : vector<16x1xf32> to vector<16x32xf32>
    %133 = arith.subf %123, %132 : vector<16x32xf32>
    %134 = vector.broadcast %131 : vector<16x1xf32> to vector<16x32xf32>
    %135 = arith.subf %123, %134 : vector<16x32xf32>
    %136 = arith.mulf %133, %135 : vector<16x32xf32>
    %cst_55 = arith.constant dense<0.000000e+00> : vector<16xf32>
    %137 = vector.multi_reduction <add>, %136, %cst_55 [1] : vector<16x32xf32> to vector<16xf32>
    %138 = vector.shape_cast %137 : vector<16xf32> to vector<16x1xf32>
    %cst_56 = arith.constant 3.200000e+01 : f32
    %139 = vector.broadcast %cst_56 : f32 to vector<16x1xf32>
    %140 = arith.divf %138, %139 : vector<16x1xf32>
    %141 = vector.broadcast %131 : vector<16x1xf32> to vector<16x32xf32>
    %142 = arith.subf %123, %141 : vector<16x32xf32>
    %cst_57 = arith.constant 9.99999974E-6 : f32
    %143 = vector.broadcast %cst_57 : f32 to vector<16x1xf32>
    %144 = arith.addf %140, %143 : vector<16x1xf32>
    %145 = math.rsqrt %144 : vector<16x1xf32>
    %146 = vector.broadcast %145 : vector<16x1xf32> to vector<16x32xf32>
    %147 = arith.mulf %142, %146 : vector<16x32xf32>
    %148 = vector.broadcast %125 : vector<1x32xf32> to vector<16x32xf32>
    %149 = arith.mulf %147, %148 : vector<16x32xf32>
    %150 = vector.broadcast %127 : vector<1x32xf32> to vector<16x32xf32>
    %151 = arith.addf %149, %150 : vector<16x32xf32>
    %152 = arith.truncf %151 : vector<16x32xf32> to vector<16x32xbf16>
    %c0_58 = arith.constant 0 : index
    %c0_59 = arith.constant 0 : index
    %c0_60 = arith.constant 0 : index
    %153 = vector.load %arg11[%c0_58, %c0_59, %c0_60] : memref<2x32x32xbf16, #tpu.memory_space<vmem>>, vector<1x32x32xbf16>
    %154 = vector.shape_cast %153 : vector<1x32x32xbf16> to vector<32x32xbf16>
    %cst_61 = arith.constant dense<0.000000e+00> : vector<16x32xf32>
    %155 = tpu.matmul %152, %154, %cst_61 {dimension_numbers = #tpu.dot_dimension_numbers<[1], [0], [0], [1], [0, 0, 1, 1], [], []>} : vector<16x32xbf16>, vector<32x32xbf16>, vector<16x32xf32> -> vector<16x32xf32>
    %c0_62 = arith.constant 0 : index
    %c0_63 = arith.constant 0 : index
    %c0_64 = arith.constant 0 : index
    %156 = vector.load %arg12[%c0_62, %c0_63, %c0_64] : memref<2x1x32xf32, #tpu.memory_space<vmem>>, vector<1x1x32xf32>
    %157 = vector.shape_cast %156 : vector<1x1x32xf32> to vector<1x32xf32>
    %158 = vector.broadcast %157 : vector<1x32xf32> to vector<16x32xf32>
    %159 = arith.addf %155, %158 : vector<16x32xf32>
    %c0_65 = arith.constant 0 : index
    %c0_66 = arith.constant 0 : index
    %c0_67 = arith.constant 0 : index
    %160 = vector.load %arg13[%c0_65, %c0_66, %c0_67] : memref<2x32x64xbf16, #tpu.memory_space<vmem>>, vector<1x32x64xbf16>
    %161 = vector.shape_cast %160 : vector<1x32x64xbf16> to vector<32x64xbf16>
    %cst_68 = arith.constant dense<0.000000e+00> : vector<32x64xf32>
    %162 = tpu.matmul %7, %161, %cst_68 {dimension_numbers = #tpu.dot_dimension_numbers<[1], [0], [0], [1], [0, 0, 1, 1], [], []>} : vector<32x32xbf16>, vector<32x64xbf16>, vector<32x64xf32> -> vector<32x64xf32>
    %c0_69 = arith.constant 0 : index
    %c0_70 = arith.constant 0 : index
    %c0_71 = arith.constant 0 : index
    %163 = vector.load %arg14[%c0_69, %c0_70, %c0_71] : memref<2x1x64xf32, #tpu.memory_space<vmem>>, vector<1x1x64xf32>
    %164 = vector.shape_cast %163 : vector<1x1x64xf32> to vector<1x64xf32>
    %165 = vector.broadcast %164 : vector<1x64xf32> to vector<32x64xf32>
    %166 = arith.addf %162, %165 : vector<32x64xf32>
    %167 = vector.extract_strided_slice %166 {offsets = [0, 0], sizes = [32, 32], strides = [1, 1]} : vector<32x64xf32> to vector<32x32xf32>
    %168 = vector.extract_strided_slice %166 {offsets = [0, 32], sizes = [32, 32], strides = [1, 1]} : vector<32x64xf32> to vector<32x32xf32>
    %c0_72 = arith.constant 0 : index
    %c0_73 = arith.constant 0 : index
    %c0_74 = arith.constant 0 : index
    %169 = vector.load %arg15[%c0_72, %c0_73, %c0_74] : memref<2x32x32xbf16, #tpu.memory_space<vmem>>, vector<1x32x32xbf16>
    %170 = vector.shape_cast %169 : vector<1x32x32xbf16> to vector<32x32xbf16>
    %c0_75 = arith.constant 0 : index
    %c0_76 = arith.constant 0 : index
    %c0_77 = arith.constant 0 : index
    %171 = vector.load %arg16[%c0_75, %c0_76, %c0_77] : memref<2x1x32xf32, #tpu.memory_space<vmem>>, vector<1x1x32xf32>
    %172 = vector.shape_cast %171 : vector<1x1x32xf32> to vector<1x32xf32>
    %173 = vector.shape_cast %159 : vector<16x32xf32> to vector<2x8x32xf32>
    %174 = vector.shape_cast %167 : vector<32x32xf32> to vector<2x16x32xf32>
    %175 = vector.shape_cast %168 : vector<32x32xf32> to vector<2x16x32xf32>
    %176 = vector.extract_strided_slice %173 {offsets = [0, 0, 0], sizes = [2, 8, 8], strides = [1, 1, 1]} : vector<2x8x32xf32> to vector<2x8x8xf32>
    %177 = arith.truncf %176 : vector<2x8x8xf32> to vector<2x8x8xbf16>
    %178 = vector.extract_strided_slice %174 {offsets = [0, 0, 0], sizes = [2, 16, 8], strides = [1, 1, 1]} : vector<2x16x32xf32> to vector<2x16x8xf32>
    %179 = arith.truncf %178 : vector<2x16x8xf32> to vector<2x16x8xbf16>
    %180 = vector.extract_strided_slice %175 {offsets = [0, 0, 0], sizes = [2, 16, 8], strides = [1, 1, 1]} : vector<2x16x32xf32> to vector<2x16x8xf32>
    %181 = arith.truncf %180 : vector<2x16x8xf32> to vector<2x16x8xbf16>
    "tpu.trace_start"() <{level = 10 : i32, message = "bqd,bkd->bqk"}> : () -> ()
    %cst_78 = arith.constant dense<0.000000e+00> : vector<2x8x16xf32>
    %182 = tpu.matmul %177, %179, %cst_78 {dimension_numbers = #tpu.dot_dimension_numbers<[2], [2], [1], [1], [0, 0, 0, 1, 1, 1], [0], [0]>} : vector<2x8x8xbf16>, vector<2x16x8xbf16>, vector<2x8x16xf32> -> vector<2x8x16xf32>
    "tpu.trace_stop"() : () -> ()
    %cst_79 = arith.constant 0.353553385 : f32
    %183 = vector.broadcast %cst_79 : f32 to vector<2x8x16xf32>
    %184 = arith.mulf %182, %183 : vector<2x8x16xf32>
    %185 = arith.addf %184, %10 : vector<2x8x16xf32>
    %cst_80 = arith.constant dense<0xFF800000> : vector<2x8xf32>
    %186 = vector.multi_reduction <maximumf>, %185, %cst_80 [2] : vector<2x8x16xf32> to vector<2x8xf32>
    %187 = vector.shape_cast %186 : vector<2x8xf32> to vector<2x8x1xf32>
    %188 = vector.broadcast %187 : vector<2x8x1xf32> to vector<2x8x16xf32>
    %189 = arith.subf %185, %188 : vector<2x8x16xf32>
    %190 = math.exp %189 : vector<2x8x16xf32>
    %cst_81 = arith.constant dense<0.000000e+00> : vector<2x8xf32>
    %191 = vector.multi_reduction <add>, %190, %cst_81 [2] : vector<2x8x16xf32> to vector<2x8xf32>
    %192 = vector.shape_cast %191 : vector<2x8xf32> to vector<2x8x1xf32>
    %193 = tpu.reciprocal %192 {approx = true} : vector<2x8x1xf32> -> vector<2x8x1xf32>
    %194 = vector.broadcast %193 : vector<2x8x1xf32> to vector<2x8x16xf32>
    %195 = arith.mulf %190, %194 : vector<2x8x16xf32>
    %196 = arith.truncf %195 : vector<2x8x16xf32> to vector<2x8x16xbf16>
    "tpu.trace_start"() <{level = 10 : i32, message = "bqk,bkd->bqd"}> : () -> ()
    %cst_82 = arith.constant dense<0.000000e+00> : vector<2x8x8xf32>
    %197 = tpu.matmul %196, %181, %cst_82 {dimension_numbers = #tpu.dot_dimension_numbers<[2], [1], [1], [2], [0, 0, 0, 1, 1, 2], [0], [0]>} : vector<2x8x16xbf16>, vector<2x16x8xbf16>, vector<2x8x8xf32> -> vector<2x8x8xf32>
    "tpu.trace_stop"() : () -> ()
    %198 = vector.extract_strided_slice %173 {offsets = [0, 0, 8], sizes = [2, 8, 8], strides = [1, 1, 1]} : vector<2x8x32xf32> to vector<2x8x8xf32>
    %199 = arith.truncf %198 : vector<2x8x8xf32> to vector<2x8x8xbf16>
    %200 = vector.extract_strided_slice %174 {offsets = [0, 0, 8], sizes = [2, 16, 8], strides = [1, 1, 1]} : vector<2x16x32xf32> to vector<2x16x8xf32>
    %201 = arith.truncf %200 : vector<2x16x8xf32> to vector<2x16x8xbf16>
    %202 = vector.extract_strided_slice %175 {offsets = [0, 0, 8], sizes = [2, 16, 8], strides = [1, 1, 1]} : vector<2x16x32xf32> to vector<2x16x8xf32>
    %203 = arith.truncf %202 : vector<2x16x8xf32> to vector<2x16x8xbf16>
    "tpu.trace_start"() <{level = 10 : i32, message = "bqd,bkd->bqk"}> : () -> ()
    %cst_83 = arith.constant dense<0.000000e+00> : vector<2x8x16xf32>
    %204 = tpu.matmul %199, %201, %cst_83 {dimension_numbers = #tpu.dot_dimension_numbers<[2], [2], [1], [1], [0, 0, 0, 1, 1, 1], [0], [0]>} : vector<2x8x8xbf16>, vector<2x16x8xbf16>, vector<2x8x16xf32> -> vector<2x8x16xf32>
    "tpu.trace_stop"() : () -> ()
    %cst_84 = arith.constant 0.353553385 : f32
    %205 = vector.broadcast %cst_84 : f32 to vector<2x8x16xf32>
    %206 = arith.mulf %204, %205 : vector<2x8x16xf32>
    %207 = arith.addf %206, %10 : vector<2x8x16xf32>
    %cst_85 = arith.constant dense<0xFF800000> : vector<2x8xf32>
    %208 = vector.multi_reduction <maximumf>, %207, %cst_85 [2] : vector<2x8x16xf32> to vector<2x8xf32>
    %209 = vector.shape_cast %208 : vector<2x8xf32> to vector<2x8x1xf32>
    %210 = vector.broadcast %209 : vector<2x8x1xf32> to vector<2x8x16xf32>
    %211 = arith.subf %207, %210 : vector<2x8x16xf32>
    %212 = math.exp %211 : vector<2x8x16xf32>
    %cst_86 = arith.constant dense<0.000000e+00> : vector<2x8xf32>
    %213 = vector.multi_reduction <add>, %212, %cst_86 [2] : vector<2x8x16xf32> to vector<2x8xf32>
    %214 = vector.shape_cast %213 : vector<2x8xf32> to vector<2x8x1xf32>
    %215 = tpu.reciprocal %214 {approx = true} : vector<2x8x1xf32> -> vector<2x8x1xf32>
    %216 = vector.broadcast %215 : vector<2x8x1xf32> to vector<2x8x16xf32>
    %217 = arith.mulf %212, %216 : vector<2x8x16xf32>
    %218 = arith.truncf %217 : vector<2x8x16xf32> to vector<2x8x16xbf16>
    "tpu.trace_start"() <{level = 10 : i32, message = "bqk,bkd->bqd"}> : () -> ()
    %cst_87 = arith.constant dense<0.000000e+00> : vector<2x8x8xf32>
    %219 = tpu.matmul %218, %203, %cst_87 {dimension_numbers = #tpu.dot_dimension_numbers<[2], [1], [1], [2], [0, 0, 0, 1, 1, 2], [0], [0]>} : vector<2x8x16xbf16>, vector<2x16x8xbf16>, vector<2x8x8xf32> -> vector<2x8x8xf32>
    "tpu.trace_stop"() : () -> ()
    %220 = vector.extract_strided_slice %173 {offsets = [0, 0, 16], sizes = [2, 8, 8], strides = [1, 1, 1]} : vector<2x8x32xf32> to vector<2x8x8xf32>
    %221 = arith.truncf %220 : vector<2x8x8xf32> to vector<2x8x8xbf16>
    %222 = vector.extract_strided_slice %174 {offsets = [0, 0, 16], sizes = [2, 16, 8], strides = [1, 1, 1]} : vector<2x16x32xf32> to vector<2x16x8xf32>
    %223 = arith.truncf %222 : vector<2x16x8xf32> to vector<2x16x8xbf16>
    %224 = vector.extract_strided_slice %175 {offsets = [0, 0, 16], sizes = [2, 16, 8], strides = [1, 1, 1]} : vector<2x16x32xf32> to vector<2x16x8xf32>
    %225 = arith.truncf %224 : vector<2x16x8xf32> to vector<2x16x8xbf16>
    "tpu.trace_start"() <{level = 10 : i32, message = "bqd,bkd->bqk"}> : () -> ()
    %cst_88 = arith.constant dense<0.000000e+00> : vector<2x8x16xf32>
    %226 = tpu.matmul %221, %223, %cst_88 {dimension_numbers = #tpu.dot_dimension_numbers<[2], [2], [1], [1], [0, 0, 0, 1, 1, 1], [0], [0]>} : vector<2x8x8xbf16>, vector<2x16x8xbf16>, vector<2x8x16xf32> -> vector<2x8x16xf32>
    "tpu.trace_stop"() : () -> ()
    %cst_89 = arith.constant 0.353553385 : f32
    %227 = vector.broadcast %cst_89 : f32 to vector<2x8x16xf32>
    %228 = arith.mulf %226, %227 : vector<2x8x16xf32>
    %229 = arith.addf %228, %10 : vector<2x8x16xf32>
    %cst_90 = arith.constant dense<0xFF800000> : vector<2x8xf32>
    %230 = vector.multi_reduction <maximumf>, %229, %cst_90 [2] : vector<2x8x16xf32> to vector<2x8xf32>
    %231 = vector.shape_cast %230 : vector<2x8xf32> to vector<2x8x1xf32>
    %232 = vector.broadcast %231 : vector<2x8x1xf32> to vector<2x8x16xf32>
    %233 = arith.subf %229, %232 : vector<2x8x16xf32>
    %234 = math.exp %233 : vector<2x8x16xf32>
    %cst_91 = arith.constant dense<0.000000e+00> : vector<2x8xf32>
    %235 = vector.multi_reduction <add>, %234, %cst_91 [2] : vector<2x8x16xf32> to vector<2x8xf32>
    %236 = vector.shape_cast %235 : vector<2x8xf32> to vector<2x8x1xf32>
    %237 = tpu.reciprocal %236 {approx = true} : vector<2x8x1xf32> -> vector<2x8x1xf32>
    %238 = vector.broadcast %237 : vector<2x8x1xf32> to vector<2x8x16xf32>
    %239 = arith.mulf %234, %238 : vector<2x8x16xf32>
    %240 = arith.truncf %239 : vector<2x8x16xf32> to vector<2x8x16xbf16>
    "tpu.trace_start"() <{level = 10 : i32, message = "bqk,bkd->bqd"}> : () -> ()
    %cst_92 = arith.constant dense<0.000000e+00> : vector<2x8x8xf32>
    %241 = tpu.matmul %240, %225, %cst_92 {dimension_numbers = #tpu.dot_dimension_numbers<[2], [1], [1], [2], [0, 0, 0, 1, 1, 2], [0], [0]>} : vector<2x8x16xbf16>, vector<2x16x8xbf16>, vector<2x8x8xf32> -> vector<2x8x8xf32>
    "tpu.trace_stop"() : () -> ()
    %242 = vector.extract_strided_slice %173 {offsets = [0, 0, 24], sizes = [2, 8, 8], strides = [1, 1, 1]} : vector<2x8x32xf32> to vector<2x8x8xf32>
    %243 = arith.truncf %242 : vector<2x8x8xf32> to vector<2x8x8xbf16>
    %244 = vector.extract_strided_slice %174 {offsets = [0, 0, 24], sizes = [2, 16, 8], strides = [1, 1, 1]} : vector<2x16x32xf32> to vector<2x16x8xf32>
    %245 = arith.truncf %244 : vector<2x16x8xf32> to vector<2x16x8xbf16>
    %246 = vector.extract_strided_slice %175 {offsets = [0, 0, 24], sizes = [2, 16, 8], strides = [1, 1, 1]} : vector<2x16x32xf32> to vector<2x16x8xf32>
    %247 = arith.truncf %246 : vector<2x16x8xf32> to vector<2x16x8xbf16>
    "tpu.trace_start"() <{level = 10 : i32, message = "bqd,bkd->bqk"}> : () -> ()
    %cst_93 = arith.constant dense<0.000000e+00> : vector<2x8x16xf32>
    %248 = tpu.matmul %243, %245, %cst_93 {dimension_numbers = #tpu.dot_dimension_numbers<[2], [2], [1], [1], [0, 0, 0, 1, 1, 1], [0], [0]>} : vector<2x8x8xbf16>, vector<2x16x8xbf16>, vector<2x8x16xf32> -> vector<2x8x16xf32>
    "tpu.trace_stop"() : () -> ()
    %cst_94 = arith.constant 0.353553385 : f32
    %249 = vector.broadcast %cst_94 : f32 to vector<2x8x16xf32>
    %250 = arith.mulf %248, %249 : vector<2x8x16xf32>
    %251 = arith.addf %250, %10 : vector<2x8x16xf32>
    %cst_95 = arith.constant dense<0xFF800000> : vector<2x8xf32>
    %252 = vector.multi_reduction <maximumf>, %251, %cst_95 [2] : vector<2x8x16xf32> to vector<2x8xf32>
    %253 = vector.shape_cast %252 : vector<2x8xf32> to vector<2x8x1xf32>
    %254 = vector.broadcast %253 : vector<2x8x1xf32> to vector<2x8x16xf32>
    %255 = arith.subf %251, %254 : vector<2x8x16xf32>
    %256 = math.exp %255 : vector<2x8x16xf32>
    %cst_96 = arith.constant dense<0.000000e+00> : vector<2x8xf32>
    %257 = vector.multi_reduction <add>, %256, %cst_96 [2] : vector<2x8x16xf32> to vector<2x8xf32>
    %258 = vector.shape_cast %257 : vector<2x8xf32> to vector<2x8x1xf32>
    %259 = tpu.reciprocal %258 {approx = true} : vector<2x8x1xf32> -> vector<2x8x1xf32>
    %260 = vector.broadcast %259 : vector<2x8x1xf32> to vector<2x8x16xf32>
    %261 = arith.mulf %256, %260 : vector<2x8x16xf32>
    %262 = arith.truncf %261 : vector<2x8x16xf32> to vector<2x8x16xbf16>
    "tpu.trace_start"() <{level = 10 : i32, message = "bqk,bkd->bqd"}> : () -> ()
    %cst_97 = arith.constant dense<0.000000e+00> : vector<2x8x8xf32>
    %263 = tpu.matmul %262, %247, %cst_97 {dimension_numbers = #tpu.dot_dimension_numbers<[2], [1], [1], [2], [0, 0, 0, 1, 1, 2], [0], [0]>} : vector<2x8x16xbf16>, vector<2x16x8xbf16>, vector<2x8x8xf32> -> vector<2x8x8xf32>
    "tpu.trace_stop"() : () -> ()
    %264 = tpu.concatenate %197, %219, %241, %263 in 2 : vector<2x8x8xf32>, vector<2x8x8xf32>, vector<2x8x8xf32>, vector<2x8x8xf32> -> vector<2x8x32xf32>
    %265 = vector.shape_cast %264 : vector<2x8x32xf32> to vector<16x32xf32>
    %266 = arith.truncf %265 : vector<16x32xf32> to vector<16x32xbf16>
    %cst_98 = arith.constant dense<0.000000e+00> : vector<16x32xf32>
    %267 = tpu.matmul %266, %170, %cst_98 {dimension_numbers = #tpu.dot_dimension_numbers<[1], [0], [0], [1], [0, 0, 1, 1], [], []>} : vector<16x32xbf16>, vector<32x32xbf16>, vector<16x32xf32> -> vector<16x32xf32>
    %268 = vector.broadcast %172 : vector<1x32xf32> to vector<16x32xf32>
    %269 = arith.addf %267, %268 : vector<16x32xf32>
    %270 = arith.addf %151, %269 : vector<16x32xf32>
    %c0_99 = arith.constant 0 : index
    %c0_100 = arith.constant 0 : index
    %c0_101 = arith.constant 0 : index
    %271 = vector.load %arg19[%c0_99, %c0_100, %c0_101] : memref<2x1x32xf32, #tpu.memory_space<vmem>>, vector<1x1x32xf32>
    %272 = vector.shape_cast %271 : vector<1x1x32xf32> to vector<1x32xf32>
    %c0_102 = arith.constant 0 : index
    %c0_103 = arith.constant 0 : index
    %c0_104 = arith.constant 0 : index
    %273 = vector.load %arg20[%c0_102, %c0_103, %c0_104] : memref<2x1x32xf32, #tpu.memory_space<vmem>>, vector<1x1x32xf32>
    %274 = vector.shape_cast %273 : vector<1x1x32xf32> to vector<1x32xf32>
    %cst_105 = arith.constant dense<0.000000e+00> : vector<16xf32>
    %275 = vector.multi_reduction <add>, %270, %cst_105 [1] : vector<16x32xf32> to vector<16xf32>
    %276 = vector.shape_cast %275 : vector<16xf32> to vector<16x1xf32>
    %cst_106 = arith.constant 3.200000e+01 : f32
    %277 = vector.broadcast %cst_106 : f32 to vector<16x1xf32>
    %278 = arith.divf %276, %277 : vector<16x1xf32>
    %279 = vector.broadcast %278 : vector<16x1xf32> to vector<16x32xf32>
    %280 = arith.subf %270, %279 : vector<16x32xf32>
    %281 = vector.broadcast %278 : vector<16x1xf32> to vector<16x32xf32>
    %282 = arith.subf %270, %281 : vector<16x32xf32>
    %283 = arith.mulf %280, %282 : vector<16x32xf32>
    %cst_107 = arith.constant dense<0.000000e+00> : vector<16xf32>
    %284 = vector.multi_reduction <add>, %283, %cst_107 [1] : vector<16x32xf32> to vector<16xf32>
    %285 = vector.shape_cast %284 : vector<16xf32> to vector<16x1xf32>
    %cst_108 = arith.constant 3.200000e+01 : f32
    %286 = vector.broadcast %cst_108 : f32 to vector<16x1xf32>
    %287 = arith.divf %285, %286 : vector<16x1xf32>
    %288 = vector.broadcast %278 : vector<16x1xf32> to vector<16x32xf32>
    %289 = arith.subf %270, %288 : vector<16x32xf32>
    %cst_109 = arith.constant 9.99999974E-6 : f32
    %290 = vector.broadcast %cst_109 : f32 to vector<16x1xf32>
    %291 = arith.addf %287, %290 : vector<16x1xf32>
    %292 = math.rsqrt %291 : vector<16x1xf32>
    %293 = vector.broadcast %292 : vector<16x1xf32> to vector<16x32xf32>
    %294 = arith.mulf %289, %293 : vector<16x32xf32>
    %295 = vector.broadcast %272 : vector<1x32xf32> to vector<16x32xf32>
    %296 = arith.mulf %294, %295 : vector<16x32xf32>
    %297 = vector.broadcast %274 : vector<1x32xf32> to vector<16x32xf32>
    %298 = arith.addf %296, %297 : vector<16x32xf32>
    %299 = arith.truncf %298 : vector<16x32xf32> to vector<16x32xbf16>
    %c0_110 = arith.constant 0 : index
    %c0_111 = arith.constant 0 : index
    %c0_112 = arith.constant 0 : index
    %300 = vector.load %arg23[%c0_110, %c0_111, %c0_112] : memref<2x32x2048xbf16, #tpu.memory_space<vmem>>, vector<1x32x2048xbf16>
    %301 = vector.shape_cast %300 : vector<1x32x2048xbf16> to vector<32x2048xbf16>
    %cst_113 = arith.constant dense<0.000000e+00> : vector<16x2048xf32>
    %302 = tpu.matmul %299, %301, %cst_113 {dimension_numbers = #tpu.dot_dimension_numbers<[1], [0], [0], [1], [0, 0, 1, 1], [], []>} : vector<16x32xbf16>, vector<32x2048xbf16>, vector<16x2048xf32> -> vector<16x2048xf32>
    %c0_114 = arith.constant 0 : index
    %c0_115 = arith.constant 0 : index
    %c0_116 = arith.constant 0 : index
    %303 = vector.load %arg24[%c0_114, %c0_115, %c0_116] : memref<2x1x2048xf32, #tpu.memory_space<vmem>>, vector<1x1x2048xf32>
    %304 = vector.shape_cast %303 : vector<1x1x2048xf32> to vector<1x2048xf32>
    %305 = vector.broadcast %304 : vector<1x2048xf32> to vector<16x2048xf32>
    %306 = arith.addf %302, %305 : vector<16x2048xf32>
    %cst_117 = arith.constant 0.000000e+00 : f32
    %307 = vector.broadcast %cst_117 : f32 to vector<16x2048xf32>
    %308 = arith.maximumf %306, %307 : vector<16x2048xf32>
    %309 = arith.truncf %308 : vector<16x2048xf32> to vector<16x2048xbf16>
    %c0_118 = arith.constant 0 : index
    %c0_119 = arith.constant 0 : index
    %c0_120 = arith.constant 0 : index
    %310 = vector.load %arg25[%c0_118, %c0_119, %c0_120] : memref<2x2048x32xbf16, #tpu.memory_space<vmem>>, vector<1x2048x32xbf16>
    %311 = vector.shape_cast %310 : vector<1x2048x32xbf16> to vector<2048x32xbf16>
    %cst_121 = arith.constant dense<0.000000e+00> : vector<16x32xf32>
    %312 = tpu.matmul %309, %311, %cst_121 {dimension_numbers = #tpu.dot_dimension_numbers<[1], [0], [0], [1], [0, 0, 1, 1], [], []>} : vector<16x2048xbf16>, vector<2048x32xbf16>, vector<16x32xf32> -> vector<16x32xf32>
    %c0_122 = arith.constant 0 : index
    %c0_123 = arith.constant 0 : index
    %c0_124 = arith.constant 0 : index
    %313 = vector.load %arg26[%c0_122, %c0_123, %c0_124] : memref<2x1x32xf32, #tpu.memory_space<vmem>>, vector<1x1x32xf32>
    %314 = vector.shape_cast %313 : vector<1x1x32xf32> to vector<1x32xf32>
    %315 = vector.broadcast %314 : vector<1x32xf32> to vector<16x32xf32>
    %316 = arith.addf %312, %315 : vector<16x32xf32>
    %317 = arith.addf %298, %316 : vector<16x32xf32>
    %c0_125 = arith.constant 0 : index
    %c0_126 = arith.constant 0 : index
    %c0_127 = arith.constant 0 : index
    %318 = vector.load %arg21[%c0_125, %c0_126, %c0_127] : memref<2x1x32xf32, #tpu.memory_space<vmem>>, vector<1x1x32xf32>
    %319 = vector.shape_cast %318 : vector<1x1x32xf32> to vector<1x32xf32>
    %c0_128 = arith.constant 0 : index
    %c0_129 = arith.constant 0 : index
    %c0_130 = arith.constant 0 : index
    %320 = vector.load %arg22[%c0_128, %c0_129, %c0_130] : memref<2x1x32xf32, #tpu.memory_space<vmem>>, vector<1x1x32xf32>
    %321 = vector.shape_cast %320 : vector<1x1x32xf32> to vector<1x32xf32>
    %cst_131 = arith.constant dense<0.000000e+00> : vector<16xf32>
    %322 = vector.multi_reduction <add>, %317, %cst_131 [1] : vector<16x32xf32> to vector<16xf32>
    %323 = vector.shape_cast %322 : vector<16xf32> to vector<16x1xf32>
    %cst_132 = arith.constant 3.200000e+01 : f32
    %324 = vector.broadcast %cst_132 : f32 to vector<16x1xf32>
    %325 = arith.divf %323, %324 : vector<16x1xf32>
    %326 = vector.broadcast %325 : vector<16x1xf32> to vector<16x32xf32>
    %327 = arith.subf %317, %326 : vector<16x32xf32>
    %328 = vector.broadcast %325 : vector<16x1xf32> to vector<16x32xf32>
    %329 = arith.subf %317, %328 : vector<16x32xf32>
    %330 = arith.mulf %327, %329 : vector<16x32xf32>
    %cst_133 = arith.constant dense<0.000000e+00> : vector<16xf32>
    %331 = vector.multi_reduction <add>, %330, %cst_133 [1] : vector<16x32xf32> to vector<16xf32>
    %332 = vector.shape_cast %331 : vector<16xf32> to vector<16x1xf32>
    %cst_134 = arith.constant 3.200000e+01 : f32
    %333 = vector.broadcast %cst_134 : f32 to vector<16x1xf32>
    %334 = arith.divf %332, %333 : vector<16x1xf32>
    %335 = vector.broadcast %325 : vector<16x1xf32> to vector<16x32xf32>
    %336 = arith.subf %317, %335 : vector<16x32xf32>
    %cst_135 = arith.constant 9.99999974E-6 : f32
    %337 = vector.broadcast %cst_135 : f32 to vector<16x1xf32>
    %338 = arith.addf %334, %337 : vector<16x1xf32>
    %339 = math.rsqrt %338 : vector<16x1xf32>
    %340 = vector.broadcast %339 : vector<16x1xf32> to vector<16x32xf32>
    %341 = arith.mulf %336, %340 : vector<16x32xf32>
    %342 = vector.broadcast %319 : vector<1x32xf32> to vector<16x32xf32>
    %343 = arith.mulf %341, %342 : vector<16x32xf32>
    %344 = vector.broadcast %321 : vector<1x32xf32> to vector<16x32xf32>
    %345 = arith.addf %343, %344 : vector<16x32xf32>
    %346 = arith.truncf %345 : vector<16x32xf32> to vector<16x32xbf16>
    %c1 = arith.constant 1 : index
    %c0_136 = arith.constant 0 : index
    %c0_137 = arith.constant 0 : index
    %347 = vector.load %arg7[%c1, %c0_136, %c0_137] : memref<2x32x96xbf16, #tpu.memory_space<vmem>>, vector<1x32x96xbf16>
    %348 = vector.shape_cast %347 : vector<1x32x96xbf16> to vector<32x96xbf16>
    %cst_138 = arith.constant dense<0.000000e+00> : vector<16x96xf32>
    %349 = tpu.matmul %346, %348, %cst_138 {dimension_numbers = #tpu.dot_dimension_numbers<[1], [0], [0], [1], [0, 0, 1, 1], [], []>} : vector<16x32xbf16>, vector<32x96xbf16>, vector<16x96xf32> -> vector<16x96xf32>
    %c1_139 = arith.constant 1 : index
    %c0_140 = arith.constant 0 : index
    %c0_141 = arith.constant 0 : index
    %350 = vector.load %arg8[%c1_139, %c0_140, %c0_141] : memref<2x1x96xf32, #tpu.memory_space<vmem>>, vector<1x1x96xf32>
    %351 = vector.shape_cast %350 : vector<1x1x96xf32> to vector<1x96xf32>
    %352 = vector.broadcast %351 : vector<1x96xf32> to vector<16x96xf32>
    %353 = arith.addf %349, %352 : vector<16x96xf32>
    %354 = vector.extract_strided_slice %353 {offsets = [0, 0], sizes = [16, 32], strides = [1, 1]} : vector<16x96xf32> to vector<16x32xf32>
    %355 = vector.extract_strided_slice %353 {offsets = [0, 32], sizes = [16, 32], strides = [1, 1]} : vector<16x96xf32> to vector<16x32xf32>
    %356 = vector.extract_strided_slice %353 {offsets = [0, 64], sizes = [16, 32], strides = [1, 1]} : vector<16x96xf32> to vector<16x32xf32>
    %c1_142 = arith.constant 1 : index
    %c0_143 = arith.constant 0 : index
    %c0_144 = arith.constant 0 : index
    %357 = vector.load %arg9[%c1_142, %c0_143, %c0_144] : memref<2x32x32xbf16, #tpu.memory_space<vmem>>, vector<1x32x32xbf16>
    %358 = vector.shape_cast %357 : vector<1x32x32xbf16> to vector<32x32xbf16>
    %c1_145 = arith.constant 1 : index
    %c0_146 = arith.constant 0 : index
    %c0_147 = arith.constant 0 : index
    %359 = vector.load %arg10[%c1_145, %c0_146, %c0_147] : memref<2x1x32xf32, #tpu.memory_space<vmem>>, vector<1x1x32xf32>
    %360 = vector.shape_cast %359 : vector<1x1x32xf32> to vector<1x32xf32>
    %361 = vector.shape_cast %354 : vector<16x32xf32> to vector<2x8x32xf32>
    %362 = vector.shape_cast %355 : vector<16x32xf32> to vector<2x8x32xf32>
    %363 = vector.shape_cast %356 : vector<16x32xf32> to vector<2x8x32xf32>
    %364 = vector.extract_strided_slice %361 {offsets = [0, 0, 0], sizes = [2, 8, 8], strides = [1, 1, 1]} : vector<2x8x32xf32> to vector<2x8x8xf32>
    %365 = arith.truncf %364 : vector<2x8x8xf32> to vector<2x8x8xbf16>
    %366 = vector.extract_strided_slice %362 {offsets = [0, 0, 0], sizes = [2, 8, 8], strides = [1, 1, 1]} : vector<2x8x32xf32> to vector<2x8x8xf32>
    %367 = arith.truncf %366 : vector<2x8x8xf32> to vector<2x8x8xbf16>
    %368 = vector.extract_strided_slice %363 {offsets = [0, 0, 0], sizes = [2, 8, 8], strides = [1, 1, 1]} : vector<2x8x32xf32> to vector<2x8x8xf32>
    %369 = arith.truncf %368 : vector<2x8x8xf32> to vector<2x8x8xbf16>
    "tpu.trace_start"() <{level = 10 : i32, message = "bqd,bkd->bqk"}> : () -> ()
    %cst_148 = arith.constant dense<0.000000e+00> : vector<2x8x8xf32>
    %370 = tpu.matmul %365, %367, %cst_148 {dimension_numbers = #tpu.dot_dimension_numbers<[2], [2], [1], [1], [0, 0, 0, 1, 1, 1], [0], [0]>} : vector<2x8x8xbf16>, vector<2x8x8xbf16>, vector<2x8x8xf32> -> vector<2x8x8xf32>
    "tpu.trace_stop"() : () -> ()
    %cst_149 = arith.constant 0.353553385 : f32
    %371 = vector.broadcast %cst_149 : f32 to vector<2x8x8xf32>
    %372 = arith.mulf %370, %371 : vector<2x8x8xf32>
    %373 = arith.addf %372, %9 : vector<2x8x8xf32>
    %cst_150 = arith.constant dense<0xFF800000> : vector<2x8xf32>
    %374 = vector.multi_reduction <maximumf>, %373, %cst_150 [2] : vector<2x8x8xf32> to vector<2x8xf32>
    %375 = vector.shape_cast %374 : vector<2x8xf32> to vector<2x8x1xf32>
    %376 = vector.broadcast %375 : vector<2x8x1xf32> to vector<2x8x8xf32>
    %377 = arith.subf %373, %376 : vector<2x8x8xf32>
    %378 = math.exp %377 : vector<2x8x8xf32>
    %cst_151 = arith.constant dense<0.000000e+00> : vector<2x8xf32>
    %379 = vector.multi_reduction <add>, %378, %cst_151 [2] : vector<2x8x8xf32> to vector<2x8xf32>
    %380 = vector.shape_cast %379 : vector<2x8xf32> to vector<2x8x1xf32>
    %381 = tpu.reciprocal %380 {approx = true} : vector<2x8x1xf32> -> vector<2x8x1xf32>
    %382 = vector.broadcast %381 : vector<2x8x1xf32> to vector<2x8x8xf32>
    %383 = arith.mulf %378, %382 : vector<2x8x8xf32>
    %384 = arith.truncf %383 : vector<2x8x8xf32> to vector<2x8x8xbf16>
    "tpu.trace_start"() <{level = 10 : i32, message = "bqk,bkd->bqd"}> : () -> ()
    %cst_152 = arith.constant dense<0.000000e+00> : vector<2x8x8xf32>
    %385 = tpu.matmul %384, %369, %cst_152 {dimension_numbers = #tpu.dot_dimension_numbers<[2], [1], [1], [2], [0, 0, 0, 1, 1, 2], [0], [0]>} : vector<2x8x8xbf16>, vector<2x8x8xbf16>, vector<2x8x8xf32> -> vector<2x8x8xf32>
    "tpu.trace_stop"() : () -> ()
    %386 = vector.extract_strided_slice %361 {offsets = [0, 0, 8], sizes = [2, 8, 8], strides = [1, 1, 1]} : vector<2x8x32xf32> to vector<2x8x8xf32>
    %387 = arith.truncf %386 : vector<2x8x8xf32> to vector<2x8x8xbf16>
    %388 = vector.extract_strided_slice %362 {offsets = [0, 0, 8], sizes = [2, 8, 8], strides = [1, 1, 1]} : vector<2x8x32xf32> to vector<2x8x8xf32>
    %389 = arith.truncf %388 : vector<2x8x8xf32> to vector<2x8x8xbf16>
    %390 = vector.extract_strided_slice %363 {offsets = [0, 0, 8], sizes = [2, 8, 8], strides = [1, 1, 1]} : vector<2x8x32xf32> to vector<2x8x8xf32>
    %391 = arith.truncf %390 : vector<2x8x8xf32> to vector<2x8x8xbf16>
    "tpu.trace_start"() <{level = 10 : i32, message = "bqd,bkd->bqk"}> : () -> ()
    %cst_153 = arith.constant dense<0.000000e+00> : vector<2x8x8xf32>
    %392 = tpu.matmul %387, %389, %cst_153 {dimension_numbers = #tpu.dot_dimension_numbers<[2], [2], [1], [1], [0, 0, 0, 1, 1, 1], [0], [0]>} : vector<2x8x8xbf16>, vector<2x8x8xbf16>, vector<2x8x8xf32> -> vector<2x8x8xf32>
    "tpu.trace_stop"() : () -> ()
    %cst_154 = arith.constant 0.353553385 : f32
    %393 = vector.broadcast %cst_154 : f32 to vector<2x8x8xf32>
    %394 = arith.mulf %392, %393 : vector<2x8x8xf32>
    %395 = arith.addf %394, %9 : vector<2x8x8xf32>
    %cst_155 = arith.constant dense<0xFF800000> : vector<2x8xf32>
    %396 = vector.multi_reduction <maximumf>, %395, %cst_155 [2] : vector<2x8x8xf32> to vector<2x8xf32>
    %397 = vector.shape_cast %396 : vector<2x8xf32> to vector<2x8x1xf32>
    %398 = vector.broadcast %397 : vector<2x8x1xf32> to vector<2x8x8xf32>
    %399 = arith.subf %395, %398 : vector<2x8x8xf32>
    %400 = math.exp %399 : vector<2x8x8xf32>
    %cst_156 = arith.constant dense<0.000000e+00> : vector<2x8xf32>
    %401 = vector.multi_reduction <add>, %400, %cst_156 [2] : vector<2x8x8xf32> to vector<2x8xf32>
    %402 = vector.shape_cast %401 : vector<2x8xf32> to vector<2x8x1xf32>
    %403 = tpu.reciprocal %402 {approx = true} : vector<2x8x1xf32> -> vector<2x8x1xf32>
    %404 = vector.broadcast %403 : vector<2x8x1xf32> to vector<2x8x8xf32>
    %405 = arith.mulf %400, %404 : vector<2x8x8xf32>
    %406 = arith.truncf %405 : vector<2x8x8xf32> to vector<2x8x8xbf16>
    "tpu.trace_start"() <{level = 10 : i32, message = "bqk,bkd->bqd"}> : () -> ()
    %cst_157 = arith.constant dense<0.000000e+00> : vector<2x8x8xf32>
    %407 = tpu.matmul %406, %391, %cst_157 {dimension_numbers = #tpu.dot_dimension_numbers<[2], [1], [1], [2], [0, 0, 0, 1, 1, 2], [0], [0]>} : vector<2x8x8xbf16>, vector<2x8x8xbf16>, vector<2x8x8xf32> -> vector<2x8x8xf32>
    "tpu.trace_stop"() : () -> ()
    %408 = vector.extract_strided_slice %361 {offsets = [0, 0, 16], sizes = [2, 8, 8], strides = [1, 1, 1]} : vector<2x8x32xf32> to vector<2x8x8xf32>
    %409 = arith.truncf %408 : vector<2x8x8xf32> to vector<2x8x8xbf16>
    %410 = vector.extract_strided_slice %362 {offsets = [0, 0, 16], sizes = [2, 8, 8], strides = [1, 1, 1]} : vector<2x8x32xf32> to vector<2x8x8xf32>
    %411 = arith.truncf %410 : vector<2x8x8xf32> to vector<2x8x8xbf16>
    %412 = vector.extract_strided_slice %363 {offsets = [0, 0, 16], sizes = [2, 8, 8], strides = [1, 1, 1]} : vector<2x8x32xf32> to vector<2x8x8xf32>
    %413 = arith.truncf %412 : vector<2x8x8xf32> to vector<2x8x8xbf16>
    "tpu.trace_start"() <{level = 10 : i32, message = "bqd,bkd->bqk"}> : () -> ()
    %cst_158 = arith.constant dense<0.000000e+00> : vector<2x8x8xf32>
    %414 = tpu.matmul %409, %411, %cst_158 {dimension_numbers = #tpu.dot_dimension_numbers<[2], [2], [1], [1], [0, 0, 0, 1, 1, 1], [0], [0]>} : vector<2x8x8xbf16>, vector<2x8x8xbf16>, vector<2x8x8xf32> -> vector<2x8x8xf32>
    "tpu.trace_stop"() : () -> ()
    %cst_159 = arith.constant 0.353553385 : f32
    %415 = vector.broadcast %cst_159 : f32 to vector<2x8x8xf32>
    %416 = arith.mulf %414, %415 : vector<2x8x8xf32>
    %417 = arith.addf %416, %9 : vector<2x8x8xf32>
    %cst_160 = arith.constant dense<0xFF800000> : vector<2x8xf32>
    %418 = vector.multi_reduction <maximumf>, %417, %cst_160 [2] : vector<2x8x8xf32> to vector<2x8xf32>
    %419 = vector.shape_cast %418 : vector<2x8xf32> to vector<2x8x1xf32>
    %420 = vector.broadcast %419 : vector<2x8x1xf32> to vector<2x8x8xf32>
    %421 = arith.subf %417, %420 : vector<2x8x8xf32>
    %422 = math.exp %421 : vector<2x8x8xf32>
    %cst_161 = arith.constant dense<0.000000e+00> : vector<2x8xf32>
    %423 = vector.multi_reduction <add>, %422, %cst_161 [2] : vector<2x8x8xf32> to vector<2x8xf32>
    %424 = vector.shape_cast %423 : vector<2x8xf32> to vector<2x8x1xf32>
    %425 = tpu.reciprocal %424 {approx = true} : vector<2x8x1xf32> -> vector<2x8x1xf32>
    %426 = vector.broadcast %425 : vector<2x8x1xf32> to vector<2x8x8xf32>
    %427 = arith.mulf %422, %426 : vector<2x8x8xf32>
    %428 = arith.truncf %427 : vector<2x8x8xf32> to vector<2x8x8xbf16>
    "tpu.trace_start"() <{level = 10 : i32, message = "bqk,bkd->bqd"}> : () -> ()
    %cst_162 = arith.constant dense<0.000000e+00> : vector<2x8x8xf32>
    %429 = tpu.matmul %428, %413, %cst_162 {dimension_numbers = #tpu.dot_dimension_numbers<[2], [1], [1], [2], [0, 0, 0, 1, 1, 2], [0], [0]>} : vector<2x8x8xbf16>, vector<2x8x8xbf16>, vector<2x8x8xf32> -> vector<2x8x8xf32>
    "tpu.trace_stop"() : () -> ()
    %430 = vector.extract_strided_slice %361 {offsets = [0, 0, 24], sizes = [2, 8, 8], strides = [1, 1, 1]} : vector<2x8x32xf32> to vector<2x8x8xf32>
    %431 = arith.truncf %430 : vector<2x8x8xf32> to vector<2x8x8xbf16>
    %432 = vector.extract_strided_slice %362 {offsets = [0, 0, 24], sizes = [2, 8, 8], strides = [1, 1, 1]} : vector<2x8x32xf32> to vector<2x8x8xf32>
    %433 = arith.truncf %432 : vector<2x8x8xf32> to vector<2x8x8xbf16>
    %434 = vector.extract_strided_slice %363 {offsets = [0, 0, 24], sizes = [2, 8, 8], strides = [1, 1, 1]} : vector<2x8x32xf32> to vector<2x8x8xf32>
    %435 = arith.truncf %434 : vector<2x8x8xf32> to vector<2x8x8xbf16>
    "tpu.trace_start"() <{level = 10 : i32, message = "bqd,bkd->bqk"}> : () -> ()
    %cst_163 = arith.constant dense<0.000000e+00> : vector<2x8x8xf32>
    %436 = tpu.matmul %431, %433, %cst_163 {dimension_numbers = #tpu.dot_dimension_numbers<[2], [2], [1], [1], [0, 0, 0, 1, 1, 1], [0], [0]>} : vector<2x8x8xbf16>, vector<2x8x8xbf16>, vector<2x8x8xf32> -> vector<2x8x8xf32>
    "tpu.trace_stop"() : () -> ()
    %cst_164 = arith.constant 0.353553385 : f32
    %437 = vector.broadcast %cst_164 : f32 to vector<2x8x8xf32>
    %438 = arith.mulf %436, %437 : vector<2x8x8xf32>
    %439 = arith.addf %438, %9 : vector<2x8x8xf32>
    %cst_165 = arith.constant dense<0xFF800000> : vector<2x8xf32>
    %440 = vector.multi_reduction <maximumf>, %439, %cst_165 [2] : vector<2x8x8xf32> to vector<2x8xf32>
    %441 = vector.shape_cast %440 : vector<2x8xf32> to vector<2x8x1xf32>
    %442 = vector.broadcast %441 : vector<2x8x1xf32> to vector<2x8x8xf32>
    %443 = arith.subf %439, %442 : vector<2x8x8xf32>
    %444 = math.exp %443 : vector<2x8x8xf32>
    %cst_166 = arith.constant dense<0.000000e+00> : vector<2x8xf32>
    %445 = vector.multi_reduction <add>, %444, %cst_166 [2] : vector<2x8x8xf32> to vector<2x8xf32>
    %446 = vector.shape_cast %445 : vector<2x8xf32> to vector<2x8x1xf32>
    %447 = tpu.reciprocal %446 {approx = true} : vector<2x8x1xf32> -> vector<2x8x1xf32>
    %448 = vector.broadcast %447 : vector<2x8x1xf32> to vector<2x8x8xf32>
    %449 = arith.mulf %444, %448 : vector<2x8x8xf32>
    %450 = arith.truncf %449 : vector<2x8x8xf32> to vector<2x8x8xbf16>
    "tpu.trace_start"() <{level = 10 : i32, message = "bqk,bkd->bqd"}> : () -> ()
    %cst_167 = arith.constant dense<0.000000e+00> : vector<2x8x8xf32>
    %451 = tpu.matmul %450, %435, %cst_167 {dimension_numbers = #tpu.dot_dimension_numbers<[2], [1], [1], [2], [0, 0, 0, 1, 1, 2], [0], [0]>} : vector<2x8x8xbf16>, vector<2x8x8xbf16>, vector<2x8x8xf32> -> vector<2x8x8xf32>
    "tpu.trace_stop"() : () -> ()
    %452 = tpu.concatenate %385, %407, %429, %451 in 2 : vector<2x8x8xf32>, vector<2x8x8xf32>, vector<2x8x8xf32>, vector<2x8x8xf32> -> vector<2x8x32xf32>
    %453 = vector.shape_cast %452 : vector<2x8x32xf32> to vector<16x32xf32>
    %454 = arith.truncf %453 : vector<16x32xf32> to vector<16x32xbf16>
    %cst_168 = arith.constant dense<0.000000e+00> : vector<16x32xf32>
    %455 = tpu.matmul %454, %358, %cst_168 {dimension_numbers = #tpu.dot_dimension_numbers<[1], [0], [0], [1], [0, 0, 1, 1], [], []>} : vector<16x32xbf16>, vector<32x32xbf16>, vector<16x32xf32> -> vector<16x32xf32>
    %456 = vector.broadcast %360 : vector<1x32xf32> to vector<16x32xf32>
    %457 = arith.addf %455, %456 : vector<16x32xf32>
    %458 = arith.addf %345, %457 : vector<16x32xf32>
    %c1_169 = arith.constant 1 : index
    %c0_170 = arith.constant 0 : index
    %c0_171 = arith.constant 0 : index
    %459 = vector.load %arg17[%c1_169, %c0_170, %c0_171] : memref<2x1x32xf32, #tpu.memory_space<vmem>>, vector<1x1x32xf32>
    %460 = vector.shape_cast %459 : vector<1x1x32xf32> to vector<1x32xf32>
    %c1_172 = arith.constant 1 : index
    %c0_173 = arith.constant 0 : index
    %c0_174 = arith.constant 0 : index
    %461 = vector.load %arg18[%c1_172, %c0_173, %c0_174] : memref<2x1x32xf32, #tpu.memory_space<vmem>>, vector<1x1x32xf32>
    %462 = vector.shape_cast %461 : vector<1x1x32xf32> to vector<1x32xf32>
    %cst_175 = arith.constant dense<0.000000e+00> : vector<16xf32>
    %463 = vector.multi_reduction <add>, %458, %cst_175 [1] : vector<16x32xf32> to vector<16xf32>
    %464 = vector.shape_cast %463 : vector<16xf32> to vector<16x1xf32>
    %cst_176 = arith.constant 3.200000e+01 : f32
    %465 = vector.broadcast %cst_176 : f32 to vector<16x1xf32>
    %466 = arith.divf %464, %465 : vector<16x1xf32>
    %467 = vector.broadcast %466 : vector<16x1xf32> to vector<16x32xf32>
    %468 = arith.subf %458, %467 : vector<16x32xf32>
    %469 = vector.broadcast %466 : vector<16x1xf32> to vector<16x32xf32>
    %470 = arith.subf %458, %469 : vector<16x32xf32>
    %471 = arith.mulf %468, %470 : vector<16x32xf32>
    %cst_177 = arith.constant dense<0.000000e+00> : vector<16xf32>
    %472 = vector.multi_reduction <add>, %471, %cst_177 [1] : vector<16x32xf32> to vector<16xf32>
    %473 = vector.shape_cast %472 : vector<16xf32> to vector<16x1xf32>
    %cst_178 = arith.constant 3.200000e+01 : f32
    %474 = vector.broadcast %cst_178 : f32 to vector<16x1xf32>
    %475 = arith.divf %473, %474 : vector<16x1xf32>
    %476 = vector.broadcast %466 : vector<16x1xf32> to vector<16x32xf32>
    %477 = arith.subf %458, %476 : vector<16x32xf32>
    %cst_179 = arith.constant 9.99999974E-6 : f32
    %478 = vector.broadcast %cst_179 : f32 to vector<16x1xf32>
    %479 = arith.addf %475, %478 : vector<16x1xf32>
    %480 = math.rsqrt %479 : vector<16x1xf32>
    %481 = vector.broadcast %480 : vector<16x1xf32> to vector<16x32xf32>
    %482 = arith.mulf %477, %481 : vector<16x32xf32>
    %483 = vector.broadcast %460 : vector<1x32xf32> to vector<16x32xf32>
    %484 = arith.mulf %482, %483 : vector<16x32xf32>
    %485 = vector.broadcast %462 : vector<1x32xf32> to vector<16x32xf32>
    %486 = arith.addf %484, %485 : vector<16x32xf32>
    %487 = arith.truncf %486 : vector<16x32xf32> to vector<16x32xbf16>
    %c1_180 = arith.constant 1 : index
    %c0_181 = arith.constant 0 : index
    %c0_182 = arith.constant 0 : index
    %488 = vector.load %arg11[%c1_180, %c0_181, %c0_182] : memref<2x32x32xbf16, #tpu.memory_space<vmem>>, vector<1x32x32xbf16>
    %489 = vector.shape_cast %488 : vector<1x32x32xbf16> to vector<32x32xbf16>
    %cst_183 = arith.constant dense<0.000000e+00> : vector<16x32xf32>
    %490 = tpu.matmul %487, %489, %cst_183 {dimension_numbers = #tpu.dot_dimension_numbers<[1], [0], [0], [1], [0, 0, 1, 1], [], []>} : vector<16x32xbf16>, vector<32x32xbf16>, vector<16x32xf32> -> vector<16x32xf32>
    %c1_184 = arith.constant 1 : index
    %c0_185 = arith.constant 0 : index
    %c0_186 = arith.constant 0 : index
    %491 = vector.load %arg12[%c1_184, %c0_185, %c0_186] : memref<2x1x32xf32, #tpu.memory_space<vmem>>, vector<1x1x32xf32>
    %492 = vector.shape_cast %491 : vector<1x1x32xf32> to vector<1x32xf32>
    %493 = vector.broadcast %492 : vector<1x32xf32> to vector<16x32xf32>
    %494 = arith.addf %490, %493 : vector<16x32xf32>
    %c1_187 = arith.constant 1 : index
    %c0_188 = arith.constant 0 : index
    %c0_189 = arith.constant 0 : index
    %495 = vector.load %arg13[%c1_187, %c0_188, %c0_189] : memref<2x32x64xbf16, #tpu.memory_space<vmem>>, vector<1x32x64xbf16>
    %496 = vector.shape_cast %495 : vector<1x32x64xbf16> to vector<32x64xbf16>
    %cst_190 = arith.constant dense<0.000000e+00> : vector<32x64xf32>
    %497 = tpu.matmul %7, %496, %cst_190 {dimension_numbers = #tpu.dot_dimension_numbers<[1], [0], [0], [1], [0, 0, 1, 1], [], []>} : vector<32x32xbf16>, vector<32x64xbf16>, vector<32x64xf32> -> vector<32x64xf32>
    %c1_191 = arith.constant 1 : index
    %c0_192 = arith.constant 0 : index
    %c0_193 = arith.constant 0 : index
    %498 = vector.load %arg14[%c1_191, %c0_192, %c0_193] : memref<2x1x64xf32, #tpu.memory_space<vmem>>, vector<1x1x64xf32>
    %499 = vector.shape_cast %498 : vector<1x1x64xf32> to vector<1x64xf32>
    %500 = vector.broadcast %499 : vector<1x64xf32> to vector<32x64xf32>
    %501 = arith.addf %497, %500 : vector<32x64xf32>
    %502 = vector.extract_strided_slice %501 {offsets = [0, 0], sizes = [32, 32], strides = [1, 1]} : vector<32x64xf32> to vector<32x32xf32>
    %503 = vector.extract_strided_slice %501 {offsets = [0, 32], sizes = [32, 32], strides = [1, 1]} : vector<32x64xf32> to vector<32x32xf32>
    %c1_194 = arith.constant 1 : index
    %c0_195 = arith.constant 0 : index
    %c0_196 = arith.constant 0 : index
    %504 = vector.load %arg15[%c1_194, %c0_195, %c0_196] : memref<2x32x32xbf16, #tpu.memory_space<vmem>>, vector<1x32x32xbf16>
    %505 = vector.shape_cast %504 : vector<1x32x32xbf16> to vector<32x32xbf16>
    %c1_197 = arith.constant 1 : index
    %c0_198 = arith.constant 0 : index
    %c0_199 = arith.constant 0 : index
    %506 = vector.load %arg16[%c1_197, %c0_198, %c0_199] : memref<2x1x32xf32, #tpu.memory_space<vmem>>, vector<1x1x32xf32>
    %507 = vector.shape_cast %506 : vector<1x1x32xf32> to vector<1x32xf32>
    %508 = vector.shape_cast %494 : vector<16x32xf32> to vector<2x8x32xf32>
    %509 = vector.shape_cast %502 : vector<32x32xf32> to vector<2x16x32xf32>
    %510 = vector.shape_cast %503 : vector<32x32xf32> to vector<2x16x32xf32>
    %511 = vector.extract_strided_slice %508 {offsets = [0, 0, 0], sizes = [2, 8, 8], strides = [1, 1, 1]} : vector<2x8x32xf32> to vector<2x8x8xf32>
    %512 = arith.truncf %511 : vector<2x8x8xf32> to vector<2x8x8xbf16>
    %513 = vector.extract_strided_slice %509 {offsets = [0, 0, 0], sizes = [2, 16, 8], strides = [1, 1, 1]} : vector<2x16x32xf32> to vector<2x16x8xf32>
    %514 = arith.truncf %513 : vector<2x16x8xf32> to vector<2x16x8xbf16>
    %515 = vector.extract_strided_slice %510 {offsets = [0, 0, 0], sizes = [2, 16, 8], strides = [1, 1, 1]} : vector<2x16x32xf32> to vector<2x16x8xf32>
    %516 = arith.truncf %515 : vector<2x16x8xf32> to vector<2x16x8xbf16>
    "tpu.trace_start"() <{level = 10 : i32, message = "bqd,bkd->bqk"}> : () -> ()
    %cst_200 = arith.constant dense<0.000000e+00> : vector<2x8x16xf32>
    %517 = tpu.matmul %512, %514, %cst_200 {dimension_numbers = #tpu.dot_dimension_numbers<[2], [2], [1], [1], [0, 0, 0, 1, 1, 1], [0], [0]>} : vector<2x8x8xbf16>, vector<2x16x8xbf16>, vector<2x8x16xf32> -> vector<2x8x16xf32>
    "tpu.trace_stop"() : () -> ()
    %cst_201 = arith.constant 0.353553385 : f32
    %518 = vector.broadcast %cst_201 : f32 to vector<2x8x16xf32>
    %519 = arith.mulf %517, %518 : vector<2x8x16xf32>
    %520 = arith.addf %519, %10 : vector<2x8x16xf32>
    %cst_202 = arith.constant dense<0xFF800000> : vector<2x8xf32>
    %521 = vector.multi_reduction <maximumf>, %520, %cst_202 [2] : vector<2x8x16xf32> to vector<2x8xf32>
    %522 = vector.shape_cast %521 : vector<2x8xf32> to vector<2x8x1xf32>
    %523 = vector.broadcast %522 : vector<2x8x1xf32> to vector<2x8x16xf32>
    %524 = arith.subf %520, %523 : vector<2x8x16xf32>
    %525 = math.exp %524 : vector<2x8x16xf32>
    %cst_203 = arith.constant dense<0.000000e+00> : vector<2x8xf32>
    %526 = vector.multi_reduction <add>, %525, %cst_203 [2] : vector<2x8x16xf32> to vector<2x8xf32>
    %527 = vector.shape_cast %526 : vector<2x8xf32> to vector<2x8x1xf32>
    %528 = tpu.reciprocal %527 {approx = true} : vector<2x8x1xf32> -> vector<2x8x1xf32>
    %529 = vector.broadcast %528 : vector<2x8x1xf32> to vector<2x8x16xf32>
    %530 = arith.mulf %525, %529 : vector<2x8x16xf32>
    %531 = arith.truncf %530 : vector<2x8x16xf32> to vector<2x8x16xbf16>
    "tpu.trace_start"() <{level = 10 : i32, message = "bqk,bkd->bqd"}> : () -> ()
    %cst_204 = arith.constant dense<0.000000e+00> : vector<2x8x8xf32>
    %532 = tpu.matmul %531, %516, %cst_204 {dimension_numbers = #tpu.dot_dimension_numbers<[2], [1], [1], [2], [0, 0, 0, 1, 1, 2], [0], [0]>} : vector<2x8x16xbf16>, vector<2x16x8xbf16>, vector<2x8x8xf32> -> vector<2x8x8xf32>
    "tpu.trace_stop"() : () -> ()
    %533 = vector.extract_strided_slice %508 {offsets = [0, 0, 8], sizes = [2, 8, 8], strides = [1, 1, 1]} : vector<2x8x32xf32> to vector<2x8x8xf32>
    %534 = arith.truncf %533 : vector<2x8x8xf32> to vector<2x8x8xbf16>
    %535 = vector.extract_strided_slice %509 {offsets = [0, 0, 8], sizes = [2, 16, 8], strides = [1, 1, 1]} : vector<2x16x32xf32> to vector<2x16x8xf32>
    %536 = arith.truncf %535 : vector<2x16x8xf32> to vector<2x16x8xbf16>
    %537 = vector.extract_strided_slice %510 {offsets = [0, 0, 8], sizes = [2, 16, 8], strides = [1, 1, 1]} : vector<2x16x32xf32> to vector<2x16x8xf32>
    %538 = arith.truncf %537 : vector<2x16x8xf32> to vector<2x16x8xbf16>
    "tpu.trace_start"() <{level = 10 : i32, message = "bqd,bkd->bqk"}> : () -> ()
    %cst_205 = arith.constant dense<0.000000e+00> : vector<2x8x16xf32>
    %539 = tpu.matmul %534, %536, %cst_205 {dimension_numbers = #tpu.dot_dimension_numbers<[2], [2], [1], [1], [0, 0, 0, 1, 1, 1], [0], [0]>} : vector<2x8x8xbf16>, vector<2x16x8xbf16>, vector<2x8x16xf32> -> vector<2x8x16xf32>
    "tpu.trace_stop"() : () -> ()
    %cst_206 = arith.constant 0.353553385 : f32
    %540 = vector.broadcast %cst_206 : f32 to vector<2x8x16xf32>
    %541 = arith.mulf %539, %540 : vector<2x8x16xf32>
    %542 = arith.addf %541, %10 : vector<2x8x16xf32>
    %cst_207 = arith.constant dense<0xFF800000> : vector<2x8xf32>
    %543 = vector.multi_reduction <maximumf>, %542, %cst_207 [2] : vector<2x8x16xf32> to vector<2x8xf32>
    %544 = vector.shape_cast %543 : vector<2x8xf32> to vector<2x8x1xf32>
    %545 = vector.broadcast %544 : vector<2x8x1xf32> to vector<2x8x16xf32>
    %546 = arith.subf %542, %545 : vector<2x8x16xf32>
    %547 = math.exp %546 : vector<2x8x16xf32>
    %cst_208 = arith.constant dense<0.000000e+00> : vector<2x8xf32>
    %548 = vector.multi_reduction <add>, %547, %cst_208 [2] : vector<2x8x16xf32> to vector<2x8xf32>
    %549 = vector.shape_cast %548 : vector<2x8xf32> to vector<2x8x1xf32>
    %550 = tpu.reciprocal %549 {approx = true} : vector<2x8x1xf32> -> vector<2x8x1xf32>
    %551 = vector.broadcast %550 : vector<2x8x1xf32> to vector<2x8x16xf32>
    %552 = arith.mulf %547, %551 : vector<2x8x16xf32>
    %553 = arith.truncf %552 : vector<2x8x16xf32> to vector<2x8x16xbf16>
    "tpu.trace_start"() <{level = 10 : i32, message = "bqk,bkd->bqd"}> : () -> ()
    %cst_209 = arith.constant dense<0.000000e+00> : vector<2x8x8xf32>
    %554 = tpu.matmul %553, %538, %cst_209 {dimension_numbers = #tpu.dot_dimension_numbers<[2], [1], [1], [2], [0, 0, 0, 1, 1, 2], [0], [0]>} : vector<2x8x16xbf16>, vector<2x16x8xbf16>, vector<2x8x8xf32> -> vector<2x8x8xf32>
    "tpu.trace_stop"() : () -> ()
    %555 = vector.extract_strided_slice %508 {offsets = [0, 0, 16], sizes = [2, 8, 8], strides = [1, 1, 1]} : vector<2x8x32xf32> to vector<2x8x8xf32>
    %556 = arith.truncf %555 : vector<2x8x8xf32> to vector<2x8x8xbf16>
    %557 = vector.extract_strided_slice %509 {offsets = [0, 0, 16], sizes = [2, 16, 8], strides = [1, 1, 1]} : vector<2x16x32xf32> to vector<2x16x8xf32>
    %558 = arith.truncf %557 : vector<2x16x8xf32> to vector<2x16x8xbf16>
    %559 = vector.extract_strided_slice %510 {offsets = [0, 0, 16], sizes = [2, 16, 8], strides = [1, 1, 1]} : vector<2x16x32xf32> to vector<2x16x8xf32>
    %560 = arith.truncf %559 : vector<2x16x8xf32> to vector<2x16x8xbf16>
    "tpu.trace_start"() <{level = 10 : i32, message = "bqd,bkd->bqk"}> : () -> ()
    %cst_210 = arith.constant dense<0.000000e+00> : vector<2x8x16xf32>
    %561 = tpu.matmul %556, %558, %cst_210 {dimension_numbers = #tpu.dot_dimension_numbers<[2], [2], [1], [1], [0, 0, 0, 1, 1, 1], [0], [0]>} : vector<2x8x8xbf16>, vector<2x16x8xbf16>, vector<2x8x16xf32> -> vector<2x8x16xf32>
    "tpu.trace_stop"() : () -> ()
    %cst_211 = arith.constant 0.353553385 : f32
    %562 = vector.broadcast %cst_211 : f32 to vector<2x8x16xf32>
    %563 = arith.mulf %561, %562 : vector<2x8x16xf32>
    %564 = arith.addf %563, %10 : vector<2x8x16xf32>
    %cst_212 = arith.constant dense<0xFF800000> : vector<2x8xf32>
    %565 = vector.multi_reduction <maximumf>, %564, %cst_212 [2] : vector<2x8x16xf32> to vector<2x8xf32>
    %566 = vector.shape_cast %565 : vector<2x8xf32> to vector<2x8x1xf32>
    %567 = vector.broadcast %566 : vector<2x8x1xf32> to vector<2x8x16xf32>
    %568 = arith.subf %564, %567 : vector<2x8x16xf32>
    %569 = math.exp %568 : vector<2x8x16xf32>
    %cst_213 = arith.constant dense<0.000000e+00> : vector<2x8xf32>
    %570 = vector.multi_reduction <add>, %569, %cst_213 [2] : vector<2x8x16xf32> to vector<2x8xf32>
    %571 = vector.shape_cast %570 : vector<2x8xf32> to vector<2x8x1xf32>
    %572 = tpu.reciprocal %571 {approx = true} : vector<2x8x1xf32> -> vector<2x8x1xf32>
    %573 = vector.broadcast %572 : vector<2x8x1xf32> to vector<2x8x16xf32>
    %574 = arith.mulf %569, %573 : vector<2x8x16xf32>
    %575 = arith.truncf %574 : vector<2x8x16xf32> to vector<2x8x16xbf16>
    "tpu.trace_start"() <{level = 10 : i32, message = "bqk,bkd->bqd"}> : () -> ()
    %cst_214 = arith.constant dense<0.000000e+00> : vector<2x8x8xf32>
    %576 = tpu.matmul %575, %560, %cst_214 {dimension_numbers = #tpu.dot_dimension_numbers<[2], [1], [1], [2], [0, 0, 0, 1, 1, 2], [0], [0]>} : vector<2x8x16xbf16>, vector<2x16x8xbf16>, vector<2x8x8xf32> -> vector<2x8x8xf32>
    "tpu.trace_stop"() : () -> ()
    %577 = vector.extract_strided_slice %508 {offsets = [0, 0, 24], sizes = [2, 8, 8], strides = [1, 1, 1]} : vector<2x8x32xf32> to vector<2x8x8xf32>
    %578 = arith.truncf %577 : vector<2x8x8xf32> to vector<2x8x8xbf16>
    %579 = vector.extract_strided_slice %509 {offsets = [0, 0, 24], sizes = [2, 16, 8], strides = [1, 1, 1]} : vector<2x16x32xf32> to vector<2x16x8xf32>
    %580 = arith.truncf %579 : vector<2x16x8xf32> to vector<2x16x8xbf16>
    %581 = vector.extract_strided_slice %510 {offsets = [0, 0, 24], sizes = [2, 16, 8], strides = [1, 1, 1]} : vector<2x16x32xf32> to vector<2x16x8xf32>
    %582 = arith.truncf %581 : vector<2x16x8xf32> to vector<2x16x8xbf16>
    "tpu.trace_start"() <{level = 10 : i32, message = "bqd,bkd->bqk"}> : () -> ()
    %cst_215 = arith.constant dense<0.000000e+00> : vector<2x8x16xf32>
    %583 = tpu.matmul %578, %580, %cst_215 {dimension_numbers = #tpu.dot_dimension_numbers<[2], [2], [1], [1], [0, 0, 0, 1, 1, 1], [0], [0]>} : vector<2x8x8xbf16>, vector<2x16x8xbf16>, vector<2x8x16xf32> -> vector<2x8x16xf32>
    "tpu.trace_stop"() : () -> ()
    %cst_216 = arith.constant 0.353553385 : f32
    %584 = vector.broadcast %cst_216 : f32 to vector<2x8x16xf32>
    %585 = arith.mulf %583, %584 : vector<2x8x16xf32>
    %586 = arith.addf %585, %10 : vector<2x8x16xf32>
    %cst_217 = arith.constant dense<0xFF800000> : vector<2x8xf32>
    %587 = vector.multi_reduction <maximumf>, %586, %cst_217 [2] : vector<2x8x16xf32> to vector<2x8xf32>
    %588 = vector.shape_cast %587 : vector<2x8xf32> to vector<2x8x1xf32>
    %589 = vector.broadcast %588 : vector<2x8x1xf32> to vector<2x8x16xf32>
    %590 = arith.subf %586, %589 : vector<2x8x16xf32>
    %591 = math.exp %590 : vector<2x8x16xf32>
    %cst_218 = arith.constant dense<0.000000e+00> : vector<2x8xf32>
    %592 = vector.multi_reduction <add>, %591, %cst_218 [2] : vector<2x8x16xf32> to vector<2x8xf32>
    %593 = vector.shape_cast %592 : vector<2x8xf32> to vector<2x8x1xf32>
    %594 = tpu.reciprocal %593 {approx = true} : vector<2x8x1xf32> -> vector<2x8x1xf32>
    %595 = vector.broadcast %594 : vector<2x8x1xf32> to vector<2x8x16xf32>
    %596 = arith.mulf %591, %595 : vector<2x8x16xf32>
    %597 = arith.truncf %596 : vector<2x8x16xf32> to vector<2x8x16xbf16>
    "tpu.trace_start"() <{level = 10 : i32, message = "bqk,bkd->bqd"}> : () -> ()
    %cst_219 = arith.constant dense<0.000000e+00> : vector<2x8x8xf32>
    %598 = tpu.matmul %597, %582, %cst_219 {dimension_numbers = #tpu.dot_dimension_numbers<[2], [1], [1], [2], [0, 0, 0, 1, 1, 2], [0], [0]>} : vector<2x8x16xbf16>, vector<2x16x8xbf16>, vector<2x8x8xf32> -> vector<2x8x8xf32>
    "tpu.trace_stop"() : () -> ()
    %599 = tpu.concatenate %532, %554, %576, %598 in 2 : vector<2x8x8xf32>, vector<2x8x8xf32>, vector<2x8x8xf32>, vector<2x8x8xf32> -> vector<2x8x32xf32>
    %600 = vector.shape_cast %599 : vector<2x8x32xf32> to vector<16x32xf32>
    %601 = arith.truncf %600 : vector<16x32xf32> to vector<16x32xbf16>
    %cst_220 = arith.constant dense<0.000000e+00> : vector<16x32xf32>
    %602 = tpu.matmul %601, %505, %cst_220 {dimension_numbers = #tpu.dot_dimension_numbers<[1], [0], [0], [1], [0, 0, 1, 1], [], []>} : vector<16x32xbf16>, vector<32x32xbf16>, vector<16x32xf32> -> vector<16x32xf32>
    %603 = vector.broadcast %507 : vector<1x32xf32> to vector<16x32xf32>
    %604 = arith.addf %602, %603 : vector<16x32xf32>
    %605 = arith.addf %486, %604 : vector<16x32xf32>
    %c1_221 = arith.constant 1 : index
    %c0_222 = arith.constant 0 : index
    %c0_223 = arith.constant 0 : index
    %606 = vector.load %arg19[%c1_221, %c0_222, %c0_223] : memref<2x1x32xf32, #tpu.memory_space<vmem>>, vector<1x1x32xf32>
    %607 = vector.shape_cast %606 : vector<1x1x32xf32> to vector<1x32xf32>
    %c1_224 = arith.constant 1 : index
    %c0_225 = arith.constant 0 : index
    %c0_226 = arith.constant 0 : index
    %608 = vector.load %arg20[%c1_224, %c0_225, %c0_226] : memref<2x1x32xf32, #tpu.memory_space<vmem>>, vector<1x1x32xf32>
    %609 = vector.shape_cast %608 : vector<1x1x32xf32> to vector<1x32xf32>
    %cst_227 = arith.constant dense<0.000000e+00> : vector<16xf32>
    %610 = vector.multi_reduction <add>, %605, %cst_227 [1] : vector<16x32xf32> to vector<16xf32>
    %611 = vector.shape_cast %610 : vector<16xf32> to vector<16x1xf32>
    %cst_228 = arith.constant 3.200000e+01 : f32
    %612 = vector.broadcast %cst_228 : f32 to vector<16x1xf32>
    %613 = arith.divf %611, %612 : vector<16x1xf32>
    %614 = vector.broadcast %613 : vector<16x1xf32> to vector<16x32xf32>
    %615 = arith.subf %605, %614 : vector<16x32xf32>
    %616 = vector.broadcast %613 : vector<16x1xf32> to vector<16x32xf32>
    %617 = arith.subf %605, %616 : vector<16x32xf32>
    %618 = arith.mulf %615, %617 : vector<16x32xf32>
    %cst_229 = arith.constant dense<0.000000e+00> : vector<16xf32>
    %619 = vector.multi_reduction <add>, %618, %cst_229 [1] : vector<16x32xf32> to vector<16xf32>
    %620 = vector.shape_cast %619 : vector<16xf32> to vector<16x1xf32>
    %cst_230 = arith.constant 3.200000e+01 : f32
    %621 = vector.broadcast %cst_230 : f32 to vector<16x1xf32>
    %622 = arith.divf %620, %621 : vector<16x1xf32>
    %623 = vector.broadcast %613 : vector<16x1xf32> to vector<16x32xf32>
    %624 = arith.subf %605, %623 : vector<16x32xf32>
    %cst_231 = arith.constant 9.99999974E-6 : f32
    %625 = vector.broadcast %cst_231 : f32 to vector<16x1xf32>
    %626 = arith.addf %622, %625 : vector<16x1xf32>
    %627 = math.rsqrt %626 : vector<16x1xf32>
    %628 = vector.broadcast %627 : vector<16x1xf32> to vector<16x32xf32>
    %629 = arith.mulf %624, %628 : vector<16x32xf32>
    %630 = vector.broadcast %607 : vector<1x32xf32> to vector<16x32xf32>
    %631 = arith.mulf %629, %630 : vector<16x32xf32>
    %632 = vector.broadcast %609 : vector<1x32xf32> to vector<16x32xf32>
    %633 = arith.addf %631, %632 : vector<16x32xf32>
    %634 = arith.truncf %633 : vector<16x32xf32> to vector<16x32xbf16>
    %c1_232 = arith.constant 1 : index
    %c0_233 = arith.constant 0 : index
    %c0_234 = arith.constant 0 : index
    %635 = vector.load %arg23[%c1_232, %c0_233, %c0_234] : memref<2x32x2048xbf16, #tpu.memory_space<vmem>>, vector<1x32x2048xbf16>
    %636 = vector.shape_cast %635 : vector<1x32x2048xbf16> to vector<32x2048xbf16>
    %cst_235 = arith.constant dense<0.000000e+00> : vector<16x2048xf32>
    %637 = tpu.matmul %634, %636, %cst_235 {dimension_numbers = #tpu.dot_dimension_numbers<[1], [0], [0], [1], [0, 0, 1, 1], [], []>} : vector<16x32xbf16>, vector<32x2048xbf16>, vector<16x2048xf32> -> vector<16x2048xf32>
    %c1_236 = arith.constant 1 : index
    %c0_237 = arith.constant 0 : index
    %c0_238 = arith.constant 0 : index
    %638 = vector.load %arg24[%c1_236, %c0_237, %c0_238] : memref<2x1x2048xf32, #tpu.memory_space<vmem>>, vector<1x1x2048xf32>
    %639 = vector.shape_cast %638 : vector<1x1x2048xf32> to vector<1x2048xf32>
    %640 = vector.broadcast %639 : vector<1x2048xf32> to vector<16x2048xf32>
    %641 = arith.addf %637, %640 : vector<16x2048xf32>
    %cst_239 = arith.constant 0.000000e+00 : f32
    %642 = vector.broadcast %cst_239 : f32 to vector<16x2048xf32>
    %643 = arith.maximumf %641, %642 : vector<16x2048xf32>
    %644 = arith.truncf %643 : vector<16x2048xf32> to vector<16x2048xbf16>
    %c1_240 = arith.constant 1 : index
    %c0_241 = arith.constant 0 : index
    %c0_242 = arith.constant 0 : index
    %645 = vector.load %arg25[%c1_240, %c0_241, %c0_242] : memref<2x2048x32xbf16, #tpu.memory_space<vmem>>, vector<1x2048x32xbf16>
    %646 = vector.shape_cast %645 : vector<1x2048x32xbf16> to vector<2048x32xbf16>
    %cst_243 = arith.constant dense<0.000000e+00> : vector<16x32xf32>
    %647 = tpu.matmul %644, %646, %cst_243 {dimension_numbers = #tpu.dot_dimension_numbers<[1], [0], [0], [1], [0, 0, 1, 1], [], []>} : vector<16x2048xbf16>, vector<2048x32xbf16>, vector<16x32xf32> -> vector<16x32xf32>
    %c1_244 = arith.constant 1 : index
    %c0_245 = arith.constant 0 : index
    %c0_246 = arith.constant 0 : index
    %648 = vector.load %arg26[%c1_244, %c0_245, %c0_246] : memref<2x1x32xf32, #tpu.memory_space<vmem>>, vector<1x1x32xf32>
    %649 = vector.shape_cast %648 : vector<1x1x32xf32> to vector<1x32xf32>
    %650 = vector.broadcast %649 : vector<1x32xf32> to vector<16x32xf32>
    %651 = arith.addf %647, %650 : vector<16x32xf32>
    %652 = arith.addf %633, %651 : vector<16x32xf32>
    %c1_247 = arith.constant 1 : index
    %c0_248 = arith.constant 0 : index
    %c0_249 = arith.constant 0 : index
    %653 = vector.load %arg21[%c1_247, %c0_248, %c0_249] : memref<2x1x32xf32, #tpu.memory_space<vmem>>, vector<1x1x32xf32>
    %654 = vector.shape_cast %653 : vector<1x1x32xf32> to vector<1x32xf32>
    %c1_250 = arith.constant 1 : index
    %c0_251 = arith.constant 0 : index
    %c0_252 = arith.constant 0 : index
    %655 = vector.load %arg22[%c1_250, %c0_251, %c0_252] : memref<2x1x32xf32, #tpu.memory_space<vmem>>, vector<1x1x32xf32>
    %656 = vector.shape_cast %655 : vector<1x1x32xf32> to vector<1x32xf32>
    %cst_253 = arith.constant dense<0.000000e+00> : vector<16xf32>
    %657 = vector.multi_reduction <add>, %652, %cst_253 [1] : vector<16x32xf32> to vector<16xf32>
    %658 = vector.shape_cast %657 : vector<16xf32> to vector<16x1xf32>
    %cst_254 = arith.constant 3.200000e+01 : f32
    %659 = vector.broadcast %cst_254 : f32 to vector<16x1xf32>
    %660 = arith.divf %658, %659 : vector<16x1xf32>
    %661 = vector.broadcast %660 : vector<16x1xf32> to vector<16x32xf32>
    %662 = arith.subf %652, %661 : vector<16x32xf32>
    %663 = vector.broadcast %660 : vector<16x1xf32> to vector<16x32xf32>
    %664 = arith.subf %652, %663 : vector<16x32xf32>
    %665 = arith.mulf %662, %664 : vector<16x32xf32>
    %cst_255 = arith.constant dense<0.000000e+00> : vector<16xf32>
    %666 = vector.multi_reduction <add>, %665, %cst_255 [1] : vector<16x32xf32> to vector<16xf32>
    %667 = vector.shape_cast %666 : vector<16xf32> to vector<16x1xf32>
    %cst_256 = arith.constant 3.200000e+01 : f32
    %668 = vector.broadcast %cst_256 : f32 to vector<16x1xf32>
    %669 = arith.divf %667, %668 : vector<16x1xf32>
    %670 = vector.broadcast %660 : vector<16x1xf32> to vector<16x32xf32>
    %671 = arith.subf %652, %670 : vector<16x32xf32>
    %cst_257 = arith.constant 9.99999974E-6 : f32
    %672 = vector.broadcast %cst_257 : f32 to vector<16x1xf32>
    %673 = arith.addf %669, %672 : vector<16x1xf32>
    %674 = math.rsqrt %673 : vector<16x1xf32>
    %675 = vector.broadcast %674 : vector<16x1xf32> to vector<16x32xf32>
    %676 = arith.mulf %671, %675 : vector<16x32xf32>
    %677 = vector.broadcast %654 : vector<1x32xf32> to vector<16x32xf32>
    %678 = arith.mulf %676, %677 : vector<16x32xf32>
    %679 = vector.broadcast %656 : vector<1x32xf32> to vector<16x32xf32>
    %680 = arith.addf %678, %679 : vector<16x32xf32>
    %c0_258 = arith.constant 0 : index
    %c0_259 = arith.constant 0 : index
    %681 = vector.load %arg27[%c0_258, %c0_259] : memref<1x32xf32, #tpu.memory_space<vmem>>, vector<1x32xf32>
    %c0_260 = arith.constant 0 : index
    %c0_261 = arith.constant 0 : index
    %682 = vector.load %arg28[%c0_260, %c0_261] : memref<1x32xf32, #tpu.memory_space<vmem>>, vector<1x32xf32>
    %cst_262 = arith.constant dense<0.000000e+00> : vector<16xf32>
    %683 = vector.multi_reduction <add>, %680, %cst_262 [1] : vector<16x32xf32> to vector<16xf32>
    %684 = vector.shape_cast %683 : vector<16xf32> to vector<16x1xf32>
    %cst_263 = arith.constant 3.200000e+01 : f32
    %685 = vector.broadcast %cst_263 : f32 to vector<16x1xf32>
    %686 = arith.divf %684, %685 : vector<16x1xf32>
    %687 = vector.broadcast %686 : vector<16x1xf32> to vector<16x32xf32>
    %688 = arith.subf %680, %687 : vector<16x32xf32>
    %689 = vector.broadcast %686 : vector<16x1xf32> to vector<16x32xf32>
    %690 = arith.subf %680, %689 : vector<16x32xf32>
    %691 = arith.mulf %688, %690 : vector<16x32xf32>
    %cst_264 = arith.constant dense<0.000000e+00> : vector<16xf32>
    %692 = vector.multi_reduction <add>, %691, %cst_264 [1] : vector<16x32xf32> to vector<16xf32>
    %693 = vector.shape_cast %692 : vector<16xf32> to vector<16x1xf32>
    %cst_265 = arith.constant 3.200000e+01 : f32
    %694 = vector.broadcast %cst_265 : f32 to vector<16x1xf32>
    %695 = arith.divf %693, %694 : vector<16x1xf32>
    %696 = vector.broadcast %686 : vector<16x1xf32> to vector<16x32xf32>
    %697 = arith.subf %680, %696 : vector<16x32xf32>
    %cst_266 = arith.constant 9.99999974E-6 : f32
    %698 = vector.broadcast %cst_266 : f32 to vector<16x1xf32>
    %699 = arith.addf %695, %698 : vector<16x1xf32>
    %700 = math.rsqrt %699 : vector<16x1xf32>
    %701 = vector.broadcast %700 : vector<16x1xf32> to vector<16x32xf32>
    %702 = arith.mulf %697, %701 : vector<16x32xf32>
    %703 = vector.broadcast %681 : vector<1x32xf32> to vector<16x32xf32>
    %704 = arith.mulf %702, %703 : vector<16x32xf32>
    %705 = vector.broadcast %682 : vector<1x32xf32> to vector<16x32xf32>
    %706 = arith.addf %704, %705 : vector<16x32xf32>
    %707 = arith.truncf %706 : vector<16x32xf32> to vector<16x32xbf16>
    %c0_267 = arith.constant 0 : index
    %c0_268 = arith.constant 0 : index
    %708 = vector.load %arg29[%c0_267, %c0_268] : memref<32x128xbf16, #tpu.memory_space<vmem>>, vector<32x128xbf16>
    %cst_269 = arith.constant dense<0.000000e+00> : vector<16x128xf32>
    %709 = tpu.matmul %707, %708, %cst_269 {dimension_numbers = #tpu.dot_dimension_numbers<[1], [0], [0], [1], [0, 0, 1, 1], [], []>} : vector<16x32xbf16>, vector<32x128xbf16>, vector<16x128xf32> -> vector<16x128xf32>
    %c0_270 = arith.constant 0 : index
    %c0_271 = arith.constant 0 : index
    %710 = vector.load %arg30[%c0_270, %c0_271] : memref<1x128xf32, #tpu.memory_space<vmem>>, vector<1x128xf32>
    %711 = vector.broadcast %710 : vector<1x128xf32> to vector<16x128xf32>
    %712 = arith.addf %709, %711 : vector<16x128xf32>
    %c0_272 = arith.constant 0 : index
    %c0_273 = arith.constant 0 : index
    %713 = vector.load %arg31[%c0_272, %c0_273] : memref<16x128xf32, #tpu.memory_space<vmem>>, vector<16x128xf32>
    tpu.vector_store %arg31[%c0_272, %c0_273], %712 {strides = array<i32>} : memref<16x128xf32, #tpu.memory_space<vmem>>, vector<16x128xf32>,
    return
  }
  func.func @transform_0(%arg0: i32) -> (i32, i32) {
    %c0_i32 = arith.constant 0 : i32
    %c0_i32_0 = arith.constant 0 : i32
    return %arg0, %c0_i32 : i32, i32
  }
  func.func @transform_1(%arg0: i32) -> (i32, i32) {
    %c0_i32 = arith.constant 0 : i32
    %c0_i32_0 = arith.constant 0 : i32
    return %arg0, %c0_i32 : i32, i32
  }
  func.func @transform_2(%arg0: i32) -> (i32, i32) {
    %c0_i32 = arith.constant 0 : i32
    %c0_i32_0 = arith.constant 0 : i32
    %c0_i32_1 = arith.constant 0 : i32
    return %c0_i32, %c0_i32_0 : i32, i32
  }
  func.func @transform_3(%arg0: i32) -> (i32, i32) {
    %c0_i32 = arith.constant 0 : i32
    %c0_i32_0 = arith.constant 0 : i32
    %c0_i32_1 = arith.constant 0 : i32
    return %c0_i32, %c0_i32_0 : i32, i32
  }
  func.func @transform_4(%arg0: i32) -> (i32, i32, i32) {
    %c0_i32 = arith.constant 0 : i32
    %c0_i32_0 = arith.constant 0 : i32
    %c0_i32_1 = arith.constant 0 : i32
    return %arg0, %c0_i32, %c0_i32_0 : i32, i32, i32
  }
  func.func @transform_5(%arg0: i32) -> (i32, i32, i32) {
    %c0_i32 = arith.constant 0 : i32
    %c0_i32_0 = arith.constant 0 : i32
    %c0_i32_1 = arith.constant 0 : i32
    return %arg0, %c0_i32, %c0_i32_0 : i32, i32, i32
  }
  func.func @transform_6(%arg0: i32) -> (i32, i32, i32) {
    %c0_i32 = arith.constant 0 : i32
    %c0_i32_0 = arith.constant 0 : i32
    %c0_i32_1 = arith.constant 0 : i32
    %c0_i32_2 = arith.constant 0 : i32
    return %c0_i32, %c0_i32_0, %c0_i32_1 : i32, i32, i32
  }
  func.func @transform_7(%arg0: i32) -> (i32, i32, i32) {
    %c0_i32 = arith.constant 0 : i32
    %c0_i32_0 = arith.constant 0 : i32
    %c0_i32_1 = arith.constant 0 : i32
    %c0_i32_2 = arith.constant 0 : i32
    return %c0_i32, %c0_i32_0, %c0_i32_1 : i32, i32, i32
  }
  func.func @transform_8(%arg0: i32) -> (i32, i32, i32) {
    %c0_i32 = arith.constant 0 : i32
    %c0_i32_0 = arith.constant 0 : i32
    %c0_i32_1 = arith.constant 0 : i32
    %c0_i32_2 = arith.constant 0 : i32
    return %c0_i32, %c0_i32_0, %c0_i32_1 : i32, i32, i32
  }
  func.func @transform_9(%arg0: i32) -> (i32, i32, i32) {
    %c0_i32 = arith.constant 0 : i32
    %c0_i32_0 = arith.constant 0 : i32
    %c0_i32_1 = arith.constant 0 : i32
    %c0_i32_2 = arith.constant 0 : i32
    return %c0_i32, %c0_i32_0, %c0_i32_1 : i32, i32, i32
  }
  func.func @transform_10(%arg0: i32) -> (i32, i32, i32) {
    %c0_i32 = arith.constant 0 : i32
    %c0_i32_0 = arith.constant 0 : i32
    %c0_i32_1 = arith.constant 0 : i32
    %c0_i32_2 = arith.constant 0 : i32
    return %c0_i32, %c0_i32_0, %c0_i32_1 : i32, i32, i32
  }
  func.func @transform_11(%arg0: i32) -> (i32, i32, i32) {
    %c0_i32 = arith.constant 0 : i32
    %c0_i32_0 = arith.constant 0 : i32
    %c0_i32_1 = arith.constant 0 : i32
    %c0_i32_2 = arith.constant 0 : i32
    return %c0_i32, %c0_i32_0, %c0_i32_1 : i32, i32, i32
  }
  func.func @transform_12(%arg0: i32) -> (i32, i32, i32) {
    %c0_i32 = arith.constant 0 : i32
    %c0_i32_0 = arith.constant 0 : i32
    %c0_i32_1 = arith.constant 0 : i32
    %c0_i32_2 = arith.constant 0 : i32
    return %c0_i32, %c0_i32_0, %c0_i32_1 : i32, i32, i32
  }
  func.func @transform_13(%arg0: i32) -> (i32, i32, i32) {
    %c0_i32 = arith.constant 0 : i32
    %c0_i32_0 = arith.constant 0 : i32
    %c0_i32_1 = arith.constant 0 : i32
    %c0_i32_2 = arith.constant 0 : i32
    return %c0_i32, %c0_i32_0, %c0_i32_1 : i32, i32, i32
  }
  func.func @transform_14(%arg0: i32) -> (i32, i32, i32) {
    %c0_i32 = arith.constant 0 : i32
    %c0_i32_0 = arith.constant 0 : i32
    %c0_i32_1 = arith.constant 0 : i32
    %c0_i32_2 = arith.constant 0 : i32
    return %c0_i32, %c0_i32_0, %c0_i32_1 : i32, i32, i32
  }
  func.func @transform_15(%arg0: i32) -> (i32, i32, i32) {
    %c0_i32 = arith.constant 0 : i32
    %c0_i32_0 = arith.constant 0 : i32
    %c0_i32_1 = arith.constant 0 : i32
    %c0_i32_2 = arith.constant 0 : i32
    return %c0_i32, %c0_i32_0, %c0_i32_1 : i32, i32, i32
  }
  func.func @transform_16(%arg0: i32) -> (i32, i32, i32) {
    %c0_i32 = arith.constant 0 : i32
    %c0_i32_0 = arith.constant 0 : i32
    %c0_i32_1 = arith.constant 0 : i32
    %c0_i32_2 = arith.constant 0 : i32
    return %c0_i32, %c0_i32_0, %c0_i32_1 : i32, i32, i32
  }
  func.func @transform_17(%arg0: i32) -> (i32, i32, i32) {
    %c0_i32 = arith.constant 0 : i32
    %c0_i32_0 = arith.constant 0 : i32
    %c0_i32_1 = arith.constant 0 : i32
    %c0_i32_2 = arith.constant 0 : i32
    return %c0_i32, %c0_i32_0, %c0_i32_1 : i32, i32, i32
  }
  func.func @transform_18(%arg0: i32) -> (i32, i32, i32) {
    %c0_i32 = arith.constant 0 : i32
    %c0_i32_0 = arith.constant 0 : i32
    %c0_i32_1 = arith.constant 0 : i32
    %c0_i32_2 = arith.constant 0 : i32
    return %c0_i32, %c0_i32_0, %c0_i32_1 : i32, i32, i32
  }
  func.func @transform_19(%arg0: i32) -> (i32, i32, i32) {
    %c0_i32 = arith.constant 0 : i32
    %c0_i32_0 = arith.constant 0 : i32
    %c0_i32_1 = arith.constant 0 : i32
    %c0_i32_2 = arith.constant 0 : i32
    return %c0_i32, %c0_i32_0, %c0_i32_1 : i32, i32, i32
  }
  func.func @transform_20(%arg0: i32) -> (i32, i32, i32) {
    %c0_i32 = arith.constant 0 : i32
    %c0_i32_0 = arith.constant 0 : i32
    %c0_i32_1 = arith.constant 0 : i32
    %c0_i32_2 = arith.constant 0 : i32
    return %c0_i32, %c0_i32_0, %c0_i32_1 : i32, i32, i32
  }
  func.func @transform_21(%arg0: i32) -> (i32, i32, i32) {
    %c0_i32 = arith.constant 0 : i32
    %c0_i32_0 = arith.constant 0 : i32
    %c0_i32_1 = arith.constant 0 : i32
    %c0_i32_2 = arith.constant 0 : i32
    return %c0_i32, %c0_i32_0, %c0_i32_1 : i32, i32, i32
  }
  func.func @transform_22(%arg0: i32) -> (i32, i32, i32) {
    %c0_i32 = arith.constant 0 : i32
    %c0_i32_0 = arith.constant 0 : i32
    %c0_i32_1 = arith.constant 0 : i32
    %c0_i32_2 = arith.constant 0 : i32
    return %c0_i32, %c0_i32_0, %c0_i32_1 : i32, i32, i32
  }
  func.func @transform_23(%arg0: i32) -> (i32, i32, i32) {
    %c0_i32 = arith.constant 0 : i32
    %c0_i32_0 = arith.constant 0 : i32
    %c0_i32_1 = arith.constant 0 : i32
    %c0_i32_2 = arith.constant 0 : i32
    return %c0_i32, %c0_i32_0, %c0_i32_1 : i32, i32, i32
  }
  func.func @transform_24(%arg0: i32) -> (i32, i32, i32) {
    %c0_i32 = arith.constant 0 : i32
    %c0_i32_0 = arith.constant 0 : i32
    %c0_i32_1 = arith.constant 0 : i32
    %c0_i32_2 = arith.constant 0 : i32
    return %c0_i32, %c0_i32_0, %c0_i32_1 : i32, i32, i32
  }
  func.func @transform_25(%arg0: i32) -> (i32, i32, i32) {
    %c0_i32 = arith.constant 0 : i32
    %c0_i32_0 = arith.constant 0 : i32
    %c0_i32_1 = arith.constant 0 : i32
    %c0_i32_2 = arith.constant 0 : i32
    return %c0_i32, %c0_i32_0, %c0_i32_1 : i32, i32, i32
  }
  func.func @transform_26(%arg0: i32) -> (i32, i32) {
    %c0_i32 = arith.constant 0 : i32
    %c0_i32_0 = arith.constant 0 : i32
    %c0_i32_1 = arith.constant 0 : i32
    return %c0_i32, %c0_i32_0 : i32, i32
  }
  func.func @transform_27(%arg0: i32) -> (i32, i32) {
    %c0_i32 = arith.constant 0 : i32
    %c0_i32_0 = arith.constant 0 : i32
    %c0_i32_1 = arith.constant 0 : i32
    return %c0_i32, %c0_i32_0 : i32, i32
  }
  func.func @transform_28(%arg0: i32) -> (i32, i32) {
    %c0_i32 = arith.constant 0 : i32
    %c0_i32_0 = arith.constant 0 : i32
    %c0_i32_1 = arith.constant 0 : i32
    return %c0_i32, %c0_i32_0 : i32, i32
  }
  func.func @transform_29(%arg0: i32) -> (i32, i32) {
    %c0_i32 = arith.constant 0 : i32
    %c0_i32_0 = arith.constant 0 : i32
    %c0_i32_1 = arith.constant 0 : i32
    return %c0_i32, %c0_i32_0 : i32, i32
  }
  func.func @transform_30(%arg0: i32) -> (i32, i32) {
    %c0_i32 = arith.constant 0 : i32
    %c0_i32_0 = arith.constant 0 : i32
    return %arg0, %c0_i32 : i32, i32
  }
}

</mosaic_0001>

<llo_original>
// kernel: seq2seq_forward.1
$region0: #{seq2seq_forward.1}
  #allocation0 [shape = 'u32[]', space=smem, size = 0x4, offset = 0x4, fixed_abs, tag = 'smem constant byte address 0x4 - core index']
  #allocation1 [shape = 'u32[144,128]{1,0:T(1,128)}', space=vmem, size = 0x12000, scoped, tag = 'internal scratch']
  %s0 = inlined_call_operand.smem [shape: u32[31], index: -1, kind: input, shape index: {}]
  %s1 = sld [smem:[%s0]]
  %s2 = scalar_lea.smem %s0, 1
  %s3 = sld [smem:[%s2]]
  %s4 = scalar_lea.smem %s0, 2
  %s5 = sld [smem:[%s4]]
  %s6 = scalar_lea.smem %s0, 3
  %s7 = sld [smem:[%s6]]
  %s8 = scalar_lea.smem %s0, 4
  %s9 = sld [smem:[%s8]]
  %s10 = scalar_lea.smem %s0, 5
  %s11 = sld [smem:[%s10]]
  %s12 = scalar_lea.smem %s0, 6
  %s13 = sld [smem:[%s12]]
  %s14 = scalar_lea.smem %s0, 7
  %s15 = sld [smem:[%s14]]
  %s16 = scalar_lea.smem %s0, 8
  %s17 = sld [smem:[%s16]]
  %s18 = scalar_lea.smem %s0, 9
  %s19 = sld [smem:[%s18]]
  %s20 = scalar_lea.smem %s0, 10
  %s21 = sld [smem:[%s20]]
  %s22 = scalar_lea.smem %s0, 11
  %s23 = sld [smem:[%s22]]
  %s24 = scalar_lea.smem %s0, 12
  %s25 = sld [smem:[%s24]]
  %s26 = scalar_lea.smem %s0, 13
  %s27 = sld [smem:[%s26]]
  %s28 = scalar_lea.smem %s0, 14
  %s29 = sld [smem:[%s28]]
  %s30 = scalar_lea.smem %s0, 15
  %s31 = sld [smem:[%s30]]
  %s32 = scalar_lea.smem %s0, 16
  %s33 = sld [smem:[%s32]]
  %s34 = scalar_lea.smem %s0, 17
  %s35 = sld [smem:[%s34]]
  %s36 = scalar_lea.smem %s0, 18
  %s37 = sld [smem:[%s36]]
  %s38 = scalar_lea.smem %s0, 19
  %s39 = sld [smem:[%s38]]
  %s40 = scalar_lea.smem %s0, 20
  %s41 = sld [smem:[%s40]]
  %s42 = scalar_lea.smem %s0, 21
  %s43 = sld [smem:[%s42]]
  %s44 = scalar_lea.smem %s0, 22
  %s45 = sld [smem:[%s44]]
  %s46 = scalar_lea.smem %s0, 23
  %s47 = sld [smem:[%s46]]
  %s48 = scalar_lea.smem %s0, 24
  %s49 = sld [smem:[%s48]]
  %s50 = scalar_lea.smem %s0, 25
  %s51 = sld [smem:[%s50]]
  %s52 = scalar_lea.smem %s0, 26
  %s53 = sld [smem:[%s52]]
  %s54 = scalar_lea.smem %s0, 27
  %s55 = sld [smem:[%s54]]
  %s56 = scalar_lea.smem %s0, 28
  %s57 = sld [smem:[%s56]]
  %s58 = scalar_lea.smem %s0, 29
  %s59 = sld [smem:[%s58]]
  %s60 = scalar_lea.smem %s0, 30
  %s61 = sld [smem:[%s60]]
  %s62 = sld [smem:[#allocation0]]
  $region130: #{seq2seq_forward.1} parent=0
    _
  %s64 = ssub.s32 1, %s62
  %s65 = scalar_select 0, %s64, %s62
  $region1: #{seq2seq_forward.1} parent=0
    #allocation2 [shape = 'u8[8192]{0}', space=vmem, size = 0x2000, scoped, tag = 'output window, operand 0, single buffered']
    #allocation3 [shape = 's32[1]{0}', space=sflag, size = 0x4, scoped, tag = 'scoped memory for seq2seq_forward.1']
    %66 = vsyncpa [#allocation3], 0
    // Predicated region
    $region2: #{seq2seq_forward.1} parent=1 // pred_check
      _
    $region3: #{seq2seq_forward.1} parent=1 // pred_check_branch
      %68 = sbr.rel (0) target = $region5
    $region4: #{seq2seq_forward.1} parent=1 // pred_region
      _
    $region5: #{seq2seq_forward.1} parent=1 // pred_fallthru
      _
    // Predicated region
    $region6: #{seq2seq_forward.1} parent=1 // pred_check
      _
    $region7: #{seq2seq_forward.1} parent=1 // pred_check_branch
      %70 = sbr.rel (0) target = $region9
    $region8: #{seq2seq_forward.1} parent=1 // pred_region
      _
    $region9: #{seq2seq_forward.1} parent=1 // pred_fallthru
      _
    // Predicated region
    $region10: #{seq2seq_forward.1} parent=1 // pred_check
      _
    $region11: #{seq2seq_forward.1} parent=1 // pred_check_branch
      %72 = sbr.rel (0) target = $region13
    $region12: #{seq2seq_forward.1} parent=1 // pred_region
      _
    $region13: #{seq2seq_forward.1} parent=1 // pred_fallthru
      _
    // Predicated region
    $region14: #{seq2seq_forward.1} parent=1 // pred_check
      _
    $region15: #{seq2seq_forward.1} parent=1 // pred_check_branch
      %74 = sbr.rel (0) target = $region17
    $region16: #{seq2seq_forward.1} parent=1 // pred_region
      _
    $region17: #{seq2seq_forward.1} parent=1 // pred_fallthru
      _
    // Predicated region
    $region18: #{seq2seq_forward.1} parent=1 // pred_check
      _
    $region19: #{seq2seq_forward.1} parent=1 // pred_check_branch
      %76 = sbr.rel (0) target = $region21
    $region20: #{seq2seq_forward.1} parent=1 // pred_region
      _
    $region21: #{seq2seq_forward.1} parent=1 // pred_fallthru
      _
    // Predicated region
    $region22: #{seq2seq_forward.1} parent=1 // pred_check
      _
    $region23: #{seq2seq_forward.1} parent=1 // pred_check_branch
      %78 = sbr.rel (0) target = $region25
    $region24: #{seq2seq_forward.1} parent=1 // pred_region
      _
    $region25: #{seq2seq_forward.1} parent=1 // pred_fallthru
      _
    // Predicated region
    $region26: #{seq2seq_forward.1} parent=1 // pred_check
      _
    $region27: #{seq2seq_forward.1} parent=1 // pred_check_branch
      %80 = sbr.rel (0) target = $region29
    $region28: #{seq2seq_forward.1} parent=1 // pred_region
      _
    $region29: #{seq2seq_forward.1} parent=1 // pred_fallthru
      _
    // Predicated region
    $region30: #{seq2seq_forward.1} parent=1 // pred_check
      _
    $region31: #{seq2seq_forward.1} parent=1 // pred_check_branch
      %82 = sbr.rel (0) target = $region33
    $region32: #{seq2seq_forward.1} parent=1 // pred_region
      _
    $region33: #{seq2seq_forward.1} parent=1 // pred_fallthru
      _
    // Predicated region
    $region34: #{seq2seq_forward.1} parent=1 // pred_check
      _
    $region35: #{seq2seq_forward.1} parent=1 // pred_check_branch
      %84 = sbr.rel (0) target = $region37
    $region36: #{seq2seq_forward.1} parent=1 // pred_region
      _
    $region37: #{seq2seq_forward.1} parent=1 // pred_fallthru
      _
    // Predicated region
    $region38: #{seq2seq_forward.1} parent=1 // pred_check
      _
    $region39: #{seq2seq_forward.1} parent=1 // pred_check_branch
      %86 = sbr.rel (0) target = $region41
    $region40: #{seq2seq_forward.1} parent=1 // pred_region
      _
    $region41: #{seq2seq_forward.1} parent=1 // pred_fallthru
      _
    // Predicated region
    $region42: #{seq2seq_forward.1} parent=1 // pred_check
      _
    $region43: #{seq2seq_forward.1} parent=1 // pred_check_branch
      %88 = sbr.rel (0) target = $region45
    $region44: #{seq2seq_forward.1} parent=1 // pred_region
      _
    $region45: #{seq2seq_forward.1} parent=1 // pred_fallthru
      _
    // Predicated region
    $region46: #{seq2seq_forward.1} parent=1 // pred_check
      _
    $region47: #{seq2seq_forward.1} parent=1 // pred_check_branch
      %90 = sbr.rel (0) target = $region49
    $region48: #{seq2seq_forward.1} parent=1 // pred_region
      _
    $region49: #{seq2seq_forward.1} parent=1 // pred_fallthru
      _
    // Predicated region
    $region50: #{seq2seq_forward.1} parent=1 // pred_check
      _
    $region51: #{seq2seq_forward.1} parent=1 // pred_check_branch
      %92 = sbr.rel (0) target = $region53
    $region52: #{seq2seq_forward.1} parent=1 // pred_region
      _
    $region53: #{seq2seq_forward.1} parent=1 // pred_fallthru
      _
    // Predicated region
    $region54: #{seq2seq_forward.1} parent=1 // pred_check
      _
    $region55: #{seq2seq_forward.1} parent=1 // pred_check_branch
      %94 = sbr.rel (0) target = $region57
    $region56: #{seq2seq_forward.1} parent=1 // pred_region
      _
    $region57: #{seq2seq_forward.1} parent=1 // pred_fallthru
      _
    // Predicated region
    $region58: #{seq2seq_forward.1} parent=1 // pred_check
      _
    $region59: #{seq2seq_forward.1} parent=1 // pred_check_branch
      %96 = sbr.rel (0) target = $region61
    $region60: #{seq2seq_forward.1} parent=1 // pred_region
      _
    $region61: #{seq2seq_forward.1} parent=1 // pred_fallthru
      _
    // Predicated region
    $region62: #{seq2seq_forward.1} parent=1 // pred_check
      _
    $region63: #{seq2seq_forward.1} parent=1 // pred_check_branch
      %98 = sbr.rel (0) target = $region65
    $region64: #{seq2seq_forward.1} parent=1 // pred_region
      _
    $region65: #{seq2seq_forward.1} parent=1 // pred_fallthru
      _
    // Predicated region
    $region66: #{seq2seq_forward.1} parent=1 // pred_check
      _
    $region67: #{seq2seq_forward.1} parent=1 // pred_check_branch
      %100 = sbr.rel (0) target = $region69
    $region68: #{seq2seq_forward.1} parent=1 // pred_region
      _
    $region69: #{seq2seq_forward.1} parent=1 // pred_fallthru
      _
    // Predicated region
    $region70: #{seq2seq_forward.1} parent=1 // pred_check
      _
    $region71: #{seq2seq_forward.1} parent=1 // pred_check_branch
      %102 = sbr.rel (0) target = $region73
    $region72: #{seq2seq_forward.1} parent=1 // pred_region
      _
    $region73: #{seq2seq_forward.1} parent=1 // pred_fallthru
      _
    // Predicated region
    $region74: #{seq2seq_forward.1} parent=1 // pred_check
      _
    $region75: #{seq2seq_forward.1} parent=1 // pred_check_branch
      %104 = sbr.rel (0) target = $region77
    $region76: #{seq2seq_forward.1} parent=1 // pred_region
      _
    $region77: #{seq2seq_forward.1} parent=1 // pred_fallthru
      _
    // Predicated region
    $region78: #{seq2seq_forward.1} parent=1 // pred_check
      _
    $region79: #{seq2seq_forward.1} parent=1 // pred_check_branch
      %106 = sbr.rel (0) target = $region81
    $region80: #{seq2seq_forward.1} parent=1 // pred_region
      _
    $region81: #{seq2seq_forward.1} parent=1 // pred_fallthru
      _
    // Predicated region
    $region82: #{seq2seq_forward.1} parent=1 // pred_check
      _
    $region83: #{seq2seq_forward.1} parent=1 // pred_check_branch
      %108 = sbr.rel (0) target = $region85
    $region84: #{seq2seq_forward.1} parent=1 // pred_region
      _
    $region85: #{seq2seq_forward.1} parent=1 // pred_fallthru
      _
    // Predicated region
    $region86: #{seq2seq_forward.1} parent=1 // pred_check
      _
    $region87: #{seq2seq_forward.1} parent=1 // pred_check_branch
      %110 = sbr.rel (0) target = $region89
    $region88: #{seq2seq_forward.1} parent=1 // pred_region
      _
    $region89: #{seq2seq_forward.1} parent=1 // pred_fallthru
      _
    // Predicated region
    $region90: #{seq2seq_forward.1} parent=1 // pred_check
      _
    $region91: #{seq2seq_forward.1} parent=1 // pred_check_branch
      %112 = sbr.rel (0) target = $region93
    $region92: #{seq2seq_forward.1} parent=1 // pred_region
      _
    $region93: #{seq2seq_forward.1} parent=1 // pred_fallthru
      _
    // Predicated region
    $region94: #{seq2seq_forward.1} parent=1 // pred_check
      _
    $region95: #{seq2seq_forward.1} parent=1 // pred_check_branch
      %114 = sbr.rel (0) target = $region97
    $region96: #{seq2seq_forward.1} parent=1 // pred_region
      _
    $region97: #{seq2seq_forward.1} parent=1 // pred_fallthru
      _
    // Predicated region
    $region98: #{seq2seq_forward.1} parent=1 // pred_check
      _
    $region99: #{seq2seq_forward.1} parent=1 // pred_check_branch
      %116 = sbr.rel (0) target = $region101
    $region100: #{seq2seq_forward.1} parent=1 // pred_region
      _
    $region101: #{seq2seq_forward.1} parent=1 // pred_fallthru
      _
    // Predicated region
    $region102: #{seq2seq_forward.1} parent=1 // pred_check
      _
    $region103: #{seq2seq_forward.1} parent=1 // pred_check_branch
      %118 = sbr.rel (0) target = $region105
    $region104: #{seq2seq_forward.1} parent=1 // pred_region
      _
    $region105: #{seq2seq_forward.1} parent=1 // pred_fallthru
      _
    // Predicated region
    $region106: #{seq2seq_forward.1} parent=1 // pred_check
      _
    $region107: #{seq2seq_forward.1} parent=1 // pred_check_branch
      %120 = sbr.rel (0) target = $region109
    $region108: #{seq2seq_forward.1} parent=1 // pred_region
      _
    $region109: #{seq2seq_forward.1} parent=1 // pred_fallthru
      _
    // Predicated region
    $region110: #{seq2seq_forward.1} parent=1 // pred_check
      _
    $region111: #{seq2seq_forward.1} parent=1 // pred_check_branch
      %122 = sbr.rel (0) target = $region113
    $region112: #{seq2seq_forward.1} parent=1 // pred_region
      _
    $region113: #{seq2seq_forward.1} parent=1 // pred_fallthru
      _
    // Predicated region
    $region114: #{seq2seq_forward.1} parent=1 // pred_check
      _
    $region115: #{seq2seq_forward.1} parent=1 // pred_check_branch
      %124 = sbr.rel (0) target = $region117
    $region116: #{seq2seq_forward.1} parent=1 // pred_region
      _
    $region117: #{seq2seq_forward.1} parent=1 // pred_fallthru
      _
    // Predicated region
    $region118: #{seq2seq_forward.1} parent=1 // pred_check
      _
    $region119: #{seq2seq_forward.1} parent=1 // pred_check_branch
      %126 = sbr.rel (0) target = $region121
    $region120: #{seq2seq_forward.1} parent=1 // pred_region
      _
    $region121: #{seq2seq_forward.1} parent=1 // pred_fallthru
      _
    %v128 = vld [vmem:[%s1] sm:$0xff]
    %v129 = vld [vmem:[%s1 + $0x8] sm:$0xff]
    %v130 = vld [vmem:[%s1 + $0x10] sm:$0xff]
    %v131 = vld [vmem:[%s1 + $0x18] sm:$0xff]
    %v132 = vpack.c.bf16 %v129, %v128
    %v133 = vpack.c.bf16 %v131, %v130
    %v134 = vld [vmem:[%s5] sm:$0xf]
    %v135 = vld [vmem:[%s5 + $0x4] sm:$0xf]
    %v136 = vld [vmem:[%s5 + $0x8] sm:$0xf]
    %v137 = vld [vmem:[%s5 + $0xc] sm:$0xf]
    %v138 = vld [vmem:[%s7] sm:$0x1]
    %v140 = vlaneseq
    %v141 = vshrl.u32 %v140, 7
    %v142 = vsub.s32 0, %v141
    %v143 = vrot.slane %v138, %v142
    %v149 = vunpack.c.l.b16 %v134
    %v150 = vunpack.c.l.b16 %v135
    %v151 = vunpack.c.l.b16 %v136
    %v152 = vunpack.c.l.b16 %v137
    %v153 = vpack.c.b16 %v150, %v149
    %v154 = vpack.c.b16 %v152, %v151
    %vm157 = vcmask 261120
    %v159 = vsel %vm157, %v132, 0
    %v162 = vsel %vm157, %v133, 0
    %164 = vmatprep.subr.bf16.mxu0 0
    %165 = vmatpush1.bf16.msra.mxu0 %v153
    %166 = vmatprep.subr.bf16.mxu0 0
    %167 = vmatpush1.bf16.msra.mxu0 %v154
    %168 = vmatprep.subr.bf16.mxu0 0
    %169 = vmatpush1.bf16.msra.mxu0 0
    %170 = vmatprep.subr.bf16.mxu0 0
    %171 = vmatpush1.bf16.msra.mxu0 0
    %172 = vmatprep.subr.bf16.mxu0 0
    %173 = vmatpush1.bf16.msra.mxu0 0
    %174 = vmatprep.subr.bf16.mxu0 0
    %175 = vmatpush1.bf16.msra.mxu0 0
    %176 = vmatprep.subr.bf16.mxu0 0
    %177 = vmatpush1.bf16.msra.mxu0 0
    %178 = vmatprep.subr.bf16.mxu0 0
    %179 = vmatpush1.bf16.msra.mxu0 0
    %180 = vmatprep.subr.bf16.mxu0 0
    %181 = vmatpush1.bf16.msra.mxu0 0
    %182 = vmatprep.subr.bf16.mxu0 0
    %183 = vmatpush1.bf16.msra.mxu0 0
    %184 = vmatprep.subr.bf16.mxu0 0
    %185 = vmatpush1.bf16.msra.mxu0 0
    %186 = vmatprep.subr.bf16.mxu0 0
    %187 = vmatpush1.bf16.msra.mxu0 0
    %188 = vmatprep.subr.bf16.mxu0 0
    %189 = vmatpush1.bf16.msra.mxu0 0
    %190 = vmatprep.subr.bf16.mxu0 0
    %191 = vmatpush1.bf16.msra.mxu0 0
    %192 = vmatprep.subr.bf16.mxu0 0
    %193 = vmatpush1.bf16.msra.mxu0 0
    %194 = vmatprep.subr.bf16.mxu0 0
    %195 = vmatpush1.bf16.msra.mxu0 0
    %196 = vmatprep.mubr.bf16.mxu0 0
    %197 = vmatmul.mubr.bf16.gmra.mrb[0].mxu0 %v159
    %v198 = vpop.f32.mrb[0].mxu0
    %v199 = vadd.f32 %v143, %v198
    %v200 = vpop.f32.mrb[0].mxu0
    %v201 = vpop.f32.mrb[0].mxu0
    %v202 = vadd.f32 %v143, %v201
    %v203 = vpop.f32.mrb[0].mxu0
    %204 = vmatprep.mubr.bf16.mxu0 0
    %205 = vmatmul.mubr.bf16.gmra.mrb[0].mxu0 %v162
    %v206 = vpop.f32.mrb[0].mxu0
    %v207 = vadd.f32 %v143, %v206
    %v208 = vpop.f32.mrb[0].mxu0
    %v209 = vpop.f32.mrb[0].mxu0
    %v210 = vadd.f32 %v143, %v209
    %v211 = vpop.f32.mrb[0].mxu0
    %212 = vdwg.mxu0
    %v213 = vpack.c.bf16 %v202, %v199
    %v214 = vpack.c.bf16 %v210, %v207
    %v215 = vld [vmem:[%s3] sm:$0xff]
    %v216 = vld [vmem:[%s3 + $0x8] sm:$0xff]
    %v217 = vld [vmem:[%s9] sm:$0xff]
    %v218 = vld [vmem:[%s9 + $0x8] sm:$0xff]
    %v219 = vld [vmem:[%s11] sm:$0xff]
    %v220 = vld [vmem:[%s11 + $0x8] sm:$0xff]
    %v221 = vpack.c.bf16 %v216, %v215
    %v222 = vld [vmem:[%s13] sm:$0xf]
    %v223 = vld [vmem:[%s13 + $0x4] sm:$0xf]
    %v224 = vld [vmem:[%s13 + $0x8] sm:$0xf]
    %v225 = vld [vmem:[%s13 + $0xc] sm:$0xf]
    %v226 = vld [vmem:[%s15] sm:$0x1]
    %v228 = vlaneseq
    %v229 = vshrl.u32 %v228, 7
    %v230 = vsub.s32 0, %v229
    %v231 = vrot.slane %v226, %v230
    %v237 = vunpack.c.l.b16 %v222
    %v238 = vunpack.c.l.b16 %v223
    %v239 = vunpack.c.l.b16 %v224
    %v240 = vunpack.c.l.b16 %v225
    %v241 = vpack.c.b16 %v238, %v237
    %v242 = vpack.c.b16 %v240, %v239
    %v246 = vsel %vm157, %v221, 0
    %248 = vmatprep.subr.bf16.mxu0 0
    %249 = vmatpush1.bf16.msra.mxu0 %v241
    %250 = vmatprep.subr.bf16.mxu0 0
    %251 = vmatpush1.bf16.msra.mxu0 %v242
    %252 = vmatprep.subr.bf16.mxu0 0
    %253 = vmatpush1.bf16.msra.mxu0 0
    %254 = vmatprep.subr.bf16.mxu0 0
    %255 = vmatpush1.bf16.msra.mxu0 0
    %256 = vmatprep.subr.bf16.mxu0 0
    %257 = vmatpush1.bf16.msra.mxu0 0
    %258 = vmatprep.subr.bf16.mxu0 0
    %259 = vmatpush1.bf16.msra.mxu0 0
    %260 = vmatprep.subr.bf16.mxu0 0
    %261 = vmatpush1.bf16.msra.mxu0 0
    %262 = vmatprep.subr.bf16.mxu0 0
    %263 = vmatpush1.bf16.msra.mxu0 0
    %264 = vmatprep.subr.bf16.mxu0 0
    %265 = vmatpush1.bf16.msra.mxu0 0
    %266 = vmatprep.subr.bf16.mxu0 0
    %267 = vmatpush1.bf16.msra.mxu0 0
    %268 = vmatprep.subr.bf16.mxu0 0
    %269 = vmatpush1.bf16.msra.mxu0 0
    %270 = vmatprep.subr.bf16.mxu0 0
    %271 = vmatpush1.bf16.msra.mxu0 0
    %272 = vmatprep.subr.bf16.mxu0 0
    %273 = vmatpush1.bf16.msra.mxu0 0
    %274 = vmatprep.subr.bf16.mxu0 0
    %275 = vmatpush1.bf16.msra.mxu0 0
    %276 = vmatprep.subr.bf16.mxu0 0
    %277 = vmatpush1.bf16.msra.mxu0 0
    %278 = vmatprep.subr.bf16.mxu0 0
    %279 = vmatpush1.bf16.msra.mxu0 0
    %280 = vmatprep.mubr.bf16.mxu0 0
    %281 = vmatmul.mubr.bf16.gmra.mrb[0].mxu0 %v246
    %v282 = vpop.f32.mrb[0].mxu0
    %v283 = vadd.f32 %v231, %v282
    %v284 = vpop.f32.mrb[0].mxu0
    %v285 = vpop.f32.mrb[0].mxu0
    %v286 = vadd.f32 %v231, %v285
    %v287 = vpop.f32.mrb[0].mxu0
    %288 = vdwg.mxu0
    %v289 = vld [vmem:[%s17] sm:$0xf]
    %v290 = vld [vmem:[%s17 + $0x4] sm:$0xf]
    %v291 = vld [vmem:[%s17 + $0x8] sm:$0xf]
    %v292 = vld [vmem:[%s17 + $0xc] sm:$0xf]
    %v293 = vld [vmem:[%s19] sm:$0x1]
    %v294 = vpack.c.bf16 %v283, %v283
    %v295 = vpack.c.bf16 %v286, %v286
    %297 = vrot.lane.b32.xlu0 %v294, 96
    %v298 = vpop.permute.xlu0 %297
    %vm299 = vcmask 64512
    %v301 = vsel %vm299, %v294, 0
    %v304 = vsel %vm299, %v298, 0
    %306 = vmatprep.subr.bf16.mxu0 0
    %307 = vmatpush1.bf16.xpose.msra.mxu0 %v304
    %308 = vmatprep.subr.bf16.mxu0 0
    %309 = vmatpush1.bf16.xpose.msra.mxu0 0
    %310 = vmatprep.subr.bf16.mxu0 0
    %311 = vmatpush1.bf16.xpose.msra.mxu0 0
    %312 = vmatprep.subr.bf16.mxu0 0
    %313 = vmatpush1.bf16.xpose.msra.mxu0 0
    %314 = vmatprep.subr.bf16.mxu0 0
    %315 = vmatpush1.bf16.xpose.msra.mxu0 0
    %316 = vmatprep.subr.bf16.mxu0 0
    %317 = vmatpush1.bf16.xpose.msra.mxu0 0
    %318 = vmatprep.subr.bf16.mxu0 0
    %319 = vmatpush1.bf16.xpose.msra.mxu0 0
    %320 = vmatprep.subr.bf16.mxu0 0
    %321 = vmatpush1.bf16.xpose.msra.mxu0 0
    %322 = vmatprep.subr.bf16.mxu0 0
    %323 = vmatpush1.bf16.xpose.msra.mxu0 0
    %324 = vmatprep.subr.bf16.mxu0 0
    %325 = vmatpush1.bf16.xpose.msra.mxu0 0
    %326 = vmatprep.subr.bf16.mxu0 0
    %327 = vmatpush1.bf16.xpose.msra.mxu0 0
    %328 = vmatprep.subr.bf16.mxu0 0
    %329 = vmatpush1.bf16.xpose.msra.mxu0 0
    %330 = vmatprep.subr.bf16.mxu0 0
    %331 = vmatpush1.bf16.xpose.msra.mxu0 0
    %332 = vmatprep.subr.bf16.mxu0 0
    %333 = vmatpush1.bf16.xpose.msra.mxu0 0
    %334 = vmatprep.subr.bf16.mxu0 0
    %335 = vmatpush1.bf16.xpose.msra.mxu0 0
    %336 = vmatprep.subr.bf16.mxu0 0
    %337 = vmatpush1.bf16.xpose.msra.mxu0 0
    %338 = vmatprep.mubr.bf16.mxu0 0
    %339 = vmatmul.mubr.bf16.gmra.mrb[0].mxu0 %v301
    %v340 = vpop.f32.mrb[0].mxu0
    %v341 = vadd.f32 0.0, %v340
    %v342 = vpop.f32.mrb[0].mxu0
    %v343 = vpop.f32.mrb[0].mxu0
    %v344 = vpop.f32.mrb[0].mxu0
    %345 = vdwg.mxu0
    %347 = vrot.lane.b32.xlu0 %v295, 96
    %v348 = vpop.permute.xlu0 %347
    %v350 = vsel %vm299, %v295, 0
    %v353 = vsel %vm299, %v348, 0
    %355 = vmatprep.subr.bf16.mxu0 0
    %356 = vmatpush1.bf16.xpose.msra.mxu0 %v353
    %357 = vmatprep.subr.bf16.mxu0 0
    %358 = vmatpush1.bf16.xpose.msra.mxu0 0
    %359 = vmatprep.subr.bf16.mxu0 0
    %360 = vmatpush1.bf16.xpose.msra.mxu0 0
    %361 = vmatprep.subr.bf16.mxu0 0
    %362 = vmatpush1.bf16.xpose.msra.mxu0 0
    %363 = vmatprep.subr.bf16.mxu0 0
    %364 = vmatpush1.bf16.xpose.msra.mxu0 0
    %365 = vmatprep.subr.bf16.mxu0 0
    %366 = vmatpush1.bf16.xpose.msra.mxu0 0
    %367 = vmatprep.subr.bf16.mxu0 0
    %368 = vmatpush1.bf16.xpose.msra.mxu0 0
    %369 = vmatprep.subr.bf16.mxu0 0
    %370 = vmatpush1.bf16.xpose.msra.mxu0 0
    %371 = vmatprep.subr.bf16.mxu0 0
    %372 = vmatpush1.bf16.xpose.msra.mxu0 0
    %373 = vmatprep.subr.bf16.mxu0 0
    %374 = vmatpush1.bf16.xpose.msra.mxu0 0
    %375 = vmatprep.subr.bf16.mxu0 0
    %376 = vmatpush1.bf16.xpose.msra.mxu0 0
    %377 = vmatprep.subr.bf16.mxu0 0
    %378 = vmatpush1.bf16.xpose.msra.mxu0 0
    %379 = vmatprep.subr.bf16.mxu0 0
    %380 = vmatpush1.bf16.xpose.msra.mxu0 0
    %381 = vmatprep.subr.bf16.mxu0 0
    %382 = vmatpush1.bf16.xpose.msra.mxu0 0
    %383 = vmatprep.subr.bf16.mxu0 0
    %384 = vmatpush1.bf16.xpose.msra.mxu0 0
    %385 = vmatprep.subr.bf16.mxu0 0
    %386 = vmatpush1.bf16.xpose.msra.mxu0 0
    %387 = vmatprep.mubr.bf16.mxu0 0
    %388 = vmatmul.mubr.bf16.gmra.mrb[0].mxu0 %v350
    %v389 = vpop.f32.mrb[0].mxu0
    %v390 = vadd.f32 0.0, %v389
    %v391 = vpop.f32.mrb[0].mxu0
    %v392 = vpop.f32.mrb[0].mxu0
    %v393 = vpop.f32.mrb[0].mxu0
    %394 = vdwg.mxu0
    %v395 = vmul.f32 %v341, 0.35355338
    %v396 = vmul.f32 %v390, 0.35355338
    %v397 = vadd.f32 %v395, %v217
    %v398 = vadd.f32 %v396, %v218
    %v399 = vsel %vm299, %v397, -inf
    %400 = vmax.xlane.f32.xlu0 %v399
    %v401 = vpop.xlane.xlu0 %400
    %v402 = vsel %vm299, %v398, -inf
    %403 = vmax.xlane.f32.xlu0 %v402
    %v404 = vpop.xlane.xlu0 %403
    %v405 = vsub.f32 %v397, %v401
    %v406 = vsub.f32 %v398, %v404
    %v407 = vmul.f32 %v405, 1.442695
    %v408 = vpow.pop %v407
    %v409 = vmul.f32 %v406, 1.442695
    %v410 = vpow.pop %v409
    %v411 = vsel %vm299, %v408, 0.0
    %412 = vadd.xlane.f32.xlu0 %v411
    %v413 = vpop.xlane.xlu0 %412
    %v414 = vsel %vm299, %v410, 0.0
    %415 = vadd.xlane.f32.xlu0 %v414
    %v416 = vpop.xlane.xlu0 %415
    %v417 = vrcp.pop %v413
    %v418 = vrcp.pop %v416
    %v419 = vmul.f32 %v408, %v417
    %v420 = vmul.f32 %v410, %v418
    %v421 = vpack.c.bf16 %v419, %v419
    %v422 = vpack.c.bf16 %v420, %v420
    %423 = vrot.lane.b32.xlu0 %v294, 64
    %v424 = vpop.permute.xlu0 %423
    %v426 = vsel %vm299, %v421, 0
    %vm428 = vcmask 1043456
    %v430 = vsel %vm428, %v424, 0
    %432 = vmatprep.subr.bf16.mxu0 0
    %433 = vmatpush1.bf16.msra.mxu0 %v430
    %434 = vmatprep.subr.bf16.mxu0 0
    %435 = vmatpush1.bf16.msra.mxu0 0
    %436 = vmatprep.subr.bf16.mxu0 0
    %437 = vmatpush1.bf16.msra.mxu0 0
    %438 = vmatprep.subr.bf16.mxu0 0
    %439 = vmatpush1.bf16.msra.mxu0 0
    %440 = vmatprep.subr.bf16.mxu0 0
    %441 = vmatpush1.bf16.msra.mxu0 0
    %442 = vmatprep.subr.bf16.mxu0 0
    %443 = vmatpush1.bf16.msra.mxu0 0
    %444 = vmatprep.subr.bf16.mxu0 0
    %445 = vmatpush1.bf16.msra.mxu0 0
    %446 = vmatprep.subr.bf16.mxu0 0
    %447 = vmatpush1.bf16.msra.mxu0 0
    %448 = vmatprep.subr.bf16.mxu0 0
    %449 = vmatpush1.bf16.msra.mxu0 0
    %450 = vmatprep.subr.bf16.mxu0 0
    %451 = vmatpush1.bf16.msra.mxu0 0
    %452 = vmatprep.subr.bf16.mxu0 0
    %453 = vmatpush1.bf16.msra.mxu0 0
    %454 = vmatprep.subr.bf16.mxu0 0
    %455 = vmatpush1.bf16.msra.mxu0 0
    %456 = vmatprep.subr.bf16.mxu0 0
    %457 = vmatpush1.bf16.msra.mxu0 0
    %458 = vmatprep.subr.bf16.mxu0 0
    %459 = vmatpush1.bf16.msra.mxu0 0
    %460 = vmatprep.subr.bf16.mxu0 0
    %461 = vmatpush1.bf16.msra.mxu0 0
    %462 = vmatprep.subr.bf16.mxu0 0
    %463 = vmatpush1.bf16.msra.mxu0 0
    %464 = vmatprep.mubr.bf16.mxu0 0
    %465 = vmatmul.mubr.bf16.gmra.mrb[0].mxu0 %v426
    %v466 = vpop.f32.mrb[0].mxu0
    %v467 = vadd.f32 0.0, %v466
    %v468 = vpop.f32.mrb[0].mxu0
    %v469 = vpop.f32.mrb[0].mxu0
    %v470 = vpop.f32.mrb[0].mxu0
    %471 = vdwg.mxu0
    %472 = vrot.lane.b32.xlu0 %v295, 64
    %v473 = vpop.permute.xlu0 %472
    %v475 = vsel %vm299, %v422, 0
    %v478 = vsel %vm428, %v473, 0
    %480 = vmatprep.subr.bf16.mxu0 0
    %481 = vmatpush1.bf16.msra.mxu0 %v478
    %482 = vmatprep.subr.bf16.mxu0 0
    %483 = vmatpush1.bf16.msra.mxu0 0
    %484 = vmatprep.subr.bf16.mxu0 0
    %485 = vmatpush1.bf16.msra.mxu0 0
    %486 = vmatprep.subr.bf16.mxu0 0
    %487 = vmatpush1.bf16.msra.mxu0 0
    %488 = vmatprep.subr.bf16.mxu0 0
    %489 = vmatpush1.bf16.msra.mxu0 0
    %490 = vmatprep.subr.bf16.mxu0 0
    %491 = vmatpush1.bf16.msra.mxu0 0
    %492 = vmatprep.subr.bf16.mxu0 0
    %493 = vmatpush1.bf16.msra.mxu0 0
    %494 = vmatprep.subr.bf16.mxu0 0
    %495 = vmatpush1.bf16.msra.mxu0 0
    %496 = vmatprep.subr.bf16.mxu0 0
    %497 = vmatpush1.bf16.msra.mxu0 0
    %498 = vmatprep.subr.bf16.mxu0 0
    %499 = vmatpush1.bf16.msra.mxu0 0
    %500 = vmatprep.subr.bf16.mxu0 0
    %501 = vmatpush1.bf16.msra.mxu0 0
    %502 = vmatprep.subr.bf16.mxu0 0
    %503 = vmatpush1.bf16.msra.mxu0 0
    %504 = vmatprep.subr.bf16.mxu0 0
    %505 = vmatpush1.bf16.msra.mxu0 0
    %506 = vmatprep.subr.bf16.mxu0 0
    %507 = vmatpush1.bf16.msra.mxu0 0
    %508 = vmatprep.subr.bf16.mxu0 0
    %509 = vmatpush1.bf16.msra.mxu0 0
    %510 = vmatprep.subr.bf16.mxu0 0
    %511 = vmatpush1.bf16.msra.mxu0 0
    %512 = vmatprep.mubr.bf16.mxu0 0
    %513 = vmatmul.mubr.bf16.gmra.mrb[0].mxu0 %v475
    %v514 = vpop.f32.mrb[0].mxu0
    %v515 = vadd.f32 0.0, %v514
    %v516 = vpop.f32.mrb[0].mxu0
    %v517 = vpop.f32.mrb[0].mxu0
    %v518 = vpop.f32.mrb[0].mxu0
    %519 = vdwg.mxu0
    %520 = vrot.lane.b32.xlu0 %v294, 120
    %v521 = vpop.permute.xlu0 %520
    %522 = vrot.lane.b32.xlu0 %v294, 88
    %v523 = vpop.permute.xlu0 %522
    %v525 = vsel %vm299, %v521, 0
    %v528 = vsel %vm299, %v523, 0
    %530 = vmatprep.subr.bf16.mxu0 0
    %531 = vmatpush1.bf16.xpose.msra.mxu0 %v528
    %532 = vmatprep.subr.bf16.mxu0 0
    %533 = vmatpush1.bf16.xpose.msra.mxu0 0
    %534 = vmatprep.subr.bf16.mxu0 0
    %535 = vmatpush1.bf16.xpose.msra.mxu0 0
    %536 = vmatprep.subr.bf16.mxu0 0
    %537 = vmatpush1.bf16.xpose.msra.mxu0 0
    %538 = vmatprep.subr.bf16.mxu0 0
    %539 = vmatpush1.bf16.xpose.msra.mxu0 0
    %540 = vmatprep.subr.bf16.mxu0 0
    %541 = vmatpush1.bf16.xpose.msra.mxu0 0
    %542 = vmatprep.subr.bf16.mxu0 0
    %543 = vmatpush1.bf16.xpose.msra.mxu0 0
    %544 = vmatprep.subr.bf16.mxu0 0
    %545 = vmatpush1.bf16.xpose.msra.mxu0 0
    %546 = vmatprep.subr.bf16.mxu0 0
    %547 = vmatpush1.bf16.xpose.msra.mxu0 0
    %548 = vmatprep.subr.bf16.mxu0 0
    %549 = vmatpush1.bf16.xpose.msra.mxu0 0
    %550 = vmatprep.subr.bf16.mxu0 0
    %551 = vmatpush1.bf16.xpose.msra.mxu0 0
    %552 = vmatprep.subr.bf16.mxu0 0
    %553 = vmatpush1.bf16.xpose.msra.mxu0 0
    %554 = vmatprep.subr.bf16.mxu0 0
    %555 = vmatpush1.bf16.xpose.msra.mxu0 0
    %556 = vmatprep.subr.bf16.mxu0 0
    %557 = vmatpush1.bf16.xpose.msra.mxu0 0
    %558 = vmatprep.subr.bf16.mxu0 0
    %559 = vmatpush1.bf16.xpose.msra.mxu0 0
    %560 = vmatprep.subr.bf16.mxu0 0
    %561 = vmatpush1.bf16.xpose.msra.mxu0 0
    %562 = vmatprep.mubr.bf16.mxu0 0
    %563 = vmatmul.mubr.bf16.gmra.mrb[0].mxu0 %v525
    %v564 = vpop.f32.mrb[0].mxu0
    %v565 = vadd.f32 0.0, %v564
    %v566 = vpop.f32.mrb[0].mxu0
    %v567 = vpop.f32.mrb[0].mxu0
    %v568 = vpop.f32.mrb[0].mxu0
    %569 = vdwg.mxu0
    %570 = vrot.lane.b32.xlu0 %v295, 120
    %v571 = vpop.permute.xlu0 %570
    %572 = vrot.lane.b32.xlu0 %v295, 88
    %v573 = vpop.permute.xlu0 %572
    %v575 = vsel %vm299, %v571, 0
    %v578 = vsel %vm299, %v573, 0
    %580 = vmatprep.subr.bf16.mxu0 0
    %581 = vmatpush1.bf16.xpose.msra.mxu0 %v578
    %582 = vmatprep.subr.bf16.mxu0 0
    %583 = vmatpush1.bf16.xpose.msra.mxu0 0
    %584 = vmatprep.subr.bf16.mxu0 0
    %585 = vmatpush1.bf16.xpose.msra.mxu0 0
    %586 = vmatprep.subr.bf16.mxu0 0
    %587 = vmatpush1.bf16.xpose.msra.mxu0 0
    %588 = vmatprep.subr.bf16.mxu0 0
    %589 = vmatpush1.bf16.xpose.msra.mxu0 0
    %590 = vmatprep.subr.bf16.mxu0 0
    %591 = vmatpush1.bf16.xpose.msra.mxu0 0
    %592 = vmatprep.subr.bf16.mxu0 0
    %593 = vmatpush1.bf16.xpose.msra.mxu0 0
    %594 = vmatprep.subr.bf16.mxu0 0
    %595 = vmatpush1.bf16.xpose.msra.mxu0 0
    %596 = vmatprep.subr.bf16.mxu0 0
    %597 = vmatpush1.bf16.xpose.msra.mxu0 0
    %598 = vmatprep.subr.bf16.mxu0 0
    %599 = vmatpush1.bf16.xpose.msra.mxu0 0
    %600 = vmatprep.subr.bf16.mxu0 0
    %601 = vmatpush1.bf16.xpose.msra.mxu0 0
    %602 = vmatprep.subr.bf16.mxu0 0
    %603 = vmatpush1.bf16.xpose.msra.mxu0 0
    %604 = vmatprep.subr.bf16.mxu0 0
    %605 = vmatpush1.bf16.xpose.msra.mxu0 0
    %606 = vmatprep.subr.bf16.mxu0 0
    %607 = vmatpush1.bf16.xpose.msra.mxu0 0
    %608 = vmatprep.subr.bf16.mxu0 0
    %609 = vmatpush1.bf16.xpose.msra.mxu0 0
    %610 = vmatprep.subr.bf16.mxu0 0
    %611 = vmatpush1.bf16.xpose.msra.mxu0 0
    %612 = vmatprep.mubr.bf16.mxu0 0
    %613 = vmatmul.mubr.bf16.gmra.mrb[0].mxu0 %v575
    %v614 = vpop.f32.mrb[0].mxu0
    %v615 = vadd.f32 0.0, %v614
    %v616 = vpop.f32.mrb[0].mxu0
    %v617 = vpop.f32.mrb[0].mxu0
    %v618 = vpop.f32.mrb[0].mxu0
    %619 = vdwg.mxu0
    %v620 = vmul.f32 %v565, 0.35355338
    %v621 = vmul.f32 %v615, 0.35355338
    %v622 = vadd.f32 %v620, %v217
    %v623 = vadd.f32 %v621, %v218
    %v624 = vsel %vm299, %v622, -inf
    %625 = vmax.xlane.f32.xlu0 %v624
    %v626 = vpop.xlane.xlu0 %625
    %v627 = vsel %vm299, %v623, -inf
    %628 = vmax.xlane.f32.xlu0 %v627
    %v629 = vpop.xlane.xlu0 %628
    %v630 = vsub.f32 %v622, %v626
    %v631 = vsub.f32 %v623, %v629
    %v632 = vmul.f32 %v630, 1.442695
    %v633 = vpow.pop %v632
    %v634 = vmul.f32 %v631, 1.442695
    %v635 = vpow.pop %v634
    %v636 = vsel %vm299, %v633, 0.0
    %637 = vadd.xlane.f32.xlu0 %v636
    %v638 = vpop.xlane.xlu0 %637
    %v639 = vsel %vm299, %v635, 0.0
    %640 = vadd.xlane.f32.xlu0 %v639
    %v641 = vpop.xlane.xlu0 %640
    %v642 = vrcp.pop %v638
    %v643 = vrcp.pop %v641
    %v644 = vmul.f32 %v633, %v642
    %v645 = vmul.f32 %v635, %v643
    %v646 = vpack.c.bf16 %v644, %v644
    %v647 = vpack.c.bf16 %v645, %v645
    %648 = vrot.lane.b32.xlu0 %v294, 56
    %v649 = vpop.permute.xlu0 %648
    %v651 = vsel %vm299, %v646, 0
    %v654 = vsel %vm428, %v649, 0
    %656 = vmatprep.subr.bf16.mxu0 0
    %657 = vmatpush1.bf16.msra.mxu0 %v654
    %658 = vmatprep.subr.bf16.mxu0 0
    %659 = vmatpush1.bf16.msra.mxu0 0
    %660 = vmatprep.subr.bf16.mxu0 0
    %661 = vmatpush1.bf16.msra.mxu0 0
    %662 = vmatprep.subr.bf16.mxu0 0
    %663 = vmatpush1.bf16.msra.mxu0 0
    %664 = vmatprep.subr.bf16.mxu0 0
    %665 = vmatpush1.bf16.msra.mxu0 0
    %666 = vmatprep.subr.bf16.mxu0 0
    %667 = vmatpush1.bf16.msra.mxu0 0
    %668 = vmatprep.subr.bf16.mxu0 0
    %669 = vmatpush1.bf16.msra.mxu0 0
    %670 = vmatprep.subr.bf16.mxu0 0
    %671 = vmatpush1.bf16.msra.mxu0 0
    %672 = vmatprep.subr.bf16.mxu0 0
    %673 = vmatpush1.bf16.msra.mxu0 0
    %674 = vmatprep.subr.bf16.mxu0 0
    %675 = vmatpush1.bf16.msra.mxu0 0
    %676 = vmatprep.subr.bf16.mxu0 0
    %677 = vmatpush1.bf16.msra.mxu0 0
    %678 = vmatprep.subr.bf16.mxu0 0
    %679 = vmatpush1.bf16.msra.mxu0 0
    %680 = vmatprep.subr.bf16.mxu0 0
    %681 = vmatpush1.bf16.msra.mxu0 0
    %682 = vmatprep.subr.bf16.mxu0 0
    %683 = vmatpush1.bf16.msra.mxu0 0
    %684 = vmatprep.subr.bf16.mxu0 0
    %685 = vmatpush1.bf16.msra.mxu0 0
    %686 = vmatprep.subr.bf16.mxu0 0
    %687 = vmatpush1.bf16.msra.mxu0 0
    %688 = vmatprep.mubr.bf16.mxu0 0
    %689 = vmatmul.mubr.bf16.gmra.mrb[0].mxu0 %v651
    %v690 = vpop.f32.mrb[0].mxu0
    %v691 = vadd.f32 0.0, %v690
    %v692 = vpop.f32.mrb[0].mxu0
    %v693 = vpop.f32.mrb[0].mxu0
    %v694 = vpop.f32.mrb[0].mxu0
    %695 = vdwg.mxu0
    %696 = vrot.lane.b32.xlu0 %v295, 56
    %v697 = vpop.permute.xlu0 %696
    %v699 = vsel %vm299, %v647, 0
    %v702 = vsel %vm428, %v697, 0
    %704 = vmatprep.subr.bf16.mxu0 0
    %705 = vmatpush1.bf16.msra.mxu0 %v702
    %706 = vmatprep.subr.bf16.mxu0 0
    %707 = vmatpush1.bf16.msra.mxu0 0
    %708 = vmatprep.subr.bf16.mxu0 0
    %709 = vmatpush1.bf16.msra.mxu0 0
    %710 = vmatprep.subr.bf16.mxu0 0
    %711 = vmatpush1.bf16.msra.mxu0 0
    %712 = vmatprep.subr.bf16.mxu0 0
    %713 = vmatpush1.bf16.msra.mxu0 0
    %714 = vmatprep.subr.bf16.mxu0 0
    %715 = vmatpush1.bf16.msra.mxu0 0
    %716 = vmatprep.subr.bf16.mxu0 0
    %717 = vmatpush1.bf16.msra.mxu0 0
    %718 = vmatprep.subr.bf16.mxu0 0
    %719 = vmatpush1.bf16.msra.mxu0 0
    %720 = vmatprep.subr.bf16.mxu0 0
    %721 = vmatpush1.bf16.msra.mxu0 0
    %722 = vmatprep.subr.bf16.mxu0 0
    %723 = vmatpush1.bf16.msra.mxu0 0
    %724 = vmatprep.subr.bf16.mxu0 0
    %725 = vmatpush1.bf16.msra.mxu0 0
    %726 = vmatprep.subr.bf16.mxu0 0
    %727 = vmatpush1.bf16.msra.mxu0 0
    %728 = vmatprep.subr.bf16.mxu0 0
    %729 = vmatpush1.bf16.msra.mxu0 0
    %730 = vmatprep.subr.bf16.mxu0 0
    %731 = vmatpush1.bf16.msra.mxu0 0
    %732 = vmatprep.subr.bf16.mxu0 0
    %733 = vmatpush1.bf16.msra.mxu0 0
    %734 = vmatprep.subr.bf16.mxu0 0
    %735 = vmatpush1.bf16.msra.mxu0 0
    %736 = vmatprep.mubr.bf16.mxu0 0
    %737 = vmatmul.mubr.bf16.gmra.mrb[0].mxu0 %v699
    %v738 = vpop.f32.mrb[0].mxu0
    %v739 = vadd.f32 0.0, %v738
    %v740 = vpop.f32.mrb[0].mxu0
    %v741 = vpop.f32.mrb[0].mxu0
    %v742 = vpop.f32.mrb[0].mxu0
    %743 = vdwg.mxu0
    %744 = vrot.lane.b32.xlu0 %v294, 112
    %v745 = vpop.permute.xlu0 %744
    %746 = vrot.lane.b32.xlu0 %v294, 80
    %v747 = vpop.permute.xlu0 %746
    %v749 = vsel %vm299, %v745, 0
    %v752 = vsel %vm299, %v747, 0
    %754 = vmatprep.subr.bf16.mxu0 0
    %755 = vmatpush1.bf16.xpose.msra.mxu0 %v752
    %756 = vmatprep.subr.bf16.mxu0 0
    %757 = vmatpush1.bf16.xpose.msra.mxu0 0
    %758 = vmatprep.subr.bf16.mxu0 0
    %759 = vmatpush1.bf16.xpose.msra.mxu0 0
    %760 = vmatprep.subr.bf16.mxu0 0
    %761 = vmatpush1.bf16.xpose.msra.mxu0 0
    %762 = vmatprep.subr.bf16.mxu0 0
    %763 = vmatpush1.bf16.xpose.msra.mxu0 0
    %764 = vmatprep.subr.bf16.mxu0 0
    %765 = vmatpush1.bf16.xpose.msra.mxu0 0
    %766 = vmatprep.subr.bf16.mxu0 0
    %767 = vmatpush1.bf16.xpose.msra.mxu0 0
    %768 = vmatprep.subr.bf16.mxu0 0
    %769 = vmatpush1.bf16.xpose.msra.mxu0 0
    %770 = vmatprep.subr.bf16.mxu0 0
    %771 = vmatpush1.bf16.xpose.msra.mxu0 0
    %772 = vmatprep.subr.bf16.mxu0 0
    %773 = vmatpush1.bf16.xpose.msra.mxu0 0
    %774 = vmatprep.subr.bf16.mxu0 0
    %775 = vmatpush1.bf16.xpose.msra.mxu0 0
    %776 = vmatprep.subr.bf16.mxu0 0
    %777 = vmatpush1.bf16.xpose.msra.mxu0 0
    %778 = vmatprep.subr.bf16.mxu0 0
    %779 = vmatpush1.bf16.xpose.msra.mxu0 0
    %780 = vmatprep.subr.bf16.mxu0 0
    %781 = vmatpush1.bf16.xpose.msra.mxu0 0
    %782 = vmatprep.subr.bf16.mxu0 0
    %783 = vmatpush1.bf16.xpose.msra.mxu0 0
    %784 = vmatprep.subr.bf16.mxu0 0
    %785 = vmatpush1.bf16.xpose.msra.mxu0 0
    %786 = vmatprep.mubr.bf16.mxu0 0
    %787 = vmatmul.mubr.bf16.gmra.mrb[0].mxu0 %v749
    %v788 = vpop.f32.mrb[0].mxu0
    %v789 = vadd.f32 0.0, %v788
    %v790 = vpop.f32.mrb[0].mxu0
    %v791 = vpop.f32.mrb[0].mxu0
    %v792 = vpop.f32.mrb[0].mxu0
    %793 = vdwg.mxu0
    %794 = vrot.lane.b32.xlu0 %v295, 112
    %v795 = vpop.permute.xlu0 %794
    %796 = vrot.lane.b32.xlu0 %v295, 80
    %v797 = vpop.permute.xlu0 %796
    %v799 = vsel %vm299, %v795, 0
    %v802 = vsel %vm299, %v797, 0
    %804 = vmatprep.subr.bf16.mxu0 0
    %805 = vmatpush1.bf16.xpose.msra.mxu0 %v802
    %806 = vmatprep.subr.bf16.mxu0 0
    %807 = vmatpush1.bf16.xpose.msra.mxu0 0
    %808 = vmatprep.subr.bf16.mxu0 0
    %809 = vmatpush1.bf16.xpose.msra.mxu0 0
    %810 = vmatprep.subr.bf16.mxu0 0
    %811 = vmatpush1.bf16.xpose.msra.mxu0 0
    %812 = vmatprep.subr.bf16.mxu0 0
    %813 = vmatpush1.bf16.xpose.msra.mxu0 0
    %814 = vmatprep.subr.bf16.mxu0 0
    %815 = vmatpush1.bf16.xpose.msra.mxu0 0
    %816 = vmatprep.subr.bf16.mxu0 0
    %817 = vmatpush1.bf16.xpose.msra.mxu0 0
    %818 = vmatprep.subr.bf16.mxu0 0
    %819 = vmatpush1.bf16.xpose.msra.mxu0 0
    %820 = vmatprep.subr.bf16.mxu0 0
    %821 = vmatpush1.bf16.xpose.msra.mxu0 0
    %822 = vmatprep.subr.bf16.mxu0 0
    %823 = vmatpush1.bf16.xpose.msra.mxu0 0
    %824 = vmatprep.subr.bf16.mxu0 0
    %825 = vmatpush1.bf16.xpose.msra.mxu0 0
    %826 = vmatprep.subr.bf16.mxu0 0
    %827 = vmatpush1.bf16.xpose.msra.mxu0 0
    %828 = vmatprep.subr.bf16.mxu0 0
    %829 = vmatpush1.bf16.xpose.msra.mxu0 0
    %830 = vmatprep.subr.bf16.mxu0 0
    %831 = vmatpush1.bf16.xpose.msra.mxu0 0
    %832 = vmatprep.subr.bf16.mxu0 0
    %833 = vmatpush1.bf16.xpose.msra.mxu0 0
    %834 = vmatprep.subr.bf16.mxu0 0
    %835 = vmatpush1.bf16.xpose.msra.mxu0 0
    %836 = vmatprep.mubr.bf16.mxu0 0
    %837 = vmatmul.mubr.bf16.gmra.mrb[0].mxu0 %v799
    %v838 = vpop.f32.mrb[0].mxu0
    %v839 = vadd.f32 0.0, %v838
    %v840 = vpop.f32.mrb[0].mxu0
    %v841 = vpop.f32.mrb[0].mxu0
    %v842 = vpop.f32.mrb[0].mxu0
    %843 = vdwg.mxu0
    %v844 = vmul.f32 %v789, 0.35355338
    %v845 = vmul.f32 %v839, 0.35355338
    %v846 = vadd.f32 %v844, %v217
    %v847 = vadd.f32 %v845, %v218
    %v848 = vsel %vm299, %v846, -inf
    %849 = vmax.xlane.f32.xlu0 %v848
    %v850 = vpop.xlane.xlu0 %849
    %v851 = vsel %vm299, %v847, -inf
    %852 = vmax.xlane.f32.xlu0 %v851
    %v853 = vpop.xlane.xlu0 %852
    %v854 = vsub.f32 %v846, %v850
    %v855 = vsub.f32 %v847, %v853
    %v856 = vmul.f32 %v854, 1.442695
    %v857 = vpow.pop %v856
    %v858 = vmul.f32 %v855, 1.442695
    %v859 = vpow.pop %v858
    %v860 = vsel %vm299, %v857, 0.0
    %861 = vadd.xlane.f32.xlu0 %v860
    %v862 = vpop.xlane.xlu0 %861
    %v863 = vsel %vm299, %v859, 0.0
    %864 = vadd.xlane.f32.xlu0 %v863
    %v865 = vpop.xlane.xlu0 %864
    %v866 = vrcp.pop %v862
    %v867 = vrcp.pop %v865
    %v868 = vmul.f32 %v857, %v866
    %v869 = vmul.f32 %v859, %v867
    %v870 = vpack.c.bf16 %v868, %v868
    %v871 = vpack.c.bf16 %v869, %v869
    %872 = vrot.lane.b32.xlu0 %v294, 48
    %v873 = vpop.permute.xlu0 %872
    %v875 = vsel %vm299, %v870, 0
    %v878 = vsel %vm428, %v873, 0
    %880 = vmatprep.subr.bf16.mxu0 0
    %881 = vmatpush1.bf16.msra.mxu0 %v878
    %882 = vmatprep.subr.bf16.mxu0 0
    %883 = vmatpush1.bf16.msra.mxu0 0
    %884 = vmatprep.subr.bf16.mxu0 0
    %885 = vmatpush1.bf16.msra.mxu0 0
    %886 = vmatprep.subr.bf16.mxu0 0
    %887 = vmatpush1.bf16.msra.mxu0 0
    %888 = vmatprep.subr.bf16.mxu0 0
    %889 = vmatpush1.bf16.msra.mxu0 0
    %890 = vmatprep.subr.bf16.mxu0 0
    %891 = vmatpush1.bf16.msra.mxu0 0
    %892 = vmatprep.subr.bf16.mxu0 0
    %893 = vmatpush1.bf16.msra.mxu0 0
    %894 = vmatprep.subr.bf16.mxu0 0
    %895 = vmatpush1.bf16.msra.mxu0 0
    %896 = vmatprep.subr.bf16.mxu0 0
    %897 = vmatpush1.bf16.msra.mxu0 0
    %898 = vmatprep.subr.bf16.mxu0 0
    %899 = vmatpush1.bf16.msra.mxu0 0
    %900 = vmatprep.subr.bf16.mxu0 0
    %901 = vmatpush1.bf16.msra.mxu0 0
    %902 = vmatprep.subr.bf16.mxu0 0
    %903 = vmatpush1.bf16.msra.mxu0 0
    %904 = vmatprep.subr.bf16.mxu0 0
    %905 = vmatpush1.bf16.msra.mxu0 0
    %906 = vmatprep.subr.bf16.mxu0 0
    %907 = vmatpush1.bf16.msra.mxu0 0
    %908 = vmatprep.subr.bf16.mxu0 0
    %909 = vmatpush1.bf16.msra.mxu0 0
    %910 = vmatprep.subr.bf16.mxu0 0
    %911 = vmatpush1.bf16.msra.mxu0 0
    %912 = vmatprep.mubr.bf16.mxu0 0
    %913 = vmatmul.mubr.bf16.gmra.mrb[0].mxu0 %v875
    %v914 = vpop.f32.mrb[0].mxu0
    %v915 = vadd.f32 0.0, %v914
    %v916 = vpop.f32.mrb[0].mxu0
    %v917 = vpop.f32.mrb[0].mxu0
    %v918 = vpop.f32.mrb[0].mxu0
    %919 = vdwg.mxu0
    %920 = vrot.lane.b32.xlu0 %v295, 48
    %v921 = vpop.permute.xlu0 %920
    %v923 = vsel %vm299, %v871, 0
    %v926 = vsel %vm428, %v921, 0
    %928 = vmatprep.subr.bf16.mxu0 0
    %929 = vmatpush1.bf16.msra.mxu0 %v926
    %930 = vmatprep.subr.bf16.mxu0 0
    %931 = vmatpush1.bf16.msra.mxu0 0
    %932 = vmatprep.subr.bf16.mxu0 0
    %933 = vmatpush1.bf16.msra.mxu0 0
    %934 = vmatprep.subr.bf16.mxu0 0
    %935 = vmatpush1.bf16.msra.mxu0 0
    %936 = vmatprep.subr.bf16.mxu0 0
    %937 = vmatpush1.bf16.msra.mxu0 0
    %938 = vmatprep.subr.bf16.mxu0 0
    %939 = vmatpush1.bf16.msra.mxu0 0
    %940 = vmatprep.subr.bf16.mxu0 0
    %941 = vmatpush1.bf16.msra.mxu0 0
    %942 = vmatprep.subr.bf16.mxu0 0
    %943 = vmatpush1.bf16.msra.mxu0 0
    %944 = vmatprep.subr.bf16.mxu0 0
    %945 = vmatpush1.bf16.msra.mxu0 0
    %946 = vmatprep.subr.bf16.mxu0 0
    %947 = vmatpush1.bf16.msra.mxu0 0
    %948 = vmatprep.subr.bf16.mxu0 0
    %949 = vmatpush1.bf16.msra.mxu0 0
    %950 = vmatprep.subr.bf16.mxu0 0
    %951 = vmatpush1.bf16.msra.mxu0 0
    %952 = vmatprep.subr.bf16.mxu0 0
    %953 = vmatpush1.bf16.msra.mxu0 0
    %954 = vmatprep.subr.bf16.mxu0 0
    %955 = vmatpush1.bf16.msra.mxu0 0
    %956 = vmatprep.subr.bf16.mxu0 0
    %957 = vmatpush1.bf16.msra.mxu0 0
    %958 = vmatprep.subr.bf16.mxu0 0
    %959 = vmatpush1.bf16.msra.mxu0 0
    %960 = vmatprep.mubr.bf16.mxu0 0
    %961 = vmatmul.mubr.bf16.gmra.mrb[0].mxu0 %v923
    %v962 = vpop.f32.mrb[0].mxu0
    %v963 = vadd.f32 0.0, %v962
    %v964 = vpop.f32.mrb[0].mxu0
    %v965 = vpop.f32.mrb[0].mxu0
    %v966 = vpop.f32.mrb[0].mxu0
    %967 = vdwg.mxu0
    %968 = vrot.lane.b32.xlu0 %v294, 104
    %v969 = vpop.permute.xlu0 %968
    %970 = vrot.lane.b32.xlu0 %v294, 72
    %v971 = vpop.permute.xlu0 %970
    %v973 = vsel %vm299, %v969, 0
    %v976 = vsel %vm299, %v971, 0
    %978 = vmatprep.subr.bf16.mxu0 0
    %979 = vmatpush1.bf16.xpose.msra.mxu0 %v976
    %980 = vmatprep.subr.bf16.mxu0 0
    %981 = vmatpush1.bf16.xpose.msra.mxu0 0
    %982 = vmatprep.subr.bf16.mxu0 0
    %983 = vmatpush1.bf16.xpose.msra.mxu0 0
    %984 = vmatprep.subr.bf16.mxu0 0
    %985 = vmatpush1.bf16.xpose.msra.mxu0 0
    %986 = vmatprep.subr.bf16.mxu0 0
    %987 = vmatpush1.bf16.xpose.msra.mxu0 0
    %988 = vmatprep.subr.bf16.mxu0 0
    %989 = vmatpush1.bf16.xpose.msra.mxu0 0
    %990 = vmatprep.subr.bf16.mxu0 0
    %991 = vmatpush1.bf16.xpose.msra.mxu0 0
    %992 = vmatprep.subr.bf16.mxu0 0
    %993 = vmatpush1.bf16.xpose.msra.mxu0 0
    %994 = vmatprep.subr.bf16.mxu0 0
    %995 = vmatpush1.bf16.xpose.msra.mxu0 0
    %996 = vmatprep.subr.bf16.mxu0 0
    %997 = vmatpush1.bf16.xpose.msra.mxu0 0
    %998 = vmatprep.subr.bf16.mxu0 0
    %999 = vmatpush1.bf16.xpose.msra.mxu0 0
    %1000 = vmatprep.subr.bf16.mxu0 0
    %1001 = vmatpush1.bf16.xpose.msra.mxu0 0
    %1002 = vmatprep.subr.bf16.mxu0 0
    %1003 = vmatpush1.bf16.xpose.msra.mxu0 0
    %1004 = vmatprep.subr.bf16.mxu0 0
    %1005 = vmatpush1.bf16.xpose.msra.mxu0 0
    %1006 = vmatprep.subr.bf16.mxu0 0
    %1007 = vmatpush1.bf16.xpose.msra.mxu0 0
    %1008 = vmatprep.subr.bf16.mxu0 0
    %1009 = vmatpush1.bf16.xpose.msra.mxu0 0
    %1010 = vmatprep.mubr.bf16.mxu0 0
    %1011 = vmatmul.mubr.bf16.gmra.mrb[0].mxu0 %v973
    %v1012 = vpop.f32.mrb[0].mxu0
    %v1013 = vadd.f32 0.0, %v1012
    %v1014 = vpop.f32.mrb[0].mxu0
    %v1015 = vpop.f32.mrb[0].mxu0
    %v1016 = vpop.f32.mrb[0].mxu0
    %1017 = vdwg.mxu0
    %1018 = vrot.lane.b32.xlu0 %v295, 104
    %v1019 = vpop.permute.xlu0 %1018
    %1020 = vrot.lane.b32.xlu0 %v295, 72
    %v1021 = vpop.permute.xlu0 %1020
    %v1023 = vsel %vm299, %v1019, 0
    %v1026 = vsel %vm299, %v1021, 0
    %1028 = vmatprep.subr.bf16.mxu0 0
    %1029 = vmatpush1.bf16.xpose.msra.mxu0 %v1026
    %1030 = vmatprep.subr.bf16.mxu0 0
    %1031 = vmatpush1.bf16.xpose.msra.mxu0 0
    %1032 = vmatprep.subr.bf16.mxu0 0
    %1033 = vmatpush1.bf16.xpose.msra.mxu0 0
    %1034 = vmatprep.subr.bf16.mxu0 0
    %1035 = vmatpush1.bf16.xpose.msra.mxu0 0
    %1036 = vmatprep.subr.bf16.mxu0 0
    %1037 = vmatpush1.bf16.xpose.msra.mxu0 0
    %1038 = vmatprep.subr.bf16.mxu0 0
    %1039 = vmatpush1.bf16.xpose.msra.mxu0 0
    %1040 = vmatprep.subr.bf16.mxu0 0
    %1041 = vmatpush1.bf16.xpose.msra.mxu0 0
    %1042 = vmatprep.subr.bf16.mxu0 0
    %1043 = vmatpush1.bf16.xpose.msra.mxu0 0
    %1044 = vmatprep.subr.bf16.mxu0 0
    %1045 = vmatpush1.bf16.xpose.msra.mxu0 0
    %1046 = vmatprep.subr.bf16.mxu0 0
    %1047 = vmatpush1.bf16.xpose.msra.mxu0 0
    %1048 = vmatprep.subr.bf16.mxu0 0
    %1049 = vmatpush1.bf16.xpose.msra.mxu0 0
    %1050 = vmatprep.subr.bf16.mxu0 0
    %1051 = vmatpush1.bf16.xpose.msra.mxu0 0
    %1052 = vmatprep.subr.bf16.mxu0 0
    %1053 = vmatpush1.bf16.xpose.msra.mxu0 0
    %1054 = vmatprep.subr.bf16.mxu0 0
    %1055 = vmatpush1.bf16.xpose.msra.mxu0 0
    %1056 = vmatprep.subr.bf16.mxu0 0
    %1057 = vmatpush1.bf16.xpose.msra.mxu0 0
    %1058 = vmatprep.subr.bf16.mxu0 0
    %1059 = vmatpush1.bf16.xpose.msra.mxu0 0
    %1060 = vmatprep.mubr.bf16.mxu0 0
    %1061 = vmatmul.mubr.bf16.gmra.mrb[0].mxu0 %v1023
    %v1062 = vpop.f32.mrb[0].mxu0
    %v1063 = vadd.f32 0.0, %v1062
    %v1064 = vpop.f32.mrb[0].mxu0
    %v1065 = vpop.f32.mrb[0].mxu0
    %v1066 = vpop.f32.mrb[0].mxu0
    %1067 = vdwg.mxu0
    %v1068 = vmul.f32 %v1013, 0.35355338
    %v1069 = vmul.f32 %v1063, 0.35355338
    %v1070 = vadd.f32 %v1068, %v217
    %v1071 = vadd.f32 %v1069, %v218
    %v1072 = vsel %vm299, %v1070, -inf
    %1073 = vmax.xlane.f32.xlu0 %v1072
    %v1074 = vpop.xlane.xlu0 %1073
    %v1075 = vsel %vm299, %v1071, -inf
    %1076 = vmax.xlane.f32.xlu0 %v1075
    %v1077 = vpop.xlane.xlu0 %1076
    %v1078 = vsub.f32 %v1070, %v1074
    %v1079 = vsub.f32 %v1071, %v1077
    %v1080 = vmul.f32 %v1078, 1.442695
    %v1081 = vpow.pop %v1080
    %v1082 = vmul.f32 %v1079, 1.442695
    %v1083 = vpow.pop %v1082
    %v1084 = vsel %vm299, %v1081, 0.0
    %1085 = vadd.xlane.f32.xlu0 %v1084
    %v1086 = vpop.xlane.xlu0 %1085
    %v1087 = vsel %vm299, %v1083, 0.0
    %1088 = vadd.xlane.f32.xlu0 %v1087
    %v1089 = vpop.xlane.xlu0 %1088
    %v1090 = vrcp.pop %v1086
    %v1091 = vrcp.pop %v1089
    %v1092 = vmul.f32 %v1081, %v1090
    %v1093 = vmul.f32 %v1083, %v1091
    %v1094 = vpack.c.bf16 %v1092, %v1092
    %v1095 = vpack.c.bf16 %v1093, %v1093
    %1096 = vrot.lane.b32.xlu0 %v294, 40
    %v1097 = vpop.permute.xlu0 %1096
    %v1099 = vsel %vm299, %v1094, 0
    %v1102 = vsel %vm428, %v1097, 0
    %1104 = vmatprep.subr.bf16.mxu0 0
    %1105 = vmatpush1.bf16.msra.mxu0 %v1102
    %1106 = vmatprep.subr.bf16.mxu0 0
    %1107 = vmatpush1.bf16.msra.mxu0 0
    %1108 = vmatprep.subr.bf16.mxu0 0
    %1109 = vmatpush1.bf16.msra.mxu0 0
    %1110 = vmatprep.subr.bf16.mxu0 0
    %1111 = vmatpush1.bf16.msra.mxu0 0
    %1112 = vmatprep.subr.bf16.mxu0 0
    %1113 = vmatpush1.bf16.msra.mxu0 0
    %1114 = vmatprep.subr.bf16.mxu0 0
    %1115 = vmatpush1.bf16.msra.mxu0 0
    %1116 = vmatprep.subr.bf16.mxu0 0
    %1117 = vmatpush1.bf16.msra.mxu0 0
    %1118 = vmatprep.subr.bf16.mxu0 0
    %1119 = vmatpush1.bf16.msra.mxu0 0
    %1120 = vmatprep.subr.bf16.mxu0 0
    %1121 = vmatpush1.bf16.msra.mxu0 0
    %1122 = vmatprep.subr.bf16.mxu0 0
    %1123 = vmatpush1.bf16.msra.mxu0 0
    %1124 = vmatprep.subr.bf16.mxu0 0
    %1125 = vmatpush1.bf16.msra.mxu0 0
    %1126 = vmatprep.subr.bf16.mxu0 0
    %1127 = vmatpush1.bf16.msra.mxu0 0
    %1128 = vmatprep.subr.bf16.mxu0 0
    %1129 = vmatpush1.bf16.msra.mxu0 0
    %1130 = vmatprep.subr.bf16.mxu0 0
    %1131 = vmatpush1.bf16.msra.mxu0 0
    %1132 = vmatprep.subr.bf16.mxu0 0
    %1133 = vmatpush1.bf16.msra.mxu0 0
    %1134 = vmatprep.subr.bf16.mxu0 0
    %1135 = vmatpush1.bf16.msra.mxu0 0
    %1136 = vmatprep.mubr.bf16.mxu0 0
    %1137 = vmatmul.mubr.bf16.gmra.mrb[0].mxu0 %v1099
    %v1138 = vpop.f32.mrb[0].mxu0
    %v1139 = vadd.f32 0.0, %v1138
    %v1140 = vpop.f32.mrb[0].mxu0
    %v1141 = vpop.f32.mrb[0].mxu0
    %v1142 = vpop.f32.mrb[0].mxu0
    %1143 = vdwg.mxu0
    %1144 = vrot.lane.b32.xlu0 %v295, 40
    %v1145 = vpop.permute.xlu0 %1144
    %v1147 = vsel %vm299, %v1095, 0
    %v1150 = vsel %vm428, %v1145, 0
    %1152 = vmatprep.subr.bf16.mxu0 0
    %1153 = vmatpush1.bf16.msra.mxu0 %v1150
    %1154 = vmatprep.subr.bf16.mxu0 0
    %1155 = vmatpush1.bf16.msra.mxu0 0
    %1156 = vmatprep.subr.bf16.mxu0 0
    %1157 = vmatpush1.bf16.msra.mxu0 0
    %1158 = vmatprep.subr.bf16.mxu0 0
    %1159 = vmatpush1.bf16.msra.mxu0 0
    %1160 = vmatprep.subr.bf16.mxu0 0
    %1161 = vmatpush1.bf16.msra.mxu0 0
    %1162 = vmatprep.subr.bf16.mxu0 0
    %1163 = vmatpush1.bf16.msra.mxu0 0
    %1164 = vmatprep.subr.bf16.mxu0 0
    %1165 = vmatpush1.bf16.msra.mxu0 0
    %1166 = vmatprep.subr.bf16.mxu0 0
    %1167 = vmatpush1.bf16.msra.mxu0 0
    %1168 = vmatprep.subr.bf16.mxu0 0
    %1169 = vmatpush1.bf16.msra.mxu0 0
    %1170 = vmatprep.subr.bf16.mxu0 0
    %1171 = vmatpush1.bf16.msra.mxu0 0
    %1172 = vmatprep.subr.bf16.mxu0 0
    %1173 = vmatpush1.bf16.msra.mxu0 0
    %1174 = vmatprep.subr.bf16.mxu0 0
    %1175 = vmatpush1.bf16.msra.mxu0 0
    %1176 = vmatprep.subr.bf16.mxu0 0
    %1177 = vmatpush1.bf16.msra.mxu0 0
    %1178 = vmatprep.subr.bf16.mxu0 0
    %1179 = vmatpush1.bf16.msra.mxu0 0
    %1180 = vmatprep.subr.bf16.mxu0 0
    %1181 = vmatpush1.bf16.msra.mxu0 0
    %1182 = vmatprep.subr.bf16.mxu0 0
    %1183 = vmatpush1.bf16.msra.mxu0 0
    %1184 = vmatprep.mubr.bf16.mxu0 0
    %1185 = vmatmul.mubr.bf16.gmra.mrb[0].mxu0 %v1147
    %v1186 = vpop.f32.mrb[0].mxu0
    %v1187 = vadd.f32 0.0, %v1186
    %v1188 = vpop.f32.mrb[0].mxu0
    %v1189 = vpop.f32.mrb[0].mxu0
    %v1190 = vpop.f32.mrb[0].mxu0
    %1191 = vdwg.mxu0
    %1194 = vrot.lane.b32.xlu0 %v691, 8
    %v1195 = vpop.permute.xlu0 %1194
    %1196 = vrot.lane.b32.xlu0 %v739, 8
    %v1197 = vpop.permute.xlu0 %1196
    %1202 = vrot.lane.b32.xlu0 %v915, 16
    %v1203 = vpop.permute.xlu0 %1202
    %1204 = vrot.lane.b32.xlu0 %v963, 16
    %v1205 = vpop.permute.xlu0 %1204
    %1210 = vrot.lane.b32.xlu0 %v1139, 24
    %v1211 = vpop.permute.xlu0 %1210
    %1212 = vrot.lane.b32.xlu0 %v1187, 24
    %v1213 = vpop.permute.xlu0 %1212
    %v1216 = vsel %vm299, %v467, %v1195
    %v1217 = vsel %vm299, %v515, %v1197
    %vm1218 = vcmask 130048
    %v1219 = vsel %vm1218, %v1216, %v1203
    %v1220 = vsel %vm1218, %v1217, %v1205
    %vm1221 = vcmask 195584
    %v1222 = vsel %vm1221, %v1219, %v1211
    %v1223 = vsel %vm1221, %v1220, %v1213
    %v1224 = vpack.c.bf16 %v1223, %v1222
    %v1226 = vlaneseq
    %v1227 = vshrl.u32 %v1226, 7
    %v1228 = vsub.s32 0, %v1227
    %v1229 = vrot.slane %v293, %v1228
    %v1235 = vunpack.c.l.b16 %v289
    %v1236 = vunpack.c.l.b16 %v290
    %v1237 = vunpack.c.l.b16 %v291
    %v1238 = vunpack.c.l.b16 %v292
    %v1239 = vpack.c.b16 %v1236, %v1235
    %v1240 = vpack.c.b16 %v1238, %v1237
    %v1244 = vsel %vm157, %v1224, 0
    %1246 = vmatprep.subr.bf16.mxu0 0
    %1247 = vmatpush1.bf16.msra.mxu0 %v1239
    %1248 = vmatprep.subr.bf16.mxu0 0
    %1249 = vmatpush1.bf16.msra.mxu0 %v1240
    %1250 = vmatprep.subr.bf16.mxu0 0
    %1251 = vmatpush1.bf16.msra.mxu0 0
    %1252 = vmatprep.subr.bf16.mxu0 0
    %1253 = vmatpush1.bf16.msra.mxu0 0
    %1254 = vmatprep.subr.bf16.mxu0 0
    %1255 = vmatpush1.bf16.msra.mxu0 0
    %1256 = vmatprep.subr.bf16.mxu0 0
    %1257 = vmatpush1.bf16.msra.mxu0 0
    %1258 = vmatprep.subr.bf16.mxu0 0
    %1259 = vmatpush1.bf16.msra.mxu0 0
    %1260 = vmatprep.subr.bf16.mxu0 0
    %1261 = vmatpush1.bf16.msra.mxu0 0
    %1262 = vmatprep.subr.bf16.mxu0 0
    %1263 = vmatpush1.bf16.msra.mxu0 0
    %1264 = vmatprep.subr.bf16.mxu0 0
    %1265 = vmatpush1.bf16.msra.mxu0 0
    %1266 = vmatprep.subr.bf16.mxu0 0
    %1267 = vmatpush1.bf16.msra.mxu0 0
    %1268 = vmatprep.subr.bf16.mxu0 0
    %1269 = vmatpush1.bf16.msra.mxu0 0
    %1270 = vmatprep.subr.bf16.mxu0 0
    %1271 = vmatpush1.bf16.msra.mxu0 0
    %1272 = vmatprep.subr.bf16.mxu0 0
    %1273 = vmatpush1.bf16.msra.mxu0 0
    %1274 = vmatprep.subr.bf16.mxu0 0
    %1275 = vmatpush1.bf16.msra.mxu0 0
    %1276 = vmatprep.subr.bf16.mxu0 0
    %1277 = vmatpush1.bf16.msra.mxu0 0
    %1278 = vmatprep.mubr.bf16.mxu0 0
    %1279 = vmatmul.mubr.bf16.gmra.mrb[0].mxu0 %v1244
    %v1280 = vpop.f32.mrb[0].mxu0
    %v1281 = vadd.f32 %v1229, %v1280
    %v1282 = vpop.f32.mrb[0].mxu0
    %v1283 = vpop.f32.mrb[0].mxu0
    %v1284 = vadd.f32 %v1229, %v1283
    %v1285 = vpop.f32.mrb[0].mxu0
    %1286 = vdwg.mxu0
    %v1287 = vadd.f32 %v215, %v1281
    %v1288 = vadd.f32 %v216, %v1284
    %v1289 = vld [vmem:[%s33] sm:$0x1]
    %v1290 = vld [vmem:[%s35] sm:$0x1]
    %v1291 = vsel %vm157, %v1287, 0.0
    %1292 = vadd.xlane.f32.xlu0 %v1291
    %v1293 = vpop.xlane.xlu0 %1292
    %v1294 = vsel %vm157, %v1288, 0.0
    %1295 = vadd.xlane.f32.xlu0 %v1294
    %v1296 = vpop.xlane.xlu0 %1295
    %v1297 = vrcp.pop 32.0
    %v1298 = vmul.f32 %v1293, %v1297
    %v1299 = vmul.f32 %v1296, %v1297
    %v1300 = vsub.f32 %v1287, %v1298
    %v1301 = vsub.f32 %v1288, %v1299
    %v1302 = vmul.f32 %v1300, %v1300
    %v1303 = vmul.f32 %v1301, %v1301
    %v1304 = vsel %vm157, %v1302, 0.0
    %1305 = vadd.xlane.f32.xlu0 %v1304
    %v1306 = vpop.xlane.xlu0 %1305
    %v1307 = vsel %vm157, %v1303, 0.0
    %1308 = vadd.xlane.f32.xlu0 %v1307
    %v1309 = vpop.xlane.xlu0 %1308
    %v1310 = vmul.f32 %v1306, %v1297
    %v1311 = vmul.f32 %v1309, %v1297
    %v1312 = vadd.f32 %v1310, 1e-05
    %v1313 = vadd.f32 %v1311, 1e-05
    %v1314 = vrsqrt.pop %v1312
    %v1315 = vrsqrt.pop %v1313
    %v1316 = vmul.f32 %v1300, %v1314
    %v1317 = vmul.f32 %v1301, %v1315
    %v1319 = vlaneseq
    %v1320 = vshrl.u32 %v1319, 7
    %v1321 = vsub.s32 0, %v1320
    %v1322 = vrot.slane %v1289, %v1321
    %v1324 = vmul.f32 %v1316, %v1322
    %v1325 = vmul.f32 %v1317, %v1322
    %v1327 = vlaneseq
    %v1328 = vshrl.u32 %v1327, 7
    %v1329 = vsub.s32 0, %v1328
    %v1330 = vrot.slane %v1290, %v1329
    %v1332 = vadd.f32 %v1324, %v1330
    %v1333 = vadd.f32 %v1325, %v1330
    %v1334 = vpack.c.bf16 %v1333, %v1332
    %v1335 = vld [vmem:[%s21] sm:$0xf]
    %v1336 = vld [vmem:[%s21 + $0x4] sm:$0xf]
    %v1337 = vld [vmem:[%s21 + $0x8] sm:$0xf]
    %v1338 = vld [vmem:[%s21 + $0xc] sm:$0xf]
    %v1339 = vld [vmem:[%s23] sm:$0x1]
    %v1341 = vlaneseq
    %v1342 = vshrl.u32 %v1341, 7
    %v1343 = vsub.s32 0, %v1342
    %v1344 = vrot.slane %v1339, %v1343
    %v1350 = vunpack.c.l.b16 %v1335
    %v1351 = vunpack.c.l.b16 %v1336
    %v1352 = vunpack.c.l.b16 %v1337
    %v1353 = vunpack.c.l.b16 %v1338
    %v1354 = vpack.c.b16 %v1351, %v1350
    %v1355 = vpack.c.b16 %v1353, %v1352
    %v1359 = vsel %vm157, %v1334, 0
    %1361 = vmatprep.subr.bf16.mxu0 0
    %1362 = vmatpush1.bf16.msra.mxu0 %v1354
    %1363 = vmatprep.subr.bf16.mxu0 0
    %1364 = vmatpush1.bf16.msra.mxu0 %v1355
    %1365 = vmatprep.subr.bf16.mxu0 0
    %1366 = vmatpush1.bf16.msra.mxu0 0
    %1367 = vmatprep.subr.bf16.mxu0 0
    %1368 = vmatpush1.bf16.msra.mxu0 0
    %1369 = vmatprep.subr.bf16.mxu0 0
    %1370 = vmatpush1.bf16.msra.mxu0 0
    %1371 = vmatprep.subr.bf16.mxu0 0
    %1372 = vmatpush1.bf16.msra.mxu0 0
    %1373 = vmatprep.subr.bf16.mxu0 0
    %1374 = vmatpush1.bf16.msra.mxu0 0
    %1375 = vmatprep.subr.bf16.mxu0 0
    %1376 = vmatpush1.bf16.msra.mxu0 0
    %1377 = vmatprep.subr.bf16.mxu0 0
    %1378 = vmatpush1.bf16.msra.mxu0 0
    %1379 = vmatprep.subr.bf16.mxu0 0
    %1380 = vmatpush1.bf16.msra.mxu0 0
    %1381 = vmatprep.subr.bf16.mxu0 0
    %1382 = vmatpush1.bf16.msra.mxu0 0
    %1383 = vmatprep.subr.bf16.mxu0 0
    %1384 = vmatpush1.bf16.msra.mxu0 0
    %1385 = vmatprep.subr.bf16.mxu0 0
    %1386 = vmatpush1.bf16.msra.mxu0 0
    %1387 = vmatprep.subr.bf16.mxu0 0
    %1388 = vmatpush1.bf16.msra.mxu0 0
    %1389 = vmatprep.subr.bf16.mxu0 0
    %1390 = vmatpush1.bf16.msra.mxu0 0
    %1391 = vmatprep.subr.bf16.mxu0 0
    %1392 = vmatpush1.bf16.msra.mxu0 0
    %1393 = vmatprep.mubr.bf16.mxu0 0
    %1394 = vmatmul.mubr.bf16.gmra.mrb[0].mxu0 %v1359
    %v1395 = vpop.f32.mrb[0].mxu0
    %v1396 = vadd.f32 %v1344, %v1395
    %v1397 = vpop.f32.mrb[0].mxu0
    %v1398 = vpop.f32.mrb[0].mxu0
    %v1399 = vadd.f32 %v1344, %v1398
    %v1400 = vpop.f32.mrb[0].mxu0
    %1401 = vdwg.mxu0
    %v1402 = vld [vmem:[%s25] sm:$0xf]
    %v1403 = vld [vmem:[%s25 + $0x4] sm:$0xf]
    %v1404 = vld [vmem:[%s25 + $0x8] sm:$0xf]
    %v1405 = vld [vmem:[%s25 + $0xc] sm:$0xf]
    %v1406 = vld [vmem:[%s27] sm:$0x1]
    %v1408 = vlaneseq
    %v1409 = vshrl.u32 %v1408, 7
    %v1410 = vsub.s32 0, %v1409
    %v1411 = vrot.slane %v1406, %v1410
    %v1417 = vunpack.c.l.b16 %v1402
    %v1418 = vunpack.c.l.b16 %v1403
    %v1419 = vunpack.c.l.b16 %v1404
    %v1420 = vunpack.c.l.b16 %v1405
    %v1421 = vpack.c.b16 %v1418, %v1417
    %v1422 = vpack.c.b16 %v1420, %v1419
    %v1426 = vsel %vm157, %v213, 0
    %v1429 = vsel %vm157, %v214, 0
    %1431 = vmatprep.subr.bf16.mxu0 0
    %1432 = vmatpush1.bf16.msra.mxu0 %v1421
    %1433 = vmatprep.subr.bf16.mxu0 0
    %1434 = vmatpush1.bf16.msra.mxu0 %v1422
    %1435 = vmatprep.subr.bf16.mxu0 0
    %1436 = vmatpush1.bf16.msra.mxu0 0
    %1437 = vmatprep.subr.bf16.mxu0 0
    %1438 = vmatpush1.bf16.msra.mxu0 0
    %1439 = vmatprep.subr.bf16.mxu0 0
    %1440 = vmatpush1.bf16.msra.mxu0 0
    %1441 = vmatprep.subr.bf16.mxu0 0
    %1442 = vmatpush1.bf16.msra.mxu0 0
    %1443 = vmatprep.subr.bf16.mxu0 0
    %1444 = vmatpush1.bf16.msra.mxu0 0
    %1445 = vmatprep.subr.bf16.mxu0 0
    %1446 = vmatpush1.bf16.msra.mxu0 0
    %1447 = vmatprep.subr.bf16.mxu0 0
    %1448 = vmatpush1.bf16.msra.mxu0 0
    %1449 = vmatprep.subr.bf16.mxu0 0
    %1450 = vmatpush1.bf16.msra.mxu0 0
    %1451 = vmatprep.subr.bf16.mxu0 0
    %1452 = vmatpush1.bf16.msra.mxu0 0
    %1453 = vmatprep.subr.bf16.mxu0 0
    %1454 = vmatpush1.bf16.msra.mxu0 0
    %1455 = vmatprep.subr.bf16.mxu0 0
    %1456 = vmatpush1.bf16.msra.mxu0 0
    %1457 = vmatprep.subr.bf16.mxu0 0
    %1458 = vmatpush1.bf16.msra.mxu0 0
    %1459 = vmatprep.subr.bf16.mxu0 0
    %1460 = vmatpush1.bf16.msra.mxu0 0
    %1461 = vmatprep.subr.bf16.mxu0 0
    %1462 = vmatpush1.bf16.msra.mxu0 0
    %1463 = vmatprep.mubr.bf16.mxu0 0
    %1464 = vmatmul.mubr.bf16.gmra.mrb[0].mxu0 %v1426
    %v1465 = vpop.f32.mrb[0].mxu0
    %v1466 = vadd.f32 %v1411, %v1465
    %v1467 = vpop.f32.mrb[0].mxu0
    %v1468 = vpop.f32.mrb[0].mxu0
    %v1469 = vadd.f32 %v1411, %v1468
    %v1470 = vpop.f32.mrb[0].mxu0
    %1471 = vmatprep.mubr.bf16.mxu0 0
    %1472 = vmatmul.mubr.bf16.gmra.mrb[0].mxu0 %v1429
    %v1473 = vpop.f32.mrb[0].mxu0
    %v1474 = vadd.f32 %v1411, %v1473
    %v1475 = vpop.f32.mrb[0].mxu0
    %v1476 = vpop.f32.mrb[0].mxu0
    %v1477 = vadd.f32 %v1411, %v1476
    %v1478 = vpop.f32.mrb[0].mxu0
    %1479 = vdwg.mxu0
    %v1480 = vld [vmem:[%s29] sm:$0xf]
    %v1481 = vld [vmem:[%s29 + $0x4] sm:$0xf]
    %v1482 = vld [vmem:[%s29 + $0x8] sm:$0xf]
    %v1483 = vld [vmem:[%s29 + $0xc] sm:$0xf]
    %v1484 = vld [vmem:[%s31] sm:$0x1]
    %v1485 = vpack.c.bf16 %v1396, %v1396
    %v1486 = vpack.c.bf16 %v1399, %v1399
    %v1487 = vpack.c.bf16 %v1469, %v1466
    %v1488 = vpack.c.bf16 %v1477, %v1474
    %v1490 = vsel %vm299, %v1485, 0
    %v1493 = vsel %vm299, %v1487, 0
    %1495 = vmatprep.subr.bf16.mxu0 0
    %1496 = vmatpush1.bf16.xpose.msra.mxu0 %v1493
    %1497 = vmatprep.subr.bf16.mxu0 0
    %1498 = vmatpush1.bf16.xpose.msra.mxu0 0
    %1499 = vmatprep.subr.bf16.mxu0 0
    %1500 = vmatpush1.bf16.xpose.msra.mxu0 0
    %1501 = vmatprep.subr.bf16.mxu0 0
    %1502 = vmatpush1.bf16.xpose.msra.mxu0 0
    %1503 = vmatprep.subr.bf16.mxu0 0
    %1504 = vmatpush1.bf16.xpose.msra.mxu0 0
    %1505 = vmatprep.subr.bf16.mxu0 0
    %1506 = vmatpush1.bf16.xpose.msra.mxu0 0
    %1507 = vmatprep.subr.bf16.mxu0 0
    %1508 = vmatpush1.bf16.xpose.msra.mxu0 0
    %1509 = vmatprep.subr.bf16.mxu0 0
    %1510 = vmatpush1.bf16.xpose.msra.mxu0 0
    %1511 = vmatprep.subr.bf16.mxu0 0
    %1512 = vmatpush1.bf16.xpose.msra.mxu0 0
    %1513 = vmatprep.subr.bf16.mxu0 0
    %1514 = vmatpush1.bf16.xpose.msra.mxu0 0
    %1515 = vmatprep.subr.bf16.mxu0 0
    %1516 = vmatpush1.bf16.xpose.msra.mxu0 0
    %1517 = vmatprep.subr.bf16.mxu0 0
    %1518 = vmatpush1.bf16.xpose.msra.mxu0 0
    %1519 = vmatprep.subr.bf16.mxu0 0
    %1520 = vmatpush1.bf16.xpose.msra.mxu0 0
    %1521 = vmatprep.subr.bf16.mxu0 0
    %1522 = vmatpush1.bf16.xpose.msra.mxu0 0
    %1523 = vmatprep.subr.bf16.mxu0 0
    %1524 = vmatpush1.bf16.xpose.msra.mxu0 0
    %1525 = vmatprep.subr.bf16.mxu0 0
    %1526 = vmatpush1.bf16.xpose.msra.mxu0 0
    %1527 = vmatprep.mubr.bf16.mxu0 0
    %1528 = vmatmul.mubr.bf16.gmra.mrb[0].mxu0 %v1490
    %v1529 = vpop.f32.mrb[0].mxu0
    %v1530 = vadd.f32 0.0, %v1529
    %v1531 = vpop.f32.mrb[0].mxu0
    %v1532 = vpop.f32.mrb[0].mxu0
    %v1533 = vpop.f32.mrb[0].mxu0
    %1534 = vdwg.mxu0
    %v1536 = vsel %vm299, %v1486, 0
    %v1539 = vsel %vm299, %v1488, 0
    %1541 = vmatprep.subr.bf16.mxu0 0
    %1542 = vmatpush1.bf16.xpose.msra.mxu0 %v1539
    %1543 = vmatprep.subr.bf16.mxu0 0
    %1544 = vmatpush1.bf16.xpose.msra.mxu0 0
    %1545 = vmatprep.subr.bf16.mxu0 0
    %1546 = vmatpush1.bf16.xpose.msra.mxu0 0
    %1547 = vmatprep.subr.bf16.mxu0 0
    %1548 = vmatpush1.bf16.xpose.msra.mxu0 0
    %1549 = vmatprep.subr.bf16.mxu0 0
    %1550 = vmatpush1.bf16.xpose.msra.mxu0 0
    %1551 = vmatprep.subr.bf16.mxu0 0
    %1552 = vmatpush1.bf16.xpose.msra.mxu0 0
    %1553 = vmatprep.subr.bf16.mxu0 0
    %1554 = vmatpush1.bf16.xpose.msra.mxu0 0
    %1555 = vmatprep.subr.bf16.mxu0 0
    %1556 = vmatpush1.bf16.xpose.msra.mxu0 0
    %1557 = vmatprep.subr.bf16.mxu0 0
    %1558 = vmatpush1.bf16.xpose.msra.mxu0 0
    %1559 = vmatprep.subr.bf16.mxu0 0
    %1560 = vmatpush1.bf16.xpose.msra.mxu0 0
    %1561 = vmatprep.subr.bf16.mxu0 0
    %1562 = vmatpush1.bf16.xpose.msra.mxu0 0
    %1563 = vmatprep.subr.bf16.mxu0 0
    %1564 = vmatpush1.bf16.xpose.msra.mxu0 0
    %1565 = vmatprep.subr.bf16.mxu0 0
    %1566 = vmatpush1.bf16.xpose.msra.mxu0 0
    %1567 = vmatprep.subr.bf16.mxu0 0
    %1568 = vmatpush1.bf16.xpose.msra.mxu0 0
    %1569 = vmatprep.subr.bf16.mxu0 0
    %1570 = vmatpush1.bf16.xpose.msra.mxu0 0
    %1571 = vmatprep.subr.bf16.mxu0 0
    %1572 = vmatpush1.bf16.xpose.msra.mxu0 0
    %1573 = vmatprep.mubr.bf16.mxu0 0
    %1574 = vmatmul.mubr.bf16.gmra.mrb[0].mxu0 %v1536
    %v1575 = vpop.f32.mrb[0].mxu0
    %v1576 = vadd.f32 0.0, %v1575
    %v1577 = vpop.f32.mrb[0].mxu0
    %v1578 = vpop.f32.mrb[0].mxu0
    %v1579 = vpop.f32.mrb[0].mxu0
    %1580 = vdwg.mxu0
    %v1581 = vmul.f32 %v1530, 0.35355338
    %v1582 = vmul.f32 %v1576, 0.35355338
    %v1583 = vadd.f32 %v1581, %v219
    %v1584 = vadd.f32 %v1582, %v220
    %v1585 = vsel %vm1218, %v1583, -inf
    %1586 = vmax.xlane.f32.xlu0 %v1585
    %v1587 = vpop.xlane.xlu0 %1586
    %v1588 = vsel %vm1218, %v1584, -inf
    %1589 = vmax.xlane.f32.xlu0 %v1588
    %v1590 = vpop.xlane.xlu0 %1589
    %v1591 = vsub.f32 %v1583, %v1587
    %v1592 = vsub.f32 %v1584, %v1590
    %v1593 = vmul.f32 %v1591, 1.442695
    %v1594 = vpow.pop %v1593
    %v1595 = vmul.f32 %v1592, 1.442695
    %v1596 = vpow.pop %v1595
    %v1597 = vsel %vm1218, %v1594, 0.0
    %1598 = vadd.xlane.f32.xlu0 %v1597
    %v1599 = vpop.xlane.xlu0 %1598
    %v1600 = vsel %vm1218, %v1596, 0.0
    %1601 = vadd.xlane.f32.xlu0 %v1600
    %v1602 = vpop.xlane.xlu0 %1601
    %v1603 = vrcp.pop %v1599
    %v1604 = vrcp.pop %v1602
    %v1605 = vmul.f32 %v1594, %v1603
    %v1606 = vmul.f32 %v1596, %v1604
    %v1607 = vpack.c.bf16 %v1605, %v1605
    %v1608 = vpack.c.bf16 %v1606, %v1606
    %1610 = vrot.lane.b32.xlu0 %v1487, 96
    %v1611 = vpop.permute.xlu0 %1610
    %v1614 = vsel %vm1218, %v1607, 0
    %1616 = vmatprep.subr.bf16.mxu0 0
    %1617 = vmatpush1.bf16.msra.mxu0 %v1611
    %1618 = vmatprep.subr.bf16.mxu0 0
    %1619 = vmatpush1.bf16.msra.mxu0 0
    %1620 = vmatprep.subr.bf16.mxu0 0
    %1621 = vmatpush1.bf16.msra.mxu0 0
    %1622 = vmatprep.subr.bf16.mxu0 0
    %1623 = vmatpush1.bf16.msra.mxu0 0
    %1624 = vmatprep.subr.bf16.mxu0 0
    %1625 = vmatpush1.bf16.msra.mxu0 0
    %1626 = vmatprep.subr.bf16.mxu0 0
    %1627 = vmatpush1.bf16.msra.mxu0 0
    %1628 = vmatprep.subr.bf16.mxu0 0
    %1629 = vmatpush1.bf16.msra.mxu0 0
    %1630 = vmatprep.subr.bf16.mxu0 0
    %1631 = vmatpush1.bf16.msra.mxu0 0
    %1632 = vmatprep.subr.bf16.mxu0 0
    %1633 = vmatpush1.bf16.msra.mxu0 0
    %1634 = vmatprep.subr.bf16.mxu0 0
    %1635 = vmatpush1.bf16.msra.mxu0 0
    %1636 = vmatprep.subr.bf16.mxu0 0
    %1637 = vmatpush1.bf16.msra.mxu0 0
    %1638 = vmatprep.subr.bf16.mxu0 0
    %1639 = vmatpush1.bf16.msra.mxu0 0
    %1640 = vmatprep.subr.bf16.mxu0 0
    %1641 = vmatpush1.bf16.msra.mxu0 0
    %1642 = vmatprep.subr.bf16.mxu0 0
    %1643 = vmatpush1.bf16.msra.mxu0 0
    %1644 = vmatprep.subr.bf16.mxu0 0
    %1645 = vmatpush1.bf16.msra.mxu0 0
    %1646 = vmatprep.subr.bf16.mxu0 0
    %1647 = vmatpush1.bf16.msra.mxu0 0
    %1648 = vmatprep.mubr.bf16.mxu0 0
    %1649 = vmatmul.mubr.bf16.gmra.mrb[0].mxu0 %v1614
    %v1650 = vpop.f32.mrb[0].mxu0
    %v1651 = vadd.f32 0.0, %v1650
    %v1652 = vpop.f32.mrb[0].mxu0
    %v1653 = vpop.f32.mrb[0].mxu0
    %v1654 = vpop.f32.mrb[0].mxu0
    %1655 = vdwg.mxu0
    %1657 = vrot.lane.b32.xlu0 %v1488, 96
    %v1658 = vpop.permute.xlu0 %1657
    %v1661 = vsel %vm1218, %v1608, 0
    %1663 = vmatprep.subr.bf16.mxu0 0
    %1664 = vmatpush1.bf16.msra.mxu0 %v1658
    %1665 = vmatprep.subr.bf16.mxu0 0
    %1666 = vmatpush1.bf16.msra.mxu0 0
    %1667 = vmatprep.subr.bf16.mxu0 0
    %1668 = vmatpush1.bf16.msra.mxu0 0
    %1669 = vmatprep.subr.bf16.mxu0 0
    %1670 = vmatpush1.bf16.msra.mxu0 0
    %1671 = vmatprep.subr.bf16.mxu0 0
    %1672 = vmatpush1.bf16.msra.mxu0 0
    %1673 = vmatprep.subr.bf16.mxu0 0
    %1674 = vmatpush1.bf16.msra.mxu0 0
    %1675 = vmatprep.subr.bf16.mxu0 0
    %1676 = vmatpush1.bf16.msra.mxu0 0
    %1677 = vmatprep.subr.bf16.mxu0 0
    %1678 = vmatpush1.bf16.msra.mxu0 0
    %1679 = vmatprep.subr.bf16.mxu0 0
    %1680 = vmatpush1.bf16.msra.mxu0 0
    %1681 = vmatprep.subr.bf16.mxu0 0
    %1682 = vmatpush1.bf16.msra.mxu0 0
    %1683 = vmatprep.subr.bf16.mxu0 0
    %1684 = vmatpush1.bf16.msra.mxu0 0
    %1685 = vmatprep.subr.bf16.mxu0 0
    %1686 = vmatpush1.bf16.msra.mxu0 0
    %1687 = vmatprep.subr.bf16.mxu0 0
    %1688 = vmatpush1.bf16.msra.mxu0 0
    %1689 = vmatprep.subr.bf16.mxu0 0
    %1690 = vmatpush1.bf16.msra.mxu0 0
    %1691 = vmatprep.subr.bf16.mxu0 0
    %1692 = vmatpush1.bf16.msra.mxu0 0
    %1693 = vmatprep.subr.bf16.mxu0 0
    %1694 = vmatpush1.bf16.msra.mxu0 0
    %1695 = vmatprep.mubr.bf16.mxu0 0
    %1696 = vmatmul.mubr.bf16.gmra.mrb[0].mxu0 %v1661
    %v1697 = vpop.f32.mrb[0].mxu0
    %v1698 = vadd.f32 0.0, %v1697
    %v1699 = vpop.f32.mrb[0].mxu0
    %v1700 = vpop.f32.mrb[0].mxu0
    %v1701 = vpop.f32.mrb[0].mxu0
    %1702 = vdwg.mxu0
    %1704 = vrot.lane.b32.xlu0 %v1485, 120
    %v1705 = vpop.permute.xlu0 %1704
    %1706 = vrot.lane.b32.xlu0 %v1487, 120
    %v1707 = vpop.permute.xlu0 %1706
    %v1709 = vsel %vm299, %v1705, 0
    %v1712 = vsel %vm299, %v1707, 0
    %1714 = vmatprep.subr.bf16.mxu0 0
    %1715 = vmatpush1.bf16.xpose.msra.mxu0 %v1712
    %1716 = vmatprep.subr.bf16.mxu0 0
    %1717 = vmatpush1.bf16.xpose.msra.mxu0 0
    %1718 = vmatprep.subr.bf16.mxu0 0
    %1719 = vmatpush1.bf16.xpose.msra.mxu0 0
    %1720 = vmatprep.subr.bf16.mxu0 0
    %1721 = vmatpush1.bf16.xpose.msra.mxu0 0
    %1722 = vmatprep.subr.bf16.mxu0 0
    %1723 = vmatpush1.bf16.xpose.msra.mxu0 0
    %1724 = vmatprep.subr.bf16.mxu0 0
    %1725 = vmatpush1.bf16.xpose.msra.mxu0 0
    %1726 = vmatprep.subr.bf16.mxu0 0
    %1727 = vmatpush1.bf16.xpose.msra.mxu0 0
    %1728 = vmatprep.subr.bf16.mxu0 0
    %1729 = vmatpush1.bf16.xpose.msra.mxu0 0
    %1730 = vmatprep.subr.bf16.mxu0 0
    %1731 = vmatpush1.bf16.xpose.msra.mxu0 0
    %1732 = vmatprep.subr.bf16.mxu0 0
    %1733 = vmatpush1.bf16.xpose.msra.mxu0 0
    %1734 = vmatprep.subr.bf16.mxu0 0
    %1735 = vmatpush1.bf16.xpose.msra.mxu0 0
    %1736 = vmatprep.subr.bf16.mxu0 0
    %1737 = vmatpush1.bf16.xpose.msra.mxu0 0
    %1738 = vmatprep.subr.bf16.mxu0 0
    %1739 = vmatpush1.bf16.xpose.msra.mxu0 0
    %1740 = vmatprep.subr.bf16.mxu0 0
    %1741 = vmatpush1.bf16.xpose.msra.mxu0 0
    %1742 = vmatprep.subr.bf16.mxu0 0
    %1743 = vmatpush1.bf16.xpose.msra.mxu0 0
    %1744 = vmatprep.subr.bf16.mxu0 0
    %1745 = vmatpush1.bf16.xpose.msra.mxu0 0
    %1746 = vmatprep.mubr.bf16.mxu0 0
    %1747 = vmatmul.mubr.bf16.gmra.mrb[0].mxu0 %v1709
    %v1748 = vpop.f32.mrb[0].mxu0
    %v1749 = vadd.f32 0.0, %v1748
    %v1750 = vpop.f32.mrb[0].mxu0
    %v1751 = vpop.f32.mrb[0].mxu0
    %v1752 = vpop.f32.mrb[0].mxu0
    %1753 = vdwg.mxu0
    %1755 = vrot.lane.b32.xlu0 %v1486, 120
    %v1756 = vpop.permute.xlu0 %1755
    %1757 = vrot.lane.b32.xlu0 %v1488, 120
    %v1758 = vpop.permute.xlu0 %1757
    %v1760 = vsel %vm299, %v1756, 0
    %v1763 = vsel %vm299, %v1758, 0
    %1765 = vmatprep.subr.bf16.mxu0 0
    %1766 = vmatpush1.bf16.xpose.msra.mxu0 %v1763
    %1767 = vmatprep.subr.bf16.mxu0 0
    %1768 = vmatpush1.bf16.xpose.msra.mxu0 0
    %1769 = vmatprep.subr.bf16.mxu0 0
    %1770 = vmatpush1.bf16.xpose.msra.mxu0 0
    %1771 = vmatprep.subr.bf16.mxu0 0
    %1772 = vmatpush1.bf16.xpose.msra.mxu0 0
    %1773 = vmatprep.subr.bf16.mxu0 0
    %1774 = vmatpush1.bf16.xpose.msra.mxu0 0
    %1775 = vmatprep.subr.bf16.mxu0 0
    %1776 = vmatpush1.bf16.xpose.msra.mxu0 0
    %1777 = vmatprep.subr.bf16.mxu0 0
    %1778 = vmatpush1.bf16.xpose.msra.mxu0 0
    %1779 = vmatprep.subr.bf16.mxu0 0
    %1780 = vmatpush1.bf16.xpose.msra.mxu0 0
    %1781 = vmatprep.subr.bf16.mxu0 0
    %1782 = vmatpush1.bf16.xpose.msra.mxu0 0
    %1783 = vmatprep.subr.bf16.mxu0 0
    %1784 = vmatpush1.bf16.xpose.msra.mxu0 0
    %1785 = vmatprep.subr.bf16.mxu0 0
    %1786 = vmatpush1.bf16.xpose.msra.mxu0 0
    %1787 = vmatprep.subr.bf16.mxu0 0
    %1788 = vmatpush1.bf16.xpose.msra.mxu0 0
    %1789 = vmatprep.subr.bf16.mxu0 0
    %1790 = vmatpush1.bf16.xpose.msra.mxu0 0
    %1791 = vmatprep.subr.bf16.mxu0 0
    %1792 = vmatpush1.bf16.xpose.msra.mxu0 0
    %1793 = vmatprep.subr.bf16.mxu0 0
    %1794 = vmatpush1.bf16.xpose.msra.mxu0 0
    %1795 = vmatprep.subr.bf16.mxu0 0
    %1796 = vmatpush1.bf16.xpose.msra.mxu0 0
    %1797 = vmatprep.mubr.bf16.mxu0 0
    %1798 = vmatmul.mubr.bf16.gmra.mrb[0].mxu0 %v1760
    %v1799 = vpop.f32.mrb[0].mxu0
    %v1800 = vadd.f32 0.0, %v1799
    %v1801 = vpop.f32.mrb[0].mxu0
    %v1802 = vpop.f32.mrb[0].mxu0
    %v1803 = vpop.f32.mrb[0].mxu0
    %1804 = vdwg.mxu0
    %v1805 = vmul.f32 %v1749, 0.35355338
    %v1806 = vmul.f32 %v1800, 0.35355338
    %v1807 = vadd.f32 %v1805, %v219
    %v1808 = vadd.f32 %v1806, %v220
    %v1809 = vsel %vm1218, %v1807, -inf
    %1810 = vmax.xlane.f32.xlu0 %v1809
    %v1811 = vpop.xlane.xlu0 %1810
    %v1812 = vsel %vm1218, %v1808, -inf
    %1813 = vmax.xlane.f32.xlu0 %v1812
    %v1814 = vpop.xlane.xlu0 %1813
    %v1815 = vsub.f32 %v1807, %v1811
    %v1816 = vsub.f32 %v1808, %v1814
    %v1817 = vmul.f32 %v1815, 1.442695
    %v1818 = vpow.pop %v1817
    %v1819 = vmul.f32 %v1816, 1.442695
    %v1820 = vpow.pop %v1819
    %v1821 = vsel %vm1218, %v1818, 0.0
    %1822 = vadd.xlane.f32.xlu0 %v1821
    %v1823 = vpop.xlane.xlu0 %1822
    %v1824 = vsel %vm1218, %v1820, 0.0
    %1825 = vadd.xlane.f32.xlu0 %v1824
    %v1826 = vpop.xlane.xlu0 %1825
    %v1827 = vrcp.pop %v1823
    %v1828 = vrcp.pop %v1826
    %v1829 = vmul.f32 %v1818, %v1827
    %v1830 = vmul.f32 %v1820, %v1828
    %v1831 = vpack.c.bf16 %v1829, %v1829
    %v1832 = vpack.c.bf16 %v1830, %v1830
    %1833 = vrot.lane.b32.xlu0 %v1487, 88
    %v1834 = vpop.permute.xlu0 %1833
    %v1837 = vsel %vm1218, %v1831, 0
    %1839 = vmatprep.subr.bf16.mxu0 0
    %1840 = vmatpush1.bf16.msra.mxu0 %v1834
    %1841 = vmatprep.subr.bf16.mxu0 0
    %1842 = vmatpush1.bf16.msra.mxu0 0
    %1843 = vmatprep.subr.bf16.mxu0 0
    %1844 = vmatpush1.bf16.msra.mxu0 0
    %1845 = vmatprep.subr.bf16.mxu0 0
    %1846 = vmatpush1.bf16.msra.mxu0 0
    %1847 = vmatprep.subr.bf16.mxu0 0
    %1848 = vmatpush1.bf16.msra.mxu0 0
    %1849 = vmatprep.subr.bf16.mxu0 0
    %1850 = vmatpush1.bf16.msra.mxu0 0
    %1851 = vmatprep.subr.bf16.mxu0 0
    %1852 = vmatpush1.bf16.msra.mxu0 0
    %1853 = vmatprep.subr.bf16.mxu0 0
    %1854 = vmatpush1.bf16.msra.mxu0 0
    %1855 = vmatprep.subr.bf16.mxu0 0
    %1856 = vmatpush1.bf16.msra.mxu0 0
    %1857 = vmatprep.subr.bf16.mxu0 0
    %1858 = vmatpush1.bf16.msra.mxu0 0
    %1859 = vmatprep.subr.bf16.mxu0 0
    %1860 = vmatpush1.bf16.msra.mxu0 0
    %1861 = vmatprep.subr.bf16.mxu0 0
    %1862 = vmatpush1.bf16.msra.mxu0 0
    %1863 = vmatprep.subr.bf16.mxu0 0
    %1864 = vmatpush1.bf16.msra.mxu0 0
    %1865 = vmatprep.subr.bf16.mxu0 0
    %1866 = vmatpush1.bf16.msra.mxu0 0
    %1867 = vmatprep.subr.bf16.mxu0 0
    %1868 = vmatpush1.bf16.msra.mxu0 0
    %1869 = vmatprep.subr.bf16.mxu0 0
    %1870 = vmatpush1.bf16.msra.mxu0 0
    %1871 = vmatprep.mubr.bf16.mxu0 0
    %1872 = vmatmul.mubr.bf16.gmra.mrb[0].mxu0 %v1837
    %v1873 = vpop.f32.mrb[0].mxu0
    %v1874 = vadd.f32 0.0, %v1873
    %v1875 = vpop.f32.mrb[0].mxu0
    %v1876 = vpop.f32.mrb[0].mxu0
    %v1877 = vpop.f32.mrb[0].mxu0
    %1878 = vdwg.mxu0
    %1879 = vrot.lane.b32.xlu0 %v1488, 88
    %v1880 = vpop.permute.xlu0 %1879
    %v1883 = vsel %vm1218, %v1832, 0
    %1885 = vmatprep.subr.bf16.mxu0 0
    %1886 = vmatpush1.bf16.msra.mxu0 %v1880
    %1887 = vmatprep.subr.bf16.mxu0 0
    %1888 = vmatpush1.bf16.msra.mxu0 0
    %1889 = vmatprep.subr.bf16.mxu0 0
    %1890 = vmatpush1.bf16.msra.mxu0 0
    %1891 = vmatprep.subr.bf16.mxu0 0
    %1892 = vmatpush1.bf16.msra.mxu0 0
    %1893 = vmatprep.subr.bf16.mxu0 0
    %1894 = vmatpush1.bf16.msra.mxu0 0
    %1895 = vmatprep.subr.bf16.mxu0 0
    %1896 = vmatpush1.bf16.msra.mxu0 0
    %1897 = vmatprep.subr.bf16.mxu0 0
    %1898 = vmatpush1.bf16.msra.mxu0 0
    %1899 = vmatprep.subr.bf16.mxu0 0
    %1900 = vmatpush1.bf16.msra.mxu0 0
    %1901 = vmatprep.subr.bf16.mxu0 0
    %1902 = vmatpush1.bf16.msra.mxu0 0
    %1903 = vmatprep.subr.bf16.mxu0 0
    %1904 = vmatpush1.bf16.msra.mxu0 0
    %1905 = vmatprep.subr.bf16.mxu0 0
    %1906 = vmatpush1.bf16.msra.mxu0 0
    %1907 = vmatprep.subr.bf16.mxu0 0
    %1908 = vmatpush1.bf16.msra.mxu0 0
    %1909 = vmatprep.subr.bf16.mxu0 0
    %1910 = vmatpush1.bf16.msra.mxu0 0
    %1911 = vmatprep.subr.bf16.mxu0 0
    %1912 = vmatpush1.bf16.msra.mxu0 0
    %1913 = vmatprep.subr.bf16.mxu0 0
    %1914 = vmatpush1.bf16.msra.mxu0 0
    %1915 = vmatprep.subr.bf16.mxu0 0
    %1916 = vmatpush1.bf16.msra.mxu0 0
    %1917 = vmatprep.mubr.bf16.mxu0 0
    %1918 = vmatmul.mubr.bf16.gmra.mrb[0].mxu0 %v1883
    %v1919 = vpop.f32.mrb[0].mxu0
    %v1920 = vadd.f32 0.0, %v1919
    %v1921 = vpop.f32.mrb[0].mxu0
    %v1922 = vpop.f32.mrb[0].mxu0
    %v1923 = vpop.f32.mrb[0].mxu0
    %1924 = vdwg.mxu0
    %1925 = vrot.lane.b32.xlu0 %v1485, 112
    %v1926 = vpop.permute.xlu0 %1925
    %1927 = vrot.lane.b32.xlu0 %v1487, 112
    %v1928 = vpop.permute.xlu0 %1927
    %v1930 = vsel %vm299, %v1926, 0
    %v1933 = vsel %vm299, %v1928, 0
    %1935 = vmatprep.subr.bf16.mxu0 0
    %1936 = vmatpush1.bf16.xpose.msra.mxu0 %v1933
    %1937 = vmatprep.subr.bf16.mxu0 0
    %1938 = vmatpush1.bf16.xpose.msra.mxu0 0
    %1939 = vmatprep.subr.bf16.mxu0 0
    %1940 = vmatpush1.bf16.xpose.msra.mxu0 0
    %1941 = vmatprep.subr.bf16.mxu0 0
    %1942 = vmatpush1.bf16.xpose.msra.mxu0 0
    %1943 = vmatprep.subr.bf16.mxu0 0
    %1944 = vmatpush1.bf16.xpose.msra.mxu0 0
    %1945 = vmatprep.subr.bf16.mxu0 0
    %1946 = vmatpush1.bf16.xpose.msra.mxu0 0
    %1947 = vmatprep.subr.bf16.mxu0 0
    %1948 = vmatpush1.bf16.xpose.msra.mxu0 0
    %1949 = vmatprep.subr.bf16.mxu0 0
    %1950 = vmatpush1.bf16.xpose.msra.mxu0 0
    %1951 = vmatprep.subr.bf16.mxu0 0
    %1952 = vmatpush1.bf16.xpose.msra.mxu0 0
    %1953 = vmatprep.subr.bf16.mxu0 0
    %1954 = vmatpush1.bf16.xpose.msra.mxu0 0
    %1955 = vmatprep.subr.bf16.mxu0 0
    %1956 = vmatpush1.bf16.xpose.msra.mxu0 0
    %1957 = vmatprep.subr.bf16.mxu0 0
    %1958 = vmatpush1.bf16.xpose.msra.mxu0 0
    %1959 = vmatprep.subr.bf16.mxu0 0
    %1960 = vmatpush1.bf16.xpose.msra.mxu0 0
    %1961 = vmatprep.subr.bf16.mxu0 0
    %1962 = vmatpush1.bf16.xpose.msra.mxu0 0
    %1963 = vmatprep.subr.bf16.mxu0 0
    %1964 = vmatpush1.bf16.xpose.msra.mxu0 0
    %1965 = vmatprep.subr.bf16.mxu0 0
    %1966 = vmatpush1.bf16.xpose.msra.mxu0 0
    %1967 = vmatprep.mubr.bf16.mxu0 0
    %1968 = vmatmul.mubr.bf16.gmra.mrb[0].mxu0 %v1930
    %v1969 = vpop.f32.mrb[0].mxu0
    %v1970 = vadd.f32 0.0, %v1969
    %v1971 = vpop.f32.mrb[0].mxu0
    %v1972 = vpop.f32.mrb[0].mxu0
    %v1973 = vpop.f32.mrb[0].mxu0
    %1974 = vdwg.mxu0
    %1975 = vrot.lane.b32.xlu0 %v1486, 112
    %v1976 = vpop.permute.xlu0 %1975
    %1977 = vrot.lane.b32.xlu0 %v1488, 112
    %v1978 = vpop.permute.xlu0 %1977
    %v1980 = vsel %vm299, %v1976, 0
    %v1983 = vsel %vm299, %v1978, 0
    %1985 = vmatprep.subr.bf16.mxu0 0
    %1986 = vmatpush1.bf16.xpose.msra.mxu0 %v1983
    %1987 = vmatprep.subr.bf16.mxu0 0
    %1988 = vmatpush1.bf16.xpose.msra.mxu0 0
    %1989 = vmatprep.subr.bf16.mxu0 0
    %1990 = vmatpush1.bf16.xpose.msra.mxu0 0
    %1991 = vmatprep.subr.bf16.mxu0 0
    %1992 = vmatpush1.bf16.xpose.msra.mxu0 0
    %1993 = vmatprep.subr.bf16.mxu0 0
    %1994 = vmatpush1.bf16.xpose.msra.mxu0 0
    %1995 = vmatprep.subr.bf16.mxu0 0
    %1996 = vmatpush1.bf16.xpose.msra.mxu0 0
    %1997 = vmatprep.subr.bf16.mxu0 0
    %1998 = vmatpush1.bf16.xpose.msra.mxu0 0
    %1999 = vmatprep.subr.bf16.mxu0 0
    %2000 = vmatpush1.bf16.xpose.msra.mxu0 0
    %2001 = vmatprep.subr.bf16.mxu0 0
    %2002 = vmatpush1.bf16.xpose.msra.mxu0 0
    %2003 = vmatprep.subr.bf16.mxu0 0
    %2004 = vmatpush1.bf16.xpose.msra.mxu0 0
    %2005 = vmatprep.subr.bf16.mxu0 0
    %2006 = vmatpush1.bf16.xpose.msra.mxu0 0
    %2007 = vmatprep.subr.bf16.mxu0 0
    %2008 = vmatpush1.bf16.xpose.msra.mxu0 0
    %2009 = vmatprep.subr.bf16.mxu0 0
    %2010 = vmatpush1.bf16.xpose.msra.mxu0 0
    %2011 = vmatprep.subr.bf16.mxu0 0
    %2012 = vmatpush1.bf16.xpose.msra.mxu0 0
    %2013 = vmatprep.subr.bf16.mxu0 0
    %2014 = vmatpush1.bf16.xpose.msra.mxu0 0
    %2015 = vmatprep.subr.bf16.mxu0 0
    %2016 = vmatpush1.bf16.xpose.msra.mxu0 0
    %2017 = vmatprep.mubr.bf16.mxu0 0
    %2018 = vmatmul.mubr.bf16.gmra.mrb[0].mxu0 %v1980
    %v2019 = vpop.f32.mrb[0].mxu0
    %v2020 = vadd.f32 0.0, %v2019
    %v2021 = vpop.f32.mrb[0].mxu0
    %v2022 = vpop.f32.mrb[0].mxu0
    %v2023 = vpop.f32.mrb[0].mxu0
    %2024 = vdwg.mxu0
    %v2025 = vmul.f32 %v1970, 0.35355338
    %v2026 = vmul.f32 %v2020, 0.35355338
    %v2027 = vadd.f32 %v2025, %v219
    %v2028 = vadd.f32 %v2026, %v220
    %v2029 = vsel %vm1218, %v2027, -inf
    %2030 = vmax.xlane.f32.xlu0 %v2029
    %v2031 = vpop.xlane.xlu0 %2030
    %v2032 = vsel %vm1218, %v2028, -inf
    %2033 = vmax.xlane.f32.xlu0 %v2032
    %v2034 = vpop.xlane.xlu0 %2033
    %v2035 = vsub.f32 %v2027, %v2031
    %v2036 = vsub.f32 %v2028, %v2034
    %v2037 = vmul.f32 %v2035, 1.442695
    %v2038 = vpow.pop %v2037
    %v2039 = vmul.f32 %v2036, 1.442695
    %v2040 = vpow.pop %v2039
    %v2041 = vsel %vm1218, %v2038, 0.0
    %2042 = vadd.xlane.f32.xlu0 %v2041
    %v2043 = vpop.xlane.xlu0 %2042
    %v2044 = vsel %vm1218, %v2040, 0.0
    %2045 = vadd.xlane.f32.xlu0 %v2044
    %v2046 = vpop.xlane.xlu0 %2045
    %v2047 = vrcp.pop %v2043
    %v2048 = vrcp.pop %v2046
    %v2049 = vmul.f32 %v2038, %v2047
    %v2050 = vmul.f32 %v2040, %v2048
    %v2051 = vpack.c.bf16 %v2049, %v2049
    %v2052 = vpack.c.bf16 %v2050, %v2050
    %2053 = vrot.lane.b32.xlu0 %v1487, 80
    %v2054 = vpop.permute.xlu0 %2053
    %v2057 = vsel %vm1218, %v2051, 0
    %2059 = vmatprep.subr.bf16.mxu0 0
    %2060 = vmatpush1.bf16.msra.mxu0 %v2054
    %2061 = vmatprep.subr.bf16.mxu0 0
    %2062 = vmatpush1.bf16.msra.mxu0 0
    %2063 = vmatprep.subr.bf16.mxu0 0
    %2064 = vmatpush1.bf16.msra.mxu0 0
    %2065 = vmatprep.subr.bf16.mxu0 0
    %2066 = vmatpush1.bf16.msra.mxu0 0
    %2067 = vmatprep.subr.bf16.mxu0 0
    %2068 = vmatpush1.bf16.msra.mxu0 0
    %2069 = vmatprep.subr.bf16.mxu0 0
    %2070 = vmatpush1.bf16.msra.mxu0 0
    %2071 = vmatprep.subr.bf16.mxu0 0
    %2072 = vmatpush1.bf16.msra.mxu0 0
    %2073 = vmatprep.subr.bf16.mxu0 0
    %2074 = vmatpush1.bf16.msra.mxu0 0
    %2075 = vmatprep.subr.bf16.mxu0 0
    %2076 = vmatpush1.bf16.msra.mxu0 0
    %2077 = vmatprep.subr.bf16.mxu0 0
    %2078 = vmatpush1.bf16.msra.mxu0 0
    %2079 = vmatprep.subr.bf16.mxu0 0
    %2080 = vmatpush1.bf16.msra.mxu0 0
    %2081 = vmatprep.subr.bf16.mxu0 0
    %2082 = vmatpush1.bf16.msra.mxu0 0
    %2083 = vmatprep.subr.bf16.mxu0 0
    %2084 = vmatpush1.bf16.msra.mxu0 0
    %2085 = vmatprep.subr.bf16.mxu0 0
    %2086 = vmatpush1.bf16.msra.mxu0 0
    %2087 = vmatprep.subr.bf16.mxu0 0
    %2088 = vmatpush1.bf16.msra.mxu0 0
    %2089 = vmatprep.subr.bf16.mxu0 0
    %2090 = vmatpush1.bf16.msra.mxu0 0
    %2091 = vmatprep.mubr.bf16.mxu0 0
    %2092 = vmatmul.mubr.bf16.gmra.mrb[0].mxu0 %v2057
    %v2093 = vpop.f32.mrb[0].mxu0
    %v2094 = vadd.f32 0.0, %v2093
    %v2095 = vpop.f32.mrb[0].mxu0
    %v2096 = vpop.f32.mrb[0].mxu0
    %v2097 = vpop.f32.mrb[0].mxu0
    %2098 = vdwg.mxu0
    %2099 = vrot.lane.b32.xlu0 %v1488, 80
    %v2100 = vpop.permute.xlu0 %2099
    %v2103 = vsel %vm1218, %v2052, 0
    %2105 = vmatprep.subr.bf16.mxu0 0
    %2106 = vmatpush1.bf16.msra.mxu0 %v2100
    %2107 = vmatprep.subr.bf16.mxu0 0
    %2108 = vmatpush1.bf16.msra.mxu0 0
    %2109 = vmatprep.subr.bf16.mxu0 0
    %2110 = vmatpush1.bf16.msra.mxu0 0
    %2111 = vmatprep.subr.bf16.mxu0 0
    %2112 = vmatpush1.bf16.msra.mxu0 0
    %2113 = vmatprep.subr.bf16.mxu0 0
    %2114 = vmatpush1.bf16.msra.mxu0 0
    %2115 = vmatprep.subr.bf16.mxu0 0
    %2116 = vmatpush1.bf16.msra.mxu0 0
    %2117 = vmatprep.subr.bf16.mxu0 0
    %2118 = vmatpush1.bf16.msra.mxu0 0
    %2119 = vmatprep.subr.bf16.mxu0 0
    %2120 = vmatpush1.bf16.msra.mxu0 0
    %2121 = vmatprep.subr.bf16.mxu0 0
    %2122 = vmatpush1.bf16.msra.mxu0 0
    %2123 = vmatprep.subr.bf16.mxu0 0
    %2124 = vmatpush1.bf16.msra.mxu0 0
    %2125 = vmatprep.subr.bf16.mxu0 0
    %2126 = vmatpush1.bf16.msra.mxu0 0
    %2127 = vmatprep.subr.bf16.mxu0 0
    %2128 = vmatpush1.bf16.msra.mxu0 0
    %2129 = vmatprep.subr.bf16.mxu0 0
    %2130 = vmatpush1.bf16.msra.mxu0 0
    %2131 = vmatprep.subr.bf16.mxu0 0
    %2132 = vmatpush1.bf16.msra.mxu0 0
    %2133 = vmatprep.subr.bf16.mxu0 0
    %2134 = vmatpush1.bf16.msra.mxu0 0
    %2135 = vmatprep.subr.bf16.mxu0 0
    %2136 = vmatpush1.bf16.msra.mxu0 0
    %2137 = vmatprep.mubr.bf16.mxu0 0
    %2138 = vmatmul.mubr.bf16.gmra.mrb[0].mxu0 %v2103
    %v2139 = vpop.f32.mrb[0].mxu0
    %v2140 = vadd.f32 0.0, %v2139
    %v2141 = vpop.f32.mrb[0].mxu0
    %v2142 = vpop.f32.mrb[0].mxu0
    %v2143 = vpop.f32.mrb[0].mxu0
    %2144 = vdwg.mxu0
    %2145 = vrot.lane.b32.xlu0 %v1485, 104
    %v2146 = vpop.permute.xlu0 %2145
    %2147 = vrot.lane.b32.xlu0 %v1487, 104
    %v2148 = vpop.permute.xlu0 %2147
    %v2150 = vsel %vm299, %v2146, 0
    %v2153 = vsel %vm299, %v2148, 0
    %2155 = vmatprep.subr.bf16.mxu0 0
    %2156 = vmatpush1.bf16.xpose.msra.mxu0 %v2153
    %2157 = vmatprep.subr.bf16.mxu0 0
    %2158 = vmatpush1.bf16.xpose.msra.mxu0 0
    %2159 = vmatprep.subr.bf16.mxu0 0
    %2160 = vmatpush1.bf16.xpose.msra.mxu0 0
    %2161 = vmatprep.subr.bf16.mxu0 0
    %2162 = vmatpush1.bf16.xpose.msra.mxu0 0
    %2163 = vmatprep.subr.bf16.mxu0 0
    %2164 = vmatpush1.bf16.xpose.msra.mxu0 0
    %2165 = vmatprep.subr.bf16.mxu0 0
    %2166 = vmatpush1.bf16.xpose.msra.mxu0 0
    %2167 = vmatprep.subr.bf16.mxu0 0
    %2168 = vmatpush1.bf16.xpose.msra.mxu0 0
    %2169 = vmatprep.subr.bf16.mxu0 0
    %2170 = vmatpush1.bf16.xpose.msra.mxu0 0
    %2171 = vmatprep.subr.bf16.mxu0 0
    %2172 = vmatpush1.bf16.xpose.msra.mxu0 0
    %2173 = vmatprep.subr.bf16.mxu0 0
    %2174 = vmatpush1.bf16.xpose.msra.mxu0 0
    %2175 = vmatprep.subr.bf16.mxu0 0
    %2176 = vmatpush1.bf16.xpose.msra.mxu0 0
    %2177 = vmatprep.subr.bf16.mxu0 0
    %2178 = vmatpush1.bf16.xpose.msra.mxu0 0
    %2179 = vmatprep.subr.bf16.mxu0 0
    %2180 = vmatpush1.bf16.xpose.msra.mxu0 0
    %2181 = vmatprep.subr.bf16.mxu0 0
    %2182 = vmatpush1.bf16.xpose.msra.mxu0 0
    %2183 = vmatprep.subr.bf16.mxu0 0
    %2184 = vmatpush1.bf16.xpose.msra.mxu0 0
    %2185 = vmatprep.subr.bf16.mxu0 0
    %2186 = vmatpush1.bf16.xpose.msra.mxu0 0
    %2187 = vmatprep.mubr.bf16.mxu0 0
    %2188 = vmatmul.mubr.bf16.gmra.mrb[0].mxu0 %v2150
    %v2189 = vpop.f32.mrb[0].mxu0
    %v2190 = vadd.f32 0.0, %v2189
    %v2191 = vpop.f32.mrb[0].mxu0
    %v2192 = vpop.f32.mrb[0].mxu0
    %v2193 = vpop.f32.mrb[0].mxu0
    %2194 = vdwg.mxu0
    %2195 = vrot.lane.b32.xlu0 %v1486, 104
    %v2196 = vpop.permute.xlu0 %2195
    %2197 = vrot.lane.b32.xlu0 %v1488, 104
    %v2198 = vpop.permute.xlu0 %2197
    %v2200 = vsel %vm299, %v2196, 0
    %v2203 = vsel %vm299, %v2198, 0
    %2205 = vmatprep.subr.bf16.mxu0 0
    %2206 = vmatpush1.bf16.xpose.msra.mxu0 %v2203
    %2207 = vmatprep.subr.bf16.mxu0 0
    %2208 = vmatpush1.bf16.xpose.msra.mxu0 0
    %2209 = vmatprep.subr.bf16.mxu0 0
    %2210 = vmatpush1.bf16.xpose.msra.mxu0 0
    %2211 = vmatprep.subr.bf16.mxu0 0
    %2212 = vmatpush1.bf16.xpose.msra.mxu0 0
    %2213 = vmatprep.subr.bf16.mxu0 0
    %2214 = vmatpush1.bf16.xpose.msra.mxu0 0
    %2215 = vmatprep.subr.bf16.mxu0 0
    %2216 = vmatpush1.bf16.xpose.msra.mxu0 0
    %2217 = vmatprep.subr.bf16.mxu0 0
    %2218 = vmatpush1.bf16.xpose.msra.mxu0 0
    %2219 = vmatprep.subr.bf16.mxu0 0
    %2220 = vmatpush1.bf16.xpose.msra.mxu0 0
    %2221 = vmatprep.subr.bf16.mxu0 0
    %2222 = vmatpush1.bf16.xpose.msra.mxu0 0
    %2223 = vmatprep.subr.bf16.mxu0 0
    %2224 = vmatpush1.bf16.xpose.msra.mxu0 0
    %2225 = vmatprep.subr.bf16.mxu0 0
    %2226 = vmatpush1.bf16.xpose.msra.mxu0 0
    %2227 = vmatprep.subr.bf16.mxu0 0
    %2228 = vmatpush1.bf16.xpose.msra.mxu0 0
    %2229 = vmatprep.subr.bf16.mxu0 0
    %2230 = vmatpush1.bf16.xpose.msra.mxu0 0
    %2231 = vmatprep.subr.bf16.mxu0 0
    %2232 = vmatpush1.bf16.xpose.msra.mxu0 0
    %2233 = vmatprep.subr.bf16.mxu0 0
    %2234 = vmatpush1.bf16.xpose.msra.mxu0 0
    %2235 = vmatprep.subr.bf16.mxu0 0
    %2236 = vmatpush1.bf16.xpose.msra.mxu0 0
    %2237 = vmatprep.mubr.bf16.mxu0 0
    %2238 = vmatmul.mubr.bf16.gmra.mrb[0].mxu0 %v2200
    %v2239 = vpop.f32.mrb[0].mxu0
    %v2240 = vadd.f32 0.0, %v2239
    %v2241 = vpop.f32.mrb[0].mxu0
    %v2242 = vpop.f32.mrb[0].mxu0
    %v2243 = vpop.f32.mrb[0].mxu0
    %2244 = vdwg.mxu0
    %v2245 = vmul.f32 %v2190, 0.35355338
    %v2246 = vmul.f32 %v2240, 0.35355338
    %v2247 = vadd.f32 %v2245, %v219
    %v2248 = vadd.f32 %v2246, %v220
    %v2249 = vsel %vm1218, %v2247, -inf
    %2250 = vmax.xlane.f32.xlu0 %v2249
    %v2251 = vpop.xlane.xlu0 %2250
    %v2252 = vsel %vm1218, %v2248, -inf
    %2253 = vmax.xlane.f32.xlu0 %v2252
    %v2254 = vpop.xlane.xlu0 %2253
    %v2255 = vsub.f32 %v2247, %v2251
    %v2256 = vsub.f32 %v2248, %v2254
    %v2257 = vmul.f32 %v2255, 1.442695
    %v2258 = vpow.pop %v2257
    %v2259 = vmul.f32 %v2256, 1.442695
    %v2260 = vpow.pop %v2259
    %v2261 = vsel %vm1218, %v2258, 0.0
    %2262 = vadd.xlane.f32.xlu0 %v2261
    %v2263 = vpop.xlane.xlu0 %2262
    %v2264 = vsel %vm1218, %v2260, 0.0
    %2265 = vadd.xlane.f32.xlu0 %v2264
    %v2266 = vpop.xlane.xlu0 %2265
    %v2267 = vrcp.pop %v2263
    %v2268 = vrcp.pop %v2266
    %v2269 = vmul.f32 %v2258, %v2267
    %v2270 = vmul.f32 %v2260, %v2268
    %v2271 = vpack.c.bf16 %v2269, %v2269
    %v2272 = vpack.c.bf16 %v2270, %v2270
    %2273 = vrot.lane.b32.xlu0 %v1487, 72
    %v2274 = vpop.permute.xlu0 %2273
    %v2277 = vsel %vm1218, %v2271, 0
    %2279 = vmatprep.subr.bf16.mxu0 0
    %2280 = vmatpush1.bf16.msra.mxu0 %v2274
    %2281 = vmatprep.subr.bf16.mxu0 0
    %2282 = vmatpush1.bf16.msra.mxu0 0
    %2283 = vmatprep.subr.bf16.mxu0 0
    %2284 = vmatpush1.bf16.msra.mxu0 0
    %2285 = vmatprep.subr.bf16.mxu0 0
    %2286 = vmatpush1.bf16.msra.mxu0 0
    %2287 = vmatprep.subr.bf16.mxu0 0
    %2288 = vmatpush1.bf16.msra.mxu0 0
    %2289 = vmatprep.subr.bf16.mxu0 0
    %2290 = vmatpush1.bf16.msra.mxu0 0
    %2291 = vmatprep.subr.bf16.mxu0 0
    %2292 = vmatpush1.bf16.msra.mxu0 0
    %2293 = vmatprep.subr.bf16.mxu0 0
    %2294 = vmatpush1.bf16.msra.mxu0 0
    %2295 = vmatprep.subr.bf16.mxu0 0
    %2296 = vmatpush1.bf16.msra.mxu0 0
    %2297 = vmatprep.subr.bf16.mxu0 0
    %2298 = vmatpush1.bf16.msra.mxu0 0
    %2299 = vmatprep.subr.bf16.mxu0 0
    %2300 = vmatpush1.bf16.msra.mxu0 0
    %2301 = vmatprep.subr.bf16.mxu0 0
    %2302 = vmatpush1.bf16.msra.mxu0 0
    %2303 = vmatprep.subr.bf16.mxu0 0
    %2304 = vmatpush1.bf16.msra.mxu0 0
    %2305 = vmatprep.subr.bf16.mxu0 0
    %2306 = vmatpush1.bf16.msra.mxu0 0
    %2307 = vmatprep.subr.bf16.mxu0 0
    %2308 = vmatpush1.bf16.msra.mxu0 0
    %2309 = vmatprep.subr.bf16.mxu0 0
    %2310 = vmatpush1.bf16.msra.mxu0 0
    %2311 = vmatprep.mubr.bf16.mxu0 0
    %2312 = vmatmul.mubr.bf16.gmra.mrb[0].mxu0 %v2277
    %v2313 = vpop.f32.mrb[0].mxu0
    %v2314 = vadd.f32 0.0, %v2313
    %v2315 = vpop.f32.mrb[0].mxu0
    %v2316 = vpop.f32.mrb[0].mxu0
    %v2317 = vpop.f32.mrb[0].mxu0
    %2318 = vdwg.mxu0
    %2319 = vrot.lane.b32.xlu0 %v1488, 72
    %v2320 = vpop.permute.xlu0 %2319
    %v2323 = vsel %vm1218, %v2272, 0
    %2325 = vmatprep.subr.bf16.mxu0 0
    %2326 = vmatpush1.bf16.msra.mxu0 %v2320
    %2327 = vmatprep.subr.bf16.mxu0 0
    %2328 = vmatpush1.bf16.msra.mxu0 0
    %2329 = vmatprep.subr.bf16.mxu0 0
    %2330 = vmatpush1.bf16.msra.mxu0 0
    %2331 = vmatprep.subr.bf16.mxu0 0
    %2332 = vmatpush1.bf16.msra.mxu0 0
    %2333 = vmatprep.subr.bf16.mxu0 0
    %2334 = vmatpush1.bf16.msra.mxu0 0
    %2335 = vmatprep.subr.bf16.mxu0 0
    %2336 = vmatpush1.bf16.msra.mxu0 0
    %2337 = vmatprep.subr.bf16.mxu0 0
    %2338 = vmatpush1.bf16.msra.mxu0 0
    %2339 = vmatprep.subr.bf16.mxu0 0
    %2340 = vmatpush1.bf16.msra.mxu0 0
    %2341 = vmatprep.subr.bf16.mxu0 0
    %2342 = vmatpush1.bf16.msra.mxu0 0
    %2343 = vmatprep.subr.bf16.mxu0 0
    %2344 = vmatpush1.bf16.msra.mxu0 0
    %2345 = vmatprep.subr.bf16.mxu0 0
    %2346 = vmatpush1.bf16.msra.mxu0 0
    %2347 = vmatprep.subr.bf16.mxu0 0
    %2348 = vmatpush1.bf16.msra.mxu0 0
    %2349 = vmatprep.subr.bf16.mxu0 0
    %2350 = vmatpush1.bf16.msra.mxu0 0
    %2351 = vmatprep.subr.bf16.mxu0 0
    %2352 = vmatpush1.bf16.msra.mxu0 0
    %2353 = vmatprep.subr.bf16.mxu0 0
    %2354 = vmatpush1.bf16.msra.mxu0 0
    %2355 = vmatprep.subr.bf16.mxu0 0
    %2356 = vmatpush1.bf16.msra.mxu0 0
    %2357 = vmatprep.mubr.bf16.mxu0 0
    %2358 = vmatmul.mubr.bf16.gmra.mrb[0].mxu0 %v2323
    %v2359 = vpop.f32.mrb[0].mxu0
    %v2360 = vadd.f32 0.0, %v2359
    %v2361 = vpop.f32.mrb[0].mxu0
    %v2362 = vpop.f32.mrb[0].mxu0
    %v2363 = vpop.f32.mrb[0].mxu0
    %2364 = vdwg.mxu0
    %2367 = vrot.lane.b32.xlu0 %v1874, 8
    %v2368 = vpop.permute.xlu0 %2367
    %2369 = vrot.lane.b32.xlu0 %v1920, 8
    %v2370 = vpop.permute.xlu0 %2369
    %2375 = vrot.lane.b32.xlu0 %v2094, 16
    %v2376 = vpop.permute.xlu0 %2375
    %2377 = vrot.lane.b32.xlu0 %v2140, 16
    %v2378 = vpop.permute.xlu0 %2377
    %2383 = vrot.lane.b32.xlu0 %v2314, 24
    %v2384 = vpop.permute.xlu0 %2383
    %2385 = vrot.lane.b32.xlu0 %v2360, 24
    %v2386 = vpop.permute.xlu0 %2385
    %v2389 = vsel %vm299, %v1651, %v2368
    %v2390 = vsel %vm299, %v1698, %v2370
    %v2391 = vsel %vm1218, %v2389, %v2376
    %v2392 = vsel %vm1218, %v2390, %v2378
    %v2393 = vsel %vm1221, %v2391, %v2384
    %v2394 = vsel %vm1221, %v2392, %v2386
    %v2395 = vpack.c.bf16 %v2394, %v2393
    %v2397 = vlaneseq
    %v2398 = vshrl.u32 %v2397, 7
    %v2399 = vsub.s32 0, %v2398
    %v2400 = vrot.slane %v1484, %v2399
    %v2406 = vunpack.c.l.b16 %v1480
    %v2407 = vunpack.c.l.b16 %v1481
    %v2408 = vunpack.c.l.b16 %v1482
    %v2409 = vunpack.c.l.b16 %v1483
    %v2410 = vpack.c.b16 %v2407, %v2406
    %v2411 = vpack.c.b16 %v2409, %v2408
    %v2415 = vsel %vm157, %v2395, 0
    %2417 = vmatprep.subr.bf16.mxu0 0
    %2418 = vmatpush1.bf16.msra.mxu0 %v2410
    %2419 = vmatprep.subr.bf16.mxu0 0
    %2420 = vmatpush1.bf16.msra.mxu0 %v2411
    %2421 = vmatprep.subr.bf16.mxu0 0
    %2422 = vmatpush1.bf16.msra.mxu0 0
    %2423 = vmatprep.subr.bf16.mxu0 0
    %2424 = vmatpush1.bf16.msra.mxu0 0
    %2425 = vmatprep.subr.bf16.mxu0 0
    %2426 = vmatpush1.bf16.msra.mxu0 0
    %2427 = vmatprep.subr.bf16.mxu0 0
    %2428 = vmatpush1.bf16.msra.mxu0 0
    %2429 = vmatprep.subr.bf16.mxu0 0
    %2430 = vmatpush1.bf16.msra.mxu0 0
    %2431 = vmatprep.subr.bf16.mxu0 0
    %2432 = vmatpush1.bf16.msra.mxu0 0
    %2433 = vmatprep.subr.bf16.mxu0 0
    %2434 = vmatpush1.bf16.msra.mxu0 0
    %2435 = vmatprep.subr.bf16.mxu0 0
    %2436 = vmatpush1.bf16.msra.mxu0 0
    %2437 = vmatprep.subr.bf16.mxu0 0
    %2438 = vmatpush1.bf16.msra.mxu0 0
    %2439 = vmatprep.subr.bf16.mxu0 0
    %2440 = vmatpush1.bf16.msra.mxu0 0
    %2441 = vmatprep.subr.bf16.mxu0 0
    %2442 = vmatpush1.bf16.msra.mxu0 0
    %2443 = vmatprep.subr.bf16.mxu0 0
    %2444 = vmatpush1.bf16.msra.mxu0 0
    %2445 = vmatprep.subr.bf16.mxu0 0
    %2446 = vmatpush1.bf16.msra.mxu0 0
    %2447 = vmatprep.subr.bf16.mxu0 0
    %2448 = vmatpush1.bf16.msra.mxu0 0
    %2449 = vmatprep.mubr.bf16.mxu0 0
    %2450 = vmatmul.mubr.bf16.gmra.mrb[0].mxu0 %v2415
    %v2451 = vpop.f32.mrb[0].mxu0
    %v2452 = vadd.f32 %v2400, %v2451
    %v2453 = vpop.f32.mrb[0].mxu0
    %v2454 = vpop.f32.mrb[0].mxu0
    %v2455 = vadd.f32 %v2400, %v2454
    %v2456 = vpop.f32.mrb[0].mxu0
    %2457 = vdwg.mxu0
    %v2458 = vadd.f32 %v1332, %v2452
    %v2459 = vadd.f32 %v1333, %v2455
    %v2460 = vld [vmem:[%s37] sm:$0x1]
    %v2461 = vld [vmem:[%s39] sm:$0x1]
    %v2462 = vsel %vm157, %v2458, 0.0
    %2463 = vadd.xlane.f32.xlu0 %v2462
    %v2464 = vpop.xlane.xlu0 %2463
    %v2465 = vsel %vm157, %v2459, 0.0
    %2466 = vadd.xlane.f32.xlu0 %v2465
    %v2467 = vpop.xlane.xlu0 %2466
    %v2468 = vmul.f32 %v2464, %v1297
    %v2469 = vmul.f32 %v2467, %v1297
    %v2470 = vsub.f32 %v2458, %v2468
    %v2471 = vsub.f32 %v2459, %v2469
    %v2472 = vmul.f32 %v2470, %v2470
    %v2473 = vmul.f32 %v2471, %v2471
    %v2474 = vsel %vm157, %v2472, 0.0
    %2475 = vadd.xlane.f32.xlu0 %v2474
    %v2476 = vpop.xlane.xlu0 %2475
    %v2477 = vsel %vm157, %v2473, 0.0
    %2478 = vadd.xlane.f32.xlu0 %v2477
    %v2479 = vpop.xlane.xlu0 %2478
    %v2480 = vmul.f32 %v2476, %v1297
    %v2481 = vmul.f32 %v2479, %v1297
    %v2482 = vadd.f32 %v2480, 1e-05
    %v2483 = vadd.f32 %v2481, 1e-05
    %v2484 = vrsqrt.pop %v2482
    %v2485 = vrsqrt.pop %v2483
    %v2486 = vmul.f32 %v2470, %v2484
    %v2487 = vmul.f32 %v2471, %v2485
    %v2489 = vlaneseq
    %v2490 = vshrl.u32 %v2489, 7
    %v2491 = vsub.s32 0, %v2490
    %v2492 = vrot.slane %v2460, %v2491
    %v2494 = vmul.f32 %v2486, %v2492
    %v2495 = vmul.f32 %v2487, %v2492
    %v2497 = vlaneseq
    %v2498 = vshrl.u32 %v2497, 7
    %v2499 = vsub.s32 0, %v2498
    %v2500 = vrot.slane %v2461, %v2499
    %v2502 = vadd.f32 %v2494, %v2500
    %v2503 = vadd.f32 %v2495, %v2500
    %v2504 = vpack.c.bf16 %v2503, %v2502
    %v2505 = vld [vmem:[%s45] sm:$0xff]
    %v2506 = vld [vmem:[%s45 + $0x8] sm:$0xff]
    %v2507 = vld [vmem:[%s45 + $0x10] sm:$0xff]
    %v2508 = vld [vmem:[%s45 + $0x18] sm:$0xff]
    %v2509 = vld [vmem:[%s45 + $0x20] sm:$0xff]
    %v2510 = vld [vmem:[%s45 + $0x28] sm:$0xff]
    %v2511 = vld [vmem:[%s45 + $0x30] sm:$0xff]
    %v2512 = vld [vmem:[%s45 + $0x38] sm:$0xff]
    %v2513 = vld [vmem:[%s45 + $0x40] sm:$0xff]
    %v2514 = vld [vmem:[%s45 + $0x48] sm:$0xff]
    %v2515 = vld [vmem:[%s45 + $0x50] sm:$0xff]
    %v2516 = vld [vmem:[%s45 + $0x58] sm:$0xff]
    %v2517 = vld [vmem:[%s45 + $0x60] sm:$0xff]
    %v2518 = vld [vmem:[%s45 + $0x68] sm:$0xff]
    %v2519 = vld [vmem:[%s45 + $0x70] sm:$0xff]
    %v2520 = vld [vmem:[%s45 + $0x78] sm:$0xff]
    %v2521 = vld [vmem:[%s45 + $0x80] sm:$0xff]
    %v2522 = vld [vmem:[%s45 + $0x88] sm:$0xff]
    %v2523 = vld [vmem:[%s45 + $0x90] sm:$0xff]
    %v2524 = vld [vmem:[%s45 + $0x98] sm:$0xff]
    %v2525 = vld [vmem:[%s45 + $0xa0] sm:$0xff]
    %v2526 = vld [vmem:[%s45 + $0xa8] sm:$0xff]
    %v2527 = vld [vmem:[%s45 + $0xb0] sm:$0xff]
    %v2528 = vld [vmem:[%s45 + $0xb8] sm:$0xff]
    %v2529 = vld [vmem:[%s45 + $0xc0] sm:$0xff]
    %v2530 = vld [vmem:[%s45 + $0xc8] sm:$0xff]
    %v2531 = vld [vmem:[%s45 + $0xd0] sm:$0xff]
    %v2532 = vld [vmem:[%s45 + $0xd8] sm:$0xff]
    %v2533 = vld [vmem:[%s45 + $0xe0] sm:$0xff]
    %v2534 = vld [vmem:[%s45 + $0xe8] sm:$0xff]
    %v2535 = vld [vmem:[%s45 + $0xf0] sm:$0xff]
    %v2536 = vld [vmem:[%s45 + $0xf8] sm:$0xff]
    %v2537 = vld [vmem:[%s47] sm:$0xff]
    %v2538 = vld [vmem:[%s47 + $0x8] sm:$0xff]
    %v2541 = vlaneseq
    %v2542 = vshrl.u32 %v2541, 7
    %v2543 = vsub.s32 0, %v2542
    %v2544 = vrot.slane %v2537, %v2543
    %v2545 = vlaneseq
    %v2546 = vshrl.u32 %v2545, 7
    %v2547 = vsub.s32 1, %v2546
    %v2548 = vrot.slane %v2537, %v2547
    %v2549 = vlaneseq
    %v2550 = vshrl.u32 %v2549, 7
    %v2551 = vsub.s32 2, %v2550
    %v2552 = vrot.slane %v2537, %v2551
    %v2553 = vlaneseq
    %v2554 = vshrl.u32 %v2553, 7
    %v2555 = vsub.s32 3, %v2554
    %v2556 = vrot.slane %v2537, %v2555
    %v2557 = vlaneseq
    %v2558 = vshrl.u32 %v2557, 7
    %v2559 = vsub.s32 4, %v2558
    %v2560 = vrot.slane %v2537, %v2559
    %v2561 = vlaneseq
    %v2562 = vshrl.u32 %v2561, 7
    %v2563 = vsub.s32 5, %v2562
    %v2564 = vrot.slane %v2537, %v2563
    %v2565 = vlaneseq
    %v2566 = vshrl.u32 %v2565, 7
    %v2567 = vsub.s32 6, %v2566
    %v2568 = vrot.slane %v2537, %v2567
    %v2569 = vlaneseq
    %v2570 = vshrl.u32 %v2569, 7
    %v2571 = vsub.s32 7, %v2570
    %v2572 = vrot.slane %v2537, %v2571
    %v2573 = vlaneseq
    %v2574 = vshrl.u32 %v2573, 7
    %v2575 = vsub.s32 0, %v2574
    %v2576 = vrot.slane %v2538, %v2575
    %v2577 = vlaneseq
    %v2578 = vshrl.u32 %v2577, 7
    %v2579 = vsub.s32 1, %v2578
    %v2580 = vrot.slane %v2538, %v2579
    %v2581 = vlaneseq
    %v2582 = vshrl.u32 %v2581, 7
    %v2583 = vsub.s32 2, %v2582
    %v2584 = vrot.slane %v2538, %v2583
    %v2585 = vlaneseq
    %v2586 = vshrl.u32 %v2585, 7
    %v2587 = vsub.s32 3, %v2586
    %v2588 = vrot.slane %v2538, %v2587
    %v2589 = vlaneseq
    %v2590 = vshrl.u32 %v2589, 7
    %v2591 = vsub.s32 4, %v2590
    %v2592 = vrot.slane %v2538, %v2591
    %v2593 = vlaneseq
    %v2594 = vshrl.u32 %v2593, 7
    %v2595 = vsub.s32 5, %v2594
    %v2596 = vrot.slane %v2538, %v2595
    %v2597 = vlaneseq
    %v2598 = vshrl.u32 %v2597, 7
    %v2599 = vsub.s32 6, %v2598
    %v2600 = vrot.slane %v2538, %v2599
    %v2601 = vlaneseq
    %v2602 = vshrl.u32 %v2601, 7
    %v2603 = vsub.s32 7, %v2602
    %v2604 = vrot.slane %v2538, %v2603
    %v2653 = vunpack.c.l.b16 %v2505
    %v2654 = vunpack.c.h.b16 %v2505
    %v2655 = vunpack.c.l.b16 %v2506
    %v2656 = vunpack.c.h.b16 %v2506
    %v2657 = vunpack.c.l.b16 %v2507
    %v2658 = vunpack.c.h.b16 %v2507
    %v2659 = vunpack.c.l.b16 %v2508
    %v2660 = vunpack.c.h.b16 %v2508
    %v2661 = vunpack.c.l.b16 %v2509
    %v2662 = vunpack.c.h.b16 %v2509
    %v2663 = vunpack.c.l.b16 %v2510
    %v2664 = vunpack.c.h.b16 %v2510
    %v2665 = vunpack.c.l.b16 %v2511
    %v2666 = vunpack.c.h.b16 %v2511
    %v2667 = vunpack.c.l.b16 %v2512
    %v2668 = vunpack.c.h.b16 %v2512
    %v2669 = vunpack.c.l.b16 %v2513
    %v2670 = vunpack.c.h.b16 %v2513
    %v2671 = vunpack.c.l.b16 %v2514
    %v2672 = vunpack.c.h.b16 %v2514
    %v2673 = vunpack.c.l.b16 %v2515
    %v2674 = vunpack.c.h.b16 %v2515
    %v2675 = vunpack.c.l.b16 %v2516
    %v2676 = vunpack.c.h.b16 %v2516
    %v2677 = vunpack.c.l.b16 %v2517
    %v2678 = vunpack.c.h.b16 %v2517
    %v2679 = vunpack.c.l.b16 %v2518
    %v2680 = vunpack.c.h.b16 %v2518
    %v2681 = vunpack.c.l.b16 %v2519
    %v2682 = vunpack.c.h.b16 %v2519
    %v2683 = vunpack.c.l.b16 %v2520
    %v2684 = vunpack.c.h.b16 %v2520
    %v2685 = vunpack.c.l.b16 %v2521
    %v2686 = vunpack.c.h.b16 %v2521
    %v2687 = vunpack.c.l.b16 %v2522
    %v2688 = vunpack.c.h.b16 %v2522
    %v2689 = vunpack.c.l.b16 %v2523
    %v2690 = vunpack.c.h.b16 %v2523
    %v2691 = vunpack.c.l.b16 %v2524
    %v2692 = vunpack.c.h.b16 %v2524
    %v2693 = vunpack.c.l.b16 %v2525
    %v2694 = vunpack.c.h.b16 %v2525
    %v2695 = vunpack.c.l.b16 %v2526
    %v2696 = vunpack.c.h.b16 %v2526
    %v2697 = vunpack.c.l.b16 %v2527
    %v2698 = vunpack.c.h.b16 %v2527
    %v2699 = vunpack.c.l.b16 %v2528
    %v2700 = vunpack.c.h.b16 %v2528
    %v2701 = vunpack.c.l.b16 %v2529
    %v2702 = vunpack.c.h.b16 %v2529
    %v2703 = vunpack.c.l.b16 %v2530
    %v2704 = vunpack.c.h.b16 %v2530
    %v2705 = vunpack.c.l.b16 %v2531
    %v2706 = vunpack.c.h.b16 %v2531
    %v2707 = vunpack.c.l.b16 %v2532
    %v2708 = vunpack.c.h.b16 %v2532
    %v2709 = vunpack.c.l.b16 %v2533
    %v2710 = vunpack.c.h.b16 %v2533
    %v2711 = vunpack.c.l.b16 %v2534
    %v2712 = vunpack.c.h.b16 %v2534
    %v2713 = vunpack.c.l.b16 %v2535
    %v2714 = vunpack.c.h.b16 %v2535
    %v2715 = vunpack.c.l.b16 %v2536
    %v2716 = vunpack.c.h.b16 %v2536
    %v2717 = vpack.c.b16 %v2669, %v2653
    %v2718 = vpack.c.b16 %v2670, %v2654
    %v2719 = vpack.c.b16 %v2671, %v2655
    %v2720 = vpack.c.b16 %v2672, %v2656
    %v2721 = vpack.c.b16 %v2673, %v2657
    %v2722 = vpack.c.b16 %v2674, %v2658
    %v2723 = vpack.c.b16 %v2675, %v2659
    %v2724 = vpack.c.b16 %v2676, %v2660
    %v2725 = vpack.c.b16 %v2677, %v2661
    %v2726 = vpack.c.b16 %v2678, %v2662
    %v2727 = vpack.c.b16 %v2679, %v2663
    %v2728 = vpack.c.b16 %v2680, %v2664
    %v2729 = vpack.c.b16 %v2681, %v2665
    %v2730 = vpack.c.b16 %v2682, %v2666
    %v2731 = vpack.c.b16 %v2683, %v2667
    %v2732 = vpack.c.b16 %v2684, %v2668
    %v2733 = vpack.c.b16 %v2701, %v2685
    %v2734 = vpack.c.b16 %v2702, %v2686
    %v2735 = vpack.c.b16 %v2703, %v2687
    %v2736 = vpack.c.b16 %v2704, %v2688
    %v2737 = vpack.c.b16 %v2705, %v2689
    %v2738 = vpack.c.b16 %v2706, %v2690
    %v2739 = vpack.c.b16 %v2707, %v2691
    %v2740 = vpack.c.b16 %v2708, %v2692
    %v2741 = vpack.c.b16 %v2709, %v2693
    %v2742 = vpack.c.b16 %v2710, %v2694
    %v2743 = vpack.c.b16 %v2711, %v2695
    %v2744 = vpack.c.b16 %v2712, %v2696
    %v2745 = vpack.c.b16 %v2713, %v2697
    %v2746 = vpack.c.b16 %v2714, %v2698
    %v2747 = vpack.c.b16 %v2715, %v2699
    %v2748 = vpack.c.b16 %v2716, %v2700
    %v2782 = vsel %vm157, %v2504, 0
    %2784 = vmatprep.subr.bf16.mxu0 %v2718
    %2785 = vmatpush1.bf16.msra.mxu0 %v2717
    %2786 = vmatprep.subr.bf16.mxu0 %v2734
    %2787 = vmatpush1.bf16.msra.mxu0 %v2733
    %2788 = vmatprep.subr.bf16.mxu0 0
    %2789 = vmatpush1.bf16.msra.mxu0 0
    %2790 = vmatprep.subr.bf16.mxu0 0
    %2791 = vmatpush1.bf16.msra.mxu0 0
    %2792 = vmatprep.subr.bf16.mxu0 0
    %2793 = vmatpush1.bf16.msra.mxu0 0
    %2794 = vmatprep.subr.bf16.mxu0 0
    %2795 = vmatpush1.bf16.msra.mxu0 0
    %2796 = vmatprep.subr.bf16.mxu0 0
    %2797 = vmatpush1.bf16.msra.mxu0 0
    %2798 = vmatprep.subr.bf16.mxu0 0
    %2799 = vmatpush1.bf16.msra.mxu0 0
    %2800 = vmatprep.subr.bf16.mxu0 0
    %2801 = vmatpush1.bf16.msra.mxu0 0
    %2802 = vmatprep.subr.bf16.mxu0 0
    %2803 = vmatpush1.bf16.msra.mxu0 0
    %2804 = vmatprep.subr.bf16.mxu0 0
    %2805 = vmatpush1.bf16.msra.mxu0 0
    %2806 = vmatprep.subr.bf16.mxu0 0
    %2807 = vmatpush1.bf16.msra.mxu0 0
    %2808 = vmatprep.subr.bf16.mxu0 0
    %2809 = vmatpush1.bf16.msra.mxu0 0
    %2810 = vmatprep.subr.bf16.mxu0 0
    %2811 = vmatpush1.bf16.msra.mxu0 0
    %2812 = vmatprep.subr.bf16.mxu0 0
    %2813 = vmatpush1.bf16.msra.mxu0 0
    %2814 = vmatprep.subr.bf16.mxu0 0
    %2815 = vmatpush1.bf16.msra.mxu0 0
    %2816 = vmatprep.mubr.bf16.mxu0 0
    %2817 = vmatmul.mubr.bf16.gmra.mrb[0].mxu0 %v2782
    %v2818 = vpop.f32.mrb[0].mxu0
    %v2819 = vadd.f32 %v2544, %v2818
    %v2820 = vpop.f32.mrb[0].mxu0
    %v2821 = vadd.f32 %v2548, %v2820
    %v2822 = vpop.f32.mrb[0].mxu0
    %v2823 = vadd.f32 %v2544, %v2822
    %v2824 = vpop.f32.mrb[0].mxu0
    %v2825 = vadd.f32 %v2548, %v2824
    %2826 = vdwg.mxu0
    %2827 = vmatprep.subr.bf16.mxu0 %v2720
    %2828 = vmatpush1.bf16.msra.mxu0 %v2719
    %2829 = vmatprep.subr.bf16.mxu0 %v2736
    %2830 = vmatpush1.bf16.msra.mxu0 %v2735
    %2831 = vmatprep.subr.bf16.mxu0 0
    %2832 = vmatpush1.bf16.msra.mxu0 0
    %2833 = vmatprep.subr.bf16.mxu0 0
    %2834 = vmatpush1.bf16.msra.mxu0 0
    %2835 = vmatprep.subr.bf16.mxu0 0
    %2836 = vmatpush1.bf16.msra.mxu0 0
    %2837 = vmatprep.subr.bf16.mxu0 0
    %2838 = vmatpush1.bf16.msra.mxu0 0
    %2839 = vmatprep.subr.bf16.mxu0 0
    %2840 = vmatpush1.bf16.msra.mxu0 0
    %2841 = vmatprep.subr.bf16.mxu0 0
    %2842 = vmatpush1.bf16.msra.mxu0 0
    %2843 = vmatprep.subr.bf16.mxu0 0
    %2844 = vmatpush1.bf16.msra.mxu0 0
    %2845 = vmatprep.subr.bf16.mxu0 0
    %2846 = vmatpush1.bf16.msra.mxu0 0
    %2847 = vmatprep.subr.bf16.mxu0 0
    %2848 = vmatpush1.bf16.msra.mxu0 0
    %2849 = vmatprep.subr.bf16.mxu0 0
    %2850 = vmatpush1.bf16.msra.mxu0 0
    %2851 = vmatprep.subr.bf16.mxu0 0
    %2852 = vmatpush1.bf16.msra.mxu0 0
    %2853 = vmatprep.subr.bf16.mxu0 0
    %2854 = vmatpush1.bf16.msra.mxu0 0
    %2855 = vmatprep.subr.bf16.mxu0 0
    %2856 = vmatpush1.bf16.msra.mxu0 0
    %2857 = vmatprep.subr.bf16.mxu0 0
    %2858 = vmatpush1.bf16.msra.mxu0 0
    %2859 = vmatprep.mubr.bf16.mxu0 0
    %2860 = vmatmul.mubr.bf16.gmra.mrb[0].mxu0 %v2782
    %v2861 = vpop.f32.mrb[0].mxu0
    %v2862 = vadd.f32 %v2552, %v2861
    %v2863 = vpop.f32.mrb[0].mxu0
    %v2864 = vadd.f32 %v2556, %v2863
    %v2865 = vpop.f32.mrb[0].mxu0
    %v2866 = vadd.f32 %v2552, %v2865
    %v2867 = vpop.f32.mrb[0].mxu0
    %v2868 = vadd.f32 %v2556, %v2867
    %2869 = vdwg.mxu0
    %2870 = vmatprep.subr.bf16.mxu0 %v2722
    %2871 = vmatpush1.bf16.msra.mxu0 %v2721
    %2872 = vmatprep.subr.bf16.mxu0 %v2738
    %2873 = vmatpush1.bf16.msra.mxu0 %v2737
    %2874 = vmatprep.subr.bf16.mxu0 0
    %2875 = vmatpush1.bf16.msra.mxu0 0
    %2876 = vmatprep.subr.bf16.mxu0 0
    %2877 = vmatpush1.bf16.msra.mxu0 0
    %2878 = vmatprep.subr.bf16.mxu0 0
    %2879 = vmatpush1.bf16.msra.mxu0 0
    %2880 = vmatprep.subr.bf16.mxu0 0
    %2881 = vmatpush1.bf16.msra.mxu0 0
    %2882 = vmatprep.subr.bf16.mxu0 0
    %2883 = vmatpush1.bf16.msra.mxu0 0
    %2884 = vmatprep.subr.bf16.mxu0 0
    %2885 = vmatpush1.bf16.msra.mxu0 0
    %2886 = vmatprep.subr.bf16.mxu0 0
    %2887 = vmatpush1.bf16.msra.mxu0 0
    %2888 = vmatprep.subr.bf16.mxu0 0
    %2889 = vmatpush1.bf16.msra.mxu0 0
    %2890 = vmatprep.subr.bf16.mxu0 0
    %2891 = vmatpush1.bf16.msra.mxu0 0
    %2892 = vmatprep.subr.bf16.mxu0 0
    %2893 = vmatpush1.bf16.msra.mxu0 0
    %2894 = vmatprep.subr.bf16.mxu0 0
    %2895 = vmatpush1.bf16.msra.mxu0 0
    %2896 = vmatprep.subr.bf16.mxu0 0
    %2897 = vmatpush1.bf16.msra.mxu0 0
    %2898 = vmatprep.subr.bf16.mxu0 0
    %2899 = vmatpush1.bf16.msra.mxu0 0
    %2900 = vmatprep.subr.bf16.mxu0 0
    %2901 = vmatpush1.bf16.msra.mxu0 0
    %2902 = vmatprep.mubr.bf16.mxu0 0
    %2903 = vmatmul.mubr.bf16.gmra.mrb[0].mxu0 %v2782
    %v2904 = vpop.f32.mrb[0].mxu0
    %v2905 = vadd.f32 %v2560, %v2904
    %v2906 = vpop.f32.mrb[0].mxu0
    %v2907 = vadd.f32 %v2564, %v2906
    %v2908 = vpop.f32.mrb[0].mxu0
    %v2909 = vadd.f32 %v2560, %v2908
    %v2910 = vpop.f32.mrb[0].mxu0
    %v2911 = vadd.f32 %v2564, %v2910
    %2912 = vdwg.mxu0
    %2913 = vmatprep.subr.bf16.mxu0 %v2724
    %2914 = vmatpush1.bf16.msra.mxu0 %v2723
    %2915 = vmatprep.subr.bf16.mxu0 %v2740
    %2916 = vmatpush1.bf16.msra.mxu0 %v2739
    %2917 = vmatprep.subr.bf16.mxu0 0
    %2918 = vmatpush1.bf16.msra.mxu0 0
    %2919 = vmatprep.subr.bf16.mxu0 0
    %2920 = vmatpush1.bf16.msra.mxu0 0
    %2921 = vmatprep.subr.bf16.mxu0 0
    %2922 = vmatpush1.bf16.msra.mxu0 0
    %2923 = vmatprep.subr.bf16.mxu0 0
    %2924 = vmatpush1.bf16.msra.mxu0 0
    %2925 = vmatprep.subr.bf16.mxu0 0
    %2926 = vmatpush1.bf16.msra.mxu0 0
    %2927 = vmatprep.subr.bf16.mxu0 0
    %2928 = vmatpush1.bf16.msra.mxu0 0
    %2929 = vmatprep.subr.bf16.mxu0 0
    %2930 = vmatpush1.bf16.msra.mxu0 0
    %2931 = vmatprep.subr.bf16.mxu0 0
    %2932 = vmatpush1.bf16.msra.mxu0 0
    %2933 = vmatprep.subr.bf16.mxu0 0
    %2934 = vmatpush1.bf16.msra.mxu0 0
    %2935 = vmatprep.subr.bf16.mxu0 0
    %2936 = vmatpush1.bf16.msra.mxu0 0
    %2937 = vmatprep.subr.bf16.mxu0 0
    %2938 = vmatpush1.bf16.msra.mxu0 0
    %2939 = vmatprep.subr.bf16.mxu0 0
    %2940 = vmatpush1.bf16.msra.mxu0 0
    %2941 = vmatprep.subr.bf16.mxu0 0
    %2942 = vmatpush1.bf16.msra.mxu0 0
    %2943 = vmatprep.subr.bf16.mxu0 0
    %2944 = vmatpush1.bf16.msra.mxu0 0
    %2945 = vmatprep.mubr.bf16.mxu0 0
    %2946 = vmatmul.mubr.bf16.gmra.mrb[0].mxu0 %v2782
    %v2947 = vpop.f32.mrb[0].mxu0
    %v2948 = vadd.f32 %v2568, %v2947
    %v2949 = vpop.f32.mrb[0].mxu0
    %v2950 = vadd.f32 %v2572, %v2949
    %v2951 = vpop.f32.mrb[0].mxu0
    %v2952 = vadd.f32 %v2568, %v2951
    %v2953 = vpop.f32.mrb[0].mxu0
    %v2954 = vadd.f32 %v2572, %v2953
    %2955 = vdwg.mxu0
    %2956 = vmatprep.subr.bf16.mxu0 %v2726
    %2957 = vmatpush1.bf16.msra.mxu0 %v2725
    %2958 = vmatprep.subr.bf16.mxu0 %v2742
    %2959 = vmatpush1.bf16.msra.mxu0 %v2741
    %2960 = vmatprep.subr.bf16.mxu0 0
    %2961 = vmatpush1.bf16.msra.mxu0 0
    %2962 = vmatprep.subr.bf16.mxu0 0
    %2963 = vmatpush1.bf16.msra.mxu0 0
    %2964 = vmatprep.subr.bf16.mxu0 0
    %2965 = vmatpush1.bf16.msra.mxu0 0
    %2966 = vmatprep.subr.bf16.mxu0 0
    %2967 = vmatpush1.bf16.msra.mxu0 0
    %2968 = vmatprep.subr.bf16.mxu0 0
    %2969 = vmatpush1.bf16.msra.mxu0 0
    %2970 = vmatprep.subr.bf16.mxu0 0
    %2971 = vmatpush1.bf16.msra.mxu0 0
    %2972 = vmatprep.subr.bf16.mxu0 0
    %2973 = vmatpush1.bf16.msra.mxu0 0
    %2974 = vmatprep.subr.bf16.mxu0 0
    %2975 = vmatpush1.bf16.msra.mxu0 0
    %2976 = vmatprep.subr.bf16.mxu0 0
    %2977 = vmatpush1.bf16.msra.mxu0 0
    %2978 = vmatprep.subr.bf16.mxu0 0
    %2979 = vmatpush1.bf16.msra.mxu0 0
    %2980 = vmatprep.subr.bf16.mxu0 0
    %2981 = vmatpush1.bf16.msra.mxu0 0
    %2982 = vmatprep.subr.bf16.mxu0 0
    %2983 = vmatpush1.bf16.msra.mxu0 0
    %2984 = vmatprep.subr.bf16.mxu0 0
    %2985 = vmatpush1.bf16.msra.mxu0 0
    %2986 = vmatprep.subr.bf16.mxu0 0
    %2987 = vmatpush1.bf16.msra.mxu0 0
    %2988 = vmatprep.mubr.bf16.mxu0 0
    %2989 = vmatmul.mubr.bf16.gmra.mrb[0].mxu0 %v2782
    %v2990 = vpop.f32.mrb[0].mxu0
    %v2991 = vadd.f32 %v2576, %v2990
    %v2992 = vpop.f32.mrb[0].mxu0
    %v2993 = vadd.f32 %v2580, %v2992
    %v2994 = vpop.f32.mrb[0].mxu0
    %v2995 = vadd.f32 %v2576, %v2994
    %v2996 = vpop.f32.mrb[0].mxu0
    %v2997 = vadd.f32 %v2580, %v2996
    %2998 = vdwg.mxu0
    %2999 = vmatprep.subr.bf16.mxu0 %v2728
    %3000 = vmatpush1.bf16.msra.mxu0 %v2727
    %3001 = vmatprep.subr.bf16.mxu0 %v2744
    %3002 = vmatpush1.bf16.msra.mxu0 %v2743
    %3003 = vmatprep.subr.bf16.mxu0 0
    %3004 = vmatpush1.bf16.msra.mxu0 0
    %3005 = vmatprep.subr.bf16.mxu0 0
    %3006 = vmatpush1.bf16.msra.mxu0 0
    %3007 = vmatprep.subr.bf16.mxu0 0
    %3008 = vmatpush1.bf16.msra.mxu0 0
    %3009 = vmatprep.subr.bf16.mxu0 0
    %3010 = vmatpush1.bf16.msra.mxu0 0
    %3011 = vmatprep.subr.bf16.mxu0 0
    %3012 = vmatpush1.bf16.msra.mxu0 0
    %3013 = vmatprep.subr.bf16.mxu0 0
    %3014 = vmatpush1.bf16.msra.mxu0 0
    %3015 = vmatprep.subr.bf16.mxu0 0
    %3016 = vmatpush1.bf16.msra.mxu0 0
    %3017 = vmatprep.subr.bf16.mxu0 0
    %3018 = vmatpush1.bf16.msra.mxu0 0
    %3019 = vmatprep.subr.bf16.mxu0 0
    %3020 = vmatpush1.bf16.msra.mxu0 0
    %3021 = vmatprep.subr.bf16.mxu0 0
    %3022 = vmatpush1.bf16.msra.mxu0 0
    %3023 = vmatprep.subr.bf16.mxu0 0
    %3024 = vmatpush1.bf16.msra.mxu0 0
    %3025 = vmatprep.subr.bf16.mxu0 0
    %3026 = vmatpush1.bf16.msra.mxu0 0
    %3027 = vmatprep.subr.bf16.mxu0 0
    %3028 = vmatpush1.bf16.msra.mxu0 0
    %3029 = vmatprep.subr.bf16.mxu0 0
    %3030 = vmatpush1.bf16.msra.mxu0 0
    %3031 = vmatprep.mubr.bf16.mxu0 0
    %3032 = vmatmul.mubr.bf16.gmra.mrb[0].mxu0 %v2782
    %v3033 = vpop.f32.mrb[0].mxu0
    %v3034 = vadd.f32 %v2584, %v3033
    %v3035 = vpop.f32.mrb[0].mxu0
    %v3036 = vadd.f32 %v2588, %v3035
    %v3037 = vpop.f32.mrb[0].mxu0
    %v3038 = vadd.f32 %v2584, %v3037
    %v3039 = vpop.f32.mrb[0].mxu0
    %v3040 = vadd.f32 %v2588, %v3039
    %3041 = vdwg.mxu0
    %3042 = vmatprep.subr.bf16.mxu0 %v2730
    %3043 = vmatpush1.bf16.msra.mxu0 %v2729
    %3044 = vmatprep.subr.bf16.mxu0 %v2746
    %3045 = vmatpush1.bf16.msra.mxu0 %v2745
    %3046 = vmatprep.subr.bf16.mxu0 0
    %3047 = vmatpush1.bf16.msra.mxu0 0
    %3048 = vmatprep.subr.bf16.mxu0 0
    %3049 = vmatpush1.bf16.msra.mxu0 0
    %3050 = vmatprep.subr.bf16.mxu0 0
    %3051 = vmatpush1.bf16.msra.mxu0 0
    %3052 = vmatprep.subr.bf16.mxu0 0
    %3053 = vmatpush1.bf16.msra.mxu0 0
    %3054 = vmatprep.subr.bf16.mxu0 0
    %3055 = vmatpush1.bf16.msra.mxu0 0
    %3056 = vmatprep.subr.bf16.mxu0 0
    %3057 = vmatpush1.bf16.msra.mxu0 0
    %3058 = vmatprep.subr.bf16.mxu0 0
    %3059 = vmatpush1.bf16.msra.mxu0 0
    %3060 = vmatprep.subr.bf16.mxu0 0
    %3061 = vmatpush1.bf16.msra.mxu0 0
    %3062 = vmatprep.subr.bf16.mxu0 0
    %3063 = vmatpush1.bf16.msra.mxu0 0
    %3064 = vmatprep.subr.bf16.mxu0 0
    %3065 = vmatpush1.bf16.msra.mxu0 0
    %3066 = vmatprep.subr.bf16.mxu0 0
    %3067 = vmatpush1.bf16.msra.mxu0 0
    %3068 = vmatprep.subr.bf16.mxu0 0
    %3069 = vmatpush1.bf16.msra.mxu0 0
    %3070 = vmatprep.subr.bf16.mxu0 0
    %3071 = vmatpush1.bf16.msra.mxu0 0
    %3072 = vmatprep.subr.bf16.mxu0 0
    %3073 = vmatpush1.bf16.msra.mxu0 0
    %3074 = vmatprep.mubr.bf16.mxu0 0
    %3075 = vmatmul.mubr.bf16.gmra.mrb[0].mxu0 %v2782
    %v3076 = vpop.f32.mrb[0].mxu0
    %v3077 = vadd.f32 %v2592, %v3076
    %v3078 = vpop.f32.mrb[0].mxu0
    %v3079 = vadd.f32 %v2596, %v3078
    %v3080 = vpop.f32.mrb[0].mxu0
    %v3081 = vadd.f32 %v2592, %v3080
    %v3082 = vpop.f32.mrb[0].mxu0
    %v3083 = vadd.f32 %v2596, %v3082
    %3084 = vdwg.mxu0
    %3085 = vmatprep.subr.bf16.mxu0 %v2732
    %3086 = vmatpush1.bf16.msra.mxu0 %v2731
    %3087 = vmatprep.subr.bf16.mxu0 %v2748
    %3088 = vmatpush1.bf16.msra.mxu0 %v2747
    %3089 = vmatprep.subr.bf16.mxu0 0
    %3090 = vmatpush1.bf16.msra.mxu0 0
    %3091 = vmatprep.subr.bf16.mxu0 0
    %3092 = vmatpush1.bf16.msra.mxu0 0
    %3093 = vmatprep.subr.bf16.mxu0 0
    %3094 = vmatpush1.bf16.msra.mxu0 0
    %3095 = vmatprep.subr.bf16.mxu0 0
    %3096 = vmatpush1.bf16.msra.mxu0 0
    %3097 = vmatprep.subr.bf16.mxu0 0
    %3098 = vmatpush1.bf16.msra.mxu0 0
    %3099 = vmatprep.subr.bf16.mxu0 0
    %3100 = vmatpush1.bf16.msra.mxu0 0
    %3101 = vmatprep.subr.bf16.mxu0 0
    %3102 = vmatpush1.bf16.msra.mxu0 0
    %3103 = vmatprep.subr.bf16.mxu0 0
    %3104 = vmatpush1.bf16.msra.mxu0 0
    %3105 = vmatprep.subr.bf16.mxu0 0
    %3106 = vmatpush1.bf16.msra.mxu0 0
    %3107 = vmatprep.subr.bf16.mxu0 0
    %3108 = vmatpush1.bf16.msra.mxu0 0
    %3109 = vmatprep.subr.bf16.mxu0 0
    %3110 = vmatpush1.bf16.msra.mxu0 0
    %3111 = vmatprep.subr.bf16.mxu0 0
    %3112 = vmatpush1.bf16.msra.mxu0 0
    %3113 = vmatprep.subr.bf16.mxu0 0
    %3114 = vmatpush1.bf16.msra.mxu0 0
    %3115 = vmatprep.subr.bf16.mxu0 0
    %3116 = vmatpush1.bf16.msra.mxu0 0
    %3117 = vmatprep.mubr.bf16.mxu0 0
    %3118 = vmatmul.mubr.bf16.gmra.mrb[0].mxu0 %v2782
    %v3119 = vpop.f32.mrb[0].mxu0
    %v3120 = vadd.f32 %v2600, %v3119
    %v3121 = vpop.f32.mrb[0].mxu0
    %v3122 = vadd.f32 %v2604, %v3121
    %v3123 = vpop.f32.mrb[0].mxu0
    %v3124 = vadd.f32 %v2600, %v3123
    %v3125 = vpop.f32.mrb[0].mxu0
    %v3126 = vadd.f32 %v2604, %v3125
    %3127 = vdwg.mxu0
    %v3128 = vmax.f32 %v2819, 0.0
    %v3129 = vmax.f32 %v2821, 0.0
    %v3130 = vmax.f32 %v2862, 0.0
    %v3131 = vmax.f32 %v2864, 0.0
    %v3132 = vmax.f32 %v2905, 0.0
    %v3133 = vmax.f32 %v2907, 0.0
    %v3134 = vmax.f32 %v2948, 0.0
    %v3135 = vmax.f32 %v2950, 0.0
    %v3136 = vmax.f32 %v2991, 0.0
    %v3137 = vmax.f32 %v2993, 0.0
    %v3138 = vmax.f32 %v3034, 0.0
    %v3139 = vmax.f32 %v3036, 0.0
    %v3140 = vmax.f32 %v3077, 0.0
    %v3141 = vmax.f32 %v3079, 0.0
    %v3142 = vmax.f32 %v3120, 0.0
    %v3143 = vmax.f32 %v3122, 0.0
    %v3144 = vmax.f32 %v2823, 0.0
    %v3145 = vmax.f32 %v2825, 0.0
    %v3146 = vmax.f32 %v2866, 0.0
    %v3147 = vmax.f32 %v2868, 0.0
    %v3148 = vmax.f32 %v2909, 0.0
    %v3149 = vmax.f32 %v2911, 0.0
    %v3150 = vmax.f32 %v2952, 0.0
    %v3151 = vmax.f32 %v2954, 0.0
    %v3152 = vmax.f32 %v2995, 0.0
    %v3153 = vmax.f32 %v2997, 0.0
    %v3154 = vmax.f32 %v3038, 0.0
    %v3155 = vmax.f32 %v3040, 0.0
    %v3156 = vmax.f32 %v3081, 0.0
    %v3157 = vmax.f32 %v3083, 0.0
    %v3158 = vmax.f32 %v3124, 0.0
    %v3159 = vmax.f32 %v3126, 0.0
    %v3160 = vpack.c.bf16 %v3144, %v3128
    %v3161 = vpack.c.bf16 %v3145, %v3129
    %v3162 = vpack.c.bf16 %v3146, %v3130
    %v3163 = vpack.c.bf16 %v3147, %v3131
    %v3164 = vpack.c.bf16 %v3148, %v3132
    %v3165 = vpack.c.bf16 %v3149, %v3133
    %v3166 = vpack.c.bf16 %v3150, %v3134
    %v3167 = vpack.c.bf16 %v3151, %v3135
    %v3168 = vpack.c.bf16 %v3152, %v3136
    %v3169 = vpack.c.bf16 %v3153, %v3137
    %v3170 = vpack.c.bf16 %v3154, %v3138
    %v3171 = vpack.c.bf16 %v3155, %v3139
    %v3172 = vpack.c.bf16 %v3156, %v3140
    %v3173 = vpack.c.bf16 %v3157, %v3141
    %v3174 = vpack.c.bf16 %v3158, %v3142
    %v3175 = vpack.c.bf16 %v3159, %v3143
    %v3176 = vld [vmem:[%s49] sm:$0xf]
    %v3177 = vld [vmem:[%s49 + $0x4] sm:$0xf]
    %v3178 = vld [vmem:[%s49 + $0x8] sm:$0xf]
    %v3179 = vld [vmem:[%s49 + $0xc] sm:$0xf]
    %v3180 = vld [vmem:[%s49 + $0x10] sm:$0xf]
    %v3181 = vld [vmem:[%s49 + $0x14] sm:$0xf]
    %v3182 = vld [vmem:[%s49 + $0x18] sm:$0xf]
    %v3183 = vld [vmem:[%s49 + $0x1c] sm:$0xf]
    %v3184 = vld [vmem:[%s49 + $0x20] sm:$0xf]
    %v3185 = vld [vmem:[%s49 + $0x24] sm:$0xf]
    %v3186 = vld [vmem:[%s49 + $0x28] sm:$0xf]
    %v3187 = vld [vmem:[%s49 + $0x2c] sm:$0xf]
    %v3188 = vld [vmem:[%s49 + $0x30] sm:$0xf]
    %v3189 = vld [vmem:[%s49 + $0x34] sm:$0xf]
    %v3190 = vld [vmem:[%s49 + $0x38] sm:$0xf]
    %v3191 = vld [vmem:[%s49 + $0x3c] sm:$0xf]
    %v3192 = vld [vmem:[%s49 + $0x40] sm:$0xf]
    %v3193 = vld [vmem:[%s49 + $0x44] sm:$0xf]
    %v3194 = vld [vmem:[%s49 + $0x48] sm:$0xf]
    %v3195 = vld [vmem:[%s49 + $0x4c] sm:$0xf]
    %v3196 = vld [vmem:[%s49 + $0x50] sm:$0xf]
    %v3197 = vld [vmem:[%s49 + $0x54] sm:$0xf]
    %v3198 = vld [vmem:[%s49 + $0x58] sm:$0xf]
    %v3199 = vld [vmem:[%s49 + $0x5c] sm:$0xf]
    %v3200 = vld [vmem:[%s49 + $0x60] sm:$0xf]
    %v3201 = vld [vmem:[%s49 + $0x64] sm:$0xf]
    %v3202 = vld [vmem:[%s49 + $0x68] sm:$0xf]
    %v3203 = vld [vmem:[%s49 + $0x6c] sm:$0xf]
    %v3204 = vld [vmem:[%s49 + $0x70] sm:$0xf]
    %v3205 = vld [vmem:[%s49 + $0x74] sm:$0xf]
    %v3206 = vld [vmem:[%s49 + $0x78] sm:$0xf]
    %v3207 = vld [vmem:[%s49 + $0x7c] sm:$0xf]
    %v3208 = vld [vmem:[%s49 + $0x80] sm:$0xf]
    %v3209 = vld [vmem:[%s49 + $0x84] sm:$0xf]
    %v3210 = vld [vmem:[%s49 + $0x88] sm:$0xf]
    %v3211 = vld [vmem:[%s49 + $0x8c] sm:$0xf]
    %v3212 = vld [vmem:[%s49 + $0x90] sm:$0xf]
    %v3213 = vld [vmem:[%s49 + $0x94] sm:$0xf]
    %v3214 = vld [vmem:[%s49 + $0x98] sm:$0xf]
    %v3215 = vld [vmem:[%s49 + $0x9c] sm:$0xf]
    %v3216 = vld [vmem:[%s49 + $0xa0] sm:$0xf]
    %v3217 = vld [vmem:[%s49 + $0xa4] sm:$0xf]
    %v3218 = vld [vmem:[%s49 + $0xa8] sm:$0xf]
    %v3219 = vld [vmem:[%s49 + $0xac] sm:$0xf]
    %v3220 = vld [vmem:[%s49 + $0xb0] sm:$0xf]
    %v3221 = vld [vmem:[%s49 + $0xb4] sm:$0xf]
    %v3222 = vld [vmem:[%s49 + $0xb8] sm:$0xf]
    %v3223 = vld [vmem:[%s49 + $0xbc] sm:$0xf]
    %v3224 = vld [vmem:[%s49 + $0xc0] sm:$0xf]
    %v3225 = vld [vmem:[%s49 + $0xc4] sm:$0xf]
    %v3226 = vld [vmem:[%s49 + $0xc8] sm:$0xf]
    %v3227 = vld [vmem:[%s49 + $0xcc] sm:$0xf]
    %v3228 = vld [vmem:[%s49 + $0xd0] sm:$0xf]
    %v3229 = vld [vmem:[%s49 + $0xd4] sm:$0xf]
    %v3230 = vld [vmem:[%s49 + $0xd8] sm:$0xf]
    %v3231 = vld [vmem:[%s49 + $0xdc] sm:$0xf]
    %v3232 = vld [vmem:[%s49 + $0xe0] sm:$0xf]
    %v3233 = vld [vmem:[%s49 + $0xe4] sm:$0xf]
    %v3234 = vld [vmem:[%s49 + $0xe8] sm:$0xf]
    %v3235 = vld [vmem:[%s49 + $0xec] sm:$0xf]
    %v3236 = vld [vmem:[%s49 + $0xf0] sm:$0xf]
    %v3237 = vld [vmem:[%s49 + $0xf4] sm:$0xf]
    %v3238 = vld [vmem:[%s49 + $0xf8] sm:$0xf]
    %v3239 = vld [vmem:[%s49 + $0xfc] sm:$0xf]
    %v3240 = vld [vmem:[%s49 + $0x100] sm:$0xf]
    %v3241 = vld [vmem:[%s49 + $0x104] sm:$0xf]
    %v3242 = vld [vmem:[%s49 + $0x108] sm:$0xf]
    %v3243 = vld [vmem:[%s49 + $0x10c] sm:$0xf]
    %v3244 = vld [vmem:[%s49 + $0x110] sm:$0xf]
    %v3245 = vld [vmem:[%s49 + $0x114] sm:$0xf]
    %v3246 = vld [vmem:[%s49 + $0x118] sm:$0xf]
    %v3247 = vld [vmem:[%s49 + $0x11c] sm:$0xf]
    %v3248 = vld [vmem:[%s49 + $0x120] sm:$0xf]
    %v3249 = vld [vmem:[%s49 + $0x124] sm:$0xf]
    %v3250 = vld [vmem:[%s49 + $0x128] sm:$0xf]
    %v3251 = vld [vmem:[%s49 + $0x12c] sm:$0xf]
    %v3252 = vld [vmem:[%s49 + $0x130] sm:$0xf]
    %v3253 = vld [vmem:[%s49 + $0x134] sm:$0xf]
    %v3254 = vld [vmem:[%s49 + $0x138] sm:$0xf]
    %v3255 = vld [vmem:[%s49 + $0x13c] sm:$0xf]
    %v3256 = vld [vmem:[%s49 + $0x140] sm:$0xf]
    %v3257 = vld [vmem:[%s49 + $0x144] sm:$0xf]
    %v3258 = vld [vmem:[%s49 + $0x148] sm:$0xf]
    %v3259 = vld [vmem:[%s49 + $0x14c] sm:$0xf]
    %v3260 = vld [vmem:[%s49 + $0x150] sm:$0xf]
    %v3261 = vld [vmem:[%s49 + $0x154] sm:$0xf]
    %v3262 = vld [vmem:[%s49 + $0x158] sm:$0xf]
    %v3263 = vld [vmem:[%s49 + $0x15c] sm:$0xf]
    %v3264 = vld [vmem:[%s49 + $0x160] sm:$0xf]
    %v3265 = vld [vmem:[%s49 + $0x164] sm:$0xf]
    %v3266 = vld [vmem:[%s49 + $0x168] sm:$0xf]
    %v3267 = vld [vmem:[%s49 + $0x16c] sm:$0xf]
    %v3268 = vld [vmem:[%s49 + $0x170] sm:$0xf]
    %v3269 = vld [vmem:[%s49 + $0x174] sm:$0xf]
    %v3270 = vld [vmem:[%s49 + $0x178] sm:$0xf]
    %v3271 = vld [vmem:[%s49 + $0x17c] sm:$0xf]
    %v3272 = vld [vmem:[%s49 + $0x180] sm:$0xf]
    %v3273 = vld [vmem:[%s49 + $0x184] sm:$0xf]
    %v3274 = vld [vmem:[%s49 + $0x188] sm:$0xf]
    %v3275 = vld [vmem:[%s49 + $0x18c] sm:$0xf]
    %v3276 = vld [vmem:[%s49 + $0x190] sm:$0xf]
    %v3277 = vld [vmem:[%s49 + $0x194] sm:$0xf]
    %v3278 = vld [vmem:[%s49 + $0x198] sm:$0xf]
    %v3279 = vld [vmem:[%s49 + $0x19c] sm:$0xf]
    %v3280 = vld [vmem:[%s49 + $0x1a0] sm:$0xf]
    %v3281 = vld [vmem:[%s49 + $0x1a4] sm:$0xf]
    %v3282 = vld [vmem:[%s49 + $0x1a8] sm:$0xf]
    %v3283 = vld [vmem:[%s49 + $0x1ac] sm:$0xf]
    %v3284 = vld [vmem:[%s49 + $0x1b0] sm:$0xf]
    %v3285 = vld [vmem:[%s49 + $0x1b4] sm:$0xf]
    %v3286 = vld [vmem:[%s49 + $0x1b8] sm:$0xf]
    %v3287 = vld [vmem:[%s49 + $0x1bc] sm:$0xf]
    %v3288 = vld [vmem:[%s49 + $0x1c0] sm:$0xf]
    %v3289 = vld [vmem:[%s49 + $0x1c4] sm:$0xf]
    %v3290 = vld [vmem:[%s49 + $0x1c8] sm:$0xf]
    %v3291 = vld [vmem:[%s49 + $0x1cc] sm:$0xf]
    %v3292 = vld [vmem:[%s49 + $0x1d0] sm:$0xf]
    %v3293 = vld [vmem:[%s49 + $0x1d4] sm:$0xf]
    %v3294 = vld [vmem:[%s49 + $0x1d8] sm:$0xf]
    %v3295 = vld [vmem:[%s49 + $0x1dc] sm:$0xf]
    %v3296 = vld [vmem:[%s49 + $0x1e0] sm:$0xf]
    %v3297 = vld [vmem:[%s49 + $0x1e4] sm:$0xf]
    %v3298 = vld [vmem:[%s49 + $0x1e8] sm:$0xf]
    %v3299 = vld [vmem:[%s49 + $0x1ec] sm:$0xf]
    %v3300 = vld [vmem:[%s49 + $0x1f0] sm:$0xf]
    %v3301 = vld [vmem:[%s49 + $0x1f4] sm:$0xf]
    %v3302 = vld [vmem:[%s49 + $0x1f8] sm:$0xf]
    %v3303 = vld [vmem:[%s49 + $0x1fc] sm:$0xf]
    %v3304 = vld [vmem:[%s49 + $0x200] sm:$0xf]
    %v3305 = vld [vmem:[%s49 + $0x204] sm:$0xf]
    %v3306 = vld [vmem:[%s49 + $0x208] sm:$0xf]
    %v3307 = vld [vmem:[%s49 + $0x20c] sm:$0xf]
    %v3308 = vld [vmem:[%s49 + $0x210] sm:$0xf]
    %v3309 = vld [vmem:[%s49 + $0x214] sm:$0xf]
    %v3310 = vld [vmem:[%s49 + $0x218] sm:$0xf]
    %v3311 = vld [vmem:[%s49 + $0x21c] sm:$0xf]
    %v3312 = vld [vmem:[%s49 + $0x220] sm:$0xf]
    %v3313 = vld [vmem:[%s49 + $0x224] sm:$0xf]
    %v3314 = vld [vmem:[%s49 + $0x228] sm:$0xf]
    %v3315 = vld [vmem:[%s49 + $0x22c] sm:$0xf]
    %v3316 = vld [vmem:[%s49 + $0x230] sm:$0xf]
    %v3317 = vld [vmem:[%s49 + $0x234] sm:$0xf]
    %v3318 = vld [vmem:[%s49 + $0x238] sm:$0xf]
    %v3319 = vld [vmem:[%s49 + $0x23c] sm:$0xf]
    %v3320 = vld [vmem:[%s49 + $0x240] sm:$0xf]
    %v3321 = vld [vmem:[%s49 + $0x244] sm:$0xf]
    %v3322 = vld [vmem:[%s49 + $0x248] sm:$0xf]
    %v3323 = vld [vmem:[%s49 + $0x24c] sm:$0xf]
    %v3324 = vld [vmem:[%s49 + $0x250] sm:$0xf]
    %v3325 = vld [vmem:[%s49 + $0x254] sm:$0xf]
    %v3326 = vld [vmem:[%s49 + $0x258] sm:$0xf]
    %v3327 = vld [vmem:[%s49 + $0x25c] sm:$0xf]
    %v3328 = vld [vmem:[%s49 + $0x260] sm:$0xf]
    %v3329 = vld [vmem:[%s49 + $0x264] sm:$0xf]
    %v3330 = vld [vmem:[%s49 + $0x268] sm:$0xf]
    %v3331 = vld [vmem:[%s49 + $0x26c] sm:$0xf]
    %v3332 = vld [vmem:[%s49 + $0x270] sm:$0xf]
    %v3333 = vld [vmem:[%s49 + $0x274] sm:$0xf]
    %v3334 = vld [vmem:[%s49 + $0x278] sm:$0xf]
    %v3335 = vld [vmem:[%s49 + $0x27c] sm:$0xf]
    %v3336 = vld [vmem:[%s49 + $0x280] sm:$0xf]
    %v3337 = vld [vmem:[%s49 + $0x284] sm:$0xf]
    %v3338 = vld [vmem:[%s49 + $0x288] sm:$0xf]
    %v3339 = vld [vmem:[%s49 + $0x28c] sm:$0xf]
    %v3340 = vld [vmem:[%s49 + $0x290] sm:$0xf]
    %v3341 = vld [vmem:[%s49 + $0x294] sm:$0xf]
    %v3342 = vld [vmem:[%s49 + $0x298] sm:$0xf]
    %v3343 = vld [vmem:[%s49 + $0x29c] sm:$0xf]
    %v3344 = vld [vmem:[%s49 + $0x2a0] sm:$0xf]
    %v3345 = vld [vmem:[%s49 + $0x2a4] sm:$0xf]
    %v3346 = vld [vmem:[%s49 + $0x2a8] sm:$0xf]
    %v3347 = vld [vmem:[%s49 + $0x2ac] sm:$0xf]
    %v3348 = vld [vmem:[%s49 + $0x2b0] sm:$0xf]
    %v3349 = vld [vmem:[%s49 + $0x2b4] sm:$0xf]
    %v3350 = vld [vmem:[%s49 + $0x2b8] sm:$0xf]
    %v3351 = vld [vmem:[%s49 + $0x2bc] sm:$0xf]
    %v3352 = vld [vmem:[%s49 + $0x2c0] sm:$0xf]
    %v3353 = vld [vmem:[%s49 + $0x2c4] sm:$0xf]
    %v3354 = vld [vmem:[%s49 + $0x2c8] sm:$0xf]
    %v3355 = vld [vmem:[%s49 + $0x2cc] sm:$0xf]
    %v3356 = vld [vmem:[%s49 + $0x2d0] sm:$0xf]
    %v3357 = vld [vmem:[%s49 + $0x2d4] sm:$0xf]
    %v3358 = vld [vmem:[%s49 + $0x2d8] sm:$0xf]
    %v3359 = vld [vmem:[%s49 + $0x2dc] sm:$0xf]
    %v3360 = vld [vmem:[%s49 + $0x2e0] sm:$0xf]
    %v3361 = vld [vmem:[%s49 + $0x2e4] sm:$0xf]
    %v3362 = vld [vmem:[%s49 + $0x2e8] sm:$0xf]
    %v3363 = vld [vmem:[%s49 + $0x2ec] sm:$0xf]
    %v3364 = vld [vmem:[%s49 + $0x2f0] sm:$0xf]
    %v3365 = vld [vmem:[%s49 + $0x2f4] sm:$0xf]
    %v3366 = vld [vmem:[%s49 + $0x2f8] sm:$0xf]
    %v3367 = vld [vmem:[%s49 + $0x2fc] sm:$0xf]
    %v3368 = vld [vmem:[%s49 + $0x300] sm:$0xf]
    %v3369 = vld [vmem:[%s49 + $0x304] sm:$0xf]
    %v3370 = vld [vmem:[%s49 + $0x308] sm:$0xf]
    %v3371 = vld [vmem:[%s49 + $0x30c] sm:$0xf]
    %v3372 = vld [vmem:[%s49 + $0x310] sm:$0xf]
    %v3373 = vld [vmem:[%s49 + $0x314] sm:$0xf]
    %v3374 = vld [vmem:[%s49 + $0x318] sm:$0xf]
    %v3375 = vld [vmem:[%s49 + $0x31c] sm:$0xf]
    %v3376 = vld [vmem:[%s49 + $0x320] sm:$0xf]
    %v3377 = vld [vmem:[%s49 + $0x324] sm:$0xf]
    %v3378 = vld [vmem:[%s49 + $0x328] sm:$0xf]
    %v3379 = vld [vmem:[%s49 + $0x32c] sm:$0xf]
    %v3380 = vld [vmem:[%s49 + $0x330] sm:$0xf]
    %v3381 = vld [vmem:[%s49 + $0x334] sm:$0xf]
    %v3382 = vld [vmem:[%s49 + $0x338] sm:$0xf]
    %v3383 = vld [vmem:[%s49 + $0x33c] sm:$0xf]
    %v3384 = vld [vmem:[%s49 + $0x340] sm:$0xf]
    %v3385 = vld [vmem:[%s49 + $0x344] sm:$0xf]
    %v3386 = vld [vmem:[%s49 + $0x348] sm:$0xf]
    %v3387 = vld [vmem:[%s49 + $0x34c] sm:$0xf]
    %v3388 = vld [vmem:[%s49 + $0x350] sm:$0xf]
    %v3389 = vld [vmem:[%s49 + $0x354] sm:$0xf]
    %v3390 = vld [vmem:[%s49 + $0x358] sm:$0xf]
    %v3391 = vld [vmem:[%s49 + $0x35c] sm:$0xf]
    %v3392 = vld [vmem:[%s49 + $0x360] sm:$0xf]
    %v3393 = vld [vmem:[%s49 + $0x364] sm:$0xf]
    %v3394 = vld [vmem:[%s49 + $0x368] sm:$0xf]
    %v3395 = vld [vmem:[%s49 + $0x36c] sm:$0xf]
    %v3396 = vld [vmem:[%s49 + $0x370] sm:$0xf]
    %v3397 = vld [vmem:[%s49 + $0x374] sm:$0xf]
    %v3398 = vld [vmem:[%s49 + $0x378] sm:$0xf]
    %v3399 = vld [vmem:[%s49 + $0x37c] sm:$0xf]
    %v3400 = vld [vmem:[%s49 + $0x380] sm:$0xf]
    %v3401 = vld [vmem:[%s49 + $0x384] sm:$0xf]
    %v3402 = vld [vmem:[%s49 + $0x388] sm:$0xf]
    %v3403 = vld [vmem:[%s49 + $0x38c] sm:$0xf]
    %v3404 = vld [vmem:[%s49 + $0x390] sm:$0xf]
    %v3405 = vld [vmem:[%s49 + $0x394] sm:$0xf]
    %v3406 = vld [vmem:[%s49 + $0x398] sm:$0xf]
    %v3407 = vld [vmem:[%s49 + $0x39c] sm:$0xf]
    %v3408 = vld [vmem:[%s49 + $0x3a0] sm:$0xf]
    %v3409 = vld [vmem:[%s49 + $0x3a4] sm:$0xf]
    %v3410 = vld [vmem:[%s49 + $0x3a8] sm:$0xf]
    %v3411 = vld [vmem:[%s49 + $0x3ac] sm:$0xf]
    %v3412 = vld [vmem:[%s49 + $0x3b0] sm:$0xf]
    %v3413 = vld [vmem:[%s49 + $0x3b4] sm:$0xf]
    %v3414 = vld [vmem:[%s49 + $0x3b8] sm:$0xf]
    %v3415 = vld [vmem:[%s49 + $0x3bc] sm:$0xf]
    %v3416 = vld [vmem:[%s49 + $0x3c0] sm:$0xf]
    %v3417 = vld [vmem:[%s49 + $0x3c4] sm:$0xf]
    %v3418 = vld [vmem:[%s49 + $0x3c8] sm:$0xf]
    %v3419 = vld [vmem:[%s49 + $0x3cc] sm:$0xf]
    %v3420 = vld [vmem:[%s49 + $0x3d0] sm:$0xf]
    %v3421 = vld [vmem:[%s49 + $0x3d4] sm:$0xf]
    %v3422 = vld [vmem:[%s49 + $0x3d8] sm:$0xf]
    %v3423 = vld [vmem:[%s49 + $0x3dc] sm:$0xf]
    %v3424 = vld [vmem:[%s49 + $0x3e0] sm:$0xf]
    %v3425 = vld [vmem:[%s49 + $0x3e4] sm:$0xf]
    %v3426 = vld [vmem:[%s49 + $0x3e8] sm:$0xf]
    %v3427 = vld [vmem:[%s49 + $0x3ec] sm:$0xf]
    %v3428 = vld [vmem:[%s49 + $0x3f0] sm:$0xf]
    %v3429 = vld [vmem:[%s49 + $0x3f4] sm:$0xf]
    %v3430 = vld [vmem:[%s49 + $0x3f8] sm:$0xf]
    %v3431 = vld [vmem:[%s49 + $0x3fc] sm:$0xf]
    %v3432 = vld [vmem:[%s51] sm:$0x1]
    %v3434 = vlaneseq
    %v3435 = vshrl.u32 %v3434, 7
    %v3436 = vsub.s32 0, %v3435
    %v3437 = vrot.slane %v3432, %v3436
    %v3695 = vunpack.c.l.b16 %v3176
    %v3696 = vunpack.c.l.b16 %v3177
    %v3697 = vunpack.c.l.b16 %v3178
    %v3698 = vunpack.c.l.b16 %v3179
    %v3699 = vunpack.c.l.b16 %v3180
    %v3700 = vunpack.c.l.b16 %v3181
    %v3701 = vunpack.c.l.b16 %v3182
    %v3702 = vunpack.c.l.b16 %v3183
    %v3703 = vunpack.c.l.b16 %v3184
    %v3704 = vunpack.c.l.b16 %v3185
    %v3705 = vunpack.c.l.b16 %v3186
    %v3706 = vunpack.c.l.b16 %v3187
    %v3707 = vunpack.c.l.b16 %v3188
    %v3708 = vunpack.c.l.b16 %v3189
    %v3709 = vunpack.c.l.b16 %v3190
    %v3710 = vunpack.c.l.b16 %v3191
    %v3711 = vunpack.c.l.b16 %v3192
    %v3712 = vunpack.c.l.b16 %v3193
    %v3713 = vunpack.c.l.b16 %v3194
    %v3714 = vunpack.c.l.b16 %v3195
    %v3715 = vunpack.c.l.b16 %v3196
    %v3716 = vunpack.c.l.b16 %v3197
    %v3717 = vunpack.c.l.b16 %v3198
    %v3718 = vunpack.c.l.b16 %v3199
    %v3719 = vunpack.c.l.b16 %v3200
    %v3720 = vunpack.c.l.b16 %v3201
    %v3721 = vunpack.c.l.b16 %v3202
    %v3722 = vunpack.c.l.b16 %v3203
    %v3723 = vunpack.c.l.b16 %v3204
    %v3724 = vunpack.c.l.b16 %v3205
    %v3725 = vunpack.c.l.b16 %v3206
    %v3726 = vunpack.c.l.b16 %v3207
    %v3727 = vunpack.c.l.b16 %v3208
    %v3728 = vunpack.c.l.b16 %v3209
    %v3729 = vunpack.c.l.b16 %v3210
    %v3730 = vunpack.c.l.b16 %v3211
    %v3731 = vunpack.c.l.b16 %v3212
    %v3732 = vunpack.c.l.b16 %v3213
    %v3733 = vunpack.c.l.b16 %v3214
    %v3734 = vunpack.c.l.b16 %v3215
    %v3735 = vunpack.c.l.b16 %v3216
    %v3736 = vunpack.c.l.b16 %v3217
    %v3737 = vunpack.c.l.b16 %v3218
    %v3738 = vunpack.c.l.b16 %v3219
    %v3739 = vunpack.c.l.b16 %v3220
    %v3740 = vunpack.c.l.b16 %v3221
    %v3741 = vunpack.c.l.b16 %v3222
    %v3742 = vunpack.c.l.b16 %v3223
    %v3743 = vunpack.c.l.b16 %v3224
    %v3744 = vunpack.c.l.b16 %v3225
    %v3745 = vunpack.c.l.b16 %v3226
    %v3746 = vunpack.c.l.b16 %v3227
    %v3747 = vunpack.c.l.b16 %v3228
    %v3748 = vunpack.c.l.b16 %v3229
    %v3749 = vunpack.c.l.b16 %v3230
    %v3750 = vunpack.c.l.b16 %v3231
    %v3751 = vunpack.c.l.b16 %v3232
    %v3752 = vunpack.c.l.b16 %v3233
    %v3753 = vunpack.c.l.b16 %v3234
    %v3754 = vunpack.c.l.b16 %v3235
    %v3755 = vunpack.c.l.b16 %v3236
    %v3756 = vunpack.c.l.b16 %v3237
    %v3757 = vunpack.c.l.b16 %v3238
    %v3758 = vunpack.c.l.b16 %v3239
    %v3759 = vunpack.c.l.b16 %v3240
    %v3760 = vunpack.c.l.b16 %v3241
    %v3761 = vunpack.c.l.b16 %v3242
    %v3762 = vunpack.c.l.b16 %v3243
    %v3763 = vunpack.c.l.b16 %v3244
    %v3764 = vunpack.c.l.b16 %v3245
    %v3765 = vunpack.c.l.b16 %v3246
    %v3766 = vunpack.c.l.b16 %v3247
    %v3767 = vunpack.c.l.b16 %v3248
    %v3768 = vunpack.c.l.b16 %v3249
    %v3769 = vunpack.c.l.b16 %v3250
    %v3770 = vunpack.c.l.b16 %v3251
    %v3771 = vunpack.c.l.b16 %v3252
    %v3772 = vunpack.c.l.b16 %v3253
    %v3773 = vunpack.c.l.b16 %v3254
    %v3774 = vunpack.c.l.b16 %v3255
    %v3775 = vunpack.c.l.b16 %v3256
    %v3776 = vunpack.c.l.b16 %v3257
    %v3777 = vunpack.c.l.b16 %v3258
    %v3778 = vunpack.c.l.b16 %v3259
    %v3779 = vunpack.c.l.b16 %v3260
    %v3780 = vunpack.c.l.b16 %v3261
    %v3781 = vunpack.c.l.b16 %v3262
    %v3782 = vunpack.c.l.b16 %v3263
    %v3783 = vunpack.c.l.b16 %v3264
    %v3784 = vunpack.c.l.b16 %v3265
    %v3785 = vunpack.c.l.b16 %v3266
    %v3786 = vunpack.c.l.b16 %v3267
    %v3787 = vunpack.c.l.b16 %v3268
    %v3788 = vunpack.c.l.b16 %v3269
    %v3789 = vunpack.c.l.b16 %v3270
    %v3790 = vunpack.c.l.b16 %v3271
    %v3791 = vunpack.c.l.b16 %v3272
    %v3792 = vunpack.c.l.b16 %v3273
    %v3793 = vunpack.c.l.b16 %v3274
    %v3794 = vunpack.c.l.b16 %v3275
    %v3795 = vunpack.c.l.b16 %v3276
    %v3796 = vunpack.c.l.b16 %v3277
    %v3797 = vunpack.c.l.b16 %v3278
    %v3798 = vunpack.c.l.b16 %v3279
    %v3799 = vunpack.c.l.b16 %v3280
    %v3800 = vunpack.c.l.b16 %v3281
    %v3801 = vunpack.c.l.b16 %v3282
    %v3802 = vunpack.c.l.b16 %v3283
    %v3803 = vunpack.c.l.b16 %v3284
    %v3804 = vunpack.c.l.b16 %v3285
    %v3805 = vunpack.c.l.b16 %v3286
    %v3806 = vunpack.c.l.b16 %v3287
    %v3807 = vunpack.c.l.b16 %v3288
    %v3808 = vunpack.c.l.b16 %v3289
    %v3809 = vunpack.c.l.b16 %v3290
    %v3810 = vunpack.c.l.b16 %v3291
    %v3811 = vunpack.c.l.b16 %v3292
    %v3812 = vunpack.c.l.b16 %v3293
    %v3813 = vunpack.c.l.b16 %v3294
    %v3814 = vunpack.c.l.b16 %v3295
    %v3815 = vunpack.c.l.b16 %v3296
    %v3816 = vunpack.c.l.b16 %v3297
    %v3817 = vunpack.c.l.b16 %v3298
    %v3818 = vunpack.c.l.b16 %v3299
    %v3819 = vunpack.c.l.b16 %v3300
    %v3820 = vunpack.c.l.b16 %v3301
    %v3821 = vunpack.c.l.b16 %v3302
    %v3822 = vunpack.c.l.b16 %v3303
    %v3823 = vunpack.c.l.b16 %v3304
    %v3824 = vunpack.c.l.b16 %v3305
    %v3825 = vunpack.c.l.b16 %v3306
    %v3826 = vunpack.c.l.b16 %v3307
    %v3827 = vunpack.c.l.b16 %v3308
    %v3828 = vunpack.c.l.b16 %v3309
    %v3829 = vunpack.c.l.b16 %v3310
    %v3830 = vunpack.c.l.b16 %v3311
    %v3831 = vunpack.c.l.b16 %v3312
    %v3832 = vunpack.c.l.b16 %v3313
    %v3833 = vunpack.c.l.b16 %v3314
    %v3834 = vunpack.c.l.b16 %v3315
    %v3835 = vunpack.c.l.b16 %v3316
    %v3836 = vunpack.c.l.b16 %v3317
    %v3837 = vunpack.c.l.b16 %v3318
    %v3838 = vunpack.c.l.b16 %v3319
    %v3839 = vunpack.c.l.b16 %v3320
    %v3840 = vunpack.c.l.b16 %v3321
    %v3841 = vunpack.c.l.b16 %v3322
    %v3842 = vunpack.c.l.b16 %v3323
    %v3843 = vunpack.c.l.b16 %v3324
    %v3844 = vunpack.c.l.b16 %v3325
    %v3845 = vunpack.c.l.b16 %v3326
    %v3846 = vunpack.c.l.b16 %v3327
    %v3847 = vunpack.c.l.b16 %v3328
    %v3848 = vunpack.c.l.b16 %v3329
    %v3849 = vunpack.c.l.b16 %v3330
    %v3850 = vunpack.c.l.b16 %v3331
    %v3851 = vunpack.c.l.b16 %v3332
    %v3852 = vunpack.c.l.b16 %v3333
    %v3853 = vunpack.c.l.b16 %v3334
    %v3854 = vunpack.c.l.b16 %v3335
    %v3855 = vunpack.c.l.b16 %v3336
    %v3856 = vunpack.c.l.b16 %v3337
    %v3857 = vunpack.c.l.b16 %v3338
    %v3858 = vunpack.c.l.b16 %v3339
    %v3859 = vunpack.c.l.b16 %v3340
    %v3860 = vunpack.c.l.b16 %v3341
    %v3861 = vunpack.c.l.b16 %v3342
    %v3862 = vunpack.c.l.b16 %v3343
    %v3863 = vunpack.c.l.b16 %v3344
    %v3864 = vunpack.c.l.b16 %v3345
    %v3865 = vunpack.c.l.b16 %v3346
    %v3866 = vunpack.c.l.b16 %v3347
    %v3867 = vunpack.c.l.b16 %v3348
    %v3868 = vunpack.c.l.b16 %v3349
    %v3869 = vunpack.c.l.b16 %v3350
    %v3870 = vunpack.c.l.b16 %v3351
    %v3871 = vunpack.c.l.b16 %v3352
    %v3872 = vunpack.c.l.b16 %v3353
    %v3873 = vunpack.c.l.b16 %v3354
    %v3874 = vunpack.c.l.b16 %v3355
    %v3875 = vunpack.c.l.b16 %v3356
    %v3876 = vunpack.c.l.b16 %v3357
    %v3877 = vunpack.c.l.b16 %v3358
    %v3878 = vunpack.c.l.b16 %v3359
    %v3879 = vunpack.c.l.b16 %v3360
    %v3880 = vunpack.c.l.b16 %v3361
    %v3881 = vunpack.c.l.b16 %v3362
    %v3882 = vunpack.c.l.b16 %v3363
    %v3883 = vunpack.c.l.b16 %v3364
    %v3884 = vunpack.c.l.b16 %v3365
    %v3885 = vunpack.c.l.b16 %v3366
    %v3886 = vunpack.c.l.b16 %v3367
    %v3887 = vunpack.c.l.b16 %v3368
    %v3888 = vunpack.c.l.b16 %v3369
    %v3889 = vunpack.c.l.b16 %v3370
    %v3890 = vunpack.c.l.b16 %v3371
    %v3891 = vunpack.c.l.b16 %v3372
    %v3892 = vunpack.c.l.b16 %v3373
    %v3893 = vunpack.c.l.b16 %v3374
    %v3894 = vunpack.c.l.b16 %v3375
    %v3895 = vunpack.c.l.b16 %v3376
    %v3896 = vunpack.c.l.b16 %v3377
    %v3897 = vunpack.c.l.b16 %v3378
    %v3898 = vunpack.c.l.b16 %v3379
    %v3899 = vunpack.c.l.b16 %v3380
    %v3900 = vunpack.c.l.b16 %v3381
    %v3901 = vunpack.c.l.b16 %v3382
    %v3902 = vunpack.c.l.b16 %v3383
    %v3903 = vunpack.c.l.b16 %v3384
    %v3904 = vunpack.c.l.b16 %v3385
    %v3905 = vunpack.c.l.b16 %v3386
    %v3906 = vunpack.c.l.b16 %v3387
    %v3907 = vunpack.c.l.b16 %v3388
    %v3908 = vunpack.c.l.b16 %v3389
    %v3909 = vunpack.c.l.b16 %v3390
    %v3910 = vunpack.c.l.b16 %v3391
    %v3911 = vunpack.c.l.b16 %v3392
    %v3912 = vunpack.c.l.b16 %v3393
    %v3913 = vunpack.c.l.b16 %v3394
    %v3914 = vunpack.c.l.b16 %v3395
    %v3915 = vunpack.c.l.b16 %v3396
    %v3916 = vunpack.c.l.b16 %v3397
    %v3917 = vunpack.c.l.b16 %v3398
    %v3918 = vunpack.c.l.b16 %v3399
    %v3919 = vunpack.c.l.b16 %v3400
    %v3920 = vunpack.c.l.b16 %v3401
    %v3921 = vunpack.c.l.b16 %v3402
    %v3922 = vunpack.c.l.b16 %v3403
    %v3923 = vunpack.c.l.b16 %v3404
    %v3924 = vunpack.c.l.b16 %v3405
    %v3925 = vunpack.c.l.b16 %v3406
    %v3926 = vunpack.c.l.b16 %v3407
    %v3927 = vunpack.c.l.b16 %v3408
    %v3928 = vunpack.c.l.b16 %v3409
    %v3929 = vunpack.c.l.b16 %v3410
    %v3930 = vunpack.c.l.b16 %v3411
    %v3931 = vunpack.c.l.b16 %v3412
    %v3932 = vunpack.c.l.b16 %v3413
    %v3933 = vunpack.c.l.b16 %v3414
    %v3934 = vunpack.c.l.b16 %v3415
    %v3935 = vunpack.c.l.b16 %v3416
    %v3936 = vunpack.c.l.b16 %v3417
    %v3937 = vunpack.c.l.b16 %v3418
    %v3938 = vunpack.c.l.b16 %v3419
    %v3939 = vunpack.c.l.b16 %v3420
    %v3940 = vunpack.c.l.b16 %v3421
    %v3941 = vunpack.c.l.b16 %v3422
    %v3942 = vunpack.c.l.b16 %v3423
    %v3943 = vunpack.c.l.b16 %v3424
    %v3944 = vunpack.c.l.b16 %v3425
    %v3945 = vunpack.c.l.b16 %v3426
    %v3946 = vunpack.c.l.b16 %v3427
    %v3947 = vunpack.c.l.b16 %v3428
    %v3948 = vunpack.c.l.b16 %v3429
    %v3949 = vunpack.c.l.b16 %v3430
    %v3950 = vunpack.c.l.b16 %v3431
    %v3951 = vpack.c.b16 %v3696, %v3695
    %v3952 = vpack.c.b16 %v3698, %v3697
    %v3953 = vpack.c.b16 %v3700, %v3699
    %v3954 = vpack.c.b16 %v3702, %v3701
    %v3955 = vpack.c.b16 %v3704, %v3703
    %v3956 = vpack.c.b16 %v3706, %v3705
    %v3957 = vpack.c.b16 %v3708, %v3707
    %v3958 = vpack.c.b16 %v3710, %v3709
    %v3959 = vpack.c.b16 %v3712, %v3711
    %v3960 = vpack.c.b16 %v3714, %v3713
    %v3961 = vpack.c.b16 %v3716, %v3715
    %v3962 = vpack.c.b16 %v3718, %v3717
    %v3963 = vpack.c.b16 %v3720, %v3719
    %v3964 = vpack.c.b16 %v3722, %v3721
    %v3965 = vpack.c.b16 %v3724, %v3723
    %v3966 = vpack.c.b16 %v3726, %v3725
    %v3967 = vpack.c.b16 %v3728, %v3727
    %v3968 = vpack.c.b16 %v3730, %v3729
    %v3969 = vpack.c.b16 %v3732, %v3731
    %v3970 = vpack.c.b16 %v3734, %v3733
    %v3971 = vpack.c.b16 %v3736, %v3735
    %v3972 = vpack.c.b16 %v3738, %v3737
    %v3973 = vpack.c.b16 %v3740, %v3739
    %v3974 = vpack.c.b16 %v3742, %v3741
    %v3975 = vpack.c.b16 %v3744, %v3743
    %v3976 = vpack.c.b16 %v3746, %v3745
    %v3977 = vpack.c.b16 %v3748, %v3747
    %v3978 = vpack.c.b16 %v3750, %v3749
    %v3979 = vpack.c.b16 %v3752, %v3751
    %v3980 = vpack.c.b16 %v3754, %v3753
    %v3981 = vpack.c.b16 %v3756, %v3755
    %v3982 = vpack.c.b16 %v3758, %v3757
    %v3983 = vpack.c.b16 %v3760, %v3759
    %v3984 = vpack.c.b16 %v3762, %v3761
    %v3985 = vpack.c.b16 %v3764, %v3763
    %v3986 = vpack.c.b16 %v3766, %v3765
    %v3987 = vpack.c.b16 %v3768, %v3767
    %v3988 = vpack.c.b16 %v3770, %v3769
    %v3989 = vpack.c.b16 %v3772, %v3771
    %v3990 = vpack.c.b16 %v3774, %v3773
    %v3991 = vpack.c.b16 %v3776, %v3775
    %v3992 = vpack.c.b16 %v3778, %v3777
    %v3993 = vpack.c.b16 %v3780, %v3779
    %v3994 = vpack.c.b16 %v3782, %v3781
    %v3995 = vpack.c.b16 %v3784, %v3783
    %v3996 = vpack.c.b16 %v3786, %v3785
    %v3997 = vpack.c.b16 %v3788, %v3787
    %v3998 = vpack.c.b16 %v3790, %v3789
    %v3999 = vpack.c.b16 %v3792, %v3791
    %v4000 = vpack.c.b16 %v3794, %v3793
    %v4001 = vpack.c.b16 %v3796, %v3795
    %v4002 = vpack.c.b16 %v3798, %v3797
    %v4003 = vpack.c.b16 %v3800, %v3799
    %v4004 = vpack.c.b16 %v3802, %v3801
    %v4005 = vpack.c.b16 %v3804, %v3803
    %v4006 = vpack.c.b16 %v3806, %v3805
    %v4007 = vpack.c.b16 %v3808, %v3807
    %v4008 = vpack.c.b16 %v3810, %v3809
    %v4009 = vpack.c.b16 %v3812, %v3811
    %v4010 = vpack.c.b16 %v3814, %v3813
    %v4011 = vpack.c.b16 %v3816, %v3815
    %v4012 = vpack.c.b16 %v3818, %v3817
    %v4013 = vpack.c.b16 %v3820, %v3819
    %v4014 = vpack.c.b16 %v3822, %v3821
    %v4015 = vpack.c.b16 %v3824, %v3823
    %v4016 = vpack.c.b16 %v3826, %v3825
    %v4017 = vpack.c.b16 %v3828, %v3827
    %v4018 = vpack.c.b16 %v3830, %v3829
    %v4019 = vpack.c.b16 %v3832, %v3831
    %v4020 = vpack.c.b16 %v3834, %v3833
    %v4021 = vpack.c.b16 %v3836, %v3835
    %v4022 = vpack.c.b16 %v3838, %v3837
    %v4023 = vpack.c.b16 %v3840, %v3839
    %v4024 = vpack.c.b16 %v3842, %v3841
    %v4025 = vpack.c.b16 %v3844, %v3843
    %v4026 = vpack.c.b16 %v3846, %v3845
    %v4027 = vpack.c.b16 %v3848, %v3847
    %v4028 = vpack.c.b16 %v3850, %v3849
    %v4029 = vpack.c.b16 %v3852, %v3851
    %v4030 = vpack.c.b16 %v3854, %v3853
    %v4031 = vpack.c.b16 %v3856, %v3855
    %v4032 = vpack.c.b16 %v3858, %v3857
    %v4033 = vpack.c.b16 %v3860, %v3859
    %v4034 = vpack.c.b16 %v3862, %v3861
    %v4035 = vpack.c.b16 %v3864, %v3863
    %v4036 = vpack.c.b16 %v3866, %v3865
    %v4037 = vpack.c.b16 %v3868, %v3867
    %v4038 = vpack.c.b16 %v3870, %v3869
    %v4039 = vpack.c.b16 %v3872, %v3871
    %v4040 = vpack.c.b16 %v3874, %v3873
    %v4041 = vpack.c.b16 %v3876, %v3875
    %v4042 = vpack.c.b16 %v3878, %v3877
    %v4043 = vpack.c.b16 %v3880, %v3879
    %v4044 = vpack.c.b16 %v3882, %v3881
    %v4045 = vpack.c.b16 %v3884, %v3883
    %v4046 = vpack.c.b16 %v3886, %v3885
    %v4047 = vpack.c.b16 %v3888, %v3887
    %v4048 = vpack.c.b16 %v3890, %v3889
    %v4049 = vpack.c.b16 %v3892, %v3891
    %v4050 = vpack.c.b16 %v3894, %v3893
    %v4051 = vpack.c.b16 %v3896, %v3895
    %v4052 = vpack.c.b16 %v3898, %v3897
    %v4053 = vpack.c.b16 %v3900, %v3899
    %v4054 = vpack.c.b16 %v3902, %v3901
    %v4055 = vpack.c.b16 %v3904, %v3903
    %v4056 = vpack.c.b16 %v3906, %v3905
    %v4057 = vpack.c.b16 %v3908, %v3907
    %v4058 = vpack.c.b16 %v3910, %v3909
    %v4059 = vpack.c.b16 %v3912, %v3911
    %v4060 = vpack.c.b16 %v3914, %v3913
    %v4061 = vpack.c.b16 %v3916, %v3915
    %v4062 = vpack.c.b16 %v3918, %v3917
    %v4063 = vpack.c.b16 %v3920, %v3919
    %v4064 = vpack.c.b16 %v3922, %v3921
    %v4065 = vpack.c.b16 %v3924, %v3923
    %v4066 = vpack.c.b16 %v3926, %v3925
    %v4067 = vpack.c.b16 %v3928, %v3927
    %v4068 = vpack.c.b16 %v3930, %v3929
    %v4069 = vpack.c.b16 %v3932, %v3931
    %v4070 = vpack.c.b16 %v3934, %v3933
    %v4071 = vpack.c.b16 %v3936, %v3935
    %v4072 = vpack.c.b16 %v3938, %v3937
    %v4073 = vpack.c.b16 %v3940, %v3939
    %v4074 = vpack.c.b16 %v3942, %v3941
    %v4075 = vpack.c.b16 %v3944, %v3943
    %v4076 = vpack.c.b16 %v3946, %v3945
    %v4077 = vpack.c.b16 %v3948, %v3947
    %v4078 = vpack.c.b16 %v3950, %v3949
    %4207 = vmatprep.subr.bf16.mxu0 0
    %4208 = vmatpush1.bf16.msra.mxu0 %v3951
    %4209 = vmatprep.subr.bf16.mxu0 0
    %4210 = vmatpush1.bf16.msra.mxu0 %v3952
    %4211 = vmatprep.subr.bf16.mxu0 0
    %4212 = vmatpush1.bf16.msra.mxu0 %v3953
    %4213 = vmatprep.subr.bf16.mxu0 0
    %4214 = vmatpush1.bf16.msra.mxu0 %v3954
    %4215 = vmatprep.subr.bf16.mxu0 0
    %4216 = vmatpush1.bf16.msra.mxu0 %v3955
    %4217 = vmatprep.subr.bf16.mxu0 0
    %4218 = vmatpush1.bf16.msra.mxu0 %v3956
    %4219 = vmatprep.subr.bf16.mxu0 0
    %4220 = vmatpush1.bf16.msra.mxu0 %v3957
    %4221 = vmatprep.subr.bf16.mxu0 0
    %4222 = vmatpush1.bf16.msra.mxu0 %v3958
    %4223 = vmatprep.subr.bf16.mxu0 0
    %4224 = vmatpush1.bf16.msra.mxu0 %v3959
    %4225 = vmatprep.subr.bf16.mxu0 0
    %4226 = vmatpush1.bf16.msra.mxu0 %v3960
    %4227 = vmatprep.subr.bf16.mxu0 0
    %4228 = vmatpush1.bf16.msra.mxu0 %v3961
    %4229 = vmatprep.subr.bf16.mxu0 0
    %4230 = vmatpush1.bf16.msra.mxu0 %v3962
    %4231 = vmatprep.subr.bf16.mxu0 0
    %4232 = vmatpush1.bf16.msra.mxu0 %v3963
    %4233 = vmatprep.subr.bf16.mxu0 0
    %4234 = vmatpush1.bf16.msra.mxu0 %v3964
    %4235 = vmatprep.subr.bf16.mxu0 0
    %4236 = vmatpush1.bf16.msra.mxu0 %v3965
    %4237 = vmatprep.subr.bf16.mxu0 0
    %4238 = vmatpush1.bf16.msra.mxu0 %v3966
    %4239 = vmatprep.mubr.bf16.mxu0 %v3161
    %4240 = vmatmul.mubr.bf16.gmra.mrb[0].mxu0 %v3160
    %v4241 = vpop.f32.mrb[0].mxu0
    %v4242 = vadd.f32 %v3437, %v4241
    %v4243 = vpop.f32.mrb[0].mxu0
    %v4244 = vpop.f32.mrb[0].mxu0
    %v4245 = vadd.f32 %v3437, %v4244
    %v4246 = vpop.f32.mrb[0].mxu0
    %4247 = vdwg.mxu0
    %4248 = vmatprep.subr.bf16.mxu0 0
    %4249 = vmatpush1.bf16.msra.mxu0 %v3967
    %4250 = vmatprep.subr.bf16.mxu0 0
    %4251 = vmatpush1.bf16.msra.mxu0 %v3968
    %4252 = vmatprep.subr.bf16.mxu0 0
    %4253 = vmatpush1.bf16.msra.mxu0 %v3969
    %4254 = vmatprep.subr.bf16.mxu0 0
    %4255 = vmatpush1.bf16.msra.mxu0 %v3970
    %4256 = vmatprep.subr.bf16.mxu0 0
    %4257 = vmatpush1.bf16.msra.mxu0 %v3971
    %4258 = vmatprep.subr.bf16.mxu0 0
    %4259 = vmatpush1.bf16.msra.mxu0 %v3972
    %4260 = vmatprep.subr.bf16.mxu0 0
    %4261 = vmatpush1.bf16.msra.mxu0 %v3973
    %4262 = vmatprep.subr.bf16.mxu0 0
    %4263 = vmatpush1.bf16.msra.mxu0 %v3974
    %4264 = vmatprep.subr.bf16.mxu0 0
    %4265 = vmatpush1.bf16.msra.mxu0 %v3975
    %4266 = vmatprep.subr.bf16.mxu0 0
    %4267 = vmatpush1.bf16.msra.mxu0 %v3976
    %4268 = vmatprep.subr.bf16.mxu0 0
    %4269 = vmatpush1.bf16.msra.mxu0 %v3977
    %4270 = vmatprep.subr.bf16.mxu0 0
    %4271 = vmatpush1.bf16.msra.mxu0 %v3978
    %4272 = vmatprep.subr.bf16.mxu0 0
    %4273 = vmatpush1.bf16.msra.mxu0 %v3979
    %4274 = vmatprep.subr.bf16.mxu0 0
    %4275 = vmatpush1.bf16.msra.mxu0 %v3980
    %4276 = vmatprep.subr.bf16.mxu0 0
    %4277 = vmatpush1.bf16.msra.mxu0 %v3981
    %4278 = vmatprep.subr.bf16.mxu0 0
    %4279 = vmatpush1.bf16.msra.mxu0 %v3982
    %4280 = vmatprep.mubr.bf16.mxu0 %v3163
    %4281 = vmatmul.mubr.bf16.gmra.mrb[0].mxu0 %v3162
    %v4282 = vpop.f32.mrb[0].mxu0
    %v4283 = vadd.f32 %v4242, %v4282
    %v4284 = vpop.f32.mrb[0].mxu0
    %v4285 = vpop.f32.mrb[0].mxu0
    %v4286 = vadd.f32 %v4245, %v4285
    %v4287 = vpop.f32.mrb[0].mxu0
    %4288 = vdwg.mxu0
    %4289 = vmatprep.subr.bf16.mxu0 0
    %4290 = vmatpush1.bf16.msra.mxu0 %v3983
    %4291 = vmatprep.subr.bf16.mxu0 0
    %4292 = vmatpush1.bf16.msra.mxu0 %v3984
    %4293 = vmatprep.subr.bf16.mxu0 0
    %4294 = vmatpush1.bf16.msra.mxu0 %v3985
    %4295 = vmatprep.subr.bf16.mxu0 0
    %4296 = vmatpush1.bf16.msra.mxu0 %v3986
    %4297 = vmatprep.subr.bf16.mxu0 0
    %4298 = vmatpush1.bf16.msra.mxu0 %v3987
    %4299 = vmatprep.subr.bf16.mxu0 0
    %4300 = vmatpush1.bf16.msra.mxu0 %v3988
    %4301 = vmatprep.subr.bf16.mxu0 0
    %4302 = vmatpush1.bf16.msra.mxu0 %v3989
    %4303 = vmatprep.subr.bf16.mxu0 0
    %4304 = vmatpush1.bf16.msra.mxu0 %v3990
    %4305 = vmatprep.subr.bf16.mxu0 0
    %4306 = vmatpush1.bf16.msra.mxu0 %v3991
    %4307 = vmatprep.subr.bf16.mxu0 0
    %4308 = vmatpush1.bf16.msra.mxu0 %v3992
    %4309 = vmatprep.subr.bf16.mxu0 0
    %4310 = vmatpush1.bf16.msra.mxu0 %v3993
    %4311 = vmatprep.subr.bf16.mxu0 0
    %4312 = vmatpush1.bf16.msra.mxu0 %v3994
    %4313 = vmatprep.subr.bf16.mxu0 0
    %4314 = vmatpush1.bf16.msra.mxu0 %v3995
    %4315 = vmatprep.subr.bf16.mxu0 0
    %4316 = vmatpush1.bf16.msra.mxu0 %v3996
    %4317 = vmatprep.subr.bf16.mxu0 0
    %4318 = vmatpush1.bf16.msra.mxu0 %v3997
    %4319 = vmatprep.subr.bf16.mxu0 0
    %4320 = vmatpush1.bf16.msra.mxu0 %v3998
    %4321 = vmatprep.mubr.bf16.mxu0 %v3165
    %4322 = vmatmul.mubr.bf16.gmra.mrb[0].mxu0 %v3164
    %v4323 = vpop.f32.mrb[0].mxu0
    %v4324 = vadd.f32 %v4283, %v4323
    %v4325 = vpop.f32.mrb[0].mxu0
    %v4326 = vpop.f32.mrb[0].mxu0
    %v4327 = vadd.f32 %v4286, %v4326
    %v4328 = vpop.f32.mrb[0].mxu0
    %4329 = vdwg.mxu0
    %4330 = vmatprep.subr.bf16.mxu0 0
    %4331 = vmatpush1.bf16.msra.mxu0 %v3999
    %4332 = vmatprep.subr.bf16.mxu0 0
    %4333 = vmatpush1.bf16.msra.mxu0 %v4000
    %4334 = vmatprep.subr.bf16.mxu0 0
    %4335 = vmatpush1.bf16.msra.mxu0 %v4001
    %4336 = vmatprep.subr.bf16.mxu0 0
    %4337 = vmatpush1.bf16.msra.mxu0 %v4002
    %4338 = vmatprep.subr.bf16.mxu0 0
    %4339 = vmatpush1.bf16.msra.mxu0 %v4003
    %4340 = vmatprep.subr.bf16.mxu0 0
    %4341 = vmatpush1.bf16.msra.mxu0 %v4004
    %4342 = vmatprep.subr.bf16.mxu0 0
    %4343 = vmatpush1.bf16.msra.mxu0 %v4005
    %4344 = vmatprep.subr.bf16.mxu0 0
    %4345 = vmatpush1.bf16.msra.mxu0 %v4006
    %4346 = vmatprep.subr.bf16.mxu0 0
    %4347 = vmatpush1.bf16.msra.mxu0 %v4007
    %4348 = vmatprep.subr.bf16.mxu0 0
    %4349 = vmatpush1.bf16.msra.mxu0 %v4008
    %4350 = vmatprep.subr.bf16.mxu0 0
    %4351 = vmatpush1.bf16.msra.mxu0 %v4009
    %4352 = vmatprep.subr.bf16.mxu0 0
    %4353 = vmatpush1.bf16.msra.mxu0 %v4010
    %4354 = vmatprep.subr.bf16.mxu0 0
    %4355 = vmatpush1.bf16.msra.mxu0 %v4011
    %4356 = vmatprep.subr.bf16.mxu0 0
    %4357 = vmatpush1.bf16.msra.mxu0 %v4012
    %4358 = vmatprep.subr.bf16.mxu0 0
    %4359 = vmatpush1.bf16.msra.mxu0 %v4013
    %4360 = vmatprep.subr.bf16.mxu0 0
    %4361 = vmatpush1.bf16.msra.mxu0 %v4014
    %4362 = vmatprep.mubr.bf16.mxu0 %v3167
    %4363 = vmatmul.mubr.bf16.gmra.mrb[0].mxu0 %v3166
    %v4364 = vpop.f32.mrb[0].mxu0
    %v4365 = vadd.f32 %v4324, %v4364
    %v4366 = vpop.f32.mrb[0].mxu0
    %v4367 = vpop.f32.mrb[0].mxu0
    %v4368 = vadd.f32 %v4327, %v4367
    %v4369 = vpop.f32.mrb[0].mxu0
    %4370 = vdwg.mxu0
    %4371 = vmatprep.subr.bf16.mxu0 0
    %4372 = vmatpush1.bf16.msra.mxu0 %v4015
    %4373 = vmatprep.subr.bf16.mxu0 0
    %4374 = vmatpush1.bf16.msra.mxu0 %v4016
    %4375 = vmatprep.subr.bf16.mxu0 0
    %4376 = vmatpush1.bf16.msra.mxu0 %v4017
    %4377 = vmatprep.subr.bf16.mxu0 0
    %4378 = vmatpush1.bf16.msra.mxu0 %v4018
    %4379 = vmatprep.subr.bf16.mxu0 0
    %4380 = vmatpush1.bf16.msra.mxu0 %v4019
    %4381 = vmatprep.subr.bf16.mxu0 0
    %4382 = vmatpush1.bf16.msra.mxu0 %v4020
    %4383 = vmatprep.subr.bf16.mxu0 0
    %4384 = vmatpush1.bf16.msra.mxu0 %v4021
    %4385 = vmatprep.subr.bf16.mxu0 0
    %4386 = vmatpush1.bf16.msra.mxu0 %v4022
    %4387 = vmatprep.subr.bf16.mxu0 0
    %4388 = vmatpush1.bf16.msra.mxu0 %v4023
    %4389 = vmatprep.subr.bf16.mxu0 0
    %4390 = vmatpush1.bf16.msra.mxu0 %v4024
    %4391 = vmatprep.subr.bf16.mxu0 0
    %4392 = vmatpush1.bf16.msra.mxu0 %v4025
    %4393 = vmatprep.subr.bf16.mxu0 0
    %4394 = vmatpush1.bf16.msra.mxu0 %v4026
    %4395 = vmatprep.subr.bf16.mxu0 0
    %4396 = vmatpush1.bf16.msra.mxu0 %v4027
    %4397 = vmatprep.subr.bf16.mxu0 0
    %4398 = vmatpush1.bf16.msra.mxu0 %v4028
    %4399 = vmatprep.subr.bf16.mxu0 0
    %4400 = vmatpush1.bf16.msra.mxu0 %v4029
    %4401 = vmatprep.subr.bf16.mxu0 0
    %4402 = vmatpush1.bf16.msra.mxu0 %v4030
    %4403 = vmatprep.mubr.bf16.mxu0 %v3169
    %4404 = vmatmul.mubr.bf16.gmra.mrb[0].mxu0 %v3168
    %v4405 = vpop.f32.mrb[0].mxu0
    %v4406 = vadd.f32 %v4365, %v4405
    %v4407 = vpop.f32.mrb[0].mxu0
    %v4408 = vpop.f32.mrb[0].mxu0
    %v4409 = vadd.f32 %v4368, %v4408
    %v4410 = vpop.f32.mrb[0].mxu0
    %4411 = vdwg.mxu0
    %4412 = vmatprep.subr.bf16.mxu0 0
    %4413 = vmatpush1.bf16.msra.mxu0 %v4031
    %4414 = vmatprep.subr.bf16.mxu0 0
    %4415 = vmatpush1.bf16.msra.mxu0 %v4032
    %4416 = vmatprep.subr.bf16.mxu0 0
    %4417 = vmatpush1.bf16.msra.mxu0 %v4033
    %4418 = vmatprep.subr.bf16.mxu0 0
    %4419 = vmatpush1.bf16.msra.mxu0 %v4034
    %4420 = vmatprep.subr.bf16.mxu0 0
    %4421 = vmatpush1.bf16.msra.mxu0 %v4035
    %4422 = vmatprep.subr.bf16.mxu0 0
    %4423 = vmatpush1.bf16.msra.mxu0 %v4036
    %4424 = vmatprep.subr.bf16.mxu0 0
    %4425 = vmatpush1.bf16.msra.mxu0 %v4037
    %4426 = vmatprep.subr.bf16.mxu0 0
    %4427 = vmatpush1.bf16.msra.mxu0 %v4038
    %4428 = vmatprep.subr.bf16.mxu0 0
    %4429 = vmatpush1.bf16.msra.mxu0 %v4039
    %4430 = vmatprep.subr.bf16.mxu0 0
    %4431 = vmatpush1.bf16.msra.mxu0 %v4040
    %4432 = vmatprep.subr.bf16.mxu0 0
    %4433 = vmatpush1.bf16.msra.mxu0 %v4041
    %4434 = vmatprep.subr.bf16.mxu0 0
    %4435 = vmatpush1.bf16.msra.mxu0 %v4042
    %4436 = vmatprep.subr.bf16.mxu0 0
    %4437 = vmatpush1.bf16.msra.mxu0 %v4043
    %4438 = vmatprep.subr.bf16.mxu0 0
    %4439 = vmatpush1.bf16.msra.mxu0 %v4044
    %4440 = vmatprep.subr.bf16.mxu0 0
    %4441 = vmatpush1.bf16.msra.mxu0 %v4045
    %4442 = vmatprep.subr.bf16.mxu0 0
    %4443 = vmatpush1.bf16.msra.mxu0 %v4046
    %4444 = vmatprep.mubr.bf16.mxu0 %v3171
    %4445 = vmatmul.mubr.bf16.gmra.mrb[0].mxu0 %v3170
    %v4446 = vpop.f32.mrb[0].mxu0
    %v4447 = vadd.f32 %v4406, %v4446
    %v4448 = vpop.f32.mrb[0].mxu0
    %v4449 = vpop.f32.mrb[0].mxu0
    %v4450 = vadd.f32 %v4409, %v4449
    %v4451 = vpop.f32.mrb[0].mxu0
    %4452 = vdwg.mxu0
    %4453 = vmatprep.subr.bf16.mxu0 0
    %4454 = vmatpush1.bf16.msra.mxu0 %v4047
    %4455 = vmatprep.subr.bf16.mxu0 0
    %4456 = vmatpush1.bf16.msra.mxu0 %v4048
    %4457 = vmatprep.subr.bf16.mxu0 0
    %4458 = vmatpush1.bf16.msra.mxu0 %v4049
    %4459 = vmatprep.subr.bf16.mxu0 0
    %4460 = vmatpush1.bf16.msra.mxu0 %v4050
    %4461 = vmatprep.subr.bf16.mxu0 0
    %4462 = vmatpush1.bf16.msra.mxu0 %v4051
    %4463 = vmatprep.subr.bf16.mxu0 0
    %4464 = vmatpush1.bf16.msra.mxu0 %v4052
    %4465 = vmatprep.subr.bf16.mxu0 0
    %4466 = vmatpush1.bf16.msra.mxu0 %v4053
    %4467 = vmatprep.subr.bf16.mxu0 0
    %4468 = vmatpush1.bf16.msra.mxu0 %v4054
    %4469 = vmatprep.subr.bf16.mxu0 0
    %4470 = vmatpush1.bf16.msra.mxu0 %v4055
    %4471 = vmatprep.subr.bf16.mxu0 0
    %4472 = vmatpush1.bf16.msra.mxu0 %v4056
    %4473 = vmatprep.subr.bf16.mxu0 0
    %4474 = vmatpush1.bf16.msra.mxu0 %v4057
    %4475 = vmatprep.subr.bf16.mxu0 0
    %4476 = vmatpush1.bf16.msra.mxu0 %v4058
    %4477 = vmatprep.subr.bf16.mxu0 0
    %4478 = vmatpush1.bf16.msra.mxu0 %v4059
    %4479 = vmatprep.subr.bf16.mxu0 0
    %4480 = vmatpush1.bf16.msra.mxu0 %v4060
    %4481 = vmatprep.subr.bf16.mxu0 0
    %4482 = vmatpush1.bf16.msra.mxu0 %v4061
    %4483 = vmatprep.subr.bf16.mxu0 0
    %4484 = vmatpush1.bf16.msra.mxu0 %v4062
    %4485 = vmatprep.mubr.bf16.mxu0 %v3173
    %4486 = vmatmul.mubr.bf16.gmra.mrb[0].mxu0 %v3172
    %v4487 = vpop.f32.mrb[0].mxu0
    %v4488 = vadd.f32 %v4447, %v4487
    %v4489 = vpop.f32.mrb[0].mxu0
    %v4490 = vpop.f32.mrb[0].mxu0
    %v4491 = vadd.f32 %v4450, %v4490
    %v4492 = vpop.f32.mrb[0].mxu0
    %4493 = vdwg.mxu0
    %4494 = vmatprep.subr.bf16.mxu0 0
    %4495 = vmatpush1.bf16.msra.mxu0 %v4063
    %4496 = vmatprep.subr.bf16.mxu0 0
    %4497 = vmatpush1.bf16.msra.mxu0 %v4064
    %4498 = vmatprep.subr.bf16.mxu0 0
    %4499 = vmatpush1.bf16.msra.mxu0 %v4065
    %4500 = vmatprep.subr.bf16.mxu0 0
    %4501 = vmatpush1.bf16.msra.mxu0 %v4066
    %4502 = vmatprep.subr.bf16.mxu0 0
    %4503 = vmatpush1.bf16.msra.mxu0 %v4067
    %4504 = vmatprep.subr.bf16.mxu0 0
    %4505 = vmatpush1.bf16.msra.mxu0 %v4068
    %4506 = vmatprep.subr.bf16.mxu0 0
    %4507 = vmatpush1.bf16.msra.mxu0 %v4069
    %4508 = vmatprep.subr.bf16.mxu0 0
    %4509 = vmatpush1.bf16.msra.mxu0 %v4070
    %4510 = vmatprep.subr.bf16.mxu0 0
    %4511 = vmatpush1.bf16.msra.mxu0 %v4071
    %4512 = vmatprep.subr.bf16.mxu0 0
    %4513 = vmatpush1.bf16.msra.mxu0 %v4072
    %4514 = vmatprep.subr.bf16.mxu0 0
    %4515 = vmatpush1.bf16.msra.mxu0 %v4073
    %4516 = vmatprep.subr.bf16.mxu0 0
    %4517 = vmatpush1.bf16.msra.mxu0 %v4074
    %4518 = vmatprep.subr.bf16.mxu0 0
    %4519 = vmatpush1.bf16.msra.mxu0 %v4075
    %4520 = vmatprep.subr.bf16.mxu0 0
    %4521 = vmatpush1.bf16.msra.mxu0 %v4076
    %4522 = vmatprep.subr.bf16.mxu0 0
    %4523 = vmatpush1.bf16.msra.mxu0 %v4077
    %4524 = vmatprep.subr.bf16.mxu0 0
    %4525 = vmatpush1.bf16.msra.mxu0 %v4078
    %4526 = vmatprep.mubr.bf16.mxu0 %v3175
    %4527 = vmatmul.mubr.bf16.gmra.mrb[0].mxu0 %v3174
    %v4528 = vpop.f32.mrb[0].mxu0
    %v4529 = vadd.f32 %v4488, %v4528
    %v4530 = vpop.f32.mrb[0].mxu0
    %v4531 = vpop.f32.mrb[0].mxu0
    %v4532 = vadd.f32 %v4491, %v4531
    %v4533 = vpop.f32.mrb[0].mxu0
    %4534 = vdwg.mxu0
    %v4535 = vadd.f32 %v2502, %v4529
    %v4536 = vadd.f32 %v2503, %v4532
    %v4537 = vld [vmem:[%s41] sm:$0x1]
    %v4538 = vld [vmem:[%s43] sm:$0x1]
    %v4539 = vsel %vm157, %v4535, 0.0
    %4540 = vadd.xlane.f32.xlu0 %v4539
    %v4541 = vpop.xlane.xlu0 %4540
    %v4542 = vsel %vm157, %v4536, 0.0
    %4543 = vadd.xlane.f32.xlu0 %v4542
    %v4544 = vpop.xlane.xlu0 %4543
    %v4545 = vmul.f32 %v4541, %v1297
    %v4546 = vmul.f32 %v4544, %v1297
    %v4547 = vsub.f32 %v4535, %v4545
    %v4548 = vsub.f32 %v4536, %v4546
    %v4549 = vmul.f32 %v4547, %v4547
    %v4550 = vmul.f32 %v4548, %v4548
    %v4551 = vsel %vm157, %v4549, 0.0
    %4552 = vadd.xlane.f32.xlu0 %v4551
    %v4553 = vpop.xlane.xlu0 %4552
    %v4554 = vsel %vm157, %v4550, 0.0
    %4555 = vadd.xlane.f32.xlu0 %v4554
    %v4556 = vpop.xlane.xlu0 %4555
    %v4557 = vmul.f32 %v4553, %v1297
    %v4558 = vmul.f32 %v4556, %v1297
    %v4559 = vadd.f32 %v4557, 1e-05
    %v4560 = vadd.f32 %v4558, 1e-05
    %v4561 = vrsqrt.pop %v4559
    %v4562 = vrsqrt.pop %v4560
    %v4563 = vmul.f32 %v4547, %v4561
    %v4564 = vmul.f32 %v4548, %v4562
    %v4566 = vlaneseq
    %v4567 = vshrl.u32 %v4566, 7
    %v4568 = vsub.s32 0, %v4567
    %v4569 = vrot.slane %v4537, %v4568
    %v4571 = vmul.f32 %v4563, %v4569
    %v4572 = vmul.f32 %v4564, %v4569
    %v4574 = vlaneseq
    %v4575 = vshrl.u32 %v4574, 7
    %v4576 = vsub.s32 0, %v4575
    %v4577 = vrot.slane %v4538, %v4576
    %v4579 = vadd.f32 %v4571, %v4577
    %v4580 = vadd.f32 %v4572, %v4577
    %v4581 = vpack.c.bf16 %v4580, %v4579
    %s4582 = scalar_lea.vmem %s13, 16
    %v4583 = vld [vmem:[%s4582] sm:$0xf]
    %v4584 = vld [vmem:[%s4582 + $0x4] sm:$0xf]
    %v4585 = vld [vmem:[%s4582 + $0x8] sm:$0xf]
    %v4586 = vld [vmem:[%s4582 + $0xc] sm:$0xf]
    %s4587 = scalar_lea.vmem %s15, 1
    %v4588 = vld [vmem:[%s4587] sm:$0x1]
    %v4590 = vlaneseq
    %v4591 = vshrl.u32 %v4590, 7
    %v4592 = vsub.s32 0, %v4591
    %v4593 = vrot.slane %v4588, %v4592
    %v4599 = vunpack.c.l.b16 %v4583
    %v4600 = vunpack.c.l.b16 %v4584
    %v4601 = vunpack.c.l.b16 %v4585
    %v4602 = vunpack.c.l.b16 %v4586
    %v4603 = vpack.c.b16 %v4600, %v4599
    %v4604 = vpack.c.b16 %v4602, %v4601
    %v4608 = vsel %vm157, %v4581, 0
    %4610 = vmatprep.subr.bf16.mxu0 0
    %4611 = vmatpush1.bf16.msra.mxu0 %v4603
    %4612 = vmatprep.subr.bf16.mxu0 0
    %4613 = vmatpush1.bf16.msra.mxu0 %v4604
    %4614 = vmatprep.subr.bf16.mxu0 0
    %4615 = vmatpush1.bf16.msra.mxu0 0
    %4616 = vmatprep.subr.bf16.mxu0 0
    %4617 = vmatpush1.bf16.msra.mxu0 0
    %4618 = vmatprep.subr.bf16.mxu0 0
    %4619 = vmatpush1.bf16.msra.mxu0 0
    %4620 = vmatprep.subr.bf16.mxu0 0
    %4621 = vmatpush1.bf16.msra.mxu0 0
    %4622 = vmatprep.subr.bf16.mxu0 0
    %4623 = vmatpush1.bf16.msra.mxu0 0
    %4624 = vmatprep.subr.bf16.mxu0 0
    %4625 = vmatpush1.bf16.msra.mxu0 0
    %4626 = vmatprep.subr.bf16.mxu0 0
    %4627 = vmatpush1.bf16.msra.mxu0 0
    %4628 = vmatprep.subr.bf16.mxu0 0
    %4629 = vmatpush1.bf16.msra.mxu0 0
    %4630 = vmatprep.subr.bf16.mxu0 0
    %4631 = vmatpush1.bf16.msra.mxu0 0
    %4632 = vmatprep.subr.bf16.mxu0 0
    %4633 = vmatpush1.bf16.msra.mxu0 0
    %4634 = vmatprep.subr.bf16.mxu0 0
    %4635 = vmatpush1.bf16.msra.mxu0 0
    %4636 = vmatprep.subr.bf16.mxu0 0
    %4637 = vmatpush1.bf16.msra.mxu0 0
    %4638 = vmatprep.subr.bf16.mxu0 0
    %4639 = vmatpush1.bf16.msra.mxu0 0
    %4640 = vmatprep.subr.bf16.mxu0 0
    %4641 = vmatpush1.bf16.msra.mxu0 0
    %4642 = vmatprep.mubr.bf16.mxu0 0
    %4643 = vmatmul.mubr.bf16.gmra.mrb[0].mxu0 %v4608
    %v4644 = vpop.f32.mrb[0].mxu0
    %v4645 = vadd.f32 %v4593, %v4644
    %v4646 = vpop.f32.mrb[0].mxu0
    %v4647 = vpop.f32.mrb[0].mxu0
    %v4648 = vadd.f32 %v4593, %v4647
    %v4649 = vpop.f32.mrb[0].mxu0
    %4650 = vdwg.mxu0
    %s4651 = scalar_lea.vmem %s17, 16
    %v4652 = vld [vmem:[%s4651] sm:$0xf]
    %v4653 = vld [vmem:[%s4651 + $0x4] sm:$0xf]
    %v4654 = vld [vmem:[%s4651 + $0x8] sm:$0xf]
    %v4655 = vld [vmem:[%s4651 + $0xc] sm:$0xf]
    %s4656 = scalar_lea.vmem %s19, 1
    %v4657 = vld [vmem:[%s4656] sm:$0x1]
    %v4658 = vpack.c.bf16 %v4645, %v4645
    %v4659 = vpack.c.bf16 %v4648, %v4648
    %4661 = vrot.lane.b32.xlu0 %v4658, 96
    %v4662 = vpop.permute.xlu0 %4661
    %v4664 = vsel %vm299, %v4658, 0
    %v4667 = vsel %vm299, %v4662, 0
    %4669 = vmatprep.subr.bf16.mxu0 0
    %4670 = vmatpush1.bf16.xpose.msra.mxu0 %v4667
    %4671 = vmatprep.subr.bf16.mxu0 0
    %4672 = vmatpush1.bf16.xpose.msra.mxu0 0
    %4673 = vmatprep.subr.bf16.mxu0 0
    %4674 = vmatpush1.bf16.xpose.msra.mxu0 0
    %4675 = vmatprep.subr.bf16.mxu0 0
    %4676 = vmatpush1.bf16.xpose.msra.mxu0 0
    %4677 = vmatprep.subr.bf16.mxu0 0
    %4678 = vmatpush1.bf16.xpose.msra.mxu0 0
    %4679 = vmatprep.subr.bf16.mxu0 0
    %4680 = vmatpush1.bf16.xpose.msra.mxu0 0
    %4681 = vmatprep.subr.bf16.mxu0 0
    %4682 = vmatpush1.bf16.xpose.msra.mxu0 0
    %4683 = vmatprep.subr.bf16.mxu0 0
    %4684 = vmatpush1.bf16.xpose.msra.mxu0 0
    %4685 = vmatprep.subr.bf16.mxu0 0
    %4686 = vmatpush1.bf16.xpose.msra.mxu0 0
    %4687 = vmatprep.subr.bf16.mxu0 0
    %4688 = vmatpush1.bf16.xpose.msra.mxu0 0
    %4689 = vmatprep.subr.bf16.mxu0 0
    %4690 = vmatpush1.bf16.xpose.msra.mxu0 0
    %4691 = vmatprep.subr.bf16.mxu0 0
    %4692 = vmatpush1.bf16.xpose.msra.mxu0 0
    %4693 = vmatprep.subr.bf16.mxu0 0
    %4694 = vmatpush1.bf16.xpose.msra.mxu0 0
    %4695 = vmatprep.subr.bf16.mxu0 0
    %4696 = vmatpush1.bf16.xpose.msra.mxu0 0
    %4697 = vmatprep.subr.bf16.mxu0 0
    %4698 = vmatpush1.bf16.xpose.msra.mxu0 0
    %4699 = vmatprep.subr.bf16.mxu0 0
    %4700 = vmatpush1.bf16.xpose.msra.mxu0 0
    %4701 = vmatprep.mubr.bf16.mxu0 0
    %4702 = vmatmul.mubr.bf16.gmra.mrb[0].mxu0 %v4664
    %v4703 = vpop.f32.mrb[0].mxu0
    %v4704 = vadd.f32 0.0, %v4703
    %v4705 = vpop.f32.mrb[0].mxu0
    %v4706 = vpop.f32.mrb[0].mxu0
    %v4707 = vpop.f32.mrb[0].mxu0
    %4708 = vdwg.mxu0
    %4710 = vrot.lane.b32.xlu0 %v4659, 96
    %v4711 = vpop.permute.xlu0 %4710
    %v4713 = vsel %vm299, %v4659, 0
    %v4716 = vsel %vm299, %v4711, 0
    %4718 = vmatprep.subr.bf16.mxu0 0
    %4719 = vmatpush1.bf16.xpose.msra.mxu0 %v4716
    %4720 = vmatprep.subr.bf16.mxu0 0
    %4721 = vmatpush1.bf16.xpose.msra.mxu0 0
    %4722 = vmatprep.subr.bf16.mxu0 0
    %4723 = vmatpush1.bf16.xpose.msra.mxu0 0
    %4724 = vmatprep.subr.bf16.mxu0 0
    %4725 = vmatpush1.bf16.xpose.msra.mxu0 0
    %4726 = vmatprep.subr.bf16.mxu0 0
    %4727 = vmatpush1.bf16.xpose.msra.mxu0 0
    %4728 = vmatprep.subr.bf16.mxu0 0
    %4729 = vmatpush1.bf16.xpose.msra.mxu0 0
    %4730 = vmatprep.subr.bf16.mxu0 0
    %4731 = vmatpush1.bf16.xpose.msra.mxu0 0
    %4732 = vmatprep.subr.bf16.mxu0 0
    %4733 = vmatpush1.bf16.xpose.msra.mxu0 0
    %4734 = vmatprep.subr.bf16.mxu0 0
    %4735 = vmatpush1.bf16.xpose.msra.mxu0 0
    %4736 = vmatprep.subr.bf16.mxu0 0
    %4737 = vmatpush1.bf16.xpose.msra.mxu0 0
    %4738 = vmatprep.subr.bf16.mxu0 0
    %4739 = vmatpush1.bf16.xpose.msra.mxu0 0
    %4740 = vmatprep.subr.bf16.mxu0 0
    %4741 = vmatpush1.bf16.xpose.msra.mxu0 0
    %4742 = vmatprep.subr.bf16.mxu0 0
    %4743 = vmatpush1.bf16.xpose.msra.mxu0 0
    %4744 = vmatprep.subr.bf16.mxu0 0
    %4745 = vmatpush1.bf16.xpose.msra.mxu0 0
    %4746 = vmatprep.subr.bf16.mxu0 0
    %4747 = vmatpush1.bf16.xpose.msra.mxu0 0
    %4748 = vmatprep.subr.bf16.mxu0 0
    %4749 = vmatpush1.bf16.xpose.msra.mxu0 0
    %4750 = vmatprep.mubr.bf16.mxu0 0
    %4751 = vmatmul.mubr.bf16.gmra.mrb[0].mxu0 %v4713
    %v4752 = vpop.f32.mrb[0].mxu0
    %v4753 = vadd.f32 0.0, %v4752
    %v4754 = vpop.f32.mrb[0].mxu0
    %v4755 = vpop.f32.mrb[0].mxu0
    %v4756 = vpop.f32.mrb[0].mxu0
    %4757 = vdwg.mxu0
    %v4758 = vmul.f32 %v4704, 0.35355338
    %v4759 = vmul.f32 %v4753, 0.35355338
    %v4760 = vadd.f32 %v4758, %v217
    %v4761 = vadd.f32 %v4759, %v218
    %v4762 = vsel %vm299, %v4760, -inf
    %4763 = vmax.xlane.f32.xlu0 %v4762
    %v4764 = vpop.xlane.xlu0 %4763
    %v4765 = vsel %vm299, %v4761, -inf
    %4766 = vmax.xlane.f32.xlu0 %v4765
    %v4767 = vpop.xlane.xlu0 %4766
    %v4768 = vsub.f32 %v4760, %v4764
    %v4769 = vsub.f32 %v4761, %v4767
    %v4770 = vmul.f32 %v4768, 1.442695
    %v4771 = vpow.pop %v4770
    %v4772 = vmul.f32 %v4769, 1.442695
    %v4773 = vpow.pop %v4772
    %v4774 = vsel %vm299, %v4771, 0.0
    %4775 = vadd.xlane.f32.xlu0 %v4774
    %v4776 = vpop.xlane.xlu0 %4775
    %v4777 = vsel %vm299, %v4773, 0.0
    %4778 = vadd.xlane.f32.xlu0 %v4777
    %v4779 = vpop.xlane.xlu0 %4778
    %v4780 = vrcp.pop %v4776
    %v4781 = vrcp.pop %v4779
    %v4782 = vmul.f32 %v4771, %v4780
    %v4783 = vmul.f32 %v4773, %v4781
    %v4784 = vpack.c.bf16 %v4782, %v4782
    %v4785 = vpack.c.bf16 %v4783, %v4783
    %4786 = vrot.lane.b32.xlu0 %v4658, 64
    %v4787 = vpop.permute.xlu0 %4786
    %v4789 = vsel %vm299, %v4784, 0
    %v4792 = vsel %vm428, %v4787, 0
    %4794 = vmatprep.subr.bf16.mxu0 0
    %4795 = vmatpush1.bf16.msra.mxu0 %v4792
    %4796 = vmatprep.subr.bf16.mxu0 0
    %4797 = vmatpush1.bf16.msra.mxu0 0
    %4798 = vmatprep.subr.bf16.mxu0 0
    %4799 = vmatpush1.bf16.msra.mxu0 0
    %4800 = vmatprep.subr.bf16.mxu0 0
    %4801 = vmatpush1.bf16.msra.mxu0 0
    %4802 = vmatprep.subr.bf16.mxu0 0
    %4803 = vmatpush1.bf16.msra.mxu0 0
    %4804 = vmatprep.subr.bf16.mxu0 0
    %4805 = vmatpush1.bf16.msra.mxu0 0
    %4806 = vmatprep.subr.bf16.mxu0 0
    %4807 = vmatpush1.bf16.msra.mxu0 0
    %4808 = vmatprep.subr.bf16.mxu0 0
    %4809 = vmatpush1.bf16.msra.mxu0 0
    %4810 = vmatprep.subr.bf16.mxu0 0
    %4811 = vmatpush1.bf16.msra.mxu0 0
    %4812 = vmatprep.subr.bf16.mxu0 0
    %4813 = vmatpush1.bf16.msra.mxu0 0
    %4814 = vmatprep.subr.bf16.mxu0 0
    %4815 = vmatpush1.bf16.msra.mxu0 0
    %4816 = vmatprep.subr.bf16.mxu0 0
    %4817 = vmatpush1.bf16.msra.mxu0 0
    %4818 = vmatprep.subr.bf16.mxu0 0
    %4819 = vmatpush1.bf16.msra.mxu0 0
    %4820 = vmatprep.subr.bf16.mxu0 0
    %4821 = vmatpush1.bf16.msra.mxu0 0
    %4822 = vmatprep.subr.bf16.mxu0 0
    %4823 = vmatpush1.bf16.msra.mxu0 0
    %4824 = vmatprep.subr.bf16.mxu0 0
    %4825 = vmatpush1.bf16.msra.mxu0 0
    %4826 = vmatprep.mubr.bf16.mxu0 0
    %4827 = vmatmul.mubr.bf16.gmra.mrb[0].mxu0 %v4789
    %v4828 = vpop.f32.mrb[0].mxu0
    %v4829 = vadd.f32 0.0, %v4828
    %v4830 = vpop.f32.mrb[0].mxu0
    %v4831 = vpop.f32.mrb[0].mxu0
    %v4832 = vpop.f32.mrb[0].mxu0
    %4833 = vdwg.mxu0
    %4834 = vrot.lane.b32.xlu0 %v4659, 64
    %v4835 = vpop.permute.xlu0 %4834
    %v4837 = vsel %vm299, %v4785, 0
    %v4840 = vsel %vm428, %v4835, 0
    %4842 = vmatprep.subr.bf16.mxu0 0
    %4843 = vmatpush1.bf16.msra.mxu0 %v4840
    %4844 = vmatprep.subr.bf16.mxu0 0
    %4845 = vmatpush1.bf16.msra.mxu0 0
    %4846 = vmatprep.subr.bf16.mxu0 0
    %4847 = vmatpush1.bf16.msra.mxu0 0
    %4848 = vmatprep.subr.bf16.mxu0 0
    %4849 = vmatpush1.bf16.msra.mxu0 0
    %4850 = vmatprep.subr.bf16.mxu0 0
    %4851 = vmatpush1.bf16.msra.mxu0 0
    %4852 = vmatprep.subr.bf16.mxu0 0
    %4853 = vmatpush1.bf16.msra.mxu0 0
    %4854 = vmatprep.subr.bf16.mxu0 0
    %4855 = vmatpush1.bf16.msra.mxu0 0
    %4856 = vmatprep.subr.bf16.mxu0 0
    %4857 = vmatpush1.bf16.msra.mxu0 0
    %4858 = vmatprep.subr.bf16.mxu0 0
    %4859 = vmatpush1.bf16.msra.mxu0 0
    %4860 = vmatprep.subr.bf16.mxu0 0
    %4861 = vmatpush1.bf16.msra.mxu0 0
    %4862 = vmatprep.subr.bf16.mxu0 0
    %4863 = vmatpush1.bf16.msra.mxu0 0
    %4864 = vmatprep.subr.bf16.mxu0 0
    %4865 = vmatpush1.bf16.msra.mxu0 0
    %4866 = vmatprep.subr.bf16.mxu0 0
    %4867 = vmatpush1.bf16.msra.mxu0 0
    %4868 = vmatprep.subr.bf16.mxu0 0
    %4869 = vmatpush1.bf16.msra.mxu0 0
    %4870 = vmatprep.subr.bf16.mxu0 0
    %4871 = vmatpush1.bf16.msra.mxu0 0
    %4872 = vmatprep.subr.bf16.mxu0 0
    %4873 = vmatpush1.bf16.msra.mxu0 0
    %4874 = vmatprep.mubr.bf16.mxu0 0
    %4875 = vmatmul.mubr.bf16.gmra.mrb[0].mxu0 %v4837
    %v4876 = vpop.f32.mrb[0].mxu0
    %v4877 = vadd.f32 0.0, %v4876
    %v4878 = vpop.f32.mrb[0].mxu0
    %v4879 = vpop.f32.mrb[0].mxu0
    %v4880 = vpop.f32.mrb[0].mxu0
    %4881 = vdwg.mxu0
    %4882 = vrot.lane.b32.xlu0 %v4658, 120
    %v4883 = vpop.permute.xlu0 %4882
    %4884 = vrot.lane.b32.xlu0 %v4658, 88
    %v4885 = vpop.permute.xlu0 %4884
    %v4887 = vsel %vm299, %v4883, 0
    %v4890 = vsel %vm299, %v4885, 0
    %4892 = vmatprep.subr.bf16.mxu0 0
    %4893 = vmatpush1.bf16.xpose.msra.mxu0 %v4890
    %4894 = vmatprep.subr.bf16.mxu0 0
    %4895 = vmatpush1.bf16.xpose.msra.mxu0 0
    %4896 = vmatprep.subr.bf16.mxu0 0
    %4897 = vmatpush1.bf16.xpose.msra.mxu0 0
    %4898 = vmatprep.subr.bf16.mxu0 0
    %4899 = vmatpush1.bf16.xpose.msra.mxu0 0
    %4900 = vmatprep.subr.bf16.mxu0 0
    %4901 = vmatpush1.bf16.xpose.msra.mxu0 0
    %4902 = vmatprep.subr.bf16.mxu0 0
    %4903 = vmatpush1.bf16.xpose.msra.mxu0 0
    %4904 = vmatprep.subr.bf16.mxu0 0
    %4905 = vmatpush1.bf16.xpose.msra.mxu0 0
    %4906 = vmatprep.subr.bf16.mxu0 0
    %4907 = vmatpush1.bf16.xpose.msra.mxu0 0
    %4908 = vmatprep.subr.bf16.mxu0 0
    %4909 = vmatpush1.bf16.xpose.msra.mxu0 0
    %4910 = vmatprep.subr.bf16.mxu0 0
    %4911 = vmatpush1.bf16.xpose.msra.mxu0 0
    %4912 = vmatprep.subr.bf16.mxu0 0
    %4913 = vmatpush1.bf16.xpose.msra.mxu0 0
    %4914 = vmatprep.subr.bf16.mxu0 0
    %4915 = vmatpush1.bf16.xpose.msra.mxu0 0
    %4916 = vmatprep.subr.bf16.mxu0 0
    %4917 = vmatpush1.bf16.xpose.msra.mxu0 0
    %4918 = vmatprep.subr.bf16.mxu0 0
    %4919 = vmatpush1.bf16.xpose.msra.mxu0 0
    %4920 = vmatprep.subr.bf16.mxu0 0
    %4921 = vmatpush1.bf16.xpose.msra.mxu0 0
    %4922 = vmatprep.subr.bf16.mxu0 0
    %4923 = vmatpush1.bf16.xpose.msra.mxu0 0
    %4924 = vmatprep.mubr.bf16.mxu0 0
    %4925 = vmatmul.mubr.bf16.gmra.mrb[0].mxu0 %v4887
    %v4926 = vpop.f32.mrb[0].mxu0
    %v4927 = vadd.f32 0.0, %v4926
    %v4928 = vpop.f32.mrb[0].mxu0
    %v4929 = vpop.f32.mrb[0].mxu0
    %v4930 = vpop.f32.mrb[0].mxu0
    %4931 = vdwg.mxu0
    %4932 = vrot.lane.b32.xlu0 %v4659, 120
    %v4933 = vpop.permute.xlu0 %4932
    %4934 = vrot.lane.b32.xlu0 %v4659, 88
    %v4935 = vpop.permute.xlu0 %4934
    %v4937 = vsel %vm299, %v4933, 0
    %v4940 = vsel %vm299, %v4935, 0
    %4942 = vmatprep.subr.bf16.mxu0 0
    %4943 = vmatpush1.bf16.xpose.msra.mxu0 %v4940
    %4944 = vmatprep.subr.bf16.mxu0 0
    %4945 = vmatpush1.bf16.xpose.msra.mxu0 0
    %4946 = vmatprep.subr.bf16.mxu0 0
    %4947 = vmatpush1.bf16.xpose.msra.mxu0 0
    %4948 = vmatprep.subr.bf16.mxu0 0
    %4949 = vmatpush1.bf16.xpose.msra.mxu0 0
    %4950 = vmatprep.subr.bf16.mxu0 0
    %4951 = vmatpush1.bf16.xpose.msra.mxu0 0
    %4952 = vmatprep.subr.bf16.mxu0 0
    %4953 = vmatpush1.bf16.xpose.msra.mxu0 0
    %4954 = vmatprep.subr.bf16.mxu0 0
    %4955 = vmatpush1.bf16.xpose.msra.mxu0 0
    %4956 = vmatprep.subr.bf16.mxu0 0
    %4957 = vmatpush1.bf16.xpose.msra.mxu0 0
    %4958 = vmatprep.subr.bf16.mxu0 0
    %4959 = vmatpush1.bf16.xpose.msra.mxu0 0
    %4960 = vmatprep.subr.bf16.mxu0 0
    %4961 = vmatpush1.bf16.xpose.msra.mxu0 0
    %4962 = vmatprep.subr.bf16.mxu0 0
    %4963 = vmatpush1.bf16.xpose.msra.mxu0 0
    %4964 = vmatprep.subr.bf16.mxu0 0
    %4965 = vmatpush1.bf16.xpose.msra.mxu0 0
    %4966 = vmatprep.subr.bf16.mxu0 0
    %4967 = vmatpush1.bf16.xpose.msra.mxu0 0
    %4968 = vmatprep.subr.bf16.mxu0 0
    %4969 = vmatpush1.bf16.xpose.msra.mxu0 0
    %4970 = vmatprep.subr.bf16.mxu0 0
    %4971 = vmatpush1.bf16.xpose.msra.mxu0 0
    %4972 = vmatprep.subr.bf16.mxu0 0
    %4973 = vmatpush1.bf16.xpose.msra.mxu0 0
    %4974 = vmatprep.mubr.bf16.mxu0 0
    %4975 = vmatmul.mubr.bf16.gmra.mrb[0].mxu0 %v4937
    %v4976 = vpop.f32.mrb[0].mxu0
    %v4977 = vadd.f32 0.0, %v4976
    %v4978 = vpop.f32.mrb[0].mxu0
    %v4979 = vpop.f32.mrb[0].mxu0
    %v4980 = vpop.f32.mrb[0].mxu0
    %4981 = vdwg.mxu0
    %v4982 = vmul.f32 %v4927, 0.35355338
    %v4983 = vmul.f32 %v4977, 0.35355338
    %v4984 = vadd.f32 %v4982, %v217
    %v4985 = vadd.f32 %v4983, %v218
    %v4986 = vsel %vm299, %v4984, -inf
    %4987 = vmax.xlane.f32.xlu0 %v4986
    %v4988 = vpop.xlane.xlu0 %4987
    %v4989 = vsel %vm299, %v4985, -inf
    %4990 = vmax.xlane.f32.xlu0 %v4989
    %v4991 = vpop.xlane.xlu0 %4990
    %v4992 = vsub.f32 %v4984, %v4988
    %v4993 = vsub.f32 %v4985, %v4991
    %v4994 = vmul.f32 %v4992, 1.442695
    %v4995 = vpow.pop %v4994
    %v4996 = vmul.f32 %v4993, 1.442695
    %v4997 = vpow.pop %v4996
    %v4998 = vsel %vm299, %v4995, 0.0
    %4999 = vadd.xlane.f32.xlu0 %v4998
    %v5000 = vpop.xlane.xlu0 %4999
    %v5001 = vsel %vm299, %v4997, 0.0
    %5002 = vadd.xlane.f32.xlu0 %v5001
    %v5003 = vpop.xlane.xlu0 %5002
    %v5004 = vrcp.pop %v5000
    %v5005 = vrcp.pop %v5003
    %v5006 = vmul.f32 %v4995, %v5004
    %v5007 = vmul.f32 %v4997, %v5005
    %v5008 = vpack.c.bf16 %v5006, %v5006
    %v5009 = vpack.c.bf16 %v5007, %v5007
    %5010 = vrot.lane.b32.xlu0 %v4658, 56
    %v5011 = vpop.permute.xlu0 %5010
    %v5013 = vsel %vm299, %v5008, 0
    %v5016 = vsel %vm428, %v5011, 0
    %5018 = vmatprep.subr.bf16.mxu0 0
    %5019 = vmatpush1.bf16.msra.mxu0 %v5016
    %5020 = vmatprep.subr.bf16.mxu0 0
    %5021 = vmatpush1.bf16.msra.mxu0 0
    %5022 = vmatprep.subr.bf16.mxu0 0
    %5023 = vmatpush1.bf16.msra.mxu0 0
    %5024 = vmatprep.subr.bf16.mxu0 0
    %5025 = vmatpush1.bf16.msra.mxu0 0
    %5026 = vmatprep.subr.bf16.mxu0 0
    %5027 = vmatpush1.bf16.msra.mxu0 0
    %5028 = vmatprep.subr.bf16.mxu0 0
    %5029 = vmatpush1.bf16.msra.mxu0 0
    %5030 = vmatprep.subr.bf16.mxu0 0
    %5031 = vmatpush1.bf16.msra.mxu0 0
    %5032 = vmatprep.subr.bf16.mxu0 0
    %5033 = vmatpush1.bf16.msra.mxu0 0
    %5034 = vmatprep.subr.bf16.mxu0 0
    %5035 = vmatpush1.bf16.msra.mxu0 0
    %5036 = vmatprep.subr.bf16.mxu0 0
    %5037 = vmatpush1.bf16.msra.mxu0 0
    %5038 = vmatprep.subr.bf16.mxu0 0
    %5039 = vmatpush1.bf16.msra.mxu0 0
    %5040 = vmatprep.subr.bf16.mxu0 0
    %5041 = vmatpush1.bf16.msra.mxu0 0
    %5042 = vmatprep.subr.bf16.mxu0 0
    %5043 = vmatpush1.bf16.msra.mxu0 0
    %5044 = vmatprep.subr.bf16.mxu0 0
    %5045 = vmatpush1.bf16.msra.mxu0 0
    %5046 = vmatprep.subr.bf16.mxu0 0
    %5047 = vmatpush1.bf16.msra.mxu0 0
    %5048 = vmatprep.subr.bf16.mxu0 0
    %5049 = vmatpush1.bf16.msra.mxu0 0
    %5050 = vmatprep.mubr.bf16.mxu0 0
    %5051 = vmatmul.mubr.bf16.gmra.mrb[0].mxu0 %v5013
    %v5052 = vpop.f32.mrb[0].mxu0
    %v5053 = vadd.f32 0.0, %v5052
    %v5054 = vpop.f32.mrb[0].mxu0
    %v5055 = vpop.f32.mrb[0].mxu0
    %v5056 = vpop.f32.mrb[0].mxu0
    %5057 = vdwg.mxu0
    %5058 = vrot.lane.b32.xlu0 %v4659, 56
    %v5059 = vpop.permute.xlu0 %5058
    %v5061 = vsel %vm299, %v5009, 0
    %v5064 = vsel %vm428, %v5059, 0
    %5066 = vmatprep.subr.bf16.mxu0 0
    %5067 = vmatpush1.bf16.msra.mxu0 %v5064
    %5068 = vmatprep.subr.bf16.mxu0 0
    %5069 = vmatpush1.bf16.msra.mxu0 0
    %5070 = vmatprep.subr.bf16.mxu0 0
    %5071 = vmatpush1.bf16.msra.mxu0 0
    %5072 = vmatprep.subr.bf16.mxu0 0
    %5073 = vmatpush1.bf16.msra.mxu0 0
    %5074 = vmatprep.subr.bf16.mxu0 0
    %5075 = vmatpush1.bf16.msra.mxu0 0
    %5076 = vmatprep.subr.bf16.mxu0 0
    %5077 = vmatpush1.bf16.msra.mxu0 0
    %5078 = vmatprep.subr.bf16.mxu0 0
    %5079 = vmatpush1.bf16.msra.mxu0 0
    %5080 = vmatprep.subr.bf16.mxu0 0
    %5081 = vmatpush1.bf16.msra.mxu0 0
    %5082 = vmatprep.subr.bf16.mxu0 0
    %5083 = vmatpush1.bf16.msra.mxu0 0
    %5084 = vmatprep.subr.bf16.mxu0 0
    %5085 = vmatpush1.bf16.msra.mxu0 0
    %5086 = vmatprep.subr.bf16.mxu0 0
    %5087 = vmatpush1.bf16.msra.mxu0 0
    %5088 = vmatprep.subr.bf16.mxu0 0
    %5089 = vmatpush1.bf16.msra.mxu0 0
    %5090 = vmatprep.subr.bf16.mxu0 0
    %5091 = vmatpush1.bf16.msra.mxu0 0
    %5092 = vmatprep.subr.bf16.mxu0 0
    %5093 = vmatpush1.bf16.msra.mxu0 0
    %5094 = vmatprep.subr.bf16.mxu0 0
    %5095 = vmatpush1.bf16.msra.mxu0 0
    %5096 = vmatprep.subr.bf16.mxu0 0
    %5097 = vmatpush1.bf16.msra.mxu0 0
    %5098 = vmatprep.mubr.bf16.mxu0 0
    %5099 = vmatmul.mubr.bf16.gmra.mrb[0].mxu0 %v5061
    %v5100 = vpop.f32.mrb[0].mxu0
    %v5101 = vadd.f32 0.0, %v5100
    %v5102 = vpop.f32.mrb[0].mxu0
    %v5103 = vpop.f32.mrb[0].mxu0
    %v5104 = vpop.f32.mrb[0].mxu0
    %5105 = vdwg.mxu0
    %5106 = vrot.lane.b32.xlu0 %v4658, 112
    %v5107 = vpop.permute.xlu0 %5106
    %5108 = vrot.lane.b32.xlu0 %v4658, 80
    %v5109 = vpop.permute.xlu0 %5108
    %v5111 = vsel %vm299, %v5107, 0
    %v5114 = vsel %vm299, %v5109, 0
    %5116 = vmatprep.subr.bf16.mxu0 0
    %5117 = vmatpush1.bf16.xpose.msra.mxu0 %v5114
    %5118 = vmatprep.subr.bf16.mxu0 0
    %5119 = vmatpush1.bf16.xpose.msra.mxu0 0
    %5120 = vmatprep.subr.bf16.mxu0 0
    %5121 = vmatpush1.bf16.xpose.msra.mxu0 0
    %5122 = vmatprep.subr.bf16.mxu0 0
    %5123 = vmatpush1.bf16.xpose.msra.mxu0 0
    %5124 = vmatprep.subr.bf16.mxu0 0
    %5125 = vmatpush1.bf16.xpose.msra.mxu0 0
    %5126 = vmatprep.subr.bf16.mxu0 0
    %5127 = vmatpush1.bf16.xpose.msra.mxu0 0
    %5128 = vmatprep.subr.bf16.mxu0 0
    %5129 = vmatpush1.bf16.xpose.msra.mxu0 0
    %5130 = vmatprep.subr.bf16.mxu0 0
    %5131 = vmatpush1.bf16.xpose.msra.mxu0 0
    %5132 = vmatprep.subr.bf16.mxu0 0
    %5133 = vmatpush1.bf16.xpose.msra.mxu0 0
    %5134 = vmatprep.subr.bf16.mxu0 0
    %5135 = vmatpush1.bf16.xpose.msra.mxu0 0
    %5136 = vmatprep.subr.bf16.mxu0 0
    %5137 = vmatpush1.bf16.xpose.msra.mxu0 0
    %5138 = vmatprep.subr.bf16.mxu0 0
    %5139 = vmatpush1.bf16.xpose.msra.mxu0 0
    %5140 = vmatprep.subr.bf16.mxu0 0
    %5141 = vmatpush1.bf16.xpose.msra.mxu0 0
    %5142 = vmatprep.subr.bf16.mxu0 0
    %5143 = vmatpush1.bf16.xpose.msra.mxu0 0
    %5144 = vmatprep.subr.bf16.mxu0 0
    %5145 = vmatpush1.bf16.xpose.msra.mxu0 0
    %5146 = vmatprep.subr.bf16.mxu0 0
    %5147 = vmatpush1.bf16.xpose.msra.mxu0 0
    %5148 = vmatprep.mubr.bf16.mxu0 0
    %5149 = vmatmul.mubr.bf16.gmra.mrb[0].mxu0 %v5111
    %v5150 = vpop.f32.mrb[0].mxu0
    %v5151 = vadd.f32 0.0, %v5150
    %v5152 = vpop.f32.mrb[0].mxu0
    %v5153 = vpop.f32.mrb[0].mxu0
    %v5154 = vpop.f32.mrb[0].mxu0
    %5155 = vdwg.mxu0
    %5156 = vrot.lane.b32.xlu0 %v4659, 112
    %v5157 = vpop.permute.xlu0 %5156
    %5158 = vrot.lane.b32.xlu0 %v4659, 80
    %v5159 = vpop.permute.xlu0 %5158
    %v5161 = vsel %vm299, %v5157, 0
    %v5164 = vsel %vm299, %v5159, 0
    %5166 = vmatprep.subr.bf16.mxu0 0
    %5167 = vmatpush1.bf16.xpose.msra.mxu0 %v5164
    %5168 = vmatprep.subr.bf16.mxu0 0
    %5169 = vmatpush1.bf16.xpose.msra.mxu0 0
    %5170 = vmatprep.subr.bf16.mxu0 0
    %5171 = vmatpush1.bf16.xpose.msra.mxu0 0
    %5172 = vmatprep.subr.bf16.mxu0 0
    %5173 = vmatpush1.bf16.xpose.msra.mxu0 0
    %5174 = vmatprep.subr.bf16.mxu0 0
    %5175 = vmatpush1.bf16.xpose.msra.mxu0 0
    %5176 = vmatprep.subr.bf16.mxu0 0
    %5177 = vmatpush1.bf16.xpose.msra.mxu0 0
    %5178 = vmatprep.subr.bf16.mxu0 0
    %5179 = vmatpush1.bf16.xpose.msra.mxu0 0
    %5180 = vmatprep.subr.bf16.mxu0 0
    %5181 = vmatpush1.bf16.xpose.msra.mxu0 0
    %5182 = vmatprep.subr.bf16.mxu0 0
    %5183 = vmatpush1.bf16.xpose.msra.mxu0 0
    %5184 = vmatprep.subr.bf16.mxu0 0
    %5185 = vmatpush1.bf16.xpose.msra.mxu0 0
    %5186 = vmatprep.subr.bf16.mxu0 0
    %5187 = vmatpush1.bf16.xpose.msra.mxu0 0
    %5188 = vmatprep.subr.bf16.mxu0 0
    %5189 = vmatpush1.bf16.xpose.msra.mxu0 0
    %5190 = vmatprep.subr.bf16.mxu0 0
    %5191 = vmatpush1.bf16.xpose.msra.mxu0 0
    %5192 = vmatprep.subr.bf16.mxu0 0
    %5193 = vmatpush1.bf16.xpose.msra.mxu0 0
    %5194 = vmatprep.subr.bf16.mxu0 0
    %5195 = vmatpush1.bf16.xpose.msra.mxu0 0
    %5196 = vmatprep.subr.bf16.mxu0 0
    %5197 = vmatpush1.bf16.xpose.msra.mxu0 0
    %5198 = vmatprep.mubr.bf16.mxu0 0
    %5199 = vmatmul.mubr.bf16.gmra.mrb[0].mxu0 %v5161
    %v5200 = vpop.f32.mrb[0].mxu0
    %v5201 = vadd.f32 0.0, %v5200
    %v5202 = vpop.f32.mrb[0].mxu0
    %v5203 = vpop.f32.mrb[0].mxu0
    %v5204 = vpop.f32.mrb[0].mxu0
    %5205 = vdwg.mxu0
    %v5206 = vmul.f32 %v5151, 0.35355338
    %v5207 = vmul.f32 %v5201, 0.35355338
    %v5208 = vadd.f32 %v5206, %v217
    %v5209 = vadd.f32 %v5207, %v218
    %v5210 = vsel %vm299, %v5208, -inf
    %5211 = vmax.xlane.f32.xlu0 %v5210
    %v5212 = vpop.xlane.xlu0 %5211
    %v5213 = vsel %vm299, %v5209, -inf
    %5214 = vmax.xlane.f32.xlu0 %v5213
    %v5215 = vpop.xlane.xlu0 %5214
    %v5216 = vsub.f32 %v5208, %v5212
    %v5217 = vsub.f32 %v5209, %v5215
    %v5218 = vmul.f32 %v5216, 1.442695
    %v5219 = vpow.pop %v5218
    %v5220 = vmul.f32 %v5217, 1.442695
    %v5221 = vpow.pop %v5220
    %v5222 = vsel %vm299, %v5219, 0.0
    %5223 = vadd.xlane.f32.xlu0 %v5222
    %v5224 = vpop.xlane.xlu0 %5223
    %v5225 = vsel %vm299, %v5221, 0.0
    %5226 = vadd.xlane.f32.xlu0 %v5225
    %v5227 = vpop.xlane.xlu0 %5226
    %v5228 = vrcp.pop %v5224
    %v5229 = vrcp.pop %v5227
    %v5230 = vmul.f32 %v5219, %v5228
    %v5231 = vmul.f32 %v5221, %v5229
    %v5232 = vpack.c.bf16 %v5230, %v5230
    %v5233 = vpack.c.bf16 %v5231, %v5231
    %5234 = vrot.lane.b32.xlu0 %v4658, 48
    %v5235 = vpop.permute.xlu0 %5234
    %v5237 = vsel %vm299, %v5232, 0
    %v5240 = vsel %vm428, %v5235, 0
    %5242 = vmatprep.subr.bf16.mxu0 0
    %5243 = vmatpush1.bf16.msra.mxu0 %v5240
    %5244 = vmatprep.subr.bf16.mxu0 0
    %5245 = vmatpush1.bf16.msra.mxu0 0
    %5246 = vmatprep.subr.bf16.mxu0 0
    %5247 = vmatpush1.bf16.msra.mxu0 0
    %5248 = vmatprep.subr.bf16.mxu0 0
    %5249 = vmatpush1.bf16.msra.mxu0 0
    %5250 = vmatprep.subr.bf16.mxu0 0
    %5251 = vmatpush1.bf16.msra.mxu0 0
    %5252 = vmatprep.subr.bf16.mxu0 0
    %5253 = vmatpush1.bf16.msra.mxu0 0
    %5254 = vmatprep.subr.bf16.mxu0 0
    %5255 = vmatpush1.bf16.msra.mxu0 0
    %5256 = vmatprep.subr.bf16.mxu0 0
    %5257 = vmatpush1.bf16.msra.mxu0 0
    %5258 = vmatprep.subr.bf16.mxu0 0
    %5259 = vmatpush1.bf16.msra.mxu0 0
    %5260 = vmatprep.subr.bf16.mxu0 0
    %5261 = vmatpush1.bf16.msra.mxu0 0
    %5262 = vmatprep.subr.bf16.mxu0 0
    %5263 = vmatpush1.bf16.msra.mxu0 0
    %5264 = vmatprep.subr.bf16.mxu0 0
    %5265 = vmatpush1.bf16.msra.mxu0 0
    %5266 = vmatprep.subr.bf16.mxu0 0
    %5267 = vmatpush1.bf16.msra.mxu0 0
    %5268 = vmatprep.subr.bf16.mxu0 0
    %5269 = vmatpush1.bf16.msra.mxu0 0
    %5270 = vmatprep.subr.bf16.mxu0 0
    %5271 = vmatpush1.bf16.msra.mxu0 0
    %5272 = vmatprep.subr.bf16.mxu0 0
    %5273 = vmatpush1.bf16.msra.mxu0 0
    %5274 = vmatprep.mubr.bf16.mxu0 0
    %5275 = vmatmul.mubr.bf16.gmra.mrb[0].mxu0 %v5237
    %v5276 = vpop.f32.mrb[0].mxu0
    %v5277 = vadd.f32 0.0, %v5276
    %v5278 = vpop.f32.mrb[0].mxu0
    %v5279 = vpop.f32.mrb[0].mxu0
    %v5280 = vpop.f32.mrb[0].mxu0
    %5281 = vdwg.mxu0
    %5282 = vrot.lane.b32.xlu0 %v4659, 48
    %v5283 = vpop.permute.xlu0 %5282
    %v5285 = vsel %vm299, %v5233, 0
    %v5288 = vsel %vm428, %v5283, 0
    %5290 = vmatprep.subr.bf16.mxu0 0
    %5291 = vmatpush1.bf16.msra.mxu0 %v5288
    %5292 = vmatprep.subr.bf16.mxu0 0
    %5293 = vmatpush1.bf16.msra.mxu0 0
    %5294 = vmatprep.subr.bf16.mxu0 0
    %5295 = vmatpush1.bf16.msra.mxu0 0
    %5296 = vmatprep.subr.bf16.mxu0 0
    %5297 = vmatpush1.bf16.msra.mxu0 0
    %5298 = vmatprep.subr.bf16.mxu0 0
    %5299 = vmatpush1.bf16.msra.mxu0 0
    %5300 = vmatprep.subr.bf16.mxu0 0
    %5301 = vmatpush1.bf16.msra.mxu0 0
    %5302 = vmatprep.subr.bf16.mxu0 0
    %5303 = vmatpush1.bf16.msra.mxu0 0
    %5304 = vmatprep.subr.bf16.mxu0 0
    %5305 = vmatpush1.bf16.msra.mxu0 0
    %5306 = vmatprep.subr.bf16.mxu0 0
    %5307 = vmatpush1.bf16.msra.mxu0 0
    %5308 = vmatprep.subr.bf16.mxu0 0
    %5309 = vmatpush1.bf16.msra.mxu0 0
    %5310 = vmatprep.subr.bf16.mxu0 0
    %5311 = vmatpush1.bf16.msra.mxu0 0
    %5312 = vmatprep.subr.bf16.mxu0 0
    %5313 = vmatpush1.bf16.msra.mxu0 0
    %5314 = vmatprep.subr.bf16.mxu0 0
    %5315 = vmatpush1.bf16.msra.mxu0 0
    %5316 = vmatprep.subr.bf16.mxu0 0
    %5317 = vmatpush1.bf16.msra.mxu0 0
    %5318 = vmatprep.subr.bf16.mxu0 0
    %5319 = vmatpush1.bf16.msra.mxu0 0
    %5320 = vmatprep.subr.bf16.mxu0 0
    %5321 = vmatpush1.bf16.msra.mxu0 0
    %5322 = vmatprep.mubr.bf16.mxu0 0
    %5323 = vmatmul.mubr.bf16.gmra.mrb[0].mxu0 %v5285
    %v5324 = vpop.f32.mrb[0].mxu0
    %v5325 = vadd.f32 0.0, %v5324
    %v5326 = vpop.f32.mrb[0].mxu0
    %v5327 = vpop.f32.mrb[0].mxu0
    %v5328 = vpop.f32.mrb[0].mxu0
    %5329 = vdwg.mxu0
    %5330 = vrot.lane.b32.xlu0 %v4658, 104
    %v5331 = vpop.permute.xlu0 %5330
    %5332 = vrot.lane.b32.xlu0 %v4658, 72
    %v5333 = vpop.permute.xlu0 %5332
    %v5335 = vsel %vm299, %v5331, 0
    %v5338 = vsel %vm299, %v5333, 0
    %5340 = vmatprep.subr.bf16.mxu0 0
    %5341 = vmatpush1.bf16.xpose.msra.mxu0 %v5338
    %5342 = vmatprep.subr.bf16.mxu0 0
    %5343 = vmatpush1.bf16.xpose.msra.mxu0 0
    %5344 = vmatprep.subr.bf16.mxu0 0
    %5345 = vmatpush1.bf16.xpose.msra.mxu0 0
    %5346 = vmatprep.subr.bf16.mxu0 0
    %5347 = vmatpush1.bf16.xpose.msra.mxu0 0
    %5348 = vmatprep.subr.bf16.mxu0 0
    %5349 = vmatpush1.bf16.xpose.msra.mxu0 0
    %5350 = vmatprep.subr.bf16.mxu0 0
    %5351 = vmatpush1.bf16.xpose.msra.mxu0 0
    %5352 = vmatprep.subr.bf16.mxu0 0
    %5353 = vmatpush1.bf16.xpose.msra.mxu0 0
    %5354 = vmatprep.subr.bf16.mxu0 0
    %5355 = vmatpush1.bf16.xpose.msra.mxu0 0
    %5356 = vmatprep.subr.bf16.mxu0 0
    %5357 = vmatpush1.bf16.xpose.msra.mxu0 0
    %5358 = vmatprep.subr.bf16.mxu0 0
    %5359 = vmatpush1.bf16.xpose.msra.mxu0 0
    %5360 = vmatprep.subr.bf16.mxu0 0
    %5361 = vmatpush1.bf16.xpose.msra.mxu0 0
    %5362 = vmatprep.subr.bf16.mxu0 0
    %5363 = vmatpush1.bf16.xpose.msra.mxu0 0
    %5364 = vmatprep.subr.bf16.mxu0 0
    %5365 = vmatpush1.bf16.xpose.msra.mxu0 0
    %5366 = vmatprep.subr.bf16.mxu0 0
    %5367 = vmatpush1.bf16.xpose.msra.mxu0 0
    %5368 = vmatprep.subr.bf16.mxu0 0
    %5369 = vmatpush1.bf16.xpose.msra.mxu0 0
    %5370 = vmatprep.subr.bf16.mxu0 0
    %5371 = vmatpush1.bf16.xpose.msra.mxu0 0
    %5372 = vmatprep.mubr.bf16.mxu0 0
    %5373 = vmatmul.mubr.bf16.gmra.mrb[0].mxu0 %v5335
    %v5374 = vpop.f32.mrb[0].mxu0
    %v5375 = vadd.f32 0.0, %v5374
    %v5376 = vpop.f32.mrb[0].mxu0
    %v5377 = vpop.f32.mrb[0].mxu0
    %v5378 = vpop.f32.mrb[0].mxu0
    %5379 = vdwg.mxu0
    %5380 = vrot.lane.b32.xlu0 %v4659, 104
    %v5381 = vpop.permute.xlu0 %5380
    %5382 = vrot.lane.b32.xlu0 %v4659, 72
    %v5383 = vpop.permute.xlu0 %5382
    %v5385 = vsel %vm299, %v5381, 0
    %v5388 = vsel %vm299, %v5383, 0
    %5390 = vmatprep.subr.bf16.mxu0 0
    %5391 = vmatpush1.bf16.xpose.msra.mxu0 %v5388
    %5392 = vmatprep.subr.bf16.mxu0 0
    %5393 = vmatpush1.bf16.xpose.msra.mxu0 0
    %5394 = vmatprep.subr.bf16.mxu0 0
    %5395 = vmatpush1.bf16.xpose.msra.mxu0 0
    %5396 = vmatprep.subr.bf16.mxu0 0
    %5397 = vmatpush1.bf16.xpose.msra.mxu0 0
    %5398 = vmatprep.subr.bf16.mxu0 0
    %5399 = vmatpush1.bf16.xpose.msra.mxu0 0
    %5400 = vmatprep.subr.bf16.mxu0 0
    %5401 = vmatpush1.bf16.xpose.msra.mxu0 0
    %5402 = vmatprep.subr.bf16.mxu0 0
    %5403 = vmatpush1.bf16.xpose.msra.mxu0 0
    %5404 = vmatprep.subr.bf16.mxu0 0
    %5405 = vmatpush1.bf16.xpose.msra.mxu0 0
    %5406 = vmatprep.subr.bf16.mxu0 0
    %5407 = vmatpush1.bf16.xpose.msra.mxu0 0
    %5408 = vmatprep.subr.bf16.mxu0 0
    %5409 = vmatpush1.bf16.xpose.msra.mxu0 0
    %5410 = vmatprep.subr.bf16.mxu0 0
    %5411 = vmatpush1.bf16.xpose.msra.mxu0 0
    %5412 = vmatprep.subr.bf16.mxu0 0
    %5413 = vmatpush1.bf16.xpose.msra.mxu0 0
    %5414 = vmatprep.subr.bf16.mxu0 0
    %5415 = vmatpush1.bf16.xpose.msra.mxu0 0
    %5416 = vmatprep.subr.bf16.mxu0 0
    %5417 = vmatpush1.bf16.xpose.msra.mxu0 0
    %5418 = vmatprep.subr.bf16.mxu0 0
    %5419 = vmatpush1.bf16.xpose.msra.mxu0 0
    %5420 = vmatprep.subr.bf16.mxu0 0
    %5421 = vmatpush1.bf16.xpose.msra.mxu0 0
    %5422 = vmatprep.mubr.bf16.mxu0 0
    %5423 = vmatmul.mubr.bf16.gmra.mrb[0].mxu0 %v5385
    %v5424 = vpop.f32.mrb[0].mxu0
    %v5425 = vadd.f32 0.0, %v5424
    %v5426 = vpop.f32.mrb[0].mxu0
    %v5427 = vpop.f32.mrb[0].mxu0
    %v5428 = vpop.f32.mrb[0].mxu0
    %5429 = vdwg.mxu0
    %v5430 = vmul.f32 %v5375, 0.35355338
    %v5431 = vmul.f32 %v5425, 0.35355338
    %v5432 = vadd.f32 %v5430, %v217
    %v5433 = vadd.f32 %v5431, %v218
    %v5434 = vsel %vm299, %v5432, -inf
    %5435 = vmax.xlane.f32.xlu0 %v5434
    %v5436 = vpop.xlane.xlu0 %5435
    %v5437 = vsel %vm299, %v5433, -inf
    %5438 = vmax.xlane.f32.xlu0 %v5437
    %v5439 = vpop.xlane.xlu0 %5438
    %v5440 = vsub.f32 %v5432, %v5436
    %v5441 = vsub.f32 %v5433, %v5439
    %v5442 = vmul.f32 %v5440, 1.442695
    %v5443 = vpow.pop %v5442
    %v5444 = vmul.f32 %v5441, 1.442695
    %v5445 = vpow.pop %v5444
    %v5446 = vsel %vm299, %v5443, 0.0
    %5447 = vadd.xlane.f32.xlu0 %v5446
    %v5448 = vpop.xlane.xlu0 %5447
    %v5449 = vsel %vm299, %v5445, 0.0
    %5450 = vadd.xlane.f32.xlu0 %v5449
    %v5451 = vpop.xlane.xlu0 %5450
    %v5452 = vrcp.pop %v5448
    %v5453 = vrcp.pop %v5451
    %v5454 = vmul.f32 %v5443, %v5452
    %v5455 = vmul.f32 %v5445, %v5453
    %v5456 = vpack.c.bf16 %v5454, %v5454
    %v5457 = vpack.c.bf16 %v5455, %v5455
    %5458 = vrot.lane.b32.xlu0 %v4658, 40
    %v5459 = vpop.permute.xlu0 %5458
    %v5461 = vsel %vm299, %v5456, 0
    %v5464 = vsel %vm428, %v5459, 0
    %5466 = vmatprep.subr.bf16.mxu0 0
    %5467 = vmatpush1.bf16.msra.mxu0 %v5464
    %5468 = vmatprep.subr.bf16.mxu0 0
    %5469 = vmatpush1.bf16.msra.mxu0 0
    %5470 = vmatprep.subr.bf16.mxu0 0
    %5471 = vmatpush1.bf16.msra.mxu0 0
    %5472 = vmatprep.subr.bf16.mxu0 0
    %5473 = vmatpush1.bf16.msra.mxu0 0
    %5474 = vmatprep.subr.bf16.mxu0 0
    %5475 = vmatpush1.bf16.msra.mxu0 0
    %5476 = vmatprep.subr.bf16.mxu0 0
    %5477 = vmatpush1.bf16.msra.mxu0 0
    %5478 = vmatprep.subr.bf16.mxu0 0
    %5479 = vmatpush1.bf16.msra.mxu0 0
    %5480 = vmatprep.subr.bf16.mxu0 0
    %5481 = vmatpush1.bf16.msra.mxu0 0
    %5482 = vmatprep.subr.bf16.mxu0 0
    %5483 = vmatpush1.bf16.msra.mxu0 0
    %5484 = vmatprep.subr.bf16.mxu0 0
    %5485 = vmatpush1.bf16.msra.mxu0 0
    %5486 = vmatprep.subr.bf16.mxu0 0
    %5487 = vmatpush1.bf16.msra.mxu0 0
    %5488 = vmatprep.subr.bf16.mxu0 0
    %5489 = vmatpush1.bf16.msra.mxu0 0
    %5490 = vmatprep.subr.bf16.mxu0 0
    %5491 = vmatpush1.bf16.msra.mxu0 0
    %5492 = vmatprep.subr.bf16.mxu0 0
    %5493 = vmatpush1.bf16.msra.mxu0 0
    %5494 = vmatprep.subr.bf16.mxu0 0
    %5495 = vmatpush1.bf16.msra.mxu0 0
    %5496 = vmatprep.subr.bf16.mxu0 0
    %5497 = vmatpush1.bf16.msra.mxu0 0
    %5498 = vmatprep.mubr.bf16.mxu0 0
    %5499 = vmatmul.mubr.bf16.gmra.mrb[0].mxu0 %v5461
    %v5500 = vpop.f32.mrb[0].mxu0
    %v5501 = vadd.f32 0.0, %v5500
    %v5502 = vpop.f32.mrb[0].mxu0
    %v5503 = vpop.f32.mrb[0].mxu0
    %v5504 = vpop.f32.mrb[0].mxu0
    %5505 = vdwg.mxu0
    %5506 = vrot.lane.b32.xlu0 %v4659, 40
    %v5507 = vpop.permute.xlu0 %5506
    %v5509 = vsel %vm299, %v5457, 0
    %v5512 = vsel %vm428, %v5507, 0
    %5514 = vmatprep.subr.bf16.mxu0 0
    %5515 = vmatpush1.bf16.msra.mxu0 %v5512
    %5516 = vmatprep.subr.bf16.mxu0 0
    %5517 = vmatpush1.bf16.msra.mxu0 0
    %5518 = vmatprep.subr.bf16.mxu0 0
    %5519 = vmatpush1.bf16.msra.mxu0 0
    %5520 = vmatprep.subr.bf16.mxu0 0
    %5521 = vmatpush1.bf16.msra.mxu0 0
    %5522 = vmatprep.subr.bf16.mxu0 0
    %5523 = vmatpush1.bf16.msra.mxu0 0
    %5524 = vmatprep.subr.bf16.mxu0 0
    %5525 = vmatpush1.bf16.msra.mxu0 0
    %5526 = vmatprep.subr.bf16.mxu0 0
    %5527 = vmatpush1.bf16.msra.mxu0 0
    %5528 = vmatprep.subr.bf16.mxu0 0
    %5529 = vmatpush1.bf16.msra.mxu0 0
    %5530 = vmatprep.subr.bf16.mxu0 0
    %5531 = vmatpush1.bf16.msra.mxu0 0
    %5532 = vmatprep.subr.bf16.mxu0 0
    %5533 = vmatpush1.bf16.msra.mxu0 0
    %5534 = vmatprep.subr.bf16.mxu0 0
    %5535 = vmatpush1.bf16.msra.mxu0 0
    %5536 = vmatprep.subr.bf16.mxu0 0
    %5537 = vmatpush1.bf16.msra.mxu0 0
    %5538 = vmatprep.subr.bf16.mxu0 0
    %5539 = vmatpush1.bf16.msra.mxu0 0
    %5540 = vmatprep.subr.bf16.mxu0 0
    %5541 = vmatpush1.bf16.msra.mxu0 0
    %5542 = vmatprep.subr.bf16.mxu0 0
    %5543 = vmatpush1.bf16.msra.mxu0 0
    %5544 = vmatprep.subr.bf16.mxu0 0
    %5545 = vmatpush1.bf16.msra.mxu0 0
    %5546 = vmatprep.mubr.bf16.mxu0 0
    %5547 = vmatmul.mubr.bf16.gmra.mrb[0].mxu0 %v5509
    %v5548 = vpop.f32.mrb[0].mxu0
    %v5549 = vadd.f32 0.0, %v5548
    %v5550 = vpop.f32.mrb[0].mxu0
    %v5551 = vpop.f32.mrb[0].mxu0
    %v5552 = vpop.f32.mrb[0].mxu0
    %5553 = vdwg.mxu0
    %5556 = vrot.lane.b32.xlu0 %v5053, 8
    %v5557 = vpop.permute.xlu0 %5556
    %5558 = vrot.lane.b32.xlu0 %v5101, 8
    %v5559 = vpop.permute.xlu0 %5558
    %5564 = vrot.lane.b32.xlu0 %v5277, 16
    %v5565 = vpop.permute.xlu0 %5564
    %5566 = vrot.lane.b32.xlu0 %v5325, 16
    %v5567 = vpop.permute.xlu0 %5566
    %5572 = vrot.lane.b32.xlu0 %v5501, 24
    %v5573 = vpop.permute.xlu0 %5572
    %5574 = vrot.lane.b32.xlu0 %v5549, 24
    %v5575 = vpop.permute.xlu0 %5574
    %v5578 = vsel %vm299, %v4829, %v5557
    %v5579 = vsel %vm299, %v4877, %v5559
    %v5580 = vsel %vm1218, %v5578, %v5565
    %v5581 = vsel %vm1218, %v5579, %v5567
    %v5582 = vsel %vm1221, %v5580, %v5573
    %v5583 = vsel %vm1221, %v5581, %v5575
    %v5584 = vpack.c.bf16 %v5583, %v5582
    %v5586 = vlaneseq
    %v5587 = vshrl.u32 %v5586, 7
    %v5588 = vsub.s32 0, %v5587
    %v5589 = vrot.slane %v4657, %v5588
    %v5595 = vunpack.c.l.b16 %v4652
    %v5596 = vunpack.c.l.b16 %v4653
    %v5597 = vunpack.c.l.b16 %v4654
    %v5598 = vunpack.c.l.b16 %v4655
    %v5599 = vpack.c.b16 %v5596, %v5595
    %v5600 = vpack.c.b16 %v5598, %v5597
    %v5604 = vsel %vm157, %v5584, 0
    %5606 = vmatprep.subr.bf16.mxu0 0
    %5607 = vmatpush1.bf16.msra.mxu0 %v5599
    %5608 = vmatprep.subr.bf16.mxu0 0
    %5609 = vmatpush1.bf16.msra.mxu0 %v5600
    %5610 = vmatprep.subr.bf16.mxu0 0
    %5611 = vmatpush1.bf16.msra.mxu0 0
    %5612 = vmatprep.subr.bf16.mxu0 0
    %5613 = vmatpush1.bf16.msra.mxu0 0
    %5614 = vmatprep.subr.bf16.mxu0 0
    %5615 = vmatpush1.bf16.msra.mxu0 0
    %5616 = vmatprep.subr.bf16.mxu0 0
    %5617 = vmatpush1.bf16.msra.mxu0 0
    %5618 = vmatprep.subr.bf16.mxu0 0
    %5619 = vmatpush1.bf16.msra.mxu0 0
    %5620 = vmatprep.subr.bf16.mxu0 0
    %5621 = vmatpush1.bf16.msra.mxu0 0
    %5622 = vmatprep.subr.bf16.mxu0 0
    %5623 = vmatpush1.bf16.msra.mxu0 0
    %5624 = vmatprep.subr.bf16.mxu0 0
    %5625 = vmatpush1.bf16.msra.mxu0 0
    %5626 = vmatprep.subr.bf16.mxu0 0
    %5627 = vmatpush1.bf16.msra.mxu0 0
    %5628 = vmatprep.subr.bf16.mxu0 0
    %5629 = vmatpush1.bf16.msra.mxu0 0
    %5630 = vmatprep.subr.bf16.mxu0 0
    %5631 = vmatpush1.bf16.msra.mxu0 0
    %5632 = vmatprep.subr.bf16.mxu0 0
    %5633 = vmatpush1.bf16.msra.mxu0 0
    %5634 = vmatprep.subr.bf16.mxu0 0
    %5635 = vmatpush1.bf16.msra.mxu0 0
    %5636 = vmatprep.subr.bf16.mxu0 0
    %5637 = vmatpush1.bf16.msra.mxu0 0
    %5638 = vmatprep.mubr.bf16.mxu0 0
    %5639 = vmatmul.mubr.bf16.gmra.mrb[0].mxu0 %v5604
    %v5640 = vpop.f32.mrb[0].mxu0
    %v5641 = vadd.f32 %v5589, %v5640
    %v5642 = vpop.f32.mrb[0].mxu0
    %v5643 = vpop.f32.mrb[0].mxu0
    %v5644 = vadd.f32 %v5589, %v5643
    %v5645 = vpop.f32.mrb[0].mxu0
    %5646 = vdwg.mxu0
    %v5647 = vadd.f32 %v4579, %v5641
    %v5648 = vadd.f32 %v4580, %v5644
    %s5649 = scalar_lea.vmem %s33, 1
    %v5650 = vld [vmem:[%s5649] sm:$0x1]
    %s5651 = scalar_lea.vmem %s35, 1
    %v5652 = vld [vmem:[%s5651] sm:$0x1]
    %v5653 = vsel %vm157, %v5647, 0.0
    %5654 = vadd.xlane.f32.xlu0 %v5653
    %v5655 = vpop.xlane.xlu0 %5654
    %v5656 = vsel %vm157, %v5648, 0.0
    %5657 = vadd.xlane.f32.xlu0 %v5656
    %v5658 = vpop.xlane.xlu0 %5657
    %v5659 = vmul.f32 %v5655, %v1297
    %v5660 = vmul.f32 %v5658, %v1297
    %v5661 = vsub.f32 %v5647, %v5659
    %v5662 = vsub.f32 %v5648, %v5660
    %v5663 = vmul.f32 %v5661, %v5661
    %v5664 = vmul.f32 %v5662, %v5662
    %v5665 = vsel %vm157, %v5663, 0.0
    %5666 = vadd.xlane.f32.xlu0 %v5665
    %v5667 = vpop.xlane.xlu0 %5666
    %v5668 = vsel %vm157, %v5664, 0.0
    %5669 = vadd.xlane.f32.xlu0 %v5668
    %v5670 = vpop.xlane.xlu0 %5669
    %v5671 = vmul.f32 %v5667, %v1297
    %v5672 = vmul.f32 %v5670, %v1297
    %v5673 = vadd.f32 %v5671, 1e-05
    %v5674 = vadd.f32 %v5672, 1e-05
    %v5675 = vrsqrt.pop %v5673
    %v5676 = vrsqrt.pop %v5674
    %v5677 = vmul.f32 %v5661, %v5675
    %v5678 = vmul.f32 %v5662, %v5676
    %v5680 = vlaneseq
    %v5681 = vshrl.u32 %v5680, 7
    %v5682 = vsub.s32 0, %v5681
    %v5683 = vrot.slane %v5650, %v5682
    %v5685 = vmul.f32 %v5677, %v5683
    %v5686 = vmul.f32 %v5678, %v5683
    %v5688 = vlaneseq
    %v5689 = vshrl.u32 %v5688, 7
    %v5690 = vsub.s32 0, %v5689
    %v5691 = vrot.slane %v5652, %v5690
    %v5693 = vadd.f32 %v5685, %v5691
    %v5694 = vadd.f32 %v5686, %v5691
    %v5695 = vpack.c.bf16 %v5694, %v5693
    %s5696 = scalar_lea.vmem %s21, 16
    %v5697 = vld [vmem:[%s5696] sm:$0xf]
    %v5698 = vld [vmem:[%s5696 + $0x4] sm:$0xf]
    %v5699 = vld [vmem:[%s5696 + $0x8] sm:$0xf]
    %v5700 = vld [vmem:[%s5696 + $0xc] sm:$0xf]
    %s5701 = scalar_lea.vmem %s23, 1
    %v5702 = vld [vmem:[%s5701] sm:$0x1]
    %v5704 = vlaneseq
    %v5705 = vshrl.u32 %v5704, 7
    %v5706 = vsub.s32 0, %v5705
    %v5707 = vrot.slane %v5702, %v5706
    %v5713 = vunpack.c.l.b16 %v5697
    %v5714 = vunpack.c.l.b16 %v5698
    %v5715 = vunpack.c.l.b16 %v5699
    %v5716 = vunpack.c.l.b16 %v5700
    %v5717 = vpack.c.b16 %v5714, %v5713
    %v5718 = vpack.c.b16 %v5716, %v5715
    %v5722 = vsel %vm157, %v5695, 0
    %5724 = vmatprep.subr.bf16.mxu0 0
    %5725 = vmatpush1.bf16.msra.mxu0 %v5717
    %5726 = vmatprep.subr.bf16.mxu0 0
    %5727 = vmatpush1.bf16.msra.mxu0 %v5718
    %5728 = vmatprep.subr.bf16.mxu0 0
    %5729 = vmatpush1.bf16.msra.mxu0 0
    %5730 = vmatprep.subr.bf16.mxu0 0
    %5731 = vmatpush1.bf16.msra.mxu0 0
    %5732 = vmatprep.subr.bf16.mxu0 0
    %5733 = vmatpush1.bf16.msra.mxu0 0
    %5734 = vmatprep.subr.bf16.mxu0 0
    %5735 = vmatpush1.bf16.msra.mxu0 0
    %5736 = vmatprep.subr.bf16.mxu0 0
    %5737 = vmatpush1.bf16.msra.mxu0 0
    %5738 = vmatprep.subr.bf16.mxu0 0
    %5739 = vmatpush1.bf16.msra.mxu0 0
    %5740 = vmatprep.subr.bf16.mxu0 0
    %5741 = vmatpush1.bf16.msra.mxu0 0
    %5742 = vmatprep.subr.bf16.mxu0 0
    %5743 = vmatpush1.bf16.msra.mxu0 0
    %5744 = vmatprep.subr.bf16.mxu0 0
    %5745 = vmatpush1.bf16.msra.mxu0 0
    %5746 = vmatprep.subr.bf16.mxu0 0
    %5747 = vmatpush1.bf16.msra.mxu0 0
    %5748 = vmatprep.subr.bf16.mxu0 0
    %5749 = vmatpush1.bf16.msra.mxu0 0
    %5750 = vmatprep.subr.bf16.mxu0 0
    %5751 = vmatpush1.bf16.msra.mxu0 0
    %5752 = vmatprep.subr.bf16.mxu0 0
    %5753 = vmatpush1.bf16.msra.mxu0 0
    %5754 = vmatprep.subr.bf16.mxu0 0
    %5755 = vmatpush1.bf16.msra.mxu0 0
    %5756 = vmatprep.mubr.bf16.mxu0 0
    %5757 = vmatmul.mubr.bf16.gmra.mrb[0].mxu0 %v5722
    %v5758 = vpop.f32.mrb[0].mxu0
    %v5759 = vadd.f32 %v5707, %v5758
    %v5760 = vpop.f32.mrb[0].mxu0
    %v5761 = vpop.f32.mrb[0].mxu0
    %v5762 = vadd.f32 %v5707, %v5761
    %v5763 = vpop.f32.mrb[0].mxu0
    %5764 = vdwg.mxu0
    %s5765 = scalar_lea.vmem %s25, 16
    %v5766 = vld [vmem:[%s5765] sm:$0xf]
    %v5767 = vld [vmem:[%s5765 + $0x4] sm:$0xf]
    %v5768 = vld [vmem:[%s5765 + $0x8] sm:$0xf]
    %v5769 = vld [vmem:[%s5765 + $0xc] sm:$0xf]
    %s5770 = scalar_lea.vmem %s27, 1
    %v5771 = vld [vmem:[%s5770] sm:$0x1]
    %v5773 = vlaneseq
    %v5774 = vshrl.u32 %v5773, 7
    %v5775 = vsub.s32 0, %v5774
    %v5776 = vrot.slane %v5771, %v5775
    %v5782 = vunpack.c.l.b16 %v5766
    %v5783 = vunpack.c.l.b16 %v5767
    %v5784 = vunpack.c.l.b16 %v5768
    %v5785 = vunpack.c.l.b16 %v5769
    %v5786 = vpack.c.b16 %v5783, %v5782
    %v5787 = vpack.c.b16 %v5785, %v5784
    %5790 = vmatprep.subr.bf16.mxu0 0
    %5791 = vmatpush1.bf16.msra.mxu0 %v5786
    %5792 = vmatprep.subr.bf16.mxu0 0
    %5793 = vmatpush1.bf16.msra.mxu0 %v5787
    %5794 = vmatprep.subr.bf16.mxu0 0
    %5795 = vmatpush1.bf16.msra.mxu0 0
    %5796 = vmatprep.subr.bf16.mxu0 0
    %5797 = vmatpush1.bf16.msra.mxu0 0
    %5798 = vmatprep.subr.bf16.mxu0 0
    %5799 = vmatpush1.bf16.msra.mxu0 0
    %5800 = vmatprep.subr.bf16.mxu0 0
    %5801 = vmatpush1.bf16.msra.mxu0 0
    %5802 = vmatprep.subr.bf16.mxu0 0
    %5803 = vmatpush1.bf16.msra.mxu0 0
    %5804 = vmatprep.subr.bf16.mxu0 0
    %5805 = vmatpush1.bf16.msra.mxu0 0
    %5806 = vmatprep.subr.bf16.mxu0 0
    %5807 = vmatpush1.bf16.msra.mxu0 0
    %5808 = vmatprep.subr.bf16.mxu0 0
    %5809 = vmatpush1.bf16.msra.mxu0 0
    %5810 = vmatprep.subr.bf16.mxu0 0
    %5811 = vmatpush1.bf16.msra.mxu0 0
    %5812 = vmatprep.subr.bf16.mxu0 0
    %5813 = vmatpush1.bf16.msra.mxu0 0
    %5814 = vmatprep.subr.bf16.mxu0 0
    %5815 = vmatpush1.bf16.msra.mxu0 0
    %5816 = vmatprep.subr.bf16.mxu0 0
    %5817 = vmatpush1.bf16.msra.mxu0 0
    %5818 = vmatprep.subr.bf16.mxu0 0
    %5819 = vmatpush1.bf16.msra.mxu0 0
    %5820 = vmatprep.subr.bf16.mxu0 0
    %5821 = vmatpush1.bf16.msra.mxu0 0
    %5822 = vmatprep.mubr.bf16.mxu0 0
    %5823 = vmatmul.mubr.bf16.gmra.mrb[0].mxu0 %v1426
    %v5824 = vpop.f32.mrb[0].mxu0
    %v5825 = vadd.f32 %v5776, %v5824
    %v5826 = vpop.f32.mrb[0].mxu0
    %v5827 = vpop.f32.mrb[0].mxu0
    %v5828 = vadd.f32 %v5776, %v5827
    %v5829 = vpop.f32.mrb[0].mxu0
    %5830 = vmatprep.mubr.bf16.mxu0 0
    %5831 = vmatmul.mubr.bf16.gmra.mrb[0].mxu0 %v1429
    %v5832 = vpop.f32.mrb[0].mxu0
    %v5833 = vadd.f32 %v5776, %v5832
    %v5834 = vpop.f32.mrb[0].mxu0
    %v5835 = vpop.f32.mrb[0].mxu0
    %v5836 = vadd.f32 %v5776, %v5835
    %v5837 = vpop.f32.mrb[0].mxu0
    %5838 = vdwg.mxu0
    %s5839 = scalar_lea.vmem %s29, 16
    %v5840 = vld [vmem:[%s5839] sm:$0xf]
    %v5841 = vld [vmem:[%s5839 + $0x4] sm:$0xf]
    %v5842 = vld [vmem:[%s5839 + $0x8] sm:$0xf]
    %v5843 = vld [vmem:[%s5839 + $0xc] sm:$0xf]
    %s5844 = scalar_lea.vmem %s31, 1
    %v5845 = vld [vmem:[%s5844] sm:$0x1]
    %v5846 = vpack.c.bf16 %v5759, %v5759
    %v5847 = vpack.c.bf16 %v5762, %v5762
    %v5848 = vpack.c.bf16 %v5828, %v5825
    %v5849 = vpack.c.bf16 %v5836, %v5833
    %v5851 = vsel %vm299, %v5846, 0
    %v5854 = vsel %vm299, %v5848, 0
    %5856 = vmatprep.subr.bf16.mxu0 0
    %5857 = vmatpush1.bf16.xpose.msra.mxu0 %v5854
    %5858 = vmatprep.subr.bf16.mxu0 0
    %5859 = vmatpush1.bf16.xpose.msra.mxu0 0
    %5860 = vmatprep.subr.bf16.mxu0 0
    %5861 = vmatpush1.bf16.xpose.msra.mxu0 0
    %5862 = vmatprep.subr.bf16.mxu0 0
    %5863 = vmatpush1.bf16.xpose.msra.mxu0 0
    %5864 = vmatprep.subr.bf16.mxu0 0
    %5865 = vmatpush1.bf16.xpose.msra.mxu0 0
    %5866 = vmatprep.subr.bf16.mxu0 0
    %5867 = vmatpush1.bf16.xpose.msra.mxu0 0
    %5868 = vmatprep.subr.bf16.mxu0 0
    %5869 = vmatpush1.bf16.xpose.msra.mxu0 0
    %5870 = vmatprep.subr.bf16.mxu0 0
    %5871 = vmatpush1.bf16.xpose.msra.mxu0 0
    %5872 = vmatprep.subr.bf16.mxu0 0
    %5873 = vmatpush1.bf16.xpose.msra.mxu0 0
    %5874 = vmatprep.subr.bf16.mxu0 0
    %5875 = vmatpush1.bf16.xpose.msra.mxu0 0
    %5876 = vmatprep.subr.bf16.mxu0 0
    %5877 = vmatpush1.bf16.xpose.msra.mxu0 0
    %5878 = vmatprep.subr.bf16.mxu0 0
    %5879 = vmatpush1.bf16.xpose.msra.mxu0 0
    %5880 = vmatprep.subr.bf16.mxu0 0
    %5881 = vmatpush1.bf16.xpose.msra.mxu0 0
    %5882 = vmatprep.subr.bf16.mxu0 0
    %5883 = vmatpush1.bf16.xpose.msra.mxu0 0
    %5884 = vmatprep.subr.bf16.mxu0 0
    %5885 = vmatpush1.bf16.xpose.msra.mxu0 0
    %5886 = vmatprep.subr.bf16.mxu0 0
    %5887 = vmatpush1.bf16.xpose.msra.mxu0 0
    %5888 = vmatprep.mubr.bf16.mxu0 0
    %5889 = vmatmul.mubr.bf16.gmra.mrb[0].mxu0 %v5851
    %v5890 = vpop.f32.mrb[0].mxu0
    %v5891 = vadd.f32 0.0, %v5890
    %v5892 = vpop.f32.mrb[0].mxu0
    %v5893 = vpop.f32.mrb[0].mxu0
    %v5894 = vpop.f32.mrb[0].mxu0
    %5895 = vdwg.mxu0
    %v5897 = vsel %vm299, %v5847, 0
    %v5900 = vsel %vm299, %v5849, 0
    %5902 = vmatprep.subr.bf16.mxu0 0
    %5903 = vmatpush1.bf16.xpose.msra.mxu0 %v5900
    %5904 = vmatprep.subr.bf16.mxu0 0
    %5905 = vmatpush1.bf16.xpose.msra.mxu0 0
    %5906 = vmatprep.subr.bf16.mxu0 0
    %5907 = vmatpush1.bf16.xpose.msra.mxu0 0
    %5908 = vmatprep.subr.bf16.mxu0 0
    %5909 = vmatpush1.bf16.xpose.msra.mxu0 0
    %5910 = vmatprep.subr.bf16.mxu0 0
    %5911 = vmatpush1.bf16.xpose.msra.mxu0 0
    %5912 = vmatprep.subr.bf16.mxu0 0
    %5913 = vmatpush1.bf16.xpose.msra.mxu0 0
    %5914 = vmatprep.subr.bf16.mxu0 0
    %5915 = vmatpush1.bf16.xpose.msra.mxu0 0
    %5916 = vmatprep.subr.bf16.mxu0 0
    %5917 = vmatpush1.bf16.xpose.msra.mxu0 0
    %5918 = vmatprep.subr.bf16.mxu0 0
    %5919 = vmatpush1.bf16.xpose.msra.mxu0 0
    %5920 = vmatprep.subr.bf16.mxu0 0
    %5921 = vmatpush1.bf16.xpose.msra.mxu0 0
    %5922 = vmatprep.subr.bf16.mxu0 0
    %5923 = vmatpush1.bf16.xpose.msra.mxu0 0
    %5924 = vmatprep.subr.bf16.mxu0 0
    %5925 = vmatpush1.bf16.xpose.msra.mxu0 0
    %5926 = vmatprep.subr.bf16.mxu0 0
    %5927 = vmatpush1.bf16.xpose.msra.mxu0 0
    %5928 = vmatprep.subr.bf16.mxu0 0
    %5929 = vmatpush1.bf16.xpose.msra.mxu0 0
    %5930 = vmatprep.subr.bf16.mxu0 0
    %5931 = vmatpush1.bf16.xpose.msra.mxu0 0
    %5932 = vmatprep.subr.bf16.mxu0 0
    %5933 = vmatpush1.bf16.xpose.msra.mxu0 0
    %5934 = vmatprep.mubr.bf16.mxu0 0
    %5935 = vmatmul.mubr.bf16.gmra.mrb[0].mxu0 %v5897
    %v5936 = vpop.f32.mrb[0].mxu0
    %v5937 = vadd.f32 0.0, %v5936
    %v5938 = vpop.f32.mrb[0].mxu0
    %v5939 = vpop.f32.mrb[0].mxu0
    %v5940 = vpop.f32.mrb[0].mxu0
    %5941 = vdwg.mxu0
    %v5942 = vmul.f32 %v5891, 0.35355338
    %v5943 = vmul.f32 %v5937, 0.35355338
    %v5944 = vadd.f32 %v5942, %v219
    %v5945 = vadd.f32 %v5943, %v220
    %v5946 = vsel %vm1218, %v5944, -inf
    %5947 = vmax.xlane.f32.xlu0 %v5946
    %v5948 = vpop.xlane.xlu0 %5947
    %v5949 = vsel %vm1218, %v5945, -inf
    %5950 = vmax.xlane.f32.xlu0 %v5949
    %v5951 = vpop.xlane.xlu0 %5950
    %v5952 = vsub.f32 %v5944, %v5948
    %v5953 = vsub.f32 %v5945, %v5951
    %v5954 = vmul.f32 %v5952, 1.442695
    %v5955 = vpow.pop %v5954
    %v5956 = vmul.f32 %v5953, 1.442695
    %v5957 = vpow.pop %v5956
    %v5958 = vsel %vm1218, %v5955, 0.0
    %5959 = vadd.xlane.f32.xlu0 %v5958
    %v5960 = vpop.xlane.xlu0 %5959
    %v5961 = vsel %vm1218, %v5957, 0.0
    %5962 = vadd.xlane.f32.xlu0 %v5961
    %v5963 = vpop.xlane.xlu0 %5962
    %v5964 = vrcp.pop %v5960
    %v5965 = vrcp.pop %v5963
    %v5966 = vmul.f32 %v5955, %v5964
    %v5967 = vmul.f32 %v5957, %v5965
    %v5968 = vpack.c.bf16 %v5966, %v5966
    %v5969 = vpack.c.bf16 %v5967, %v5967
    %5971 = vrot.lane.b32.xlu0 %v5848, 96
    %v5972 = vpop.permute.xlu0 %5971
    %v5975 = vsel %vm1218, %v5968, 0
    %5977 = vmatprep.subr.bf16.mxu0 0
    %5978 = vmatpush1.bf16.msra.mxu0 %v5972
    %5979 = vmatprep.subr.bf16.mxu0 0
    %5980 = vmatpush1.bf16.msra.mxu0 0
    %5981 = vmatprep.subr.bf16.mxu0 0
    %5982 = vmatpush1.bf16.msra.mxu0 0
    %5983 = vmatprep.subr.bf16.mxu0 0
    %5984 = vmatpush1.bf16.msra.mxu0 0
    %5985 = vmatprep.subr.bf16.mxu0 0
    %5986 = vmatpush1.bf16.msra.mxu0 0
    %5987 = vmatprep.subr.bf16.mxu0 0
    %5988 = vmatpush1.bf16.msra.mxu0 0
    %5989 = vmatprep.subr.bf16.mxu0 0
    %5990 = vmatpush1.bf16.msra.mxu0 0
    %5991 = vmatprep.subr.bf16.mxu0 0
    %5992 = vmatpush1.bf16.msra.mxu0 0
    %5993 = vmatprep.subr.bf16.mxu0 0
    %5994 = vmatpush1.bf16.msra.mxu0 0
    %5995 = vmatprep.subr.bf16.mxu0 0
    %5996 = vmatpush1.bf16.msra.mxu0 0
    %5997 = vmatprep.subr.bf16.mxu0 0
    %5998 = vmatpush1.bf16.msra.mxu0 0
    %5999 = vmatprep.subr.bf16.mxu0 0
    %6000 = vmatpush1.bf16.msra.mxu0 0
    %6001 = vmatprep.subr.bf16.mxu0 0
    %6002 = vmatpush1.bf16.msra.mxu0 0
    %6003 = vmatprep.subr.bf16.mxu0 0
    %6004 = vmatpush1.bf16.msra.mxu0 0
    %6005 = vmatprep.subr.bf16.mxu0 0
    %6006 = vmatpush1.bf16.msra.mxu0 0
    %6007 = vmatprep.subr.bf16.mxu0 0
    %6008 = vmatpush1.bf16.msra.mxu0 0
    %6009 = vmatprep.mubr.bf16.mxu0 0
    %6010 = vmatmul.mubr.bf16.gmra.mrb[0].mxu0 %v5975
    %v6011 = vpop.f32.mrb[0].mxu0
    %v6012 = vadd.f32 0.0, %v6011
    %v6013 = vpop.f32.mrb[0].mxu0
    %v6014 = vpop.f32.mrb[0].mxu0
    %v6015 = vpop.f32.mrb[0].mxu0
    %6016 = vdwg.mxu0
    %6018 = vrot.lane.b32.xlu0 %v5849, 96
    %v6019 = vpop.permute.xlu0 %6018
    %v6022 = vsel %vm1218, %v5969, 0
    %6024 = vmatprep.subr.bf16.mxu0 0
    %6025 = vmatpush1.bf16.msra.mxu0 %v6019
    %6026 = vmatprep.subr.bf16.mxu0 0
    %6027 = vmatpush1.bf16.msra.mxu0 0
    %6028 = vmatprep.subr.bf16.mxu0 0
    %6029 = vmatpush1.bf16.msra.mxu0 0
    %6030 = vmatprep.subr.bf16.mxu0 0
    %6031 = vmatpush1.bf16.msra.mxu0 0
    %6032 = vmatprep.subr.bf16.mxu0 0
    %6033 = vmatpush1.bf16.msra.mxu0 0
    %6034 = vmatprep.subr.bf16.mxu0 0
    %6035 = vmatpush1.bf16.msra.mxu0 0
    %6036 = vmatprep.subr.bf16.mxu0 0
    %6037 = vmatpush1.bf16.msra.mxu0 0
    %6038 = vmatprep.subr.bf16.mxu0 0
    %6039 = vmatpush1.bf16.msra.mxu0 0
    %6040 = vmatprep.subr.bf16.mxu0 0
    %6041 = vmatpush1.bf16.msra.mxu0 0
    %6042 = vmatprep.subr.bf16.mxu0 0
    %6043 = vmatpush1.bf16.msra.mxu0 0
    %6044 = vmatprep.subr.bf16.mxu0 0
    %6045 = vmatpush1.bf16.msra.mxu0 0
    %6046 = vmatprep.subr.bf16.mxu0 0
    %6047 = vmatpush1.bf16.msra.mxu0 0
    %6048 = vmatprep.subr.bf16.mxu0 0
    %6049 = vmatpush1.bf16.msra.mxu0 0
    %6050 = vmatprep.subr.bf16.mxu0 0
    %6051 = vmatpush1.bf16.msra.mxu0 0
    %6052 = vmatprep.subr.bf16.mxu0 0
    %6053 = vmatpush1.bf16.msra.mxu0 0
    %6054 = vmatprep.subr.bf16.mxu0 0
    %6055 = vmatpush1.bf16.msra.mxu0 0
    %6056 = vmatprep.mubr.bf16.mxu0 0
    %6057 = vmatmul.mubr.bf16.gmra.mrb[0].mxu0 %v6022
    %v6058 = vpop.f32.mrb[0].mxu0
    %v6059 = vadd.f32 0.0, %v6058
    %v6060 = vpop.f32.mrb[0].mxu0
    %v6061 = vpop.f32.mrb[0].mxu0
    %v6062 = vpop.f32.mrb[0].mxu0
    %6063 = vdwg.mxu0
    %6065 = vrot.lane.b32.xlu0 %v5846, 120
    %v6066 = vpop.permute.xlu0 %6065
    %6067 = vrot.lane.b32.xlu0 %v5848, 120
    %v6068 = vpop.permute.xlu0 %6067
    %v6070 = vsel %vm299, %v6066, 0
    %v6073 = vsel %vm299, %v6068, 0
    %6075 = vmatprep.subr.bf16.mxu0 0
    %6076 = vmatpush1.bf16.xpose.msra.mxu0 %v6073
    %6077 = vmatprep.subr.bf16.mxu0 0
    %6078 = vmatpush1.bf16.xpose.msra.mxu0 0
    %6079 = vmatprep.subr.bf16.mxu0 0
    %6080 = vmatpush1.bf16.xpose.msra.mxu0 0
    %6081 = vmatprep.subr.bf16.mxu0 0
    %6082 = vmatpush1.bf16.xpose.msra.mxu0 0
    %6083 = vmatprep.subr.bf16.mxu0 0
    %6084 = vmatpush1.bf16.xpose.msra.mxu0 0
    %6085 = vmatprep.subr.bf16.mxu0 0
    %6086 = vmatpush1.bf16.xpose.msra.mxu0 0
    %6087 = vmatprep.subr.bf16.mxu0 0
    %6088 = vmatpush1.bf16.xpose.msra.mxu0 0
    %6089 = vmatprep.subr.bf16.mxu0 0
    %6090 = vmatpush1.bf16.xpose.msra.mxu0 0
    %6091 = vmatprep.subr.bf16.mxu0 0
    %6092 = vmatpush1.bf16.xpose.msra.mxu0 0
    %6093 = vmatprep.subr.bf16.mxu0 0
    %6094 = vmatpush1.bf16.xpose.msra.mxu0 0
    %6095 = vmatprep.subr.bf16.mxu0 0
    %6096 = vmatpush1.bf16.xpose.msra.mxu0 0
    %6097 = vmatprep.subr.bf16.mxu0 0
    %6098 = vmatpush1.bf16.xpose.msra.mxu0 0
    %6099 = vmatprep.subr.bf16.mxu0 0
    %6100 = vmatpush1.bf16.xpose.msra.mxu0 0
    %6101 = vmatprep.subr.bf16.mxu0 0
    %6102 = vmatpush1.bf16.xpose.msra.mxu0 0
    %6103 = vmatprep.subr.bf16.mxu0 0
    %6104 = vmatpush1.bf16.xpose.msra.mxu0 0
    %6105 = vmatprep.subr.bf16.mxu0 0
    %6106 = vmatpush1.bf16.xpose.msra.mxu0 0
    %6107 = vmatprep.mubr.bf16.mxu0 0
    %6108 = vmatmul.mubr.bf16.gmra.mrb[0].mxu0 %v6070
    %v6109 = vpop.f32.mrb[0].mxu0
    %v6110 = vadd.f32 0.0, %v6109
    %v6111 = vpop.f32.mrb[0].mxu0
    %v6112 = vpop.f32.mrb[0].mxu0
    %v6113 = vpop.f32.mrb[0].mxu0
    %6114 = vdwg.mxu0
    %6116 = vrot.lane.b32.xlu0 %v5847, 120
    %v6117 = vpop.permute.xlu0 %6116
    %6118 = vrot.lane.b32.xlu0 %v5849, 120
    %v6119 = vpop.permute.xlu0 %6118
    %v6121 = vsel %vm299, %v6117, 0
    %v6124 = vsel %vm299, %v6119, 0
    %6126 = vmatprep.subr.bf16.mxu0 0
    %6127 = vmatpush1.bf16.xpose.msra.mxu0 %v6124
    %6128 = vmatprep.subr.bf16.mxu0 0
    %6129 = vmatpush1.bf16.xpose.msra.mxu0 0
    %6130 = vmatprep.subr.bf16.mxu0 0
    %6131 = vmatpush1.bf16.xpose.msra.mxu0 0
    %6132 = vmatprep.subr.bf16.mxu0 0
    %6133 = vmatpush1.bf16.xpose.msra.mxu0 0
    %6134 = vmatprep.subr.bf16.mxu0 0
    %6135 = vmatpush1.bf16.xpose.msra.mxu0 0
    %6136 = vmatprep.subr.bf16.mxu0 0
    %6137 = vmatpush1.bf16.xpose.msra.mxu0 0
    %6138 = vmatprep.subr.bf16.mxu0 0
    %6139 = vmatpush1.bf16.xpose.msra.mxu0 0
    %6140 = vmatprep.subr.bf16.mxu0 0
    %6141 = vmatpush1.bf16.xpose.msra.mxu0 0
    %6142 = vmatprep.subr.bf16.mxu0 0
    %6143 = vmatpush1.bf16.xpose.msra.mxu0 0
    %6144 = vmatprep.subr.bf16.mxu0 0
    %6145 = vmatpush1.bf16.xpose.msra.mxu0 0
    %6146 = vmatprep.subr.bf16.mxu0 0
    %6147 = vmatpush1.bf16.xpose.msra.mxu0 0
    %6148 = vmatprep.subr.bf16.mxu0 0
    %6149 = vmatpush1.bf16.xpose.msra.mxu0 0
    %6150 = vmatprep.subr.bf16.mxu0 0
    %6151 = vmatpush1.bf16.xpose.msra.mxu0 0
    %6152 = vmatprep.subr.bf16.mxu0 0
    %6153 = vmatpush1.bf16.xpose.msra.mxu0 0
    %6154 = vmatprep.subr.bf16.mxu0 0
    %6155 = vmatpush1.bf16.xpose.msra.mxu0 0
    %6156 = vmatprep.subr.bf16.mxu0 0
    %6157 = vmatpush1.bf16.xpose.msra.mxu0 0
    %6158 = vmatprep.mubr.bf16.mxu0 0
    %6159 = vmatmul.mubr.bf16.gmra.mrb[0].mxu0 %v6121
    %v6160 = vpop.f32.mrb[0].mxu0
    %v6161 = vadd.f32 0.0, %v6160
    %v6162 = vpop.f32.mrb[0].mxu0
    %v6163 = vpop.f32.mrb[0].mxu0
    %v6164 = vpop.f32.mrb[0].mxu0
    %6165 = vdwg.mxu0
    %v6166 = vmul.f32 %v6110, 0.35355338
    %v6167 = vmul.f32 %v6161, 0.35355338
    %v6168 = vadd.f32 %v6166, %v219
    %v6169 = vadd.f32 %v6167, %v220
    %v6170 = vsel %vm1218, %v6168, -inf
    %6171 = vmax.xlane.f32.xlu0 %v6170
    %v6172 = vpop.xlane.xlu0 %6171
    %v6173 = vsel %vm1218, %v6169, -inf
    %6174 = vmax.xlane.f32.xlu0 %v6173
    %v6175 = vpop.xlane.xlu0 %6174
    %v6176 = vsub.f32 %v6168, %v6172
    %v6177 = vsub.f32 %v6169, %v6175
    %v6178 = vmul.f32 %v6176, 1.442695
    %v6179 = vpow.pop %v6178
    %v6180 = vmul.f32 %v6177, 1.442695
    %v6181 = vpow.pop %v6180
    %v6182 = vsel %vm1218, %v6179, 0.0
    %6183 = vadd.xlane.f32.xlu0 %v6182
    %v6184 = vpop.xlane.xlu0 %6183
    %v6185 = vsel %vm1218, %v6181, 0.0
    %6186 = vadd.xlane.f32.xlu0 %v6185
    %v6187 = vpop.xlane.xlu0 %6186
    %v6188 = vrcp.pop %v6184
    %v6189 = vrcp.pop %v6187
    %v6190 = vmul.f32 %v6179, %v6188
    %v6191 = vmul.f32 %v6181, %v6189
    %v6192 = vpack.c.bf16 %v6190, %v6190
    %v6193 = vpack.c.bf16 %v6191, %v6191
    %6194 = vrot.lane.b32.xlu0 %v5848, 88
    %v6195 = vpop.permute.xlu0 %6194
    %v6198 = vsel %vm1218, %v6192, 0
    %6200 = vmatprep.subr.bf16.mxu0 0
    %6201 = vmatpush1.bf16.msra.mxu0 %v6195
    %6202 = vmatprep.subr.bf16.mxu0 0
    %6203 = vmatpush1.bf16.msra.mxu0 0
    %6204 = vmatprep.subr.bf16.mxu0 0
    %6205 = vmatpush1.bf16.msra.mxu0 0
    %6206 = vmatprep.subr.bf16.mxu0 0
    %6207 = vmatpush1.bf16.msra.mxu0 0
    %6208 = vmatprep.subr.bf16.mxu0 0
    %6209 = vmatpush1.bf16.msra.mxu0 0
    %6210 = vmatprep.subr.bf16.mxu0 0
    %6211 = vmatpush1.bf16.msra.mxu0 0
    %6212 = vmatprep.subr.bf16.mxu0 0
    %6213 = vmatpush1.bf16.msra.mxu0 0
    %6214 = vmatprep.subr.bf16.mxu0 0
    %6215 = vmatpush1.bf16.msra.mxu0 0
    %6216 = vmatprep.subr.bf16.mxu0 0
    %6217 = vmatpush1.bf16.msra.mxu0 0
    %6218 = vmatprep.subr.bf16.mxu0 0
    %6219 = vmatpush1.bf16.msra.mxu0 0
    %6220 = vmatprep.subr.bf16.mxu0 0
    %6221 = vmatpush1.bf16.msra.mxu0 0
    %6222 = vmatprep.subr.bf16.mxu0 0
    %6223 = vmatpush1.bf16.msra.mxu0 0
    %6224 = vmatprep.subr.bf16.mxu0 0
    %6225 = vmatpush1.bf16.msra.mxu0 0
    %6226 = vmatprep.subr.bf16.mxu0 0
    %6227 = vmatpush1.bf16.msra.mxu0 0
    %6228 = vmatprep.subr.bf16.mxu0 0
    %6229 = vmatpush1.bf16.msra.mxu0 0
    %6230 = vmatprep.subr.bf16.mxu0 0
    %6231 = vmatpush1.bf16.msra.mxu0 0
    %6232 = vmatprep.mubr.bf16.mxu0 0
    %6233 = vmatmul.mubr.bf16.gmra.mrb[0].mxu0 %v6198
    %v6234 = vpop.f32.mrb[0].mxu0
    %v6235 = vadd.f32 0.0, %v6234
    %v6236 = vpop.f32.mrb[0].mxu0
    %v6237 = vpop.f32.mrb[0].mxu0
    %v6238 = vpop.f32.mrb[0].mxu0
    %6239 = vdwg.mxu0
    %6240 = vrot.lane.b32.xlu0 %v5849, 88
    %v6241 = vpop.permute.xlu0 %6240
    %v6244 = vsel %vm1218, %v6193, 0
    %6246 = vmatprep.subr.bf16.mxu0 0
    %6247 = vmatpush1.bf16.msra.mxu0 %v6241
    %6248 = vmatprep.subr.bf16.mxu0 0
    %6249 = vmatpush1.bf16.msra.mxu0 0
    %6250 = vmatprep.subr.bf16.mxu0 0
    %6251 = vmatpush1.bf16.msra.mxu0 0
    %6252 = vmatprep.subr.bf16.mxu0 0
    %6253 = vmatpush1.bf16.msra.mxu0 0
    %6254 = vmatprep.subr.bf16.mxu0 0
    %6255 = vmatpush1.bf16.msra.mxu0 0
    %6256 = vmatprep.subr.bf16.mxu0 0
    %6257 = vmatpush1.bf16.msra.mxu0 0
    %6258 = vmatprep.subr.bf16.mxu0 0
    %6259 = vmatpush1.bf16.msra.mxu0 0
    %6260 = vmatprep.subr.bf16.mxu0 0
    %6261 = vmatpush1.bf16.msra.mxu0 0
    %6262 = vmatprep.subr.bf16.mxu0 0
    %6263 = vmatpush1.bf16.msra.mxu0 0
    %6264 = vmatprep.subr.bf16.mxu0 0
    %6265 = vmatpush1.bf16.msra.mxu0 0
    %6266 = vmatprep.subr.bf16.mxu0 0
    %6267 = vmatpush1.bf16.msra.mxu0 0
    %6268 = vmatprep.subr.bf16.mxu0 0
    %6269 = vmatpush1.bf16.msra.mxu0 0
    %6270 = vmatprep.subr.bf16.mxu0 0
    %6271 = vmatpush1.bf16.msra.mxu0 0
    %6272 = vmatprep.subr.bf16.mxu0 0
    %6273 = vmatpush1.bf16.msra.mxu0 0
    %6274 = vmatprep.subr.bf16.mxu0 0
    %6275 = vmatpush1.bf16.msra.mxu0 0
    %6276 = vmatprep.subr.bf16.mxu0 0
    %6277 = vmatpush1.bf16.msra.mxu0 0
    %6278 = vmatprep.mubr.bf16.mxu0 0
    %6279 = vmatmul.mubr.bf16.gmra.mrb[0].mxu0 %v6244
    %v6280 = vpop.f32.mrb[0].mxu0
    %v6281 = vadd.f32 0.0, %v6280
    %v6282 = vpop.f32.mrb[0].mxu0
    %v6283 = vpop.f32.mrb[0].mxu0
    %v6284 = vpop.f32.mrb[0].mxu0
    %6285 = vdwg.mxu0
    %6286 = vrot.lane.b32.xlu0 %v5846, 112
    %v6287 = vpop.permute.xlu0 %6286
    %6288 = vrot.lane.b32.xlu0 %v5848, 112
    %v6289 = vpop.permute.xlu0 %6288
    %v6291 = vsel %vm299, %v6287, 0
    %v6294 = vsel %vm299, %v6289, 0
    %6296 = vmatprep.subr.bf16.mxu0 0
    %6297 = vmatpush1.bf16.xpose.msra.mxu0 %v6294
    %6298 = vmatprep.subr.bf16.mxu0 0
    %6299 = vmatpush1.bf16.xpose.msra.mxu0 0
    %6300 = vmatprep.subr.bf16.mxu0 0
    %6301 = vmatpush1.bf16.xpose.msra.mxu0 0
    %6302 = vmatprep.subr.bf16.mxu0 0
    %6303 = vmatpush1.bf16.xpose.msra.mxu0 0
    %6304 = vmatprep.subr.bf16.mxu0 0
    %6305 = vmatpush1.bf16.xpose.msra.mxu0 0
    %6306 = vmatprep.subr.bf16.mxu0 0
    %6307 = vmatpush1.bf16.xpose.msra.mxu0 0
    %6308 = vmatprep.subr.bf16.mxu0 0
    %6309 = vmatpush1.bf16.xpose.msra.mxu0 0
    %6310 = vmatprep.subr.bf16.mxu0 0
    %6311 = vmatpush1.bf16.xpose.msra.mxu0 0
    %6312 = vmatprep.subr.bf16.mxu0 0
    %6313 = vmatpush1.bf16.xpose.msra.mxu0 0
    %6314 = vmatprep.subr.bf16.mxu0 0
    %6315 = vmatpush1.bf16.xpose.msra.mxu0 0
    %6316 = vmatprep.subr.bf16.mxu0 0
    %6317 = vmatpush1.bf16.xpose.msra.mxu0 0
    %6318 = vmatprep.subr.bf16.mxu0 0
    %6319 = vmatpush1.bf16.xpose.msra.mxu0 0
    %6320 = vmatprep.subr.bf16.mxu0 0
    %6321 = vmatpush1.bf16.xpose.msra.mxu0 0
    %6322 = vmatprep.subr.bf16.mxu0 0
    %6323 = vmatpush1.bf16.xpose.msra.mxu0 0
    %6324 = vmatprep.subr.bf16.mxu0 0
    %6325 = vmatpush1.bf16.xpose.msra.mxu0 0
    %6326 = vmatprep.subr.bf16.mxu0 0
    %6327 = vmatpush1.bf16.xpose.msra.mxu0 0
    %6328 = vmatprep.mubr.bf16.mxu0 0
    %6329 = vmatmul.mubr.bf16.gmra.mrb[0].mxu0 %v6291
    %v6330 = vpop.f32.mrb[0].mxu0
    %v6331 = vadd.f32 0.0, %v6330
    %v6332 = vpop.f32.mrb[0].mxu0
    %v6333 = vpop.f32.mrb[0].mxu0
    %v6334 = vpop.f32.mrb[0].mxu0
    %6335 = vdwg.mxu0
    %6336 = vrot.lane.b32.xlu0 %v5847, 112
    %v6337 = vpop.permute.xlu0 %6336
    %6338 = vrot.lane.b32.xlu0 %v5849, 112
    %v6339 = vpop.permute.xlu0 %6338
    %v6341 = vsel %vm299, %v6337, 0
    %v6344 = vsel %vm299, %v6339, 0
    %6346 = vmatprep.subr.bf16.mxu0 0
    %6347 = vmatpush1.bf16.xpose.msra.mxu0 %v6344
    %6348 = vmatprep.subr.bf16.mxu0 0
    %6349 = vmatpush1.bf16.xpose.msra.mxu0 0
    %6350 = vmatprep.subr.bf16.mxu0 0
    %6351 = vmatpush1.bf16.xpose.msra.mxu0 0
    %6352 = vmatprep.subr.bf16.mxu0 0
    %6353 = vmatpush1.bf16.xpose.msra.mxu0 0
    %6354 = vmatprep.subr.bf16.mxu0 0
    %6355 = vmatpush1.bf16.xpose.msra.mxu0 0
    %6356 = vmatprep.subr.bf16.mxu0 0
    %6357 = vmatpush1.bf16.xpose.msra.mxu0 0
    %6358 = vmatprep.subr.bf16.mxu0 0
    %6359 = vmatpush1.bf16.xpose.msra.mxu0 0
    %6360 = vmatprep.subr.bf16.mxu0 0
    %6361 = vmatpush1.bf16.xpose.msra.mxu0 0
    %6362 = vmatprep.subr.bf16.mxu0 0
    %6363 = vmatpush1.bf16.xpose.msra.mxu0 0
    %6364 = vmatprep.subr.bf16.mxu0 0
    %6365 = vmatpush1.bf16.xpose.msra.mxu0 0
    %6366 = vmatprep.subr.bf16.mxu0 0
    %6367 = vmatpush1.bf16.xpose.msra.mxu0 0
    %6368 = vmatprep.subr.bf16.mxu0 0
    %6369 = vmatpush1.bf16.xpose.msra.mxu0 0
    %6370 = vmatprep.subr.bf16.mxu0 0
    %6371 = vmatpush1.bf16.xpose.msra.mxu0 0
    %6372 = vmatprep.subr.bf16.mxu0 0
    %6373 = vmatpush1.bf16.xpose.msra.mxu0 0
    %6374 = vmatprep.subr.bf16.mxu0 0
    %6375 = vmatpush1.bf16.xpose.msra.mxu0 0
    %6376 = vmatprep.subr.bf16.mxu0 0
    %6377 = vmatpush1.bf16.xpose.msra.mxu0 0
    %6378 = vmatprep.mubr.bf16.mxu0 0
    %6379 = vmatmul.mubr.bf16.gmra.mrb[0].mxu0 %v6341
    %v6380 = vpop.f32.mrb[0].mxu0
    %v6381 = vadd.f32 0.0, %v6380
    %v6382 = vpop.f32.mrb[0].mxu0
    %v6383 = vpop.f32.mrb[0].mxu0
    %v6384 = vpop.f32.mrb[0].mxu0
    %6385 = vdwg.mxu0
    %v6386 = vmul.f32 %v6331, 0.35355338
    %v6387 = vmul.f32 %v6381, 0.35355338
    %v6388 = vadd.f32 %v6386, %v219
    %v6389 = vadd.f32 %v6387, %v220
    %v6390 = vsel %vm1218, %v6388, -inf
    %6391 = vmax.xlane.f32.xlu0 %v6390
    %v6392 = vpop.xlane.xlu0 %6391
    %v6393 = vsel %vm1218, %v6389, -inf
    %6394 = vmax.xlane.f32.xlu0 %v6393
    %v6395 = vpop.xlane.xlu0 %6394
    %v6396 = vsub.f32 %v6388, %v6392
    %v6397 = vsub.f32 %v6389, %v6395
    %v6398 = vmul.f32 %v6396, 1.442695
    %v6399 = vpow.pop %v6398
    %v6400 = vmul.f32 %v6397, 1.442695
    %v6401 = vpow.pop %v6400
    %v6402 = vsel %vm1218, %v6399, 0.0
    %6403 = vadd.xlane.f32.xlu0 %v6402
    %v6404 = vpop.xlane.xlu0 %6403
    %v6405 = vsel %vm1218, %v6401, 0.0
    %6406 = vadd.xlane.f32.xlu0 %v6405
    %v6407 = vpop.xlane.xlu0 %6406
    %v6408 = vrcp.pop %v6404
    %v6409 = vrcp.pop %v6407
    %v6410 = vmul.f32 %v6399, %v6408
    %v6411 = vmul.f32 %v6401, %v6409
    %v6412 = vpack.c.bf16 %v6410, %v6410
    %v6413 = vpack.c.bf16 %v6411, %v6411
    %6414 = vrot.lane.b32.xlu0 %v5848, 80
    %v6415 = vpop.permute.xlu0 %6414
    %v6418 = vsel %vm1218, %v6412, 0
    %6420 = vmatprep.subr.bf16.mxu0 0
    %6421 = vmatpush1.bf16.msra.mxu0 %v6415
    %6422 = vmatprep.subr.bf16.mxu0 0
    %6423 = vmatpush1.bf16.msra.mxu0 0
    %6424 = vmatprep.subr.bf16.mxu0 0
    %6425 = vmatpush1.bf16.msra.mxu0 0
    %6426 = vmatprep.subr.bf16.mxu0 0
    %6427 = vmatpush1.bf16.msra.mxu0 0
    %6428 = vmatprep.subr.bf16.mxu0 0
    %6429 = vmatpush1.bf16.msra.mxu0 0
    %6430 = vmatprep.subr.bf16.mxu0 0
    %6431 = vmatpush1.bf16.msra.mxu0 0
    %6432 = vmatprep.subr.bf16.mxu0 0
    %6433 = vmatpush1.bf16.msra.mxu0 0
    %6434 = vmatprep.subr.bf16.mxu0 0
    %6435 = vmatpush1.bf16.msra.mxu0 0
    %6436 = vmatprep.subr.bf16.mxu0 0
    %6437 = vmatpush1.bf16.msra.mxu0 0
    %6438 = vmatprep.subr.bf16.mxu0 0
    %6439 = vmatpush1.bf16.msra.mxu0 0
    %6440 = vmatprep.subr.bf16.mxu0 0
    %6441 = vmatpush1.bf16.msra.mxu0 0
    %6442 = vmatprep.subr.bf16.mxu0 0
    %6443 = vmatpush1.bf16.msra.mxu0 0
    %6444 = vmatprep.subr.bf16.mxu0 0
    %6445 = vmatpush1.bf16.msra.mxu0 0
    %6446 = vmatprep.subr.bf16.mxu0 0
    %6447 = vmatpush1.bf16.msra.mxu0 0
    %6448 = vmatprep.subr.bf16.mxu0 0
    %6449 = vmatpush1.bf16.msra.mxu0 0
    %6450 = vmatprep.subr.bf16.mxu0 0
    %6451 = vmatpush1.bf16.msra.mxu0 0
    %6452 = vmatprep.mubr.bf16.mxu0 0
    %6453 = vmatmul.mubr.bf16.gmra.mrb[0].mxu0 %v6418
    %v6454 = vpop.f32.mrb[0].mxu0
    %v6455 = vadd.f32 0.0, %v6454
    %v6456 = vpop.f32.mrb[0].mxu0
    %v6457 = vpop.f32.mrb[0].mxu0
    %v6458 = vpop.f32.mrb[0].mxu0
    %6459 = vdwg.mxu0
    %6460 = vrot.lane.b32.xlu0 %v5849, 80
    %v6461 = vpop.permute.xlu0 %6460
    %v6464 = vsel %vm1218, %v6413, 0
    %6466 = vmatprep.subr.bf16.mxu0 0
    %6467 = vmatpush1.bf16.msra.mxu0 %v6461
    %6468 = vmatprep.subr.bf16.mxu0 0
    %6469 = vmatpush1.bf16.msra.mxu0 0
    %6470 = vmatprep.subr.bf16.mxu0 0
    %6471 = vmatpush1.bf16.msra.mxu0 0
    %6472 = vmatprep.subr.bf16.mxu0 0
    %6473 = vmatpush1.bf16.msra.mxu0 0
    %6474 = vmatprep.subr.bf16.mxu0 0
    %6475 = vmatpush1.bf16.msra.mxu0 0
    %6476 = vmatprep.subr.bf16.mxu0 0
    %6477 = vmatpush1.bf16.msra.mxu0 0
    %6478 = vmatprep.subr.bf16.mxu0 0
    %6479 = vmatpush1.bf16.msra.mxu0 0
    %6480 = vmatprep.subr.bf16.mxu0 0
    %6481 = vmatpush1.bf16.msra.mxu0 0
    %6482 = vmatprep.subr.bf16.mxu0 0
    %6483 = vmatpush1.bf16.msra.mxu0 0
    %6484 = vmatprep.subr.bf16.mxu0 0
    %6485 = vmatpush1.bf16.msra.mxu0 0
    %6486 = vmatprep.subr.bf16.mxu0 0
    %6487 = vmatpush1.bf16.msra.mxu0 0
    %6488 = vmatprep.subr.bf16.mxu0 0
    %6489 = vmatpush1.bf16.msra.mxu0 0
    %6490 = vmatprep.subr.bf16.mxu0 0
    %6491 = vmatpush1.bf16.msra.mxu0 0
    %6492 = vmatprep.subr.bf16.mxu0 0
    %6493 = vmatpush1.bf16.msra.mxu0 0
    %6494 = vmatprep.subr.bf16.mxu0 0
    %6495 = vmatpush1.bf16.msra.mxu0 0
    %6496 = vmatprep.subr.bf16.mxu0 0
    %6497 = vmatpush1.bf16.msra.mxu0 0
    %6498 = vmatprep.mubr.bf16.mxu0 0
    %6499 = vmatmul.mubr.bf16.gmra.mrb[0].mxu0 %v6464
    %v6500 = vpop.f32.mrb[0].mxu0
    %v6501 = vadd.f32 0.0, %v6500
    %v6502 = vpop.f32.mrb[0].mxu0
    %v6503 = vpop.f32.mrb[0].mxu0
    %v6504 = vpop.f32.mrb[0].mxu0
    %6505 = vdwg.mxu0
    %6506 = vrot.lane.b32.xlu0 %v5846, 104
    %v6507 = vpop.permute.xlu0 %6506
    %6508 = vrot.lane.b32.xlu0 %v5848, 104
    %v6509 = vpop.permute.xlu0 %6508
    %v6511 = vsel %vm299, %v6507, 0
    %v6514 = vsel %vm299, %v6509, 0
    %6516 = vmatprep.subr.bf16.mxu0 0
    %6517 = vmatpush1.bf16.xpose.msra.mxu0 %v6514
    %6518 = vmatprep.subr.bf16.mxu0 0
    %6519 = vmatpush1.bf16.xpose.msra.mxu0 0
    %6520 = vmatprep.subr.bf16.mxu0 0
    %6521 = vmatpush1.bf16.xpose.msra.mxu0 0
    %6522 = vmatprep.subr.bf16.mxu0 0
    %6523 = vmatpush1.bf16.xpose.msra.mxu0 0
    %6524 = vmatprep.subr.bf16.mxu0 0
    %6525 = vmatpush1.bf16.xpose.msra.mxu0 0
    %6526 = vmatprep.subr.bf16.mxu0 0
    %6527 = vmatpush1.bf16.xpose.msra.mxu0 0
    %6528 = vmatprep.subr.bf16.mxu0 0
    %6529 = vmatpush1.bf16.xpose.msra.mxu0 0
    %6530 = vmatprep.subr.bf16.mxu0 0
    %6531 = vmatpush1.bf16.xpose.msra.mxu0 0
    %6532 = vmatprep.subr.bf16.mxu0 0
    %6533 = vmatpush1.bf16.xpose.msra.mxu0 0
    %6534 = vmatprep.subr.bf16.mxu0 0
    %6535 = vmatpush1.bf16.xpose.msra.mxu0 0
    %6536 = vmatprep.subr.bf16.mxu0 0
    %6537 = vmatpush1.bf16.xpose.msra.mxu0 0
    %6538 = vmatprep.subr.bf16.mxu0 0
    %6539 = vmatpush1.bf16.xpose.msra.mxu0 0
    %6540 = vmatprep.subr.bf16.mxu0 0
    %6541 = vmatpush1.bf16.xpose.msra.mxu0 0
    %6542 = vmatprep.subr.bf16.mxu0 0
    %6543 = vmatpush1.bf16.xpose.msra.mxu0 0
    %6544 = vmatprep.subr.bf16.mxu0 0
    %6545 = vmatpush1.bf16.xpose.msra.mxu0 0
    %6546 = vmatprep.subr.bf16.mxu0 0
    %6547 = vmatpush1.bf16.xpose.msra.mxu0 0
    %6548 = vmatprep.mubr.bf16.mxu0 0
    %6549 = vmatmul.mubr.bf16.gmra.mrb[0].mxu0 %v6511
    %v6550 = vpop.f32.mrb[0].mxu0
    %v6551 = vadd.f32 0.0, %v6550
    %v6552 = vpop.f32.mrb[0].mxu0
    %v6553 = vpop.f32.mrb[0].mxu0
    %v6554 = vpop.f32.mrb[0].mxu0
    %6555 = vdwg.mxu0
    %6556 = vrot.lane.b32.xlu0 %v5847, 104
    %v6557 = vpop.permute.xlu0 %6556
    %6558 = vrot.lane.b32.xlu0 %v5849, 104
    %v6559 = vpop.permute.xlu0 %6558
    %v6561 = vsel %vm299, %v6557, 0
    %v6564 = vsel %vm299, %v6559, 0
    %6566 = vmatprep.subr.bf16.mxu0 0
    %6567 = vmatpush1.bf16.xpose.msra.mxu0 %v6564
    %6568 = vmatprep.subr.bf16.mxu0 0
    %6569 = vmatpush1.bf16.xpose.msra.mxu0 0
    %6570 = vmatprep.subr.bf16.mxu0 0
    %6571 = vmatpush1.bf16.xpose.msra.mxu0 0
    %6572 = vmatprep.subr.bf16.mxu0 0
    %6573 = vmatpush1.bf16.xpose.msra.mxu0 0
    %6574 = vmatprep.subr.bf16.mxu0 0
    %6575 = vmatpush1.bf16.xpose.msra.mxu0 0
    %6576 = vmatprep.subr.bf16.mxu0 0
    %6577 = vmatpush1.bf16.xpose.msra.mxu0 0
    %6578 = vmatprep.subr.bf16.mxu0 0
    %6579 = vmatpush1.bf16.xpose.msra.mxu0 0
    %6580 = vmatprep.subr.bf16.mxu0 0
    %6581 = vmatpush1.bf16.xpose.msra.mxu0 0
    %6582 = vmatprep.subr.bf16.mxu0 0
    %6583 = vmatpush1.bf16.xpose.msra.mxu0 0
    %6584 = vmatprep.subr.bf16.mxu0 0
    %6585 = vmatpush1.bf16.xpose.msra.mxu0 0
    %6586 = vmatprep.subr.bf16.mxu0 0
    %6587 = vmatpush1.bf16.xpose.msra.mxu0 0
    %6588 = vmatprep.subr.bf16.mxu0 0
    %6589 = vmatpush1.bf16.xpose.msra.mxu0 0
    %6590 = vmatprep.subr.bf16.mxu0 0
    %6591 = vmatpush1.bf16.xpose.msra.mxu0 0
    %6592 = vmatprep.subr.bf16.mxu0 0
    %6593 = vmatpush1.bf16.xpose.msra.mxu0 0
    %6594 = vmatprep.subr.bf16.mxu0 0
    %6595 = vmatpush1.bf16.xpose.msra.mxu0 0
    %6596 = vmatprep.subr.bf16.mxu0 0
    %6597 = vmatpush1.bf16.xpose.msra.mxu0 0
    %6598 = vmatprep.mubr.bf16.mxu0 0
    %6599 = vmatmul.mubr.bf16.gmra.mrb[0].mxu0 %v6561
    %v6600 = vpop.f32.mrb[0].mxu0
    %v6601 = vadd.f32 0.0, %v6600
    %v6602 = vpop.f32.mrb[0].mxu0
    %v6603 = vpop.f32.mrb[0].mxu0
    %v6604 = vpop.f32.mrb[0].mxu0
    %6605 = vdwg.mxu0
    %v6606 = vmul.f32 %v6551, 0.35355338
    %v6607 = vmul.f32 %v6601, 0.35355338
    %v6608 = vadd.f32 %v6606, %v219
    %v6609 = vadd.f32 %v6607, %v220
    %v6610 = vsel %vm1218, %v6608, -inf
    %6611 = vmax.xlane.f32.xlu0 %v6610
    %v6612 = vpop.xlane.xlu0 %6611
    %v6613 = vsel %vm1218, %v6609, -inf
    %6614 = vmax.xlane.f32.xlu0 %v6613
    %v6615 = vpop.xlane.xlu0 %6614
    %v6616 = vsub.f32 %v6608, %v6612
    %v6617 = vsub.f32 %v6609, %v6615
    %v6618 = vmul.f32 %v6616, 1.442695
    %v6619 = vpow.pop %v6618
    %v6620 = vmul.f32 %v6617, 1.442695
    %v6621 = vpow.pop %v6620
    %v6622 = vsel %vm1218, %v6619, 0.0
    %6623 = vadd.xlane.f32.xlu0 %v6622
    %v6624 = vpop.xlane.xlu0 %6623
    %v6625 = vsel %vm1218, %v6621, 0.0
    %6626 = vadd.xlane.f32.xlu0 %v6625
    %v6627 = vpop.xlane.xlu0 %6626
    %v6628 = vrcp.pop %v6624
    %v6629 = vrcp.pop %v6627
    %v6630 = vmul.f32 %v6619, %v6628
    %v6631 = vmul.f32 %v6621, %v6629
    %v6632 = vpack.c.bf16 %v6630, %v6630
    %v6633 = vpack.c.bf16 %v6631, %v6631
    %6634 = vrot.lane.b32.xlu0 %v5848, 72
    %v6635 = vpop.permute.xlu0 %6634
    %v6638 = vsel %vm1218, %v6632, 0
    %6640 = vmatprep.subr.bf16.mxu0 0
    %6641 = vmatpush1.bf16.msra.mxu0 %v6635
    %6642 = vmatprep.subr.bf16.mxu0 0
    %6643 = vmatpush1.bf16.msra.mxu0 0
    %6644 = vmatprep.subr.bf16.mxu0 0
    %6645 = vmatpush1.bf16.msra.mxu0 0
    %6646 = vmatprep.subr.bf16.mxu0 0
    %6647 = vmatpush1.bf16.msra.mxu0 0
    %6648 = vmatprep.subr.bf16.mxu0 0
    %6649 = vmatpush1.bf16.msra.mxu0 0
    %6650 = vmatprep.subr.bf16.mxu0 0
    %6651 = vmatpush1.bf16.msra.mxu0 0
    %6652 = vmatprep.subr.bf16.mxu0 0
    %6653 = vmatpush1.bf16.msra.mxu0 0
    %6654 = vmatprep.subr.bf16.mxu0 0
    %6655 = vmatpush1.bf16.msra.mxu0 0
    %6656 = vmatprep.subr.bf16.mxu0 0
    %6657 = vmatpush1.bf16.msra.mxu0 0
    %6658 = vmatprep.subr.bf16.mxu0 0
    %6659 = vmatpush1.bf16.msra.mxu0 0
    %6660 = vmatprep.subr.bf16.mxu0 0
    %6661 = vmatpush1.bf16.msra.mxu0 0
    %6662 = vmatprep.subr.bf16.mxu0 0
    %6663 = vmatpush1.bf16.msra.mxu0 0
    %6664 = vmatprep.subr.bf16.mxu0 0
    %6665 = vmatpush1.bf16.msra.mxu0 0
    %6666 = vmatprep.subr.bf16.mxu0 0
    %6667 = vmatpush1.bf16.msra.mxu0 0
    %6668 = vmatprep.subr.bf16.mxu0 0
    %6669 = vmatpush1.bf16.msra.mxu0 0
    %6670 = vmatprep.subr.bf16.mxu0 0
    %6671 = vmatpush1.bf16.msra.mxu0 0
    %6672 = vmatprep.mubr.bf16.mxu0 0
    %6673 = vmatmul.mubr.bf16.gmra.mrb[0].mxu0 %v6638
    %v6674 = vpop.f32.mrb[0].mxu0
    %v6675 = vadd.f32 0.0, %v6674
    %v6676 = vpop.f32.mrb[0].mxu0
    %v6677 = vpop.f32.mrb[0].mxu0
    %v6678 = vpop.f32.mrb[0].mxu0
    %6679 = vdwg.mxu0
    %6680 = vrot.lane.b32.xlu0 %v5849, 72
    %v6681 = vpop.permute.xlu0 %6680
    %v6684 = vsel %vm1218, %v6633, 0
    %6686 = vmatprep.subr.bf16.mxu0 0
    %6687 = vmatpush1.bf16.msra.mxu0 %v6681
    %6688 = vmatprep.subr.bf16.mxu0 0
    %6689 = vmatpush1.bf16.msra.mxu0 0
    %6690 = vmatprep.subr.bf16.mxu0 0
    %6691 = vmatpush1.bf16.msra.mxu0 0
    %6692 = vmatprep.subr.bf16.mxu0 0
    %6693 = vmatpush1.bf16.msra.mxu0 0
    %6694 = vmatprep.subr.bf16.mxu0 0
    %6695 = vmatpush1.bf16.msra.mxu0 0
    %6696 = vmatprep.subr.bf16.mxu0 0
    %6697 = vmatpush1.bf16.msra.mxu0 0
    %6698 = vmatprep.subr.bf16.mxu0 0
    %6699 = vmatpush1.bf16.msra.mxu0 0
    %6700 = vmatprep.subr.bf16.mxu0 0
    %6701 = vmatpush1.bf16.msra.mxu0 0
    %6702 = vmatprep.subr.bf16.mxu0 0
    %6703 = vmatpush1.bf16.msra.mxu0 0
    %6704 = vmatprep.subr.bf16.mxu0 0
    %6705 = vmatpush1.bf16.msra.mxu0 0
    %6706 = vmatprep.subr.bf16.mxu0 0
    %6707 = vmatpush1.bf16.msra.mxu0 0
    %6708 = vmatprep.subr.bf16.mxu0 0
    %6709 = vmatpush1.bf16.msra.mxu0 0
    %6710 = vmatprep.subr.bf16.mxu0 0
    %6711 = vmatpush1.bf16.msra.mxu0 0
    %6712 = vmatprep.subr.bf16.mxu0 0
    %6713 = vmatpush1.bf16.msra.mxu0 0
    %6714 = vmatprep.subr.bf16.mxu0 0
    %6715 = vmatpush1.bf16.msra.mxu0 0
    %6716 = vmatprep.subr.bf16.mxu0 0
    %6717 = vmatpush1.bf16.msra.mxu0 0
    %6718 = vmatprep.mubr.bf16.mxu0 0
    %6719 = vmatmul.mubr.bf16.gmra.mrb[0].mxu0 %v6684
    %v6720 = vpop.f32.mrb[0].mxu0
    %v6721 = vadd.f32 0.0, %v6720
    %v6722 = vpop.f32.mrb[0].mxu0
    %v6723 = vpop.f32.mrb[0].mxu0
    %v6724 = vpop.f32.mrb[0].mxu0
    %6725 = vdwg.mxu0
    %6728 = vrot.lane.b32.xlu0 %v6235, 8
    %v6729 = vpop.permute.xlu0 %6728
    %6730 = vrot.lane.b32.xlu0 %v6281, 8
    %v6731 = vpop.permute.xlu0 %6730
    %6736 = vrot.lane.b32.xlu0 %v6455, 16
    %v6737 = vpop.permute.xlu0 %6736
    %6738 = vrot.lane.b32.xlu0 %v6501, 16
    %v6739 = vpop.permute.xlu0 %6738
    %6744 = vrot.lane.b32.xlu0 %v6675, 24
    %v6745 = vpop.permute.xlu0 %6744
    %6746 = vrot.lane.b32.xlu0 %v6721, 24
    %v6747 = vpop.permute.xlu0 %6746
    %v6750 = vsel %vm299, %v6012, %v6729
    %v6751 = vsel %vm299, %v6059, %v6731
    %v6752 = vsel %vm1218, %v6750, %v6737
    %v6753 = vsel %vm1218, %v6751, %v6739
    %v6754 = vsel %vm1221, %v6752, %v6745
    %v6755 = vsel %vm1221, %v6753, %v6747
    %v6756 = vpack.c.bf16 %v6755, %v6754
    %v6758 = vlaneseq
    %v6759 = vshrl.u32 %v6758, 7
    %v6760 = vsub.s32 0, %v6759
    %v6761 = vrot.slane %v5845, %v6760
    %v6767 = vunpack.c.l.b16 %v5840
    %v6768 = vunpack.c.l.b16 %v5841
    %v6769 = vunpack.c.l.b16 %v5842
    %v6770 = vunpack.c.l.b16 %v5843
    %v6771 = vpack.c.b16 %v6768, %v6767
    %v6772 = vpack.c.b16 %v6770, %v6769
    %v6776 = vsel %vm157, %v6756, 0
    %6778 = vmatprep.subr.bf16.mxu0 0
    %6779 = vmatpush1.bf16.msra.mxu0 %v6771
    %6780 = vmatprep.subr.bf16.mxu0 0
    %6781 = vmatpush1.bf16.msra.mxu0 %v6772
    %6782 = vmatprep.subr.bf16.mxu0 0
    %6783 = vmatpush1.bf16.msra.mxu0 0
    %6784 = vmatprep.subr.bf16.mxu0 0
    %6785 = vmatpush1.bf16.msra.mxu0 0
    %6786 = vmatprep.subr.bf16.mxu0 0
    %6787 = vmatpush1.bf16.msra.mxu0 0
    %6788 = vmatprep.subr.bf16.mxu0 0
    %6789 = vmatpush1.bf16.msra.mxu0 0
    %6790 = vmatprep.subr.bf16.mxu0 0
    %6791 = vmatpush1.bf16.msra.mxu0 0
    %6792 = vmatprep.subr.bf16.mxu0 0
    %6793 = vmatpush1.bf16.msra.mxu0 0
    %6794 = vmatprep.subr.bf16.mxu0 0
    %6795 = vmatpush1.bf16.msra.mxu0 0
    %6796 = vmatprep.subr.bf16.mxu0 0
    %6797 = vmatpush1.bf16.msra.mxu0 0
    %6798 = vmatprep.subr.bf16.mxu0 0
    %6799 = vmatpush1.bf16.msra.mxu0 0
    %6800 = vmatprep.subr.bf16.mxu0 0
    %6801 = vmatpush1.bf16.msra.mxu0 0
    %6802 = vmatprep.subr.bf16.mxu0 0
    %6803 = vmatpush1.bf16.msra.mxu0 0
    %6804 = vmatprep.subr.bf16.mxu0 0
    %6805 = vmatpush1.bf16.msra.mxu0 0
    %6806 = vmatprep.subr.bf16.mxu0 0
    %6807 = vmatpush1.bf16.msra.mxu0 0
    %6808 = vmatprep.subr.bf16.mxu0 0
    %6809 = vmatpush1.bf16.msra.mxu0 0
    %6810 = vmatprep.mubr.bf16.mxu0 0
    %6811 = vmatmul.mubr.bf16.gmra.mrb[0].mxu0 %v6776
    %v6812 = vpop.f32.mrb[0].mxu0
    %v6813 = vadd.f32 %v6761, %v6812
    %v6814 = vpop.f32.mrb[0].mxu0
    %v6815 = vpop.f32.mrb[0].mxu0
    %v6816 = vadd.f32 %v6761, %v6815
    %v6817 = vpop.f32.mrb[0].mxu0
    %6818 = vdwg.mxu0
    %v6819 = vadd.f32 %v5693, %v6813
    %v6820 = vadd.f32 %v5694, %v6816
    %s6821 = scalar_lea.vmem %s37, 1
    %v6822 = vld [vmem:[%s6821] sm:$0x1]
    %s6823 = scalar_lea.vmem %s39, 1
    %v6824 = vld [vmem:[%s6823] sm:$0x1]
    %v6825 = vsel %vm157, %v6819, 0.0
    %6826 = vadd.xlane.f32.xlu0 %v6825
    %v6827 = vpop.xlane.xlu0 %6826
    %v6828 = vsel %vm157, %v6820, 0.0
    %6829 = vadd.xlane.f32.xlu0 %v6828
    %v6830 = vpop.xlane.xlu0 %6829
    %v6831 = vmul.f32 %v6827, %v1297
    %v6832 = vmul.f32 %v6830, %v1297
    %v6833 = vsub.f32 %v6819, %v6831
    %v6834 = vsub.f32 %v6820, %v6832
    %v6835 = vmul.f32 %v6833, %v6833
    %v6836 = vmul.f32 %v6834, %v6834
    %v6837 = vsel %vm157, %v6835, 0.0
    %6838 = vadd.xlane.f32.xlu0 %v6837
    %v6839 = vpop.xlane.xlu0 %6838
    %v6840 = vsel %vm157, %v6836, 0.0
    %6841 = vadd.xlane.f32.xlu0 %v6840
    %v6842 = vpop.xlane.xlu0 %6841
    %v6843 = vmul.f32 %v6839, %v1297
    %v6844 = vmul.f32 %v6842, %v1297
    %v6845 = vadd.f32 %v6843, 1e-05
    %v6846 = vadd.f32 %v6844, 1e-05
    %v6847 = vrsqrt.pop %v6845
    %v6848 = vrsqrt.pop %v6846
    %v6849 = vmul.f32 %v6833, %v6847
    %v6850 = vmul.f32 %v6834, %v6848
    %v6852 = vlaneseq
    %v6853 = vshrl.u32 %v6852, 7
    %v6854 = vsub.s32 0, %v6853
    %v6855 = vrot.slane %v6822, %v6854
    %v6857 = vmul.f32 %v6849, %v6855
    %v6858 = vmul.f32 %v6850, %v6855
    %v6860 = vlaneseq
    %v6861 = vshrl.u32 %v6860, 7
    %v6862 = vsub.s32 0, %v6861
    %v6863 = vrot.slane %v6824, %v6862
    %v6865 = vadd.f32 %v6857, %v6863
    %v6866 = vadd.f32 %v6858, %v6863
    %v6867 = vpack.c.bf16 %v6866, %v6865
    %s6868 = scalar_lea.vmem %s45, 256
    %v6869 = vld [vmem:[%s6868] sm:$0xff]
    %v6870 = vld [vmem:[%s6868 + $0x8] sm:$0xff]
    %v6871 = vld [vmem:[%s6868 + $0x10] sm:$0xff]
    %v6872 = vld [vmem:[%s6868 + $0x18] sm:$0xff]
    %v6873 = vld [vmem:[%s6868 + $0x20] sm:$0xff]
    %v6874 = vld [vmem:[%s6868 + $0x28] sm:$0xff]
    %v6875 = vld [vmem:[%s6868 + $0x30] sm:$0xff]
    %v6876 = vld [vmem:[%s6868 + $0x38] sm:$0xff]
    %v6877 = vld [vmem:[%s6868 + $0x40] sm:$0xff]
    %v6878 = vld [vmem:[%s6868 + $0x48] sm:$0xff]
    %v6879 = vld [vmem:[%s6868 + $0x50] sm:$0xff]
    %v6880 = vld [vmem:[%s6868 + $0x58] sm:$0xff]
    %v6881 = vld [vmem:[%s6868 + $0x60] sm:$0xff]
    %v6882 = vld [vmem:[%s6868 + $0x68] sm:$0xff]
    %v6883 = vld [vmem:[%s6868 + $0x70] sm:$0xff]
    %v6884 = vld [vmem:[%s6868 + $0x78] sm:$0xff]
    %v6885 = vld [vmem:[%s6868 + $0x80] sm:$0xff]
    %v6886 = vld [vmem:[%s6868 + $0x88] sm:$0xff]
    %v6887 = vld [vmem:[%s6868 + $0x90] sm:$0xff]
    %v6888 = vld [vmem:[%s6868 + $0x98] sm:$0xff]
    %v6889 = vld [vmem:[%s6868 + $0xa0] sm:$0xff]
    %v6890 = vld [vmem:[%s6868 + $0xa8] sm:$0xff]
    %v6891 = vld [vmem:[%s6868 + $0xb0] sm:$0xff]
    %v6892 = vld [vmem:[%s6868 + $0xb8] sm:$0xff]
    %v6893 = vld [vmem:[%s6868 + $0xc0] sm:$0xff]
    %v6894 = vld [vmem:[%s6868 + $0xc8] sm:$0xff]
    %v6895 = vld [vmem:[%s6868 + $0xd0] sm:$0xff]
    %v6896 = vld [vmem:[%s6868 + $0xd8] sm:$0xff]
    %v6897 = vld [vmem:[%s6868 + $0xe0] sm:$0xff]
    %v6898 = vld [vmem:[%s6868 + $0xe8] sm:$0xff]
    %v6899 = vld [vmem:[%s6868 + $0xf0] sm:$0xff]
    %v6900 = vld [vmem:[%s6868 + $0xf8] sm:$0xff]
    %s6901 = scalar_lea.vmem %s47, 16
    %v6902 = vld [vmem:[%s6901] sm:$0xff]
    %v6903 = vld [vmem:[%s6901 + $0x8] sm:$0xff]
    %v6906 = vlaneseq
    %v6907 = vshrl.u32 %v6906, 7
    %v6908 = vsub.s32 0, %v6907
    %v6909 = vrot.slane %v6902, %v6908
    %v6910 = vlaneseq
    %v6911 = vshrl.u32 %v6910, 7
    %v6912 = vsub.s32 1, %v6911
    %v6913 = vrot.slane %v6902, %v6912
    %v6914 = vlaneseq
    %v6915 = vshrl.u32 %v6914, 7
    %v6916 = vsub.s32 2, %v6915
    %v6917 = vrot.slane %v6902, %v6916
    %v6918 = vlaneseq
    %v6919 = vshrl.u32 %v6918, 7
    %v6920 = vsub.s32 3, %v6919
    %v6921 = vrot.slane %v6902, %v6920
    %v6922 = vlaneseq
    %v6923 = vshrl.u32 %v6922, 7
    %v6924 = vsub.s32 4, %v6923
    %v6925 = vrot.slane %v6902, %v6924
    %v6926 = vlaneseq
    %v6927 = vshrl.u32 %v6926, 7
    %v6928 = vsub.s32 5, %v6927
    %v6929 = vrot.slane %v6902, %v6928
    %v6930 = vlaneseq
    %v6931 = vshrl.u32 %v6930, 7
    %v6932 = vsub.s32 6, %v6931
    %v6933 = vrot.slane %v6902, %v6932
    %v6934 = vlaneseq
    %v6935 = vshrl.u32 %v6934, 7
    %v6936 = vsub.s32 7, %v6935
    %v6937 = vrot.slane %v6902, %v6936
    %v6938 = vlaneseq
    %v6939 = vshrl.u32 %v6938, 7
    %v6940 = vsub.s32 0, %v6939
    %v6941 = vrot.slane %v6903, %v6940
    %v6942 = vlaneseq
    %v6943 = vshrl.u32 %v6942, 7
    %v6944 = vsub.s32 1, %v6943
    %v6945 = vrot.slane %v6903, %v6944
    %v6946 = vlaneseq
    %v6947 = vshrl.u32 %v6946, 7
    %v6948 = vsub.s32 2, %v6947
    %v6949 = vrot.slane %v6903, %v6948
    %v6950 = vlaneseq
    %v6951 = vshrl.u32 %v6950, 7
    %v6952 = vsub.s32 3, %v6951
    %v6953 = vrot.slane %v6903, %v6952
    %v6954 = vlaneseq
    %v6955 = vshrl.u32 %v6954, 7
    %v6956 = vsub.s32 4, %v6955
    %v6957 = vrot.slane %v6903, %v6956
    %v6958 = vlaneseq
    %v6959 = vshrl.u32 %v6958, 7
    %v6960 = vsub.s32 5, %v6959
    %v6961 = vrot.slane %v6903, %v6960
    %v6962 = vlaneseq
    %v6963 = vshrl.u32 %v6962, 7
    %v6964 = vsub.s32 6, %v6963
    %v6965 = vrot.slane %v6903, %v6964
    %v6966 = vlaneseq
    %v6967 = vshrl.u32 %v6966, 7
    %v6968 = vsub.s32 7, %v6967
    %v6969 = vrot.slane %v6903, %v6968
    %v7018 = vunpack.c.l.b16 %v6869
    %v7019 = vunpack.c.h.b16 %v6869
    %v7020 = vunpack.c.l.b16 %v6870
    %v7021 = vunpack.c.h.b16 %v6870
    %v7022 = vunpack.c.l.b16 %v6871
    %v7023 = vunpack.c.h.b16 %v6871
    %v7024 = vunpack.c.l.b16 %v6872
    %v7025 = vunpack.c.h.b16 %v6872
    %v7026 = vunpack.c.l.b16 %v6873
    %v7027 = vunpack.c.h.b16 %v6873
    %v7028 = vunpack.c.l.b16 %v6874
    %v7029 = vunpack.c.h.b16 %v6874
    %v7030 = vunpack.c.l.b16 %v6875
    %v7031 = vunpack.c.h.b16 %v6875
    %v7032 = vunpack.c.l.b16 %v6876
    %v7033 = vunpack.c.h.b16 %v6876
    %v7034 = vunpack.c.l.b16 %v6877
    %v7035 = vunpack.c.h.b16 %v6877
    %v7036 = vunpack.c.l.b16 %v6878
    %v7037 = vunpack.c.h.b16 %v6878
    %v7038 = vunpack.c.l.b16 %v6879
    %v7039 = vunpack.c.h.b16 %v6879
    %v7040 = vunpack.c.l.b16 %v6880
    %v7041 = vunpack.c.h.b16 %v6880
    %v7042 = vunpack.c.l.b16 %v6881
    %v7043 = vunpack.c.h.b16 %v6881
    %v7044 = vunpack.c.l.b16 %v6882
    %v7045 = vunpack.c.h.b16 %v6882
    %v7046 = vunpack.c.l.b16 %v6883
    %v7047 = vunpack.c.h.b16 %v6883
    %v7048 = vunpack.c.l.b16 %v6884
    %v7049 = vunpack.c.h.b16 %v6884
    %v7050 = vunpack.c.l.b16 %v6885
    %v7051 = vunpack.c.h.b16 %v6885
    %v7052 = vunpack.c.l.b16 %v6886
    %v7053 = vunpack.c.h.b16 %v6886
    %v7054 = vunpack.c.l.b16 %v6887
    %v7055 = vunpack.c.h.b16 %v6887
    %v7056 = vunpack.c.l.b16 %v6888
    %v7057 = vunpack.c.h.b16 %v6888
    %v7058 = vunpack.c.l.b16 %v6889
    %v7059 = vunpack.c.h.b16 %v6889
    %v7060 = vunpack.c.l.b16 %v6890
    %v7061 = vunpack.c.h.b16 %v6890
    %v7062 = vunpack.c.l.b16 %v6891
    %v7063 = vunpack.c.h.b16 %v6891
    %v7064 = vunpack.c.l.b16 %v6892
    %v7065 = vunpack.c.h.b16 %v6892
    %v7066 = vunpack.c.l.b16 %v6893
    %v7067 = vunpack.c.h.b16 %v6893
    %v7068 = vunpack.c.l.b16 %v6894
    %v7069 = vunpack.c.h.b16 %v6894
    %v7070 = vunpack.c.l.b16 %v6895
    %v7071 = vunpack.c.h.b16 %v6895
    %v7072 = vunpack.c.l.b16 %v6896
    %v7073 = vunpack.c.h.b16 %v6896
    %v7074 = vunpack.c.l.b16 %v6897
    %v7075 = vunpack.c.h.b16 %v6897
    %v7076 = vunpack.c.l.b16 %v6898
    %v7077 = vunpack.c.h.b16 %v6898
    %v7078 = vunpack.c.l.b16 %v6899
    %v7079 = vunpack.c.h.b16 %v6899
    %v7080 = vunpack.c.l.b16 %v6900
    %v7081 = vunpack.c.h.b16 %v6900
    %v7082 = vpack.c.b16 %v7034, %v7018
    %v7083 = vpack.c.b16 %v7035, %v7019
    %v7084 = vpack.c.b16 %v7036, %v7020
    %v7085 = vpack.c.b16 %v7037, %v7021
    %v7086 = vpack.c.b16 %v7038, %v7022
    %v7087 = vpack.c.b16 %v7039, %v7023
    %v7088 = vpack.c.b16 %v7040, %v7024
    %v7089 = vpack.c.b16 %v7041, %v7025
    %v7090 = vpack.c.b16 %v7042, %v7026
    %v7091 = vpack.c.b16 %v7043, %v7027
    %v7092 = vpack.c.b16 %v7044, %v7028
    %v7093 = vpack.c.b16 %v7045, %v7029
    %v7094 = vpack.c.b16 %v7046, %v7030
    %v7095 = vpack.c.b16 %v7047, %v7031
    %v7096 = vpack.c.b16 %v7048, %v7032
    %v7097 = vpack.c.b16 %v7049, %v7033
    %v7098 = vpack.c.b16 %v7066, %v7050
    %v7099 = vpack.c.b16 %v7067, %v7051
    %v7100 = vpack.c.b16 %v7068, %v7052
    %v7101 = vpack.c.b16 %v7069, %v7053
    %v7102 = vpack.c.b16 %v7070, %v7054
    %v7103 = vpack.c.b16 %v7071, %v7055
    %v7104 = vpack.c.b16 %v7072, %v7056
    %v7105 = vpack.c.b16 %v7073, %v7057
    %v7106 = vpack.c.b16 %v7074, %v7058
    %v7107 = vpack.c.b16 %v7075, %v7059
    %v7108 = vpack.c.b16 %v7076, %v7060
    %v7109 = vpack.c.b16 %v7077, %v7061
    %v7110 = vpack.c.b16 %v7078, %v7062
    %v7111 = vpack.c.b16 %v7079, %v7063
    %v7112 = vpack.c.b16 %v7080, %v7064
    %v7113 = vpack.c.b16 %v7081, %v7065
    %v7147 = vsel %vm157, %v6867, 0
    %7149 = vmatprep.subr.bf16.mxu0 %v7083
    %7150 = vmatpush1.bf16.msra.mxu0 %v7082
    %7151 = vmatprep.subr.bf16.mxu0 %v7099
    %7152 = vmatpush1.bf16.msra.mxu0 %v7098
    %7153 = vmatprep.subr.bf16.mxu0 0
    %7154 = vmatpush1.bf16.msra.mxu0 0
    %7155 = vmatprep.subr.bf16.mxu0 0
    %7156 = vmatpush1.bf16.msra.mxu0 0
    %7157 = vmatprep.subr.bf16.mxu0 0
    %7158 = vmatpush1.bf16.msra.mxu0 0
    %7159 = vmatprep.subr.bf16.mxu0 0
    %7160 = vmatpush1.bf16.msra.mxu0 0
    %7161 = vmatprep.subr.bf16.mxu0 0
    %7162 = vmatpush1.bf16.msra.mxu0 0
    %7163 = vmatprep.subr.bf16.mxu0 0
    %7164 = vmatpush1.bf16.msra.mxu0 0
    %7165 = vmatprep.subr.bf16.mxu0 0
    %7166 = vmatpush1.bf16.msra.mxu0 0
    %7167 = vmatprep.subr.bf16.mxu0 0
    %7168 = vmatpush1.bf16.msra.mxu0 0
    %7169 = vmatprep.subr.bf16.mxu0 0
    %7170 = vmatpush1.bf16.msra.mxu0 0
    %7171 = vmatprep.subr.bf16.mxu0 0
    %7172 = vmatpush1.bf16.msra.mxu0 0
    %7173 = vmatprep.subr.bf16.mxu0 0
    %7174 = vmatpush1.bf16.msra.mxu0 0
    %7175 = vmatprep.subr.bf16.mxu0 0
    %7176 = vmatpush1.bf16.msra.mxu0 0
    %7177 = vmatprep.subr.bf16.mxu0 0
    %7178 = vmatpush1.bf16.msra.mxu0 0
    %7179 = vmatprep.subr.bf16.mxu0 0
    %7180 = vmatpush1.bf16.msra.mxu0 0
    %7181 = vmatprep.mubr.bf16.mxu0 0
    %7182 = vmatmul.mubr.bf16.gmra.mrb[0].mxu0 %v7147
    %v7183 = vpop.f32.mrb[0].mxu0
    %v7184 = vadd.f32 %v6909, %v7183
    %v7185 = vpop.f32.mrb[0].mxu0
    %v7186 = vadd.f32 %v6913, %v7185
    %v7187 = vpop.f32.mrb[0].mxu0
    %v7188 = vadd.f32 %v6909, %v7187
    %v7189 = vpop.f32.mrb[0].mxu0
    %v7190 = vadd.f32 %v6913, %v7189
    %7191 = vdwg.mxu0
    %7192 = vmatprep.subr.bf16.mxu0 %v7085
    %7193 = vmatpush1.bf16.msra.mxu0 %v7084
    %7194 = vmatprep.subr.bf16.mxu0 %v7101
    %7195 = vmatpush1.bf16.msra.mxu0 %v7100
    %7196 = vmatprep.subr.bf16.mxu0 0
    %7197 = vmatpush1.bf16.msra.mxu0 0
    %7198 = vmatprep.subr.bf16.mxu0 0
    %7199 = vmatpush1.bf16.msra.mxu0 0
    %7200 = vmatprep.subr.bf16.mxu0 0
    %7201 = vmatpush1.bf16.msra.mxu0 0
    %7202 = vmatprep.subr.bf16.mxu0 0
    %7203 = vmatpush1.bf16.msra.mxu0 0
    %7204 = vmatprep.subr.bf16.mxu0 0
    %7205 = vmatpush1.bf16.msra.mxu0 0
    %7206 = vmatprep.subr.bf16.mxu0 0
    %7207 = vmatpush1.bf16.msra.mxu0 0
    %7208 = vmatprep.subr.bf16.mxu0 0
    %7209 = vmatpush1.bf16.msra.mxu0 0
    %7210 = vmatprep.subr.bf16.mxu0 0
    %7211 = vmatpush1.bf16.msra.mxu0 0
    %7212 = vmatprep.subr.bf16.mxu0 0
    %7213 = vmatpush1.bf16.msra.mxu0 0
    %7214 = vmatprep.subr.bf16.mxu0 0
    %7215 = vmatpush1.bf16.msra.mxu0 0
    %7216 = vmatprep.subr.bf16.mxu0 0
    %7217 = vmatpush1.bf16.msra.mxu0 0
    %7218 = vmatprep.subr.bf16.mxu0 0
    %7219 = vmatpush1.bf16.msra.mxu0 0
    %7220 = vmatprep.subr.bf16.mxu0 0
    %7221 = vmatpush1.bf16.msra.mxu0 0
    %7222 = vmatprep.subr.bf16.mxu0 0
    %7223 = vmatpush1.bf16.msra.mxu0 0
    %7224 = vmatprep.mubr.bf16.mxu0 0
    %7225 = vmatmul.mubr.bf16.gmra.mrb[0].mxu0 %v7147
    %v7226 = vpop.f32.mrb[0].mxu0
    %v7227 = vadd.f32 %v6917, %v7226
    %v7228 = vpop.f32.mrb[0].mxu0
    %v7229 = vadd.f32 %v6921, %v7228
    %v7230 = vpop.f32.mrb[0].mxu0
    %v7231 = vadd.f32 %v6917, %v7230
    %v7232 = vpop.f32.mrb[0].mxu0
    %v7233 = vadd.f32 %v6921, %v7232
    %7234 = vdwg.mxu0
    %7235 = vmatprep.subr.bf16.mxu0 %v7087
    %7236 = vmatpush1.bf16.msra.mxu0 %v7086
    %7237 = vmatprep.subr.bf16.mxu0 %v7103
    %7238 = vmatpush1.bf16.msra.mxu0 %v7102
    %7239 = vmatprep.subr.bf16.mxu0 0
    %7240 = vmatpush1.bf16.msra.mxu0 0
    %7241 = vmatprep.subr.bf16.mxu0 0
    %7242 = vmatpush1.bf16.msra.mxu0 0
    %7243 = vmatprep.subr.bf16.mxu0 0
    %7244 = vmatpush1.bf16.msra.mxu0 0
    %7245 = vmatprep.subr.bf16.mxu0 0
    %7246 = vmatpush1.bf16.msra.mxu0 0
    %7247 = vmatprep.subr.bf16.mxu0 0
    %7248 = vmatpush1.bf16.msra.mxu0 0
    %7249 = vmatprep.subr.bf16.mxu0 0
    %7250 = vmatpush1.bf16.msra.mxu0 0
    %7251 = vmatprep.subr.bf16.mxu0 0
    %7252 = vmatpush1.bf16.msra.mxu0 0
    %7253 = vmatprep.subr.bf16.mxu0 0
    %7254 = vmatpush1.bf16.msra.mxu0 0
    %7255 = vmatprep.subr.bf16.mxu0 0
    %7256 = vmatpush1.bf16.msra.mxu0 0
    %7257 = vmatprep.subr.bf16.mxu0 0
    %7258 = vmatpush1.bf16.msra.mxu0 0
    %7259 = vmatprep.subr.bf16.mxu0 0
    %7260 = vmatpush1.bf16.msra.mxu0 0
    %7261 = vmatprep.subr.bf16.mxu0 0
    %7262 = vmatpush1.bf16.msra.mxu0 0
    %7263 = vmatprep.subr.bf16.mxu0 0
    %7264 = vmatpush1.bf16.msra.mxu0 0
    %7265 = vmatprep.subr.bf16.mxu0 0
    %7266 = vmatpush1.bf16.msra.mxu0 0
    %7267 = vmatprep.mubr.bf16.mxu0 0
    %7268 = vmatmul.mubr.bf16.gmra.mrb[0].mxu0 %v7147
    %v7269 = vpop.f32.mrb[0].mxu0
    %v7270 = vadd.f32 %v6925, %v7269
    %v7271 = vpop.f32.mrb[0].mxu0
    %v7272 = vadd.f32 %v6929, %v7271
    %v7273 = vpop.f32.mrb[0].mxu0
    %v7274 = vadd.f32 %v6925, %v7273
    %v7275 = vpop.f32.mrb[0].mxu0
    %v7276 = vadd.f32 %v6929, %v7275
    %7277 = vdwg.mxu0
    %7278 = vmatprep.subr.bf16.mxu0 %v7089
    %7279 = vmatpush1.bf16.msra.mxu0 %v7088
    %7280 = vmatprep.subr.bf16.mxu0 %v7105
    %7281 = vmatpush1.bf16.msra.mxu0 %v7104
    %7282 = vmatprep.subr.bf16.mxu0 0
    %7283 = vmatpush1.bf16.msra.mxu0 0
    %7284 = vmatprep.subr.bf16.mxu0 0
    %7285 = vmatpush1.bf16.msra.mxu0 0
    %7286 = vmatprep.subr.bf16.mxu0 0
    %7287 = vmatpush1.bf16.msra.mxu0 0
    %7288 = vmatprep.subr.bf16.mxu0 0
    %7289 = vmatpush1.bf16.msra.mxu0 0
    %7290 = vmatprep.subr.bf16.mxu0 0
    %7291 = vmatpush1.bf16.msra.mxu0 0
    %7292 = vmatprep.subr.bf16.mxu0 0
    %7293 = vmatpush1.bf16.msra.mxu0 0
    %7294 = vmatprep.subr.bf16.mxu0 0
    %7295 = vmatpush1.bf16.msra.mxu0 0
    %7296 = vmatprep.subr.bf16.mxu0 0
    %7297 = vmatpush1.bf16.msra.mxu0 0
    %7298 = vmatprep.subr.bf16.mxu0 0
    %7299 = vmatpush1.bf16.msra.mxu0 0
    %7300 = vmatprep.subr.bf16.mxu0 0
    %7301 = vmatpush1.bf16.msra.mxu0 0
    %7302 = vmatprep.subr.bf16.mxu0 0
    %7303 = vmatpush1.bf16.msra.mxu0 0
    %7304 = vmatprep.subr.bf16.mxu0 0
    %7305 = vmatpush1.bf16.msra.mxu0 0
    %7306 = vmatprep.subr.bf16.mxu0 0
    %7307 = vmatpush1.bf16.msra.mxu0 0
    %7308 = vmatprep.subr.bf16.mxu0 0
    %7309 = vmatpush1.bf16.msra.mxu0 0
    %7310 = vmatprep.mubr.bf16.mxu0 0
    %7311 = vmatmul.mubr.bf16.gmra.mrb[0].mxu0 %v7147
    %v7312 = vpop.f32.mrb[0].mxu0
    %v7313 = vadd.f32 %v6933, %v7312
    %v7314 = vpop.f32.mrb[0].mxu0
    %v7315 = vadd.f32 %v6937, %v7314
    %v7316 = vpop.f32.mrb[0].mxu0
    %v7317 = vadd.f32 %v6933, %v7316
    %v7318 = vpop.f32.mrb[0].mxu0
    %v7319 = vadd.f32 %v6937, %v7318
    %7320 = vdwg.mxu0
    %7321 = vmatprep.subr.bf16.mxu0 %v7091
    %7322 = vmatpush1.bf16.msra.mxu0 %v7090
    %7323 = vmatprep.subr.bf16.mxu0 %v7107
    %7324 = vmatpush1.bf16.msra.mxu0 %v7106
    %7325 = vmatprep.subr.bf16.mxu0 0
    %7326 = vmatpush1.bf16.msra.mxu0 0
    %7327 = vmatprep.subr.bf16.mxu0 0
    %7328 = vmatpush1.bf16.msra.mxu0 0
    %7329 = vmatprep.subr.bf16.mxu0 0
    %7330 = vmatpush1.bf16.msra.mxu0 0
    %7331 = vmatprep.subr.bf16.mxu0 0
    %7332 = vmatpush1.bf16.msra.mxu0 0
    %7333 = vmatprep.subr.bf16.mxu0 0
    %7334 = vmatpush1.bf16.msra.mxu0 0
    %7335 = vmatprep.subr.bf16.mxu0 0
    %7336 = vmatpush1.bf16.msra.mxu0 0
    %7337 = vmatprep.subr.bf16.mxu0 0
    %7338 = vmatpush1.bf16.msra.mxu0 0
    %7339 = vmatprep.subr.bf16.mxu0 0
    %7340 = vmatpush1.bf16.msra.mxu0 0
    %7341 = vmatprep.subr.bf16.mxu0 0
    %7342 = vmatpush1.bf16.msra.mxu0 0
    %7343 = vmatprep.subr.bf16.mxu0 0
    %7344 = vmatpush1.bf16.msra.mxu0 0
    %7345 = vmatprep.subr.bf16.mxu0 0
    %7346 = vmatpush1.bf16.msra.mxu0 0
    %7347 = vmatprep.subr.bf16.mxu0 0
    %7348 = vmatpush1.bf16.msra.mxu0 0
    %7349 = vmatprep.subr.bf16.mxu0 0
    %7350 = vmatpush1.bf16.msra.mxu0 0
    %7351 = vmatprep.subr.bf16.mxu0 0
    %7352 = vmatpush1.bf16.msra.mxu0 0
    %7353 = vmatprep.mubr.bf16.mxu0 0
    %7354 = vmatmul.mubr.bf16.gmra.mrb[0].mxu0 %v7147
    %v7355 = vpop.f32.mrb[0].mxu0
    %v7356 = vadd.f32 %v6941, %v7355
    %v7357 = vpop.f32.mrb[0].mxu0
    %v7358 = vadd.f32 %v6945, %v7357
    %v7359 = vpop.f32.mrb[0].mxu0
    %v7360 = vadd.f32 %v6941, %v7359
    %v7361 = vpop.f32.mrb[0].mxu0
    %v7362 = vadd.f32 %v6945, %v7361
    %7363 = vdwg.mxu0
    %7364 = vmatprep.subr.bf16.mxu0 %v7093
    %7365 = vmatpush1.bf16.msra.mxu0 %v7092
    %7366 = vmatprep.subr.bf16.mxu0 %v7109
    %7367 = vmatpush1.bf16.msra.mxu0 %v7108
    %7368 = vmatprep.subr.bf16.mxu0 0
    %7369 = vmatpush1.bf16.msra.mxu0 0
    %7370 = vmatprep.subr.bf16.mxu0 0
    %7371 = vmatpush1.bf16.msra.mxu0 0
    %7372 = vmatprep.subr.bf16.mxu0 0
    %7373 = vmatpush1.bf16.msra.mxu0 0
    %7374 = vmatprep.subr.bf16.mxu0 0
    %7375 = vmatpush1.bf16.msra.mxu0 0
    %7376 = vmatprep.subr.bf16.mxu0 0
    %7377 = vmatpush1.bf16.msra.mxu0 0
    %7378 = vmatprep.subr.bf16.mxu0 0
    %7379 = vmatpush1.bf16.msra.mxu0 0
    %7380 = vmatprep.subr.bf16.mxu0 0
    %7381 = vmatpush1.bf16.msra.mxu0 0
    %7382 = vmatprep.subr.bf16.mxu0 0
    %7383 = vmatpush1.bf16.msra.mxu0 0
    %7384 = vmatprep.subr.bf16.mxu0 0
    %7385 = vmatpush1.bf16.msra.mxu0 0
    %7386 = vmatprep.subr.bf16.mxu0 0
    %7387 = vmatpush1.bf16.msra.mxu0 0
    %7388 = vmatprep.subr.bf16.mxu0 0
    %7389 = vmatpush1.bf16.msra.mxu0 0
    %7390 = vmatprep.subr.bf16.mxu0 0
    %7391 = vmatpush1.bf16.msra.mxu0 0
    %7392 = vmatprep.subr.bf16.mxu0 0
    %7393 = vmatpush1.bf16.msra.mxu0 0
    %7394 = vmatprep.subr.bf16.mxu0 0
    %7395 = vmatpush1.bf16.msra.mxu0 0
    %7396 = vmatprep.mubr.bf16.mxu0 0
    %7397 = vmatmul.mubr.bf16.gmra.mrb[0].mxu0 %v7147
    %v7398 = vpop.f32.mrb[0].mxu0
    %v7399 = vadd.f32 %v6949, %v7398
    %v7400 = vpop.f32.mrb[0].mxu0
    %v7401 = vadd.f32 %v6953, %v7400
    %v7402 = vpop.f32.mrb[0].mxu0
    %v7403 = vadd.f32 %v6949, %v7402
    %v7404 = vpop.f32.mrb[0].mxu0
    %v7405 = vadd.f32 %v6953, %v7404
    %7406 = vdwg.mxu0
    %7407 = vmatprep.subr.bf16.mxu0 %v7095
    %7408 = vmatpush1.bf16.msra.mxu0 %v7094
    %7409 = vmatprep.subr.bf16.mxu0 %v7111
    %7410 = vmatpush1.bf16.msra.mxu0 %v7110
    %7411 = vmatprep.subr.bf16.mxu0 0
    %7412 = vmatpush1.bf16.msra.mxu0 0
    %7413 = vmatprep.subr.bf16.mxu0 0
    %7414 = vmatpush1.bf16.msra.mxu0 0
    %7415 = vmatprep.subr.bf16.mxu0 0
    %7416 = vmatpush1.bf16.msra.mxu0 0
    %7417 = vmatprep.subr.bf16.mxu0 0
    %7418 = vmatpush1.bf16.msra.mxu0 0
    %7419 = vmatprep.subr.bf16.mxu0 0
    %7420 = vmatpush1.bf16.msra.mxu0 0
    %7421 = vmatprep.subr.bf16.mxu0 0
    %7422 = vmatpush1.bf16.msra.mxu0 0
    %7423 = vmatprep.subr.bf16.mxu0 0
    %7424 = vmatpush1.bf16.msra.mxu0 0
    %7425 = vmatprep.subr.bf16.mxu0 0
    %7426 = vmatpush1.bf16.msra.mxu0 0
    %7427 = vmatprep.subr.bf16.mxu0 0
    %7428 = vmatpush1.bf16.msra.mxu0 0
    %7429 = vmatprep.subr.bf16.mxu0 0
    %7430 = vmatpush1.bf16.msra.mxu0 0
    %7431 = vmatprep.subr.bf16.mxu0 0
    %7432 = vmatpush1.bf16.msra.mxu0 0
    %7433 = vmatprep.subr.bf16.mxu0 0
    %7434 = vmatpush1.bf16.msra.mxu0 0
    %7435 = vmatprep.subr.bf16.mxu0 0
    %7436 = vmatpush1.bf16.msra.mxu0 0
    %7437 = vmatprep.subr.bf16.mxu0 0
    %7438 = vmatpush1.bf16.msra.mxu0 0
    %7439 = vmatprep.mubr.bf16.mxu0 0
    %7440 = vmatmul.mubr.bf16.gmra.mrb[0].mxu0 %v7147
    %v7441 = vpop.f32.mrb[0].mxu0
    %v7442 = vadd.f32 %v6957, %v7441
    %v7443 = vpop.f32.mrb[0].mxu0
    %v7444 = vadd.f32 %v6961, %v7443
    %v7445 = vpop.f32.mrb[0].mxu0
    %v7446 = vadd.f32 %v6957, %v7445
    %v7447 = vpop.f32.mrb[0].mxu0
    %v7448 = vadd.f32 %v6961, %v7447
    %7449 = vdwg.mxu0
    %7450 = vmatprep.subr.bf16.mxu0 %v7097
    %7451 = vmatpush1.bf16.msra.mxu0 %v7096
    %7452 = vmatprep.subr.bf16.mxu0 %v7113
    %7453 = vmatpush1.bf16.msra.mxu0 %v7112
    %7454 = vmatprep.subr.bf16.mxu0 0
    %7455 = vmatpush1.bf16.msra.mxu0 0
    %7456 = vmatprep.subr.bf16.mxu0 0
    %7457 = vmatpush1.bf16.msra.mxu0 0
    %7458 = vmatprep.subr.bf16.mxu0 0
    %7459 = vmatpush1.bf16.msra.mxu0 0
    %7460 = vmatprep.subr.bf16.mxu0 0
    %7461 = vmatpush1.bf16.msra.mxu0 0
    %7462 = vmatprep.subr.bf16.mxu0 0
    %7463 = vmatpush1.bf16.msra.mxu0 0
    %7464 = vmatprep.subr.bf16.mxu0 0
    %7465 = vmatpush1.bf16.msra.mxu0 0
    %7466 = vmatprep.subr.bf16.mxu0 0
    %7467 = vmatpush1.bf16.msra.mxu0 0
    %7468 = vmatprep.subr.bf16.mxu0 0
    %7469 = vmatpush1.bf16.msra.mxu0 0
    %7470 = vmatprep.subr.bf16.mxu0 0
    %7471 = vmatpush1.bf16.msra.mxu0 0
    %7472 = vmatprep.subr.bf16.mxu0 0
    %7473 = vmatpush1.bf16.msra.mxu0 0
    %7474 = vmatprep.subr.bf16.mxu0 0
    %7475 = vmatpush1.bf16.msra.mxu0 0
    %7476 = vmatprep.subr.bf16.mxu0 0
    %7477 = vmatpush1.bf16.msra.mxu0 0
    %7478 = vmatprep.subr.bf16.mxu0 0
    %7479 = vmatpush1.bf16.msra.mxu0 0
    %7480 = vmatprep.subr.bf16.mxu0 0
    %7481 = vmatpush1.bf16.msra.mxu0 0
    %7482 = vmatprep.mubr.bf16.mxu0 0
    %7483 = vmatmul.mubr.bf16.gmra.mrb[0].mxu0 %v7147
    %v7484 = vpop.f32.mrb[0].mxu0
    %v7485 = vadd.f32 %v6965, %v7484
    %v7486 = vpop.f32.mrb[0].mxu0
    %v7487 = vadd.f32 %v6969, %v7486
    %v7488 = vpop.f32.mrb[0].mxu0
    %v7489 = vadd.f32 %v6965, %v7488
    %v7490 = vpop.f32.mrb[0].mxu0
    %v7491 = vadd.f32 %v6969, %v7490
    %7492 = vdwg.mxu0
    %v7493 = vmax.f32 %v7184, 0.0
    %v7494 = vmax.f32 %v7186, 0.0
    %v7495 = vmax.f32 %v7227, 0.0
    %v7496 = vmax.f32 %v7229, 0.0
    %v7497 = vmax.f32 %v7270, 0.0
    %v7498 = vmax.f32 %v7272, 0.0
    %v7499 = vmax.f32 %v7313, 0.0
    %v7500 = vmax.f32 %v7315, 0.0
    %v7501 = vmax.f32 %v7356, 0.0
    %v7502 = vmax.f32 %v7358, 0.0
    %v7503 = vmax.f32 %v7399, 0.0
    %v7504 = vmax.f32 %v7401, 0.0
    %v7505 = vmax.f32 %v7442, 0.0
    %v7506 = vmax.f32 %v7444, 0.0
    %v7507 = vmax.f32 %v7485, 0.0
    %v7508 = vmax.f32 %v7487, 0.0
    %v7509 = vmax.f32 %v7188, 0.0
    %v7510 = vmax.f32 %v7190, 0.0
    %v7511 = vmax.f32 %v7231, 0.0
    %v7512 = vmax.f32 %v7233, 0.0
    %v7513 = vmax.f32 %v7274, 0.0
    %v7514 = vmax.f32 %v7276, 0.0
    %v7515 = vmax.f32 %v7317, 0.0
    %v7516 = vmax.f32 %v7319, 0.0
    %v7517 = vmax.f32 %v7360, 0.0
    %v7518 = vmax.f32 %v7362, 0.0
    %v7519 = vmax.f32 %v7403, 0.0
    %v7520 = vmax.f32 %v7405, 0.0
    %v7521 = vmax.f32 %v7446, 0.0
    %v7522 = vmax.f32 %v7448, 0.0
    %v7523 = vmax.f32 %v7489, 0.0
    %v7524 = vmax.f32 %v7491, 0.0
    %v7525 = vpack.c.bf16 %v7509, %v7493
    %v7526 = vpack.c.bf16 %v7510, %v7494
    %v7527 = vpack.c.bf16 %v7511, %v7495
    %v7528 = vpack.c.bf16 %v7512, %v7496
    %v7529 = vpack.c.bf16 %v7513, %v7497
    %v7530 = vpack.c.bf16 %v7514, %v7498
    %v7531 = vpack.c.bf16 %v7515, %v7499
    %v7532 = vpack.c.bf16 %v7516, %v7500
    %v7533 = vpack.c.bf16 %v7517, %v7501
    %v7534 = vpack.c.bf16 %v7518, %v7502
    %v7535 = vpack.c.bf16 %v7519, %v7503
    %v7536 = vpack.c.bf16 %v7520, %v7504
    %v7537 = vpack.c.bf16 %v7521, %v7505
    %v7538 = vpack.c.bf16 %v7522, %v7506
    %v7539 = vpack.c.bf16 %v7523, %v7507
    %v7540 = vpack.c.bf16 %v7524, %v7508
    %s7541 = scalar_lea.vmem %s49, 1024
    %v7542 = vld [vmem:[%s7541] sm:$0xf]
    %v7543 = vld [vmem:[%s7541 + $0x4] sm:$0xf]
    %v7544 = vld [vmem:[%s7541 + $0x8] sm:$0xf]
    %v7545 = vld [vmem:[%s7541 + $0xc] sm:$0xf]
    %v7546 = vld [vmem:[%s7541 + $0x10] sm:$0xf]
    %v7547 = vld [vmem:[%s7541 + $0x14] sm:$0xf]
    %v7548 = vld [vmem:[%s7541 + $0x18] sm:$0xf]
    %v7549 = vld [vmem:[%s7541 + $0x1c] sm:$0xf]
    %v7550 = vld [vmem:[%s7541 + $0x20] sm:$0xf]
    %v7551 = vld [vmem:[%s7541 + $0x24] sm:$0xf]
    %v7552 = vld [vmem:[%s7541 + $0x28] sm:$0xf]
    %v7553 = vld [vmem:[%s7541 + $0x2c] sm:$0xf]
    %v7554 = vld [vmem:[%s7541 + $0x30] sm:$0xf]
    %v7555 = vld [vmem:[%s7541 + $0x34] sm:$0xf]
    %v7556 = vld [vmem:[%s7541 + $0x38] sm:$0xf]
    %v7557 = vld [vmem:[%s7541 + $0x3c] sm:$0xf]
    %v7558 = vld [vmem:[%s7541 + $0x40] sm:$0xf]
    %v7559 = vld [vmem:[%s7541 + $0x44] sm:$0xf]
    %v7560 = vld [vmem:[%s7541 + $0x48] sm:$0xf]
    %v7561 = vld [vmem:[%s7541 + $0x4c] sm:$0xf]
    %v7562 = vld [vmem:[%s7541 + $0x50] sm:$0xf]
    %v7563 = vld [vmem:[%s7541 + $0x54] sm:$0xf]
    %v7564 = vld [vmem:[%s7541 + $0x58] sm:$0xf]
    %v7565 = vld [vmem:[%s7541 + $0x5c] sm:$0xf]
    %v7566 = vld [vmem:[%s7541 + $0x60] sm:$0xf]
    %v7567 = vld [vmem:[%s7541 + $0x64] sm:$0xf]
    %v7568 = vld [vmem:[%s7541 + $0x68] sm:$0xf]
    %v7569 = vld [vmem:[%s7541 + $0x6c] sm:$0xf]
    %v7570 = vld [vmem:[%s7541 + $0x70] sm:$0xf]
    %v7571 = vld [vmem:[%s7541 + $0x74] sm:$0xf]
    %v7572 = vld [vmem:[%s7541 + $0x78] sm:$0xf]
    %v7573 = vld [vmem:[%s7541 + $0x7c] sm:$0xf]
    %v7574 = vld [vmem:[%s7541 + $0x80] sm:$0xf]
    %v7575 = vld [vmem:[%s7541 + $0x84] sm:$0xf]
    %v7576 = vld [vmem:[%s7541 + $0x88] sm:$0xf]
    %v7577 = vld [vmem:[%s7541 + $0x8c] sm:$0xf]
    %v7578 = vld [vmem:[%s7541 + $0x90] sm:$0xf]
    %v7579 = vld [vmem:[%s7541 + $0x94] sm:$0xf]
    %v7580 = vld [vmem:[%s7541 + $0x98] sm:$0xf]
    %v7581 = vld [vmem:[%s7541 + $0x9c] sm:$0xf]
    %v7582 = vld [vmem:[%s7541 + $0xa0] sm:$0xf]
    %v7583 = vld [vmem:[%s7541 + $0xa4] sm:$0xf]
    %v7584 = vld [vmem:[%s7541 + $0xa8] sm:$0xf]
    %v7585 = vld [vmem:[%s7541 + $0xac] sm:$0xf]
    %v7586 = vld [vmem:[%s7541 + $0xb0] sm:$0xf]
    %v7587 = vld [vmem:[%s7541 + $0xb4] sm:$0xf]
    %v7588 = vld [vmem:[%s7541 + $0xb8] sm:$0xf]
    %v7589 = vld [vmem:[%s7541 + $0xbc] sm:$0xf]
    %v7590 = vld [vmem:[%s7541 + $0xc0] sm:$0xf]
    %v7591 = vld [vmem:[%s7541 + $0xc4] sm:$0xf]
    %v7592 = vld [vmem:[%s7541 + $0xc8] sm:$0xf]
    %v7593 = vld [vmem:[%s7541 + $0xcc] sm:$0xf]
    %v7594 = vld [vmem:[%s7541 + $0xd0] sm:$0xf]
    %v7595 = vld [vmem:[%s7541 + $0xd4] sm:$0xf]
    %v7596 = vld [vmem:[%s7541 + $0xd8] sm:$0xf]
    %v7597 = vld [vmem:[%s7541 + $0xdc] sm:$0xf]
    %v7598 = vld [vmem:[%s7541 + $0xe0] sm:$0xf]
    %v7599 = vld [vmem:[%s7541 + $0xe4] sm:$0xf]
    %v7600 = vld [vmem:[%s7541 + $0xe8] sm:$0xf]
    %v7601 = vld [vmem:[%s7541 + $0xec] sm:$0xf]
    %v7602 = vld [vmem:[%s7541 + $0xf0] sm:$0xf]
    %v7603 = vld [vmem:[%s7541 + $0xf4] sm:$0xf]
    %v7604 = vld [vmem:[%s7541 + $0xf8] sm:$0xf]
    %v7605 = vld [vmem:[%s7541 + $0xfc] sm:$0xf]
    %v7606 = vld [vmem:[%s7541 + $0x100] sm:$0xf]
    %v7607 = vld [vmem:[%s7541 + $0x104] sm:$0xf]
    %v7608 = vld [vmem:[%s7541 + $0x108] sm:$0xf]
    %v7609 = vld [vmem:[%s7541 + $0x10c] sm:$0xf]
    %v7610 = vld [vmem:[%s7541 + $0x110] sm:$0xf]
    %v7611 = vld [vmem:[%s7541 + $0x114] sm:$0xf]
    %v7612 = vld [vmem:[%s7541 + $0x118] sm:$0xf]
    %v7613 = vld [vmem:[%s7541 + $0x11c] sm:$0xf]
    %v7614 = vld [vmem:[%s7541 + $0x120] sm:$0xf]
    %v7615 = vld [vmem:[%s7541 + $0x124] sm:$0xf]
    %v7616 = vld [vmem:[%s7541 + $0x128] sm:$0xf]
    %v7617 = vld [vmem:[%s7541 + $0x12c] sm:$0xf]
    %v7618 = vld [vmem:[%s7541 + $0x130] sm:$0xf]
    %v7619 = vld [vmem:[%s7541 + $0x134] sm:$0xf]
    %v7620 = vld [vmem:[%s7541 + $0x138] sm:$0xf]
    %v7621 = vld [vmem:[%s7541 + $0x13c] sm:$0xf]
    %v7622 = vld [vmem:[%s7541 + $0x140] sm:$0xf]
    %v7623 = vld [vmem:[%s7541 + $0x144] sm:$0xf]
    %v7624 = vld [vmem:[%s7541 + $0x148] sm:$0xf]
    %v7625 = vld [vmem:[%s7541 + $0x14c] sm:$0xf]
    %v7626 = vld [vmem:[%s7541 + $0x150] sm:$0xf]
    %v7627 = vld [vmem:[%s7541 + $0x154] sm:$0xf]
    %v7628 = vld [vmem:[%s7541 + $0x158] sm:$0xf]
    %v7629 = vld [vmem:[%s7541 + $0x15c] sm:$0xf]
    %v7630 = vld [vmem:[%s7541 + $0x160] sm:$0xf]
    %v7631 = vld [vmem:[%s7541 + $0x164] sm:$0xf]
    %v7632 = vld [vmem:[%s7541 + $0x168] sm:$0xf]
    %v7633 = vld [vmem:[%s7541 + $0x16c] sm:$0xf]
    %v7634 = vld [vmem:[%s7541 + $0x170] sm:$0xf]
    %v7635 = vld [vmem:[%s7541 + $0x174] sm:$0xf]
    %v7636 = vld [vmem:[%s7541 + $0x178] sm:$0xf]
    %v7637 = vld [vmem:[%s7541 + $0x17c] sm:$0xf]
    %v7638 = vld [vmem:[%s7541 + $0x180] sm:$0xf]
    %v7639 = vld [vmem:[%s7541 + $0x184] sm:$0xf]
    %v7640 = vld [vmem:[%s7541 + $0x188] sm:$0xf]
    %v7641 = vld [vmem:[%s7541 + $0x18c] sm:$0xf]
    %v7642 = vld [vmem:[%s7541 + $0x190] sm:$0xf]
    %v7643 = vld [vmem:[%s7541 + $0x194] sm:$0xf]
    %v7644 = vld [vmem:[%s7541 + $0x198] sm:$0xf]
    %v7645 = vld [vmem:[%s7541 + $0x19c] sm:$0xf]
    %v7646 = vld [vmem:[%s7541 + $0x1a0] sm:$0xf]
    %v7647 = vld [vmem:[%s7541 + $0x1a4] sm:$0xf]
    %v7648 = vld [vmem:[%s7541 + $0x1a8] sm:$0xf]
    %v7649 = vld [vmem:[%s7541 + $0x1ac] sm:$0xf]
    %v7650 = vld [vmem:[%s7541 + $0x1b0] sm:$0xf]
    %v7651 = vld [vmem:[%s7541 + $0x1b4] sm:$0xf]
    %v7652 = vld [vmem:[%s7541 + $0x1b8] sm:$0xf]
    %v7653 = vld [vmem:[%s7541 + $0x1bc] sm:$0xf]
    %v7654 = vld [vmem:[%s7541 + $0x1c0] sm:$0xf]
    %v7655 = vld [vmem:[%s7541 + $0x1c4] sm:$0xf]
    %v7656 = vld [vmem:[%s7541 + $0x1c8] sm:$0xf]
    %v7657 = vld [vmem:[%s7541 + $0x1cc] sm:$0xf]
    %v7658 = vld [vmem:[%s7541 + $0x1d0] sm:$0xf]
    %v7659 = vld [vmem:[%s7541 + $0x1d4] sm:$0xf]
    %v7660 = vld [vmem:[%s7541 + $0x1d8] sm:$0xf]
    %v7661 = vld [vmem:[%s7541 + $0x1dc] sm:$0xf]
    %v7662 = vld [vmem:[%s7541 + $0x1e0] sm:$0xf]
    %v7663 = vld [vmem:[%s7541 + $0x1e4] sm:$0xf]
    %v7664 = vld [vmem:[%s7541 + $0x1e8] sm:$0xf]
    %v7665 = vld [vmem:[%s7541 + $0x1ec] sm:$0xf]
    %v7666 = vld [vmem:[%s7541 + $0x1f0] sm:$0xf]
    %v7667 = vld [vmem:[%s7541 + $0x1f4] sm:$0xf]
    %v7668 = vld [vmem:[%s7541 + $0x1f8] sm:$0xf]
    %v7669 = vld [vmem:[%s7541 + $0x1fc] sm:$0xf]
    %v7670 = vld [vmem:[%s7541 + $0x200] sm:$0xf]
    %v7671 = vld [vmem:[%s7541 + $0x204] sm:$0xf]
    %v7672 = vld [vmem:[%s7541 + $0x208] sm:$0xf]
    %v7673 = vld [vmem:[%s7541 + $0x20c] sm:$0xf]
    %v7674 = vld [vmem:[%s7541 + $0x210] sm:$0xf]
    %v7675 = vld [vmem:[%s7541 + $0x214] sm:$0xf]
    %v7676 = vld [vmem:[%s7541 + $0x218] sm:$0xf]
    %v7677 = vld [vmem:[%s7541 + $0x21c] sm:$0xf]
    %v7678 = vld [vmem:[%s7541 + $0x220] sm:$0xf]
    %v7679 = vld [vmem:[%s7541 + $0x224] sm:$0xf]
    %v7680 = vld [vmem:[%s7541 + $0x228] sm:$0xf]
    %v7681 = vld [vmem:[%s7541 + $0x22c] sm:$0xf]
    %v7682 = vld [vmem:[%s7541 + $0x230] sm:$0xf]
    %v7683 = vld [vmem:[%s7541 + $0x234] sm:$0xf]
    %v7684 = vld [vmem:[%s7541 + $0x238] sm:$0xf]
    %v7685 = vld [vmem:[%s7541 + $0x23c] sm:$0xf]
    %v7686 = vld [vmem:[%s7541 + $0x240] sm:$0xf]
    %v7687 = vld [vmem:[%s7541 + $0x244] sm:$0xf]
    %v7688 = vld [vmem:[%s7541 + $0x248] sm:$0xf]
    %v7689 = vld [vmem:[%s7541 + $0x24c] sm:$0xf]
    %v7690 = vld [vmem:[%s7541 + $0x250] sm:$0xf]
    %v7691 = vld [vmem:[%s7541 + $0x254] sm:$0xf]
    %v7692 = vld [vmem:[%s7541 + $0x258] sm:$0xf]
    %v7693 = vld [vmem:[%s7541 + $0x25c] sm:$0xf]
    %v7694 = vld [vmem:[%s7541 + $0x260] sm:$0xf]
    %v7695 = vld [vmem:[%s7541 + $0x264] sm:$0xf]
    %v7696 = vld [vmem:[%s7541 + $0x268] sm:$0xf]
    %v7697 = vld [vmem:[%s7541 + $0x26c] sm:$0xf]
    %v7698 = vld [vmem:[%s7541 + $0x270] sm:$0xf]
    %v7699 = vld [vmem:[%s7541 + $0x274] sm:$0xf]
    %v7700 = vld [vmem:[%s7541 + $0x278] sm:$0xf]
    %v7701 = vld [vmem:[%s7541 + $0x27c] sm:$0xf]
    %v7702 = vld [vmem:[%s7541 + $0x280] sm:$0xf]
    %v7703 = vld [vmem:[%s7541 + $0x284] sm:$0xf]
    %v7704 = vld [vmem:[%s7541 + $0x288] sm:$0xf]
    %v7705 = vld [vmem:[%s7541 + $0x28c] sm:$0xf]
    %v7706 = vld [vmem:[%s7541 + $0x290] sm:$0xf]
    %v7707 = vld [vmem:[%s7541 + $0x294] sm:$0xf]
    %v7708 = vld [vmem:[%s7541 + $0x298] sm:$0xf]
    %v7709 = vld [vmem:[%s7541 + $0x29c] sm:$0xf]
    %v7710 = vld [vmem:[%s7541 + $0x2a0] sm:$0xf]
    %v7711 = vld [vmem:[%s7541 + $0x2a4] sm:$0xf]
    %v7712 = vld [vmem:[%s7541 + $0x2a8] sm:$0xf]
    %v7713 = vld [vmem:[%s7541 + $0x2ac] sm:$0xf]
    %v7714 = vld [vmem:[%s7541 + $0x2b0] sm:$0xf]
    %v7715 = vld [vmem:[%s7541 + $0x2b4] sm:$0xf]
    %v7716 = vld [vmem:[%s7541 + $0x2b8] sm:$0xf]
    %v7717 = vld [vmem:[%s7541 + $0x2bc] sm:$0xf]
    %v7718 = vld [vmem:[%s7541 + $0x2c0] sm:$0xf]
    %v7719 = vld [vmem:[%s7541 + $0x2c4] sm:$0xf]
    %v7720 = vld [vmem:[%s7541 + $0x2c8] sm:$0xf]
    %v7721 = vld [vmem:[%s7541 + $0x2cc] sm:$0xf]
    %v7722 = vld [vmem:[%s7541 + $0x2d0] sm:$0xf]
    %v7723 = vld [vmem:[%s7541 + $0x2d4] sm:$0xf]
    %v7724 = vld [vmem:[%s7541 + $0x2d8] sm:$0xf]
    %v7725 = vld [vmem:[%s7541 + $0x2dc] sm:$0xf]
    %v7726 = vld [vmem:[%s7541 + $0x2e0] sm:$0xf]
    %v7727 = vld [vmem:[%s7541 + $0x2e4] sm:$0xf]
    %v7728 = vld [vmem:[%s7541 + $0x2e8] sm:$0xf]
    %v7729 = vld [vmem:[%s7541 + $0x2ec] sm:$0xf]
    %v7730 = vld [vmem:[%s7541 + $0x2f0] sm:$0xf]
    %v7731 = vld [vmem:[%s7541 + $0x2f4] sm:$0xf]
    %v7732 = vld [vmem:[%s7541 + $0x2f8] sm:$0xf]
    %v7733 = vld [vmem:[%s7541 + $0x2fc] sm:$0xf]
    %v7734 = vld [vmem:[%s7541 + $0x300] sm:$0xf]
    %v7735 = vld [vmem:[%s7541 + $0x304] sm:$0xf]
    %v7736 = vld [vmem:[%s7541 + $0x308] sm:$0xf]
    %v7737 = vld [vmem:[%s7541 + $0x30c] sm:$0xf]
    %v7738 = vld [vmem:[%s7541 + $0x310] sm:$0xf]
    %v7739 = vld [vmem:[%s7541 + $0x314] sm:$0xf]
    %v7740 = vld [vmem:[%s7541 + $0x318] sm:$0xf]
    %v7741 = vld [vmem:[%s7541 + $0x31c] sm:$0xf]
    %v7742 = vld [vmem:[%s7541 + $0x320] sm:$0xf]
    %v7743 = vld [vmem:[%s7541 + $0x324] sm:$0xf]
    %v7744 = vld [vmem:[%s7541 + $0x328] sm:$0xf]
    %v7745 = vld [vmem:[%s7541 + $0x32c] sm:$0xf]
    %v7746 = vld [vmem:[%s7541 + $0x330] sm:$0xf]
    %v7747 = vld [vmem:[%s7541 + $0x334] sm:$0xf]
    %v7748 = vld [vmem:[%s7541 + $0x338] sm:$0xf]
    %v7749 = vld [vmem:[%s7541 + $0x33c] sm:$0xf]
    %v7750 = vld [vmem:[%s7541 + $0x340] sm:$0xf]
    %v7751 = vld [vmem:[%s7541 + $0x344] sm:$0xf]
    %v7752 = vld [vmem:[%s7541 + $0x348] sm:$0xf]
    %v7753 = vld [vmem:[%s7541 + $0x34c] sm:$0xf]
    %v7754 = vld [vmem:[%s7541 + $0x350] sm:$0xf]
    %v7755 = vld [vmem:[%s7541 + $0x354] sm:$0xf]
    %v7756 = vld [vmem:[%s7541 + $0x358] sm:$0xf]
    %v7757 = vld [vmem:[%s7541 + $0x35c] sm:$0xf]
    %v7758 = vld [vmem:[%s7541 + $0x360] sm:$0xf]
    %v7759 = vld [vmem:[%s7541 + $0x364] sm:$0xf]
    %v7760 = vld [vmem:[%s7541 + $0x368] sm:$0xf]
    %v7761 = vld [vmem:[%s7541 + $0x36c] sm:$0xf]
    %v7762 = vld [vmem:[%s7541 + $0x370] sm:$0xf]
    %v7763 = vld [vmem:[%s7541 + $0x374] sm:$0xf]
    %v7764 = vld [vmem:[%s7541 + $0x378] sm:$0xf]
    %v7765 = vld [vmem:[%s7541 + $0x37c] sm:$0xf]
    %v7766 = vld [vmem:[%s7541 + $0x380] sm:$0xf]
    %v7767 = vld [vmem:[%s7541 + $0x384] sm:$0xf]
    %v7768 = vld [vmem:[%s7541 + $0x388] sm:$0xf]
    %v7769 = vld [vmem:[%s7541 + $0x38c] sm:$0xf]
    %v7770 = vld [vmem:[%s7541 + $0x390] sm:$0xf]
    %v7771 = vld [vmem:[%s7541 + $0x394] sm:$0xf]
    %v7772 = vld [vmem:[%s7541 + $0x398] sm:$0xf]
    %v7773 = vld [vmem:[%s7541 + $0x39c] sm:$0xf]
    %v7774 = vld [vmem:[%s7541 + $0x3a0] sm:$0xf]
    %v7775 = vld [vmem:[%s7541 + $0x3a4] sm:$0xf]
    %v7776 = vld [vmem:[%s7541 + $0x3a8] sm:$0xf]
    %v7777 = vld [vmem:[%s7541 + $0x3ac] sm:$0xf]
    %v7778 = vld [vmem:[%s7541 + $0x3b0] sm:$0xf]
    %v7779 = vld [vmem:[%s7541 + $0x3b4] sm:$0xf]
    %v7780 = vld [vmem:[%s7541 + $0x3b8] sm:$0xf]
    %v7781 = vld [vmem:[%s7541 + $0x3bc] sm:$0xf]
    %v7782 = vld [vmem:[%s7541 + $0x3c0] sm:$0xf]
    %v7783 = vld [vmem:[%s7541 + $0x3c4] sm:$0xf]
    %v7784 = vld [vmem:[%s7541 + $0x3c8] sm:$0xf]
    %v7785 = vld [vmem:[%s7541 + $0x3cc] sm:$0xf]
    %v7786 = vld [vmem:[%s7541 + $0x3d0] sm:$0xf]
    %v7787 = vld [vmem:[%s7541 + $0x3d4] sm:$0xf]
    %v7788 = vld [vmem:[%s7541 + $0x3d8] sm:$0xf]
    %v7789 = vld [vmem:[%s7541 + $0x3dc] sm:$0xf]
    %v7790 = vld [vmem:[%s7541 + $0x3e0] sm:$0xf]
    %v7791 = vld [vmem:[%s7541 + $0x3e4] sm:$0xf]
    %v7792 = vld [vmem:[%s7541 + $0x3e8] sm:$0xf]
    %v7793 = vld [vmem:[%s7541 + $0x3ec] sm:$0xf]
    %v7794 = vld [vmem:[%s7541 + $0x3f0] sm:$0xf]
    %v7795 = vld [vmem:[%s7541 + $0x3f4] sm:$0xf]
    %v7796 = vld [vmem:[%s7541 + $0x3f8] sm:$0xf]
    %v7797 = vld [vmem:[%s7541 + $0x3fc] sm:$0xf]
    %s7798 = scalar_lea.vmem %s51, 1
    %v7799 = vld [vmem:[%s7798] sm:$0x1]
    %v7801 = vlaneseq
    %v7802 = vshrl.u32 %v7801, 7
    %v7803 = vsub.s32 0, %v7802
    %v7804 = vrot.slane %v7799, %v7803
    %v8062 = vunpack.c.l.b16 %v7542
    %v8063 = vunpack.c.l.b16 %v7543
    %v8064 = vunpack.c.l.b16 %v7544
    %v8065 = vunpack.c.l.b16 %v7545
    %v8066 = vunpack.c.l.b16 %v7546
    %v8067 = vunpack.c.l.b16 %v7547
    %v8068 = vunpack.c.l.b16 %v7548
    %v8069 = vunpack.c.l.b16 %v7549
    %v8070 = vunpack.c.l.b16 %v7550
    %v8071 = vunpack.c.l.b16 %v7551
    %v8072 = vunpack.c.l.b16 %v7552
    %v8073 = vunpack.c.l.b16 %v7553
    %v8074 = vunpack.c.l.b16 %v7554
    %v8075 = vunpack.c.l.b16 %v7555
    %v8076 = vunpack.c.l.b16 %v7556
    %v8077 = vunpack.c.l.b16 %v7557
    %v8078 = vunpack.c.l.b16 %v7558
    %v8079 = vunpack.c.l.b16 %v7559
    %v8080 = vunpack.c.l.b16 %v7560
    %v8081 = vunpack.c.l.b16 %v7561
    %v8082 = vunpack.c.l.b16 %v7562
    %v8083 = vunpack.c.l.b16 %v7563
    %v8084 = vunpack.c.l.b16 %v7564
    %v8085 = vunpack.c.l.b16 %v7565
    %v8086 = vunpack.c.l.b16 %v7566
    %v8087 = vunpack.c.l.b16 %v7567
    %v8088 = vunpack.c.l.b16 %v7568
    %v8089 = vunpack.c.l.b16 %v7569
    %v8090 = vunpack.c.l.b16 %v7570
    %v8091 = vunpack.c.l.b16 %v7571
    %v8092 = vunpack.c.l.b16 %v7572
    %v8093 = vunpack.c.l.b16 %v7573
    %v8094 = vunpack.c.l.b16 %v7574
    %v8095 = vunpack.c.l.b16 %v7575
    %v8096 = vunpack.c.l.b16 %v7576
    %v8097 = vunpack.c.l.b16 %v7577
    %v8098 = vunpack.c.l.b16 %v7578
    %v8099 = vunpack.c.l.b16 %v7579
    %v8100 = vunpack.c.l.b16 %v7580
    %v8101 = vunpack.c.l.b16 %v7581
    %v8102 = vunpack.c.l.b16 %v7582
    %v8103 = vunpack.c.l.b16 %v7583
    %v8104 = vunpack.c.l.b16 %v7584
    %v8105 = vunpack.c.l.b16 %v7585
    %v8106 = vunpack.c.l.b16 %v7586
    %v8107 = vunpack.c.l.b16 %v7587
    %v8108 = vunpack.c.l.b16 %v7588
    %v8109 = vunpack.c.l.b16 %v7589
    %v8110 = vunpack.c.l.b16 %v7590
    %v8111 = vunpack.c.l.b16 %v7591
    %v8112 = vunpack.c.l.b16 %v7592
    %v8113 = vunpack.c.l.b16 %v7593
    %v8114 = vunpack.c.l.b16 %v7594
    %v8115 = vunpack.c.l.b16 %v7595
    %v8116 = vunpack.c.l.b16 %v7596
    %v8117 = vunpack.c.l.b16 %v7597
    %v8118 = vunpack.c.l.b16 %v7598
    %v8119 = vunpack.c.l.b16 %v7599
    %v8120 = vunpack.c.l.b16 %v7600
    %v8121 = vunpack.c.l.b16 %v7601
    %v8122 = vunpack.c.l.b16 %v7602
    %v8123 = vunpack.c.l.b16 %v7603
    %v8124 = vunpack.c.l.b16 %v7604
    %v8125 = vunpack.c.l.b16 %v7605
    %v8126 = vunpack.c.l.b16 %v7606
    %v8127 = vunpack.c.l.b16 %v7607
    %v8128 = vunpack.c.l.b16 %v7608
    %v8129 = vunpack.c.l.b16 %v7609
    %v8130 = vunpack.c.l.b16 %v7610
    %v8131 = vunpack.c.l.b16 %v7611
    %v8132 = vunpack.c.l.b16 %v7612
    %v8133 = vunpack.c.l.b16 %v7613
    %v8134 = vunpack.c.l.b16 %v7614
    %v8135 = vunpack.c.l.b16 %v7615
    %v8136 = vunpack.c.l.b16 %v7616
    %v8137 = vunpack.c.l.b16 %v7617
    %v8138 = vunpack.c.l.b16 %v7618
    %v8139 = vunpack.c.l.b16 %v7619
    %v8140 = vunpack.c.l.b16 %v7620
    %v8141 = vunpack.c.l.b16 %v7621
    %v8142 = vunpack.c.l.b16 %v7622
    %v8143 = vunpack.c.l.b16 %v7623
    %v8144 = vunpack.c.l.b16 %v7624
    %v8145 = vunpack.c.l.b16 %v7625
    %v8146 = vunpack.c.l.b16 %v7626
    %v8147 = vunpack.c.l.b16 %v7627
    %v8148 = vunpack.c.l.b16 %v7628
    %v8149 = vunpack.c.l.b16 %v7629
    %v8150 = vunpack.c.l.b16 %v7630
    %v8151 = vunpack.c.l.b16 %v7631
    %v8152 = vunpack.c.l.b16 %v7632
    %v8153 = vunpack.c.l.b16 %v7633
    %v8154 = vunpack.c.l.b16 %v7634
    %v8155 = vunpack.c.l.b16 %v7635
    %v8156 = vunpack.c.l.b16 %v7636
    %v8157 = vunpack.c.l.b16 %v7637
    %v8158 = vunpack.c.l.b16 %v7638
    %v8159 = vunpack.c.l.b16 %v7639
    %v8160 = vunpack.c.l.b16 %v7640
    %v8161 = vunpack.c.l.b16 %v7641
    %v8162 = vunpack.c.l.b16 %v7642
    %v8163 = vunpack.c.l.b16 %v7643
    %v8164 = vunpack.c.l.b16 %v7644
    %v8165 = vunpack.c.l.b16 %v7645
    %v8166 = vunpack.c.l.b16 %v7646
    %v8167 = vunpack.c.l.b16 %v7647
    %v8168 = vunpack.c.l.b16 %v7648
    %v8169 = vunpack.c.l.b16 %v7649
    %v8170 = vunpack.c.l.b16 %v7650
    %v8171 = vunpack.c.l.b16 %v7651
    %v8172 = vunpack.c.l.b16 %v7652
    %v8173 = vunpack.c.l.b16 %v7653
    %v8174 = vunpack.c.l.b16 %v7654
    %v8175 = vunpack.c.l.b16 %v7655
    %v8176 = vunpack.c.l.b16 %v7656
    %v8177 = vunpack.c.l.b16 %v7657
    %v8178 = vunpack.c.l.b16 %v7658
    %v8179 = vunpack.c.l.b16 %v7659
    %v8180 = vunpack.c.l.b16 %v7660
    %v8181 = vunpack.c.l.b16 %v7661
    %v8182 = vunpack.c.l.b16 %v7662
    %v8183 = vunpack.c.l.b16 %v7663
    %v8184 = vunpack.c.l.b16 %v7664
    %v8185 = vunpack.c.l.b16 %v7665
    %v8186 = vunpack.c.l.b16 %v7666
    %v8187 = vunpack.c.l.b16 %v7667
    %v8188 = vunpack.c.l.b16 %v7668
    %v8189 = vunpack.c.l.b16 %v7669
    %v8190 = vunpack.c.l.b16 %v7670
    %v8191 = vunpack.c.l.b16 %v7671
    %v8192 = vunpack.c.l.b16 %v7672
    %v8193 = vunpack.c.l.b16 %v7673
    %v8194 = vunpack.c.l.b16 %v7674
    %v8195 = vunpack.c.l.b16 %v7675
    %v8196 = vunpack.c.l.b16 %v7676
    %v8197 = vunpack.c.l.b16 %v7677
    %v8198 = vunpack.c.l.b16 %v7678
    %v8199 = vunpack.c.l.b16 %v7679
    %v8200 = vunpack.c.l.b16 %v7680
    %v8201 = vunpack.c.l.b16 %v7681
    %v8202 = vunpack.c.l.b16 %v7682
    %v8203 = vunpack.c.l.b16 %v7683
    %v8204 = vunpack.c.l.b16 %v7684
    %v8205 = vunpack.c.l.b16 %v7685
    %v8206 = vunpack.c.l.b16 %v7686
    %v8207 = vunpack.c.l.b16 %v7687
    %v8208 = vunpack.c.l.b16 %v7688
    %v8209 = vunpack.c.l.b16 %v7689
    %v8210 = vunpack.c.l.b16 %v7690
    %v8211 = vunpack.c.l.b16 %v7691
    %v8212 = vunpack.c.l.b16 %v7692
    %v8213 = vunpack.c.l.b16 %v7693
    %v8214 = vunpack.c.l.b16 %v7694
    %v8215 = vunpack.c.l.b16 %v7695
    %v8216 = vunpack.c.l.b16 %v7696
    %v8217 = vunpack.c.l.b16 %v7697
    %v8218 = vunpack.c.l.b16 %v7698
    %v8219 = vunpack.c.l.b16 %v7699
    %v8220 = vunpack.c.l.b16 %v7700
    %v8221 = vunpack.c.l.b16 %v7701
    %v8222 = vunpack.c.l.b16 %v7702
    %v8223 = vunpack.c.l.b16 %v7703
    %v8224 = vunpack.c.l.b16 %v7704
    %v8225 = vunpack.c.l.b16 %v7705
    %v8226 = vunpack.c.l.b16 %v7706
    %v8227 = vunpack.c.l.b16 %v7707
    %v8228 = vunpack.c.l.b16 %v7708
    %v8229 = vunpack.c.l.b16 %v7709
    %v8230 = vunpack.c.l.b16 %v7710
    %v8231 = vunpack.c.l.b16 %v7711
    %v8232 = vunpack.c.l.b16 %v7712
    %v8233 = vunpack.c.l.b16 %v7713
    %v8234 = vunpack.c.l.b16 %v7714
    %v8235 = vunpack.c.l.b16 %v7715
    %v8236 = vunpack.c.l.b16 %v7716
    %v8237 = vunpack.c.l.b16 %v7717
    %v8238 = vunpack.c.l.b16 %v7718
    %v8239 = vunpack.c.l.b16 %v7719
    %v8240 = vunpack.c.l.b16 %v7720
    %v8241 = vunpack.c.l.b16 %v7721
    %v8242 = vunpack.c.l.b16 %v7722
    %v8243 = vunpack.c.l.b16 %v7723
    %v8244 = vunpack.c.l.b16 %v7724
    %v8245 = vunpack.c.l.b16 %v7725
    %v8246 = vunpack.c.l.b16 %v7726
    %v8247 = vunpack.c.l.b16 %v7727
    %v8248 = vunpack.c.l.b16 %v7728
    %v8249 = vunpack.c.l.b16 %v7729
    %v8250 = vunpack.c.l.b16 %v7730
    %v8251 = vunpack.c.l.b16 %v7731
    %v8252 = vunpack.c.l.b16 %v7732
    %v8253 = vunpack.c.l.b16 %v7733
    %v8254 = vunpack.c.l.b16 %v7734
    %v8255 = vunpack.c.l.b16 %v7735
    %v8256 = vunpack.c.l.b16 %v7736
    %v8257 = vunpack.c.l.b16 %v7737
    %v8258 = vunpack.c.l.b16 %v7738
    %v8259 = vunpack.c.l.b16 %v7739
    %v8260 = vunpack.c.l.b16 %v7740
    %v8261 = vunpack.c.l.b16 %v7741
    %v8262 = vunpack.c.l.b16 %v7742
    %v8263 = vunpack.c.l.b16 %v7743
    %v8264 = vunpack.c.l.b16 %v7744
    %v8265 = vunpack.c.l.b16 %v7745
    %v8266 = vunpack.c.l.b16 %v7746
    %v8267 = vunpack.c.l.b16 %v7747
    %v8268 = vunpack.c.l.b16 %v7748
    %v8269 = vunpack.c.l.b16 %v7749
    %v8270 = vunpack.c.l.b16 %v7750
    %v8271 = vunpack.c.l.b16 %v7751
    %v8272 = vunpack.c.l.b16 %v7752
    %v8273 = vunpack.c.l.b16 %v7753
    %v8274 = vunpack.c.l.b16 %v7754
    %v8275 = vunpack.c.l.b16 %v7755
    %v8276 = vunpack.c.l.b16 %v7756
    %v8277 = vunpack.c.l.b16 %v7757
    %v8278 = vunpack.c.l.b16 %v7758
    %v8279 = vunpack.c.l.b16 %v7759
    %v8280 = vunpack.c.l.b16 %v7760
    %v8281 = vunpack.c.l.b16 %v7761
    %v8282 = vunpack.c.l.b16 %v7762
    %v8283 = vunpack.c.l.b16 %v7763
    %v8284 = vunpack.c.l.b16 %v7764
    %v8285 = vunpack.c.l.b16 %v7765
    %v8286 = vunpack.c.l.b16 %v7766
    %v8287 = vunpack.c.l.b16 %v7767
    %v8288 = vunpack.c.l.b16 %v7768
    %v8289 = vunpack.c.l.b16 %v7769
    %v8290 = vunpack.c.l.b16 %v7770
    %v8291 = vunpack.c.l.b16 %v7771
    %v8292 = vunpack.c.l.b16 %v7772
    %v8293 = vunpack.c.l.b16 %v7773
    %v8294 = vunpack.c.l.b16 %v7774
    %v8295 = vunpack.c.l.b16 %v7775
    %v8296 = vunpack.c.l.b16 %v7776
    %v8297 = vunpack.c.l.b16 %v7777
    %v8298 = vunpack.c.l.b16 %v7778
    %v8299 = vunpack.c.l.b16 %v7779
    %v8300 = vunpack.c.l.b16 %v7780
    %v8301 = vunpack.c.l.b16 %v7781
    %v8302 = vunpack.c.l.b16 %v7782
    %v8303 = vunpack.c.l.b16 %v7783
    %v8304 = vunpack.c.l.b16 %v7784
    %v8305 = vunpack.c.l.b16 %v7785
    %v8306 = vunpack.c.l.b16 %v7786
    %v8307 = vunpack.c.l.b16 %v7787
    %v8308 = vunpack.c.l.b16 %v7788
    %v8309 = vunpack.c.l.b16 %v7789
    %v8310 = vunpack.c.l.b16 %v7790
    %v8311 = vunpack.c.l.b16 %v7791
    %v8312 = vunpack.c.l.b16 %v7792
    %v8313 = vunpack.c.l.b16 %v7793
    %v8314 = vunpack.c.l.b16 %v7794
    %v8315 = vunpack.c.l.b16 %v7795
    %v8316 = vunpack.c.l.b16 %v7796
    %v8317 = vunpack.c.l.b16 %v7797
    %v8318 = vpack.c.b16 %v8063, %v8062
    %v8319 = vpack.c.b16 %v8065, %v8064
    %v8320 = vpack.c.b16 %v8067, %v8066
    %v8321 = vpack.c.b16 %v8069, %v8068
    %v8322 = vpack.c.b16 %v8071, %v8070
    %v8323 = vpack.c.b16 %v8073, %v8072
    %v8324 = vpack.c.b16 %v8075, %v8074
    %v8325 = vpack.c.b16 %v8077, %v8076
    %v8326 = vpack.c.b16 %v8079, %v8078
    %v8327 = vpack.c.b16 %v8081, %v8080
    %v8328 = vpack.c.b16 %v8083, %v8082
    %v8329 = vpack.c.b16 %v8085, %v8084
    %v8330 = vpack.c.b16 %v8087, %v8086
    %v8331 = vpack.c.b16 %v8089, %v8088
    %v8332 = vpack.c.b16 %v8091, %v8090
    %v8333 = vpack.c.b16 %v8093, %v8092
    %v8334 = vpack.c.b16 %v8095, %v8094
    %v8335 = vpack.c.b16 %v8097, %v8096
    %v8336 = vpack.c.b16 %v8099, %v8098
    %v8337 = vpack.c.b16 %v8101, %v8100
    %v8338 = vpack.c.b16 %v8103, %v8102
    %v8339 = vpack.c.b16 %v8105, %v8104
    %v8340 = vpack.c.b16 %v8107, %v8106
    %v8341 = vpack.c.b16 %v8109, %v8108
    %v8342 = vpack.c.b16 %v8111, %v8110
    %v8343 = vpack.c.b16 %v8113, %v8112
    %v8344 = vpack.c.b16 %v8115, %v8114
    %v8345 = vpack.c.b16 %v8117, %v8116
    %v8346 = vpack.c.b16 %v8119, %v8118
    %v8347 = vpack.c.b16 %v8121, %v8120
    %v8348 = vpack.c.b16 %v8123, %v8122
    %v8349 = vpack.c.b16 %v8125, %v8124
    %v8350 = vpack.c.b16 %v8127, %v8126
    %v8351 = vpack.c.b16 %v8129, %v8128
    %v8352 = vpack.c.b16 %v8131, %v8130
    %v8353 = vpack.c.b16 %v8133, %v8132
    %v8354 = vpack.c.b16 %v8135, %v8134
    %v8355 = vpack.c.b16 %v8137, %v8136
    %v8356 = vpack.c.b16 %v8139, %v8138
    %v8357 = vpack.c.b16 %v8141, %v8140
    %v8358 = vpack.c.b16 %v8143, %v8142
    %v8359 = vpack.c.b16 %v8145, %v8144
    %v8360 = vpack.c.b16 %v8147, %v8146
    %v8361 = vpack.c.b16 %v8149, %v8148
    %v8362 = vpack.c.b16 %v8151, %v8150
    %v8363 = vpack.c.b16 %v8153, %v8152
    %v8364 = vpack.c.b16 %v8155, %v8154
    %v8365 = vpack.c.b16 %v8157, %v8156
    %v8366 = vpack.c.b16 %v8159, %v8158
    %v8367 = vpack.c.b16 %v8161, %v8160
    %v8368 = vpack.c.b16 %v8163, %v8162
    %v8369 = vpack.c.b16 %v8165, %v8164
    %v8370 = vpack.c.b16 %v8167, %v8166
    %v8371 = vpack.c.b16 %v8169, %v8168
    %v8372 = vpack.c.b16 %v8171, %v8170
    %v8373 = vpack.c.b16 %v8173, %v8172
    %v8374 = vpack.c.b16 %v8175, %v8174
    %v8375 = vpack.c.b16 %v8177, %v8176
    %v8376 = vpack.c.b16 %v8179, %v8178
    %v8377 = vpack.c.b16 %v8181, %v8180
    %v8378 = vpack.c.b16 %v8183, %v8182
    %v8379 = vpack.c.b16 %v8185, %v8184
    %v8380 = vpack.c.b16 %v8187, %v8186
    %v8381 = vpack.c.b16 %v8189, %v8188
    %v8382 = vpack.c.b16 %v8191, %v8190
    %v8383 = vpack.c.b16 %v8193, %v8192
    %v8384 = vpack.c.b16 %v8195, %v8194
    %v8385 = vpack.c.b16 %v8197, %v8196
    %v8386 = vpack.c.b16 %v8199, %v8198
    %v8387 = vpack.c.b16 %v8201, %v8200
    %v8388 = vpack.c.b16 %v8203, %v8202
    %v8389 = vpack.c.b16 %v8205, %v8204
    %v8390 = vpack.c.b16 %v8207, %v8206
    %v8391 = vpack.c.b16 %v8209, %v8208
    %v8392 = vpack.c.b16 %v8211, %v8210
    %v8393 = vpack.c.b16 %v8213, %v8212
    %v8394 = vpack.c.b16 %v8215, %v8214
    %v8395 = vpack.c.b16 %v8217, %v8216
    %v8396 = vpack.c.b16 %v8219, %v8218
    %v8397 = vpack.c.b16 %v8221, %v8220
    %v8398 = vpack.c.b16 %v8223, %v8222
    %v8399 = vpack.c.b16 %v8225, %v8224
    %v8400 = vpack.c.b16 %v8227, %v8226
    %v8401 = vpack.c.b16 %v8229, %v8228
    %v8402 = vpack.c.b16 %v8231, %v8230
    %v8403 = vpack.c.b16 %v8233, %v8232
    %v8404 = vpack.c.b16 %v8235, %v8234
    %v8405 = vpack.c.b16 %v8237, %v8236
    %v8406 = vpack.c.b16 %v8239, %v8238
    %v8407 = vpack.c.b16 %v8241, %v8240
    %v8408 = vpack.c.b16 %v8243, %v8242
    %v8409 = vpack.c.b16 %v8245, %v8244
    %v8410 = vpack.c.b16 %v8247, %v8246
    %v8411 = vpack.c.b16 %v8249, %v8248
    %v8412 = vpack.c.b16 %v8251, %v8250
    %v8413 = vpack.c.b16 %v8253, %v8252
    %v8414 = vpack.c.b16 %v8255, %v8254
    %v8415 = vpack.c.b16 %v8257, %v8256
    %v8416 = vpack.c.b16 %v8259, %v8258
    %v8417 = vpack.c.b16 %v8261, %v8260
    %v8418 = vpack.c.b16 %v8263, %v8262
    %v8419 = vpack.c.b16 %v8265, %v8264
    %v8420 = vpack.c.b16 %v8267, %v8266
    %v8421 = vpack.c.b16 %v8269, %v8268
    %v8422 = vpack.c.b16 %v8271, %v8270
    %v8423 = vpack.c.b16 %v8273, %v8272
    %v8424 = vpack.c.b16 %v8275, %v8274
    %v8425 = vpack.c.b16 %v8277, %v8276
    %v8426 = vpack.c.b16 %v8279, %v8278
    %v8427 = vpack.c.b16 %v8281, %v8280
    %v8428 = vpack.c.b16 %v8283, %v8282
    %v8429 = vpack.c.b16 %v8285, %v8284
    %v8430 = vpack.c.b16 %v8287, %v8286
    %v8431 = vpack.c.b16 %v8289, %v8288
    %v8432 = vpack.c.b16 %v8291, %v8290
    %v8433 = vpack.c.b16 %v8293, %v8292
    %v8434 = vpack.c.b16 %v8295, %v8294
    %v8435 = vpack.c.b16 %v8297, %v8296
    %v8436 = vpack.c.b16 %v8299, %v8298
    %v8437 = vpack.c.b16 %v8301, %v8300
    %v8438 = vpack.c.b16 %v8303, %v8302
    %v8439 = vpack.c.b16 %v8305, %v8304
    %v8440 = vpack.c.b16 %v8307, %v8306
    %v8441 = vpack.c.b16 %v8309, %v8308
    %v8442 = vpack.c.b16 %v8311, %v8310
    %v8443 = vpack.c.b16 %v8313, %v8312
    %v8444 = vpack.c.b16 %v8315, %v8314
    %v8445 = vpack.c.b16 %v8317, %v8316
    %8574 = vmatprep.subr.bf16.mxu0 0
    %8575 = vmatpush1.bf16.msra.mxu0 %v8318
    %8576 = vmatprep.subr.bf16.mxu0 0
    %8577 = vmatpush1.bf16.msra.mxu0 %v8319
    %8578 = vmatprep.subr.bf16.mxu0 0
    %8579 = vmatpush1.bf16.msra.mxu0 %v8320
    %8580 = vmatprep.subr.bf16.mxu0 0
    %8581 = vmatpush1.bf16.msra.mxu0 %v8321
    %8582 = vmatprep.subr.bf16.mxu0 0
    %8583 = vmatpush1.bf16.msra.mxu0 %v8322
    %8584 = vmatprep.subr.bf16.mxu0 0
    %8585 = vmatpush1.bf16.msra.mxu0 %v8323
    %8586 = vmatprep.subr.bf16.mxu0 0
    %8587 = vmatpush1.bf16.msra.mxu0 %v8324
    %8588 = vmatprep.subr.bf16.mxu0 0
    %8589 = vmatpush1.bf16.msra.mxu0 %v8325
    %8590 = vmatprep.subr.bf16.mxu0 0
    %8591 = vmatpush1.bf16.msra.mxu0 %v8326
    %8592 = vmatprep.subr.bf16.mxu0 0
    %8593 = vmatpush1.bf16.msra.mxu0 %v8327
    %8594 = vmatprep.subr.bf16.mxu0 0
    %8595 = vmatpush1.bf16.msra.mxu0 %v8328
    %8596 = vmatprep.subr.bf16.mxu0 0
    %8597 = vmatpush1.bf16.msra.mxu0 %v8329
    %8598 = vmatprep.subr.bf16.mxu0 0
    %8599 = vmatpush1.bf16.msra.mxu0 %v8330
    %8600 = vmatprep.subr.bf16.mxu0 0
    %8601 = vmatpush1.bf16.msra.mxu0 %v8331
    %8602 = vmatprep.subr.bf16.mxu0 0
    %8603 = vmatpush1.bf16.msra.mxu0 %v8332
    %8604 = vmatprep.subr.bf16.mxu0 0
    %8605 = vmatpush1.bf16.msra.mxu0 %v8333
    %8606 = vmatprep.mubr.bf16.mxu0 %v7526
    %8607 = vmatmul.mubr.bf16.gmra.mrb[0].mxu0 %v7525
    %v8608 = vpop.f32.mrb[0].mxu0
    %v8609 = vadd.f32 %v7804, %v8608
    %v8610 = vpop.f32.mrb[0].mxu0
    %v8611 = vpop.f32.mrb[0].mxu0
    %v8612 = vadd.f32 %v7804, %v8611
    %v8613 = vpop.f32.mrb[0].mxu0
    %8614 = vdwg.mxu0
    %8615 = vmatprep.subr.bf16.mxu0 0
    %8616 = vmatpush1.bf16.msra.mxu0 %v8334
    %8617 = vmatprep.subr.bf16.mxu0 0
    %8618 = vmatpush1.bf16.msra.mxu0 %v8335
    %8619 = vmatprep.subr.bf16.mxu0 0
    %8620 = vmatpush1.bf16.msra.mxu0 %v8336
    %8621 = vmatprep.subr.bf16.mxu0 0
    %8622 = vmatpush1.bf16.msra.mxu0 %v8337
    %8623 = vmatprep.subr.bf16.mxu0 0
    %8624 = vmatpush1.bf16.msra.mxu0 %v8338
    %8625 = vmatprep.subr.bf16.mxu0 0
    %8626 = vmatpush1.bf16.msra.mxu0 %v8339
    %8627 = vmatprep.subr.bf16.mxu0 0
    %8628 = vmatpush1.bf16.msra.mxu0 %v8340
    %8629 = vmatprep.subr.bf16.mxu0 0
    %8630 = vmatpush1.bf16.msra.mxu0 %v8341
    %8631 = vmatprep.subr.bf16.mxu0 0
    %8632 = vmatpush1.bf16.msra.mxu0 %v8342
    %8633 = vmatprep.subr.bf16.mxu0 0
    %8634 = vmatpush1.bf16.msra.mxu0 %v8343
    %8635 = vmatprep.subr.bf16.mxu0 0
    %8636 = vmatpush1.bf16.msra.mxu0 %v8344
    %8637 = vmatprep.subr.bf16.mxu0 0
    %8638 = vmatpush1.bf16.msra.mxu0 %v8345
    %8639 = vmatprep.subr.bf16.mxu0 0
    %8640 = vmatpush1.bf16.msra.mxu0 %v8346
    %8641 = vmatprep.subr.bf16.mxu0 0
    %8642 = vmatpush1.bf16.msra.mxu0 %v8347
    %8643 = vmatprep.subr.bf16.mxu0 0
    %8644 = vmatpush1.bf16.msra.mxu0 %v8348
    %8645 = vmatprep.subr.bf16.mxu0 0
    %8646 = vmatpush1.bf16.msra.mxu0 %v8349
    %8647 = vmatprep.mubr.bf16.mxu0 %v7528
    %8648 = vmatmul.mubr.bf16.gmra.mrb[0].mxu0 %v7527
    %v8649 = vpop.f32.mrb[0].mxu0
    %v8650 = vadd.f32 %v8609, %v8649
    %v8651 = vpop.f32.mrb[0].mxu0
    %v8652 = vpop.f32.mrb[0].mxu0
    %v8653 = vadd.f32 %v8612, %v8652
    %v8654 = vpop.f32.mrb[0].mxu0
    %8655 = vdwg.mxu0
    %8656 = vmatprep.subr.bf16.mxu0 0
    %8657 = vmatpush1.bf16.msra.mxu0 %v8350
    %8658 = vmatprep.subr.bf16.mxu0 0
    %8659 = vmatpush1.bf16.msra.mxu0 %v8351
    %8660 = vmatprep.subr.bf16.mxu0 0
    %8661 = vmatpush1.bf16.msra.mxu0 %v8352
    %8662 = vmatprep.subr.bf16.mxu0 0
    %8663 = vmatpush1.bf16.msra.mxu0 %v8353
    %8664 = vmatprep.subr.bf16.mxu0 0
    %8665 = vmatpush1.bf16.msra.mxu0 %v8354
    %8666 = vmatprep.subr.bf16.mxu0 0
    %8667 = vmatpush1.bf16.msra.mxu0 %v8355
    %8668 = vmatprep.subr.bf16.mxu0 0
    %8669 = vmatpush1.bf16.msra.mxu0 %v8356
    %8670 = vmatprep.subr.bf16.mxu0 0
    %8671 = vmatpush1.bf16.msra.mxu0 %v8357
    %8672 = vmatprep.subr.bf16.mxu0 0
    %8673 = vmatpush1.bf16.msra.mxu0 %v8358
    %8674 = vmatprep.subr.bf16.mxu0 0
    %8675 = vmatpush1.bf16.msra.mxu0 %v8359
    %8676 = vmatprep.subr.bf16.mxu0 0
    %8677 = vmatpush1.bf16.msra.mxu0 %v8360
    %8678 = vmatprep.subr.bf16.mxu0 0
    %8679 = vmatpush1.bf16.msra.mxu0 %v8361
    %8680 = vmatprep.subr.bf16.mxu0 0
    %8681 = vmatpush1.bf16.msra.mxu0 %v8362
    %8682 = vmatprep.subr.bf16.mxu0 0
    %8683 = vmatpush1.bf16.msra.mxu0 %v8363
    %8684 = vmatprep.subr.bf16.mxu0 0
    %8685 = vmatpush1.bf16.msra.mxu0 %v8364
    %8686 = vmatprep.subr.bf16.mxu0 0
    %8687 = vmatpush1.bf16.msra.mxu0 %v8365
    %8688 = vmatprep.mubr.bf16.mxu0 %v7530
    %8689 = vmatmul.mubr.bf16.gmra.mrb[0].mxu0 %v7529
    %v8690 = vpop.f32.mrb[0].mxu0
    %v8691 = vadd.f32 %v8650, %v8690
    %v8692 = vpop.f32.mrb[0].mxu0
    %v8693 = vpop.f32.mrb[0].mxu0
    %v8694 = vadd.f32 %v8653, %v8693
    %v8695 = vpop.f32.mrb[0].mxu0
    %8696 = vdwg.mxu0
    %8697 = vmatprep.subr.bf16.mxu0 0
    %8698 = vmatpush1.bf16.msra.mxu0 %v8366
    %8699 = vmatprep.subr.bf16.mxu0 0
    %8700 = vmatpush1.bf16.msra.mxu0 %v8367
    %8701 = vmatprep.subr.bf16.mxu0 0
    %8702 = vmatpush1.bf16.msra.mxu0 %v8368
    %8703 = vmatprep.subr.bf16.mxu0 0
    %8704 = vmatpush1.bf16.msra.mxu0 %v8369
    %8705 = vmatprep.subr.bf16.mxu0 0
    %8706 = vmatpush1.bf16.msra.mxu0 %v8370
    %8707 = vmatprep.subr.bf16.mxu0 0
    %8708 = vmatpush1.bf16.msra.mxu0 %v8371
    %8709 = vmatprep.subr.bf16.mxu0 0
    %8710 = vmatpush1.bf16.msra.mxu0 %v8372
    %8711 = vmatprep.subr.bf16.mxu0 0
    %8712 = vmatpush1.bf16.msra.mxu0 %v8373
    %8713 = vmatprep.subr.bf16.mxu0 0
    %8714 = vmatpush1.bf16.msra.mxu0 %v8374
    %8715 = vmatprep.subr.bf16.mxu0 0
    %8716 = vmatpush1.bf16.msra.mxu0 %v8375
    %8717 = vmatprep.subr.bf16.mxu0 0
    %8718 = vmatpush1.bf16.msra.mxu0 %v8376
    %8719 = vmatprep.subr.bf16.mxu0 0
    %8720 = vmatpush1.bf16.msra.mxu0 %v8377
    %8721 = vmatprep.subr.bf16.mxu0 0
    %8722 = vmatpush1.bf16.msra.mxu0 %v8378
    %8723 = vmatprep.subr.bf16.mxu0 0
    %8724 = vmatpush1.bf16.msra.mxu0 %v8379
    %8725 = vmatprep.subr.bf16.mxu0 0
    %8726 = vmatpush1.bf16.msra.mxu0 %v8380
    %8727 = vmatprep.subr.bf16.mxu0 0
    %8728 = vmatpush1.bf16.msra.mxu0 %v8381
    %8729 = vmatprep.mubr.bf16.mxu0 %v7532
    %8730 = vmatmul.mubr.bf16.gmra.mrb[0].mxu0 %v7531
    %v8731 = vpop.f32.mrb[0].mxu0
    %v8732 = vadd.f32 %v8691, %v8731
    %v8733 = vpop.f32.mrb[0].mxu0
    %v8734 = vpop.f32.mrb[0].mxu0
    %v8735 = vadd.f32 %v8694, %v8734
    %v8736 = vpop.f32.mrb[0].mxu0
    %8737 = vdwg.mxu0
    %8738 = vmatprep.subr.bf16.mxu0 0
    %8739 = vmatpush1.bf16.msra.mxu0 %v8382
    %8740 = vmatprep.subr.bf16.mxu0 0
    %8741 = vmatpush1.bf16.msra.mxu0 %v8383
    %8742 = vmatprep.subr.bf16.mxu0 0
    %8743 = vmatpush1.bf16.msra.mxu0 %v8384
    %8744 = vmatprep.subr.bf16.mxu0 0
    %8745 = vmatpush1.bf16.msra.mxu0 %v8385
    %8746 = vmatprep.subr.bf16.mxu0 0
    %8747 = vmatpush1.bf16.msra.mxu0 %v8386
    %8748 = vmatprep.subr.bf16.mxu0 0
    %8749 = vmatpush1.bf16.msra.mxu0 %v8387
    %8750 = vmatprep.subr.bf16.mxu0 0
    %8751 = vmatpush1.bf16.msra.mxu0 %v8388
    %8752 = vmatprep.subr.bf16.mxu0 0
    %8753 = vmatpush1.bf16.msra.mxu0 %v8389
    %8754 = vmatprep.subr.bf16.mxu0 0
    %8755 = vmatpush1.bf16.msra.mxu0 %v8390
    %8756 = vmatprep.subr.bf16.mxu0 0
    %8757 = vmatpush1.bf16.msra.mxu0 %v8391
    %8758 = vmatprep.subr.bf16.mxu0 0
    %8759 = vmatpush1.bf16.msra.mxu0 %v8392
    %8760 = vmatprep.subr.bf16.mxu0 0
    %8761 = vmatpush1.bf16.msra.mxu0 %v8393
    %8762 = vmatprep.subr.bf16.mxu0 0
    %8763 = vmatpush1.bf16.msra.mxu0 %v8394
    %8764 = vmatprep.subr.bf16.mxu0 0
    %8765 = vmatpush1.bf16.msra.mxu0 %v8395
    %8766 = vmatprep.subr.bf16.mxu0 0
    %8767 = vmatpush1.bf16.msra.mxu0 %v8396
    %8768 = vmatprep.subr.bf16.mxu0 0
    %8769 = vmatpush1.bf16.msra.mxu0 %v8397
    %8770 = vmatprep.mubr.bf16.mxu0 %v7534
    %8771 = vmatmul.mubr.bf16.gmra.mrb[0].mxu0 %v7533
    %v8772 = vpop.f32.mrb[0].mxu0
    %v8773 = vadd.f32 %v8732, %v8772
    %v8774 = vpop.f32.mrb[0].mxu0
    %v8775 = vpop.f32.mrb[0].mxu0
    %v8776 = vadd.f32 %v8735, %v8775
    %v8777 = vpop.f32.mrb[0].mxu0
    %8778 = vdwg.mxu0
    %8779 = vmatprep.subr.bf16.mxu0 0
    %8780 = vmatpush1.bf16.msra.mxu0 %v8398
    %8781 = vmatprep.subr.bf16.mxu0 0
    %8782 = vmatpush1.bf16.msra.mxu0 %v8399
    %8783 = vmatprep.subr.bf16.mxu0 0
    %8784 = vmatpush1.bf16.msra.mxu0 %v8400
    %8785 = vmatprep.subr.bf16.mxu0 0
    %8786 = vmatpush1.bf16.msra.mxu0 %v8401
    %8787 = vmatprep.subr.bf16.mxu0 0
    %8788 = vmatpush1.bf16.msra.mxu0 %v8402
    %8789 = vmatprep.subr.bf16.mxu0 0
    %8790 = vmatpush1.bf16.msra.mxu0 %v8403
    %8791 = vmatprep.subr.bf16.mxu0 0
    %8792 = vmatpush1.bf16.msra.mxu0 %v8404
    %8793 = vmatprep.subr.bf16.mxu0 0
    %8794 = vmatpush1.bf16.msra.mxu0 %v8405
    %8795 = vmatprep.subr.bf16.mxu0 0
    %8796 = vmatpush1.bf16.msra.mxu0 %v8406
    %8797 = vmatprep.subr.bf16.mxu0 0
    %8798 = vmatpush1.bf16.msra.mxu0 %v8407
    %8799 = vmatprep.subr.bf16.mxu0 0
    %8800 = vmatpush1.bf16.msra.mxu0 %v8408
    %8801 = vmatprep.subr.bf16.mxu0 0
    %8802 = vmatpush1.bf16.msra.mxu0 %v8409
    %8803 = vmatprep.subr.bf16.mxu0 0
    %8804 = vmatpush1.bf16.msra.mxu0 %v8410
    %8805 = vmatprep.subr.bf16.mxu0 0
    %8806 = vmatpush1.bf16.msra.mxu0 %v8411
    %8807 = vmatprep.subr.bf16.mxu0 0
    %8808 = vmatpush1.bf16.msra.mxu0 %v8412
    %8809 = vmatprep.subr.bf16.mxu0 0
    %8810 = vmatpush1.bf16.msra.mxu0 %v8413
    %8811 = vmatprep.mubr.bf16.mxu0 %v7536
    %8812 = vmatmul.mubr.bf16.gmra.mrb[0].mxu0 %v7535
    %v8813 = vpop.f32.mrb[0].mxu0
    %v8814 = vadd.f32 %v8773, %v8813
    %v8815 = vpop.f32.mrb[0].mxu0
    %v8816 = vpop.f32.mrb[0].mxu0
    %v8817 = vadd.f32 %v8776, %v8816
    %v8818 = vpop.f32.mrb[0].mxu0
    %8819 = vdwg.mxu0
    %8820 = vmatprep.subr.bf16.mxu0 0
    %8821 = vmatpush1.bf16.msra.mxu0 %v8414
    %8822 = vmatprep.subr.bf16.mxu0 0
    %8823 = vmatpush1.bf16.msra.mxu0 %v8415
    %8824 = vmatprep.subr.bf16.mxu0 0
    %8825 = vmatpush1.bf16.msra.mxu0 %v8416
    %8826 = vmatprep.subr.bf16.mxu0 0
    %8827 = vmatpush1.bf16.msra.mxu0 %v8417
    %8828 = vmatprep.subr.bf16.mxu0 0
    %8829 = vmatpush1.bf16.msra.mxu0 %v8418
    %8830 = vmatprep.subr.bf16.mxu0 0
    %8831 = vmatpush1.bf16.msra.mxu0 %v8419
    %8832 = vmatprep.subr.bf16.mxu0 0
    %8833 = vmatpush1.bf16.msra.mxu0 %v8420
    %8834 = vmatprep.subr.bf16.mxu0 0
    %8835 = vmatpush1.bf16.msra.mxu0 %v8421
    %8836 = vmatprep.subr.bf16.mxu0 0
    %8837 = vmatpush1.bf16.msra.mxu0 %v8422
    %8838 = vmatprep.subr.bf16.mxu0 0
    %8839 = vmatpush1.bf16.msra.mxu0 %v8423
    %8840 = vmatprep.subr.bf16.mxu0 0
    %8841 = vmatpush1.bf16.msra.mxu0 %v8424
    %8842 = vmatprep.subr.bf16.mxu0 0
    %8843 = vmatpush1.bf16.msra.mxu0 %v8425
    %8844 = vmatprep.subr.bf16.mxu0 0
    %8845 = vmatpush1.bf16.msra.mxu0 %v8426
    %8846 = vmatprep.subr.bf16.mxu0 0
    %8847 = vmatpush1.bf16.msra.mxu0 %v8427
    %8848 = vmatprep.subr.bf16.mxu0 0
    %8849 = vmatpush1.bf16.msra.mxu0 %v8428
    %8850 = vmatprep.subr.bf16.mxu0 0
    %8851 = vmatpush1.bf16.msra.mxu0 %v8429
    %8852 = vmatprep.mubr.bf16.mxu0 %v7538
    %8853 = vmatmul.mubr.bf16.gmra.mrb[0].mxu0 %v7537
    %v8854 = vpop.f32.mrb[0].mxu0
    %v8855 = vadd.f32 %v8814, %v8854
    %v8856 = vpop.f32.mrb[0].mxu0
    %v8857 = vpop.f32.mrb[0].mxu0
    %v8858 = vadd.f32 %v8817, %v8857
    %v8859 = vpop.f32.mrb[0].mxu0
    %8860 = vdwg.mxu0
    %8861 = vmatprep.subr.bf16.mxu0 0
    %8862 = vmatpush1.bf16.msra.mxu0 %v8430
    %8863 = vmatprep.subr.bf16.mxu0 0
    %8864 = vmatpush1.bf16.msra.mxu0 %v8431
    %8865 = vmatprep.subr.bf16.mxu0 0
    %8866 = vmatpush1.bf16.msra.mxu0 %v8432
    %8867 = vmatprep.subr.bf16.mxu0 0
    %8868 = vmatpush1.bf16.msra.mxu0 %v8433
    %8869 = vmatprep.subr.bf16.mxu0 0
    %8870 = vmatpush1.bf16.msra.mxu0 %v8434
    %8871 = vmatprep.subr.bf16.mxu0 0
    %8872 = vmatpush1.bf16.msra.mxu0 %v8435
    %8873 = vmatprep.subr.bf16.mxu0 0
    %8874 = vmatpush1.bf16.msra.mxu0 %v8436
    %8875 = vmatprep.subr.bf16.mxu0 0
    %8876 = vmatpush1.bf16.msra.mxu0 %v8437
    %8877 = vmatprep.subr.bf16.mxu0 0
    %8878 = vmatpush1.bf16.msra.mxu0 %v8438
    %8879 = vmatprep.subr.bf16.mxu0 0
    %8880 = vmatpush1.bf16.msra.mxu0 %v8439
    %8881 = vmatprep.subr.bf16.mxu0 0
    %8882 = vmatpush1.bf16.msra.mxu0 %v8440
    %8883 = vmatprep.subr.bf16.mxu0 0
    %8884 = vmatpush1.bf16.msra.mxu0 %v8441
    %8885 = vmatprep.subr.bf16.mxu0 0
    %8886 = vmatpush1.bf16.msra.mxu0 %v8442
    %8887 = vmatprep.subr.bf16.mxu0 0
    %8888 = vmatpush1.bf16.msra.mxu0 %v8443
    %8889 = vmatprep.subr.bf16.mxu0 0
    %8890 = vmatpush1.bf16.msra.mxu0 %v8444
    %8891 = vmatprep.subr.bf16.mxu0 0
    %8892 = vmatpush1.bf16.msra.mxu0 %v8445
    %8893 = vmatprep.mubr.bf16.mxu0 %v7540
    %8894 = vmatmul.mubr.bf16.gmra.mrb[0].mxu0 %v7539
    %v8895 = vpop.f32.mrb[0].mxu0
    %v8896 = vadd.f32 %v8855, %v8895
    %v8897 = vpop.f32.mrb[0].mxu0
    %v8898 = vpop.f32.mrb[0].mxu0
    %v8899 = vadd.f32 %v8858, %v8898
    %v8900 = vpop.f32.mrb[0].mxu0
    %8901 = vdwg.mxu0
    %v8902 = vadd.f32 %v6865, %v8896
    %v8903 = vadd.f32 %v6866, %v8899
    %s8904 = scalar_lea.vmem %s41, 1
    %v8905 = vld [vmem:[%s8904] sm:$0x1]
    %s8906 = scalar_lea.vmem %s43, 1
    %v8907 = vld [vmem:[%s8906] sm:$0x1]
    %v8908 = vsel %vm157, %v8902, 0.0
    %8909 = vadd.xlane.f32.xlu0 %v8908
    %v8910 = vpop.xlane.xlu0 %8909
    %v8911 = vsel %vm157, %v8903, 0.0
    %8912 = vadd.xlane.f32.xlu0 %v8911
    %v8913 = vpop.xlane.xlu0 %8912
    %v8914 = vmul.f32 %v8910, %v1297
    %v8915 = vmul.f32 %v8913, %v1297
    %v8916 = vsub.f32 %v8902, %v8914
    %v8917 = vsub.f32 %v8903, %v8915
    %v8918 = vmul.f32 %v8916, %v8916
    %v8919 = vmul.f32 %v8917, %v8917
    %v8920 = vsel %vm157, %v8918, 0.0
    %8921 = vadd.xlane.f32.xlu0 %v8920
    %v8922 = vpop.xlane.xlu0 %8921
    %v8923 = vsel %vm157, %v8919, 0.0
    %8924 = vadd.xlane.f32.xlu0 %v8923
    %v8925 = vpop.xlane.xlu0 %8924
    %v8926 = vmul.f32 %v8922, %v1297
    %v8927 = vmul.f32 %v8925, %v1297
    %v8928 = vadd.f32 %v8926, 1e-05
    %v8929 = vadd.f32 %v8927, 1e-05
    %v8930 = vrsqrt.pop %v8928
    %v8931 = vrsqrt.pop %v8929
    %v8932 = vmul.f32 %v8916, %v8930
    %v8933 = vmul.f32 %v8917, %v8931
    %v8935 = vlaneseq
    %v8936 = vshrl.u32 %v8935, 7
    %v8937 = vsub.s32 0, %v8936
    %v8938 = vrot.slane %v8905, %v8937
    %v8940 = vmul.f32 %v8932, %v8938
    %v8941 = vmul.f32 %v8933, %v8938
    %v8943 = vlaneseq
    %v8944 = vshrl.u32 %v8943, 7
    %v8945 = vsub.s32 0, %v8944
    %v8946 = vrot.slane %v8907, %v8945
    %v8948 = vadd.f32 %v8940, %v8946
    %v8949 = vadd.f32 %v8941, %v8946
    %v8950 = vld [vmem:[%s53] sm:$0x1]
    %v8951 = vld [vmem:[%s55] sm:$0x1]
    %v8952 = vsel %vm157, %v8948, 0.0
    %8953 = vadd.xlane.f32.xlu0 %v8952
    %v8954 = vpop.xlane.xlu0 %8953
    %v8955 = vsel %vm157, %v8949, 0.0
    %8956 = vadd.xlane.f32.xlu0 %v8955
    %v8957 = vpop.xlane.xlu0 %8956
    %v8958 = vmul.f32 %v8954, %v1297
    %v8959 = vmul.f32 %v8957, %v1297
    %v8960 = vsub.f32 %v8948, %v8958
    %v8961 = vsub.f32 %v8949, %v8959
    %v8962 = vmul.f32 %v8960, %v8960
    %v8963 = vmul.f32 %v8961, %v8961
    %v8964 = vsel %vm157, %v8962, 0.0
    %8965 = vadd.xlane.f32.xlu0 %v8964
    %v8966 = vpop.xlane.xlu0 %8965
    %v8967 = vsel %vm157, %v8963, 0.0
    %8968 = vadd.xlane.f32.xlu0 %v8967
    %v8969 = vpop.xlane.xlu0 %8968
    %v8970 = vmul.f32 %v8966, %v1297
    %v8971 = vmul.f32 %v8969, %v1297
    %v8972 = vadd.f32 %v8970, 1e-05
    %v8973 = vadd.f32 %v8971, 1e-05
    %v8974 = vrsqrt.pop %v8972
    %v8975 = vrsqrt.pop %v8973
    %v8976 = vmul.f32 %v8960, %v8974
    %v8977 = vmul.f32 %v8961, %v8975
    %v8979 = vlaneseq
    %v8980 = vshrl.u32 %v8979, 7
    %v8981 = vsub.s32 0, %v8980
    %v8982 = vrot.slane %v8950, %v8981
    %v8984 = vmul.f32 %v8976, %v8982
    %v8985 = vmul.f32 %v8977, %v8982
    %v8987 = vlaneseq
    %v8988 = vshrl.u32 %v8987, 7
    %v8989 = vsub.s32 0, %v8988
    %v8990 = vrot.slane %v8951, %v8989
    %v8992 = vadd.f32 %v8984, %v8990
    %v8993 = vadd.f32 %v8985, %v8990
    %v8994 = vpack.c.bf16 %v8993, %v8992
    %v8995 = vld [vmem:[%s57] sm:$0xf]
    %v8996 = vld [vmem:[%s57 + $0x4] sm:$0xf]
    %v8997 = vld [vmem:[%s57 + $0x8] sm:$0xf]
    %v8998 = vld [vmem:[%s57 + $0xc] sm:$0xf]
    %v8999 = vld [vmem:[%s59] sm:$0x1]
    %v9001 = vlaneseq
    %v9002 = vshrl.u32 %v9001, 7
    %v9003 = vsub.s32 0, %v9002
    %v9004 = vrot.slane %v8999, %v9003
    %v9010 = vunpack.c.l.b16 %v8995
    %v9011 = vunpack.c.l.b16 %v8996
    %v9012 = vunpack.c.l.b16 %v8997
    %v9013 = vunpack.c.l.b16 %v8998
    %v9014 = vpack.c.b16 %v9011, %v9010
    %v9015 = vpack.c.b16 %v9013, %v9012
    %v9019 = vsel %vm157, %v8994, 0
    %9021 = vmatprep.subr.bf16.mxu0 0
    %9022 = vmatpush1.bf16.msra.mxu0 %v9014
    %9023 = vmatprep.subr.bf16.mxu0 0
    %9024 = vmatpush1.bf16.msra.mxu0 %v9015
    %9025 = vmatprep.subr.bf16.mxu0 0
    %9026 = vmatpush1.bf16.msra.mxu0 0
    %9027 = vmatprep.subr.bf16.mxu0 0
    %9028 = vmatpush1.bf16.msra.mxu0 0
    %9029 = vmatprep.subr.bf16.mxu0 0
    %9030 = vmatpush1.bf16.msra.mxu0 0
    %9031 = vmatprep.subr.bf16.mxu0 0
    %9032 = vmatpush1.bf16.msra.mxu0 0
    %9033 = vmatprep.subr.bf16.mxu0 0
    %9034 = vmatpush1.bf16.msra.mxu0 0
    %9035 = vmatprep.subr.bf16.mxu0 0
    %9036 = vmatpush1.bf16.msra.mxu0 0
    %9037 = vmatprep.subr.bf16.mxu0 0
    %9038 = vmatpush1.bf16.msra.mxu0 0
    %9039 = vmatprep.subr.bf16.mxu0 0
    %9040 = vmatpush1.bf16.msra.mxu0 0
    %9041 = vmatprep.subr.bf16.mxu0 0
    %9042 = vmatpush1.bf16.msra.mxu0 0
    %9043 = vmatprep.subr.bf16.mxu0 0
    %9044 = vmatpush1.bf16.msra.mxu0 0
    %9045 = vmatprep.subr.bf16.mxu0 0
    %9046 = vmatpush1.bf16.msra.mxu0 0
    %9047 = vmatprep.subr.bf16.mxu0 0
    %9048 = vmatpush1.bf16.msra.mxu0 0
    %9049 = vmatprep.subr.bf16.mxu0 0
    %9050 = vmatpush1.bf16.msra.mxu0 0
    %9051 = vmatprep.subr.bf16.mxu0 0
    %9052 = vmatpush1.bf16.msra.mxu0 0
    %9053 = vmatprep.mubr.bf16.mxu0 0
    %9054 = vmatmul.mubr.bf16.gmra.mrb[0].mxu0 %v9019
    %v9055 = vpop.f32.mrb[0].mxu0
    %v9056 = vadd.f32 %v9004, %v9055
    %v9057 = vpop.f32.mrb[0].mxu0
    %v9058 = vpop.f32.mrb[0].mxu0
    %v9059 = vadd.f32 %v9004, %v9058
    %v9060 = vpop.f32.mrb[0].mxu0
    %9061 = vdwg.mxu0
    %9062 = vst [vmem:[#allocation2] sm:$0xff] %v9056
    %9063 = vst [vmem:[#allocation2 + $0x8] sm:$0xff] %v9059
    // Predicated region
    $region122: #{seq2seq_forward.1} parent=1 // pred_check
      _
    $region123: #{seq2seq_forward.1} parent=1 // pred_check_branch
      %9065 = sbr.rel (0) target = $region125
    $region124: #{seq2seq_forward.1} parent=1 // pred_region
      %s9067 = ssub.s32 256, 256
      %9068 = vsyncadd [#allocation3], %s9067
      %s9069 = sshll.u32 [#allocation2], 4
      %s9070 = int_to_ptr.vmem [resolvable:$true] %s9069
      %9075 = dma.vmem_to_hbm [thread:$0]  %s9070, 256, %s61, [#allocation3], 128, 128, 8
    $region125: #{seq2seq_forward.1} parent=1 // pred_fallthru
      _
    // Predicated region
    $region126: #{seq2seq_forward.1} parent=1 // pred_check
      _
    $region127: #{seq2seq_forward.1} parent=1 // pred_check_branch
      %9077 = sbr.rel (0) target = $region129
    $region128: #{seq2seq_forward.1} parent=1 // pred_region
      %9078 = dma.done [#allocation3], 256
    $region129: #{seq2seq_forward.1} parent=1 // pred_fallthru
      _
    %9079 = vsyncpa [#allocation3], 1

</llo_original>
